<compile_context>
chip_gen: v5e
topology: v5e:2x2
jax: 0.10.0
libtpu: 0.0.40
codegen_flags: <defaults>
</compile_context>

<pallas_src>
import jax
import jax.numpy as jnp
import numpy as np
from jax.experimental import pallas as pl
from jax.experimental.pallas import tpu as pltpu


# -----------------------------------------------------------------------------
# Fused Pallas kernel
# -----------------------------------------------------------------------------
def _fused_seq2seq_kernel(x_ref, y_ref, sgew_ref, eye_ref,
                          ewi_ref, ewh_ref, ebi_ref, ebh_ref,
                          dwi_ref, dwh_ref, dbi_ref, dbh_ref,
                          fcw_ref, fcb_ref,
                          out_ref):
    T_in, BNt, _ = x_ref.shape
    T_out = y_ref.shape[0]
    L = ewi_ref.shape[0]
    He = ewi_ref.shape[-1]          # encoder hidden size

    def gru_stack(seq2d, T, h0_list, wi_ref, wh_ref, bi_ref, bh_ref):
        """L-layer GRU (PyTorch gate order r, z, n) over a flattened (T*BN, W) seq.

        Per-gate weights avoid lane slicing; input projections for all T steps
        are hoisted into one MXU matmul per gate; the per-step serial path is
        only 3 hidden matmuls + VPU/EUP gate math.  T and L are small & static,
        so loops unroll at trace time (everything stays in vregs).
        """
        h_last = []
        for l in range(L):
            wi_r = wi_ref[l, 0, :, :]
            wi_z = wi_ref[l, 1, :, :]
            wi_n = wi_ref[l, 2, :, :]
            wh_r = wh_ref[l, 0, :, :]
            wh_z = wh_ref[l, 1, :, :]
            wh_n = wh_ref[l, 2, :, :]
            b_r = bi_ref[l, 0, :, :] + bh_ref[l, 0, :, :]     # (1, W)
            b_z = bi_ref[l, 1, :, :] + bh_ref[l, 1, :, :]
            b_in = bi_ref[l, 2, :, :]
            b_hn = bh_ref[l, 2, :, :]

            # Hoisted input projections: one (T*BN, W) x (W, W) matmul per gate.
            gi_r = jnp.dot(seq2d, wi_r, preferred_element_type=jnp.float32) + b_r
            gi_z = jnp.dot(seq2d, wi_z, preferred_element_type=jnp.float32) + b_z
            gi_n = jnp.dot(seq2d, wi_n, preferred_element_type=jnp.float32) + b_in

            h = h0_list[l]
            outs = []
            for t in range(T):
                lo = t * BNt
                hi = lo + BNt
                gh_r = jnp.dot(h, wh_r, preferred_element_type=jnp.float32)
                gh_z = jnp.dot(h, wh_z, preferred_element_type=jnp.float32)
                gh_n = jnp.dot(h, wh_n, preferred_element_type=jnp.float32) + b_hn
                r = jax.nn.sigmoid(gi_r[lo:hi] + gh_r)
                z = jax.nn.sigmoid(gi_z[lo:hi] + gh_z)
                n = jnp.tanh(gi_n[lo:hi] + r * gh_n)
                h = (1.0 - z) * n + z * h
                outs.append(h)
            seq2d = jnp.concatenate(outs, axis=0)             # (T*BN, W)
            h_last.append(h)
        return seq2d, h_last

    # ---- encoder ----
    x2d = x_ref[...].reshape(T_in * BNt, x_ref.shape[-1])
    enc_h0 = [jnp.zeros((BNt, He), jnp.float32)] * L
    _, enc_h_last = gru_stack(x2d, T_in, enc_h0,
                              ewi_ref, ewh_ref, ebi_ref, ebh_ref)

    # ---- decoder initial hidden = cat(h_enc, server graph enc), built without
    #      an in-kernel lane concat:  h_enc @ [I | 0]  +  left-zero-padded sge.
    eye_m = eye_ref[...]                                      # (He, 2He)
    dec_h0 = [jnp.dot(enc_h_last[l], eye_m, preferred_element_type=jnp.float32)
              + sgew_ref[l, :, :]
              for l in range(L)]

    # ---- decoder (teacher forcing) ----
    y2d = y_ref[...].reshape(T_out * BNt, y_ref.shape[-1])
    dec_seq, _ = gru_stack(y2d, T_out, dec_h0,
                           dwi_ref, dwh_ref, dbi_ref, dbh_ref)

    # ---- fused fc_out epilogue + single output store ----
    out2d = jnp.dot(dec_seq, fcw_ref[...],
                    preferred_element_type=jnp.float32) + fcb_ref[...]
    out_ref[...] = out2d.reshape(T_out, BNt, out_ref.shape[-1])


# -----------------------------------------------------------------------------
# Parameter packing: per-gate, per-layer stacked weights
# -----------------------------------------------------------------------------
def _stack_gru_gate_params(layers, hidden):
    """Stack PyTorch-style GRU params into per-gate tensors.

    Returns wi (L,3,hidden,hidden), wh (L,3,hidden,hidden),
            bi (L,3,1,hidden),      bh (L,3,1,hidden).
    Layer-0 input weights are zero-padded from (in0, hidden) to (hidden, hidden);
    the corresponding input sequence is zero-padded to width `hidden`, so the
    padding contributes exactly zero.
    """
    wi_l, wh_l, bi_l, bh_l = [], [], [], []
    for p in layers:
        w_ih, w_hh = p["w_ih"], p["w_hh"]          # (3h, in), (3h, h)
        in_sz = w_ih.shape[1]
        assert in_sz <= hidden, "layer-0 input width must not exceed hidden width"
        wi = jnp.transpose(jnp.transpose(w_ih).reshape(in_sz, 3, hidden), (1, 0, 2))
        wi = jnp.pad(wi, ((0, 0), (0, hidden - in_sz), (0, 0)))
        wh = jnp.transpose(jnp.transpose(w_hh).reshape(hidden, 3, hidden), (1, 0, 2))
        bi = p["b_ih"].reshape(3, 1, hidden)
        bh = p["b_hh"].reshape(3, 1, hidden)
        wi_l.append(wi); wh_l.append(wh); bi_l.append(bi); bh_l.append(bh)
    return (jnp.stack(wi_l), jnp.stack(wh_l), jnp.stack(bi_l), jnp.stack(bh_l))


# -----------------------------------------------------------------------------
# Parameter construction (deterministic, synthetic)
# -----------------------------------------------------------------------------
def init_gru_params(key, input_size, hidden_size, num_layers):
    layers = []
    s = 1.0 / np.sqrt(hidden_size)
    for l in range(num_layers):
        in_sz = input_size if l == 0 else hidden_size
        key, k1, k2, k3, k4 = jax.random.split(key, 5)
        layers.append(dict(
            w_ih=jax.random.uniform(k1, (3 * hidden_size, in_sz), jnp.float32, -s, s),
            w_hh=jax.random.uniform(k2, (3 * hidden_size, hidden_size), jnp.float32, -s, s),
            b_ih=jax.random.uniform(k3, (3 * hidden_size,), jnp.float32, -s, s),
            b_hh=jax.random.uniform(k4, (3 * hidden_size,), jnp.float32, -s, s),
        ))
    return key, layers


def init_params(key, input_size, hidden_size, output_size, num_layers):
    key, enc = init_gru_params(key, input_size, hidden_size, num_layers)
    key, dec = init_gru_params(key, input_size, 2 * hidden_size, num_layers)
    key, k1, k2 = jax.random.split(key, 3)
    s = 1.0 / np.sqrt(2 * hidden_size)
    fc_w = jax.random.uniform(k1, (output_size, 2 * hidden_size), jnp.float32, -s, s)
    fc_b = jax.random.uniform(k2, (output_size,), jnp.float32, -s, s)
    return dict(enc=enc, dec=dec, fc_w=fc_w, fc_b=fc_b)


# -----------------------------------------------------------------------------
# Forward pass (client.forward -> base_model.forward), one fused pallas_call
# -----------------------------------------------------------------------------
def client_forward(params, x, x_attr, y, y_attr, server_graph_encoding):
    """x/x_attr: (B,N,T_in,F), y/y_attr: (B,N,T_out,F),
    server_graph_encoding: (L,B,N,H) (already permuted (1,0,2,3) as in local_train)."""
    B, N, T_in, _ = x.shape
    T_out = y.shape[2]
    BN = B * N
    L = len(params["enc"])
    H = params["enc"][0]["w_hh"].shape[-1]
    H2 = 2 * H
    OUT = params["fc_w"].shape[0]

    # ---- input prep (cheap layout plumbing, plain XLA) ----
    x_input = jnp.concatenate([x, x_attr], axis=-1)
    x_input = jnp.transpose(x_input, (2, 0, 1, 3)).reshape(T_in, BN, -1)
    y_input = jnp.concatenate([y, y_attr], axis=-1)
    y_input = jnp.transpose(y_input, (2, 0, 1, 3)).reshape(T_out, BN, -1)
    y_input = jnp.concatenate([x_input[-1:], y_input[:-1]], axis=0)   # teacher forcing shift

    F = x_input.shape[-1]
    assert F <= H and F <= H2
    # Zero-pad layer-0 inputs to the hidden width so all layers share one
    # stacked per-gate weight shape (padded weight rows are zero -> no effect).
    x_pad = jnp.pad(x_input, ((0, 0), (0, 0), (0, H - F))).astype(jnp.float32)
    y_pad = jnp.pad(y_input, ((0, 0), (0, 0), (0, H2 - F))).astype(jnp.float32)

    # sge placed in the last H lanes of a (L, BN, 2H) buffer (for concat-by-add).
    sge = server_graph_encoding.reshape(L, BN, H).astype(jnp.float32)
    sge_wide = jnp.pad(sge, ((0, 0), (0, 0), (H, 0)))
    eye_pad = jnp.eye(H, H2, dtype=jnp.float32)               # [I | 0]

    ewi, ewh, ebi, ebh = _stack_gru_gate_params(params["enc"], H)
    dwi, dwh, dbi, dbh = _stack_gru_gate_params(params["dec"], H2)
    fcw_t = jnp.transpose(params["fc_w"])                     # (2H, OUT)
    fcb = params["fc_b"].reshape(1, OUT)

    # Single "parallel" grid axis over BN tiles: at production BN, pick a
    # multiple-of-8 tile sized for v7x's 64 MiB VMEM so the two TensorCores
    # split the node dimension; at this test size one tile covers everything.
    BN_TILE = BN
    grid = (BN // BN_TILE,)

    bn3 = lambda i: (0, i, 0)
    c2 = lambda i: (0, 0)
    c4 = lambda i: (0, 0, 0, 0)

    in_specs = [
        pl.BlockSpec((T_in, BN_TILE, H), bn3),        # x_pad
        pl.BlockSpec((T_out, BN_TILE, H2), bn3),      # y_pad
        pl.BlockSpec((L, BN_TILE, H2), bn3),          # sge_wide
        pl.BlockSpec((H, H2), c2),                    # eye_pad
        pl.BlockSpec((L, 3, H, H), c4),               # enc W_ih (per gate)
        pl.BlockSpec((L, 3, H, H), c4),               # enc W_hh
        pl.BlockSpec((L, 3, 1, H), c4),               # enc b_ih
        pl.BlockSpec((L, 3, 1, H), c4),               # enc b_hh
        pl.BlockSpec((L, 3, H2, H2), c4),             # dec W_ih
        pl.BlockSpec((L, 3, H2, H2), c4),             # dec W_hh
        pl.BlockSpec((L, 3, 1, H2), c4),              # dec b_ih
        pl.BlockSpec((L, 3, 1, H2), c4),              # dec b_hh
        pl.BlockSpec((H2, OUT), c2),                  # fc weight (transposed)
        pl.BlockSpec((1, OUT), c2),                   # fc bias
    ]
    out_spec = pl.BlockSpec((T_out, BN_TILE, OUT), bn3)

    out = pl.pallas_call(
        _fused_seq2seq_kernel,
        out_shape=jax.ShapeDtypeStruct((T_out, BN, OUT), jnp.float32),
        grid=grid,
        in_specs=in_specs,
        out_specs=out_spec,
        compiler_params=pltpu.CompilerParams(
            dimension_semantics=("parallel",),
            vmem_limit_bytes=64 << 20),
    )(x_pad, y_pad, sge_wide, eye_pad,
      ewi, ewh, ebi, ebh, dwi, dwh, dbi, dbh, fcw_t, fcb)

    out = out.reshape(T_out, B, N, OUT)
    return jnp.transpose(out, (1, 2, 0, 3))                   # (B, N, T_out, OUT)

    # TODO(synk): the autoregressive / curriculum-learning decode branch uses
    # torch.rand-based scheduled sampling; only the deterministic teacher-forcing
    # branch is implemented here.


# -----------------------------------------------------------------------------
# Pure-JAX reference (numerical validation of the fused Pallas kernel)
# -----------------------------------------------------------------------------
def _gru_layer_ref(x_seq, h0, w_ih, w_hh, b_ih, b_hh):
    H = h0.shape[-1]

    def step(h, x_t):
        gi = x_t @ w_ih.T + b_ih
        gh = h @ w_hh.T + b_hh
        r = jax.nn.sigmoid(gi[:, :H] + gh[:, :H])
        z = jax.nn.sigmoid(gi[:, H:2 * H] + gh[:, H:2 * H])
        n = jnp.tanh(gi[:, 2 * H:] + r * gh[:, 2 * H:])
        h_new = (1.0 - z) * n + z * h
        return h_new, h_new

    _, out = jax.lax.scan(step, h0, x_seq)
    return out


def client_forward_ref(params, x, x_attr, y, y_attr, server_graph_encoding):
    B, N, T_in, _ = x.shape
    T_out = y.shape[2]
    BN = B * N
    L = len(params["enc"])
    H = params["enc"][0]["w_hh"].shape[-1]

    x_input = jnp.concatenate([x, x_attr], axis=-1)
    x_input = jnp.transpose(x_input, (2, 0, 1, 3)).reshape(T_in, BN, -1)
    inp = x_input
    h_final = []
    for l in range(L):
        p = params["enc"][l]
        seq = _gru_layer_ref(inp, jnp.zeros((BN, H), jnp.float32),
                             p["w_ih"], p["w_hh"], p["b_ih"], p["b_hh"])
        h_final.append(seq[-1])
        inp = seq
    h_encode = jnp.stack(h_final, axis=0)
    h_cat = jnp.concatenate(
        [h_encode.reshape(L, B, N, H), server_graph_encoding], axis=-1
    ).reshape(L, BN, 2 * H)

    y_input = jnp.concatenate([y, y_attr], axis=-1)
    y_input = jnp.transpose(y_input, (2, 0, 1, 3)).reshape(T_out, BN, -1)
    y_input = jnp.concatenate([x_input[-1:], y_input[:-1]], axis=0)
    inp = y_input
    for l in range(L):
        p = params["dec"][l]
        inp = _gru_layer_ref(inp, h_cat[l], p["w_ih"], p["w_hh"], p["b_ih"], p["b_hh"])
    out = inp.reshape(T_out * BN, 2 * H) @ params["fc_w"].T + params["fc_b"]
    out = out.reshape(T_out, B, N, -1)
    return jnp.transpose(out, (1, 2, 0, 3))


# -----------------------------------------------------------------------------
# Main
# -----------------------------------------------------------------------------
if __name__ == "__main__":
    B, N = 2, 4            # batch, nodes per client
    T_in, T_out = 8, 8     # input / output horizon
    F_in, F_attr = 1, 1    # traffic feature + time-of-day attr
    H = 32                 # GRU hidden size
    L = 2                  # gru_num_layers
    OUT = 1                # output_size

    key = jax.random.PRNGKey(0)
    key, kx, kxa, ky, kya, kg = jax.random.split(key, 6)
    x = jax.random.normal(kx, (B, N, T_in, F_in), jnp.float32)
    x_attr = jax.random.normal(kxa, (B, N, T_in, F_attr), jnp.float32)
    y = jax.random.normal(ky, (B, N, T_out, F_in), jnp.float32)
    y_attr = jax.random.normal(kya, (B, N, T_out, F_attr), jnp.float32)
    # server_graph_encoding after the client's permute(1, 0, 2, 3): (L, B, N, H)
    server_graph_encoding = jax.random.normal(kg, (L, B, N, H), jnp.float32)

    params = init_params(jax.random.PRNGKey(42),
                         input_size=F_in + F_attr, hidden_size=H,
                         output_size=OUT, num_layers=L)

    fwd = jax.jit(client_forward)
    out = fwd(params, x, x_attr, y, y_attr, server_graph_encoding)
    out = jax.block_until_ready(out)

    ref = client_forward_ref(params, x, x_attr, y, y_attr, server_graph_encoding)
    ref = jax.block_until_ready(ref)

    assert out.shape == (B, N, T_out, OUT), out.shape
    np.testing.assert_allclose(np.asarray(out), np.asarray(ref),
                               rtol=1e-4, atol=1e-5)
    print("KERNEL_OK")
</pallas_src>

<mosaic_0001>
module attributes {stable_mosaic.version = 11 : i64} {
  func.func @_fused_seq2seq_kernel(%arg0: i32, %arg1: memref<8x8x32xf32, #tpu.memory_space<vmem>>, %arg2: memref<8x8x64xf32, #tpu.memory_space<vmem>>, %arg3: memref<2x8x64xf32, #tpu.memory_space<vmem>>, %arg4: memref<32x64xf32, #tpu.memory_space<vmem>>, %arg5: memref<2x3x32x32xf32, #tpu.memory_space<vmem>>, %arg6: memref<2x3x32x32xf32, #tpu.memory_space<vmem>>, %arg7: memref<2x3x1x32xf32, #tpu.memory_space<vmem>>, %arg8: memref<2x3x1x32xf32, #tpu.memory_space<vmem>>, %arg9: memref<2x3x64x64xf32, #tpu.memory_space<vmem>>, %arg10: memref<2x3x64x64xf32, #tpu.memory_space<vmem>>, %arg11: memref<2x3x1x64xf32, #tpu.memory_space<vmem>>, %arg12: memref<2x3x1x64xf32, #tpu.memory_space<vmem>>, %arg13: memref<64x1xf32, #tpu.memory_space<vmem>>, %arg14: memref<1x1xf32, #tpu.memory_space<vmem>>, %arg15: memref<8x8x1xf32, #tpu.memory_space<vmem>>) attributes {dimension_semantics = [#tpu.dimension_semantics<parallel>], iteration_bounds = array<i64: 1>, scalar_prefetch = 0 : i64, scratch_operands = 0 : i64, tpu.core_type = #tpu.core_type<tc>, window_params = [{transform_indices = @transform_0, window_bounds = array<i64: 8, 8, 32>}, {transform_indices = @transform_1, window_bounds = array<i64: 8, 8, 64>}, {transform_indices = @transform_2, window_bounds = array<i64: 2, 8, 64>}, {pipeline_mode = #tpu.pipeline_mode<synchronous>, transform_indices = @transform_3, window_bounds = array<i64: 32, 64>}, {pipeline_mode = #tpu.pipeline_mode<synchronous>, transform_indices = @transform_4, window_bounds = array<i64: 2, 3, 32, 32>}, {pipeline_mode = #tpu.pipeline_mode<synchronous>, transform_indices = @transform_5, window_bounds = array<i64: 2, 3, 32, 32>}, {pipeline_mode = #tpu.pipeline_mode<synchronous>, transform_indices = @transform_6, window_bounds = array<i64: 2, 3, 1, 32>}, {pipeline_mode = #tpu.pipeline_mode<synchronous>, transform_indices = @transform_7, window_bounds = array<i64: 2, 3, 1, 32>}, {pipeline_mode = #tpu.pipeline_mode<synchronous>, transform_indices = @transform_8, window_bounds = array<i64: 2, 3, 64, 64>}, {pipeline_mode = #tpu.pipeline_mode<synchronous>, transform_indices = @transform_9, window_bounds = array<i64: 2, 3, 64, 64>}, {pipeline_mode = #tpu.pipeline_mode<synchronous>, transform_indices = @transform_10, window_bounds = array<i64: 2, 3, 1, 64>}, {pipeline_mode = #tpu.pipeline_mode<synchronous>, transform_indices = @transform_11, window_bounds = array<i64: 2, 3, 1, 64>}, {pipeline_mode = #tpu.pipeline_mode<synchronous>, transform_indices = @transform_12, window_bounds = array<i64: 64, 1>}, {pipeline_mode = #tpu.pipeline_mode<synchronous>, transform_indices = @transform_13, window_bounds = array<i64: 1, 1>}, {transform_indices = @transform_14, window_bounds = array<i64: 8, 8, 1>}]} {
    %c0 = arith.constant 0 : index
    %c0_0 = arith.constant 0 : index
    %c0_1 = arith.constant 0 : index
    %0 = vector.load %arg1[%c0, %c0_0, %c0_1] : memref<8x8x32xf32, #tpu.memory_space<vmem>>, vector<8x8x32xf32>
    %1 = vector.shape_cast %0 : vector<8x8x32xf32> to vector<64x32xf32>
    %cst = arith.constant 0.000000e+00 : f32
    %2 = vector.broadcast %cst : f32 to vector<8x32xf32>
    %c0_2 = arith.constant 0 : index
    %c0_3 = arith.constant 0 : index
    %c0_4 = arith.constant 0 : index
    %c0_5 = arith.constant 0 : index
    %3 = vector.load %arg5[%c0_2, %c0_3, %c0_4, %c0_5] : memref<2x3x32x32xf32, #tpu.memory_space<vmem>>, vector<1x1x32x32xf32>
    %4 = vector.shape_cast %3 : vector<1x1x32x32xf32> to vector<32x32xf32>
    %c0_6 = arith.constant 0 : index
    %c1 = arith.constant 1 : index
    %c0_7 = arith.constant 0 : index
    %c0_8 = arith.constant 0 : index
    %5 = vector.load %arg5[%c0_6, %c1, %c0_7, %c0_8] : memref<2x3x32x32xf32, #tpu.memory_space<vmem>>, vector<1x1x32x32xf32>
    %6 = vector.shape_cast %5 : vector<1x1x32x32xf32> to vector<32x32xf32>
    %c0_9 = arith.constant 0 : index
    %c2 = arith.constant 2 : index
    %c0_10 = arith.constant 0 : index
    %c0_11 = arith.constant 0 : index
    %7 = vector.load %arg5[%c0_9, %c2, %c0_10, %c0_11] : memref<2x3x32x32xf32, #tpu.memory_space<vmem>>, vector<1x1x32x32xf32>
    %8 = vector.shape_cast %7 : vector<1x1x32x32xf32> to vector<32x32xf32>
    %c0_12 = arith.constant 0 : index
    %c0_13 = arith.constant 0 : index
    %c0_14 = arith.constant 0 : index
    %c0_15 = arith.constant 0 : index
    %9 = vector.load %arg6[%c0_12, %c0_13, %c0_14, %c0_15] : memref<2x3x32x32xf32, #tpu.memory_space<vmem>>, vector<1x1x32x32xf32>
    %10 = vector.shape_cast %9 : vector<1x1x32x32xf32> to vector<32x32xf32>
    %c0_16 = arith.constant 0 : index
    %c1_17 = arith.constant 1 : index
    %c0_18 = arith.constant 0 : index
    %c0_19 = arith.constant 0 : index
    %11 = vector.load %arg6[%c0_16, %c1_17, %c0_18, %c0_19] : memref<2x3x32x32xf32, #tpu.memory_space<vmem>>, vector<1x1x32x32xf32>
    %12 = vector.shape_cast %11 : vector<1x1x32x32xf32> to vector<32x32xf32>
    %c0_20 = arith.constant 0 : index
    %c2_21 = arith.constant 2 : index
    %c0_22 = arith.constant 0 : index
    %c0_23 = arith.constant 0 : index
    %13 = vector.load %arg6[%c0_20, %c2_21, %c0_22, %c0_23] : memref<2x3x32x32xf32, #tpu.memory_space<vmem>>, vector<1x1x32x32xf32>
    %14 = vector.shape_cast %13 : vector<1x1x32x32xf32> to vector<32x32xf32>
    %c0_24 = arith.constant 0 : index
    %c0_25 = arith.constant 0 : index
    %c0_26 = arith.constant 0 : index
    %c0_27 = arith.constant 0 : index
    %15 = vector.load %arg7[%c0_24, %c0_25, %c0_26, %c0_27] : memref<2x3x1x32xf32, #tpu.memory_space<vmem>>, vector<1x1x1x32xf32>
    %16 = vector.shape_cast %15 : vector<1x1x1x32xf32> to vector<1x32xf32>
    %c0_28 = arith.constant 0 : index
    %c0_29 = arith.constant 0 : index
    %c0_30 = arith.constant 0 : index
    %c0_31 = arith.constant 0 : index
    %17 = vector.load %arg8[%c0_28, %c0_29, %c0_30, %c0_31] : memref<2x3x1x32xf32, #tpu.memory_space<vmem>>, vector<1x1x1x32xf32>
    %18 = vector.shape_cast %17 : vector<1x1x1x32xf32> to vector<1x32xf32>
    %19 = arith.addf %16, %18 : vector<1x32xf32>
    %c0_32 = arith.constant 0 : index
    %c1_33 = arith.constant 1 : index
    %c0_34 = arith.constant 0 : index
    %c0_35 = arith.constant 0 : index
    %20 = vector.load %arg7[%c0_32, %c1_33, %c0_34, %c0_35] : memref<2x3x1x32xf32, #tpu.memory_space<vmem>>, vector<1x1x1x32xf32>
    %21 = vector.shape_cast %20 : vector<1x1x1x32xf32> to vector<1x32xf32>
    %c0_36 = arith.constant 0 : index
    %c1_37 = arith.constant 1 : index
    %c0_38 = arith.constant 0 : index
    %c0_39 = arith.constant 0 : index
    %22 = vector.load %arg8[%c0_36, %c1_37, %c0_38, %c0_39] : memref<2x3x1x32xf32, #tpu.memory_space<vmem>>, vector<1x1x1x32xf32>
    %23 = vector.shape_cast %22 : vector<1x1x1x32xf32> to vector<1x32xf32>
    %24 = arith.addf %21, %23 : vector<1x32xf32>
    %c0_40 = arith.constant 0 : index
    %c2_41 = arith.constant 2 : index
    %c0_42 = arith.constant 0 : index
    %c0_43 = arith.constant 0 : index
    %25 = vector.load %arg7[%c0_40, %c2_41, %c0_42, %c0_43] : memref<2x3x1x32xf32, #tpu.memory_space<vmem>>, vector<1x1x1x32xf32>
    %26 = vector.shape_cast %25 : vector<1x1x1x32xf32> to vector<1x32xf32>
    %c0_44 = arith.constant 0 : index
    %c2_45 = arith.constant 2 : index
    %c0_46 = arith.constant 0 : index
    %c0_47 = arith.constant 0 : index
    %27 = vector.load %arg8[%c0_44, %c2_45, %c0_46, %c0_47] : memref<2x3x1x32xf32, #tpu.memory_space<vmem>>, vector<1x1x1x32xf32>
    %28 = vector.shape_cast %27 : vector<1x1x1x32xf32> to vector<1x32xf32>
    %cst_48 = arith.constant dense<0.000000e+00> : vector<64x32xf32>
    %29 = tpu.matmul %1, %4, %cst_48 {dimension_numbers = #tpu.dot_dimension_numbers<[1], [0], [0], [1], [0, 0, 1, 1], [], []>} : vector<64x32xf32>, vector<32x32xf32>, vector<64x32xf32> -> vector<64x32xf32>
    %30 = vector.broadcast %19 : vector<1x32xf32> to vector<64x32xf32>
    %31 = arith.addf %29, %30 : vector<64x32xf32>
    %cst_49 = arith.constant dense<0.000000e+00> : vector<64x32xf32>
    %32 = tpu.matmul %1, %6, %cst_49 {dimension_numbers = #tpu.dot_dimension_numbers<[1], [0], [0], [1], [0, 0, 1, 1], [], []>} : vector<64x32xf32>, vector<32x32xf32>, vector<64x32xf32> -> vector<64x32xf32>
    %33 = vector.broadcast %24 : vector<1x32xf32> to vector<64x32xf32>
    %34 = arith.addf %32, %33 : vector<64x32xf32>
    %cst_50 = arith.constant dense<0.000000e+00> : vector<64x32xf32>
    %35 = tpu.matmul %1, %8, %cst_50 {dimension_numbers = #tpu.dot_dimension_numbers<[1], [0], [0], [1], [0, 0, 1, 1], [], []>} : vector<64x32xf32>, vector<32x32xf32>, vector<64x32xf32> -> vector<64x32xf32>
    %36 = vector.broadcast %26 : vector<1x32xf32> to vector<64x32xf32>
    %37 = arith.addf %35, %36 : vector<64x32xf32>
    %cst_51 = arith.constant dense<0.000000e+00> : vector<8x32xf32>
    %38 = tpu.matmul %2, %10, %cst_51 {dimension_numbers = #tpu.dot_dimension_numbers<[1], [0], [0], [1], [0, 0, 1, 1], [], []>} : vector<8x32xf32>, vector<32x32xf32>, vector<8x32xf32> -> vector<8x32xf32>
    %cst_52 = arith.constant dense<0.000000e+00> : vector<8x32xf32>
    %39 = tpu.matmul %2, %12, %cst_52 {dimension_numbers = #tpu.dot_dimension_numbers<[1], [0], [0], [1], [0, 0, 1, 1], [], []>} : vector<8x32xf32>, vector<32x32xf32>, vector<8x32xf32> -> vector<8x32xf32>
    %cst_53 = arith.constant dense<0.000000e+00> : vector<8x32xf32>
    %40 = tpu.matmul %2, %14, %cst_53 {dimension_numbers = #tpu.dot_dimension_numbers<[1], [0], [0], [1], [0, 0, 1, 1], [], []>} : vector<8x32xf32>, vector<32x32xf32>, vector<8x32xf32> -> vector<8x32xf32>
    %41 = vector.broadcast %28 : vector<1x32xf32> to vector<8x32xf32>
    %42 = arith.addf %40, %41 : vector<8x32xf32>
    %43 = vector.extract_strided_slice %31 {offsets = [0, 0], sizes = [8, 32], strides = [1, 1]} : vector<64x32xf32> to vector<8x32xf32>
    %44 = arith.addf %43, %38 : vector<8x32xf32>
    %45 = arith.negf %44 : vector<8x32xf32>
    %46 = math.exp %45 : vector<8x32xf32>
    %cst_54 = arith.constant 1.000000e+00 : f32
    %47 = vector.broadcast %cst_54 : f32 to vector<8x32xf32>
    %48 = arith.addf %47, %46 : vector<8x32xf32>
    %49 = arith.divf %47, %48 : vector<8x32xf32>
    %50 = vector.extract_strided_slice %34 {offsets = [0, 0], sizes = [8, 32], strides = [1, 1]} : vector<64x32xf32> to vector<8x32xf32>
    %51 = arith.addf %50, %39 : vector<8x32xf32>
    %52 = arith.negf %51 : vector<8x32xf32>
    %53 = math.exp %52 : vector<8x32xf32>
    %cst_55 = arith.constant 1.000000e+00 : f32
    %54 = vector.broadcast %cst_55 : f32 to vector<8x32xf32>
    %55 = arith.addf %54, %53 : vector<8x32xf32>
    %56 = arith.divf %54, %55 : vector<8x32xf32>
    %57 = vector.extract_strided_slice %37 {offsets = [0, 0], sizes = [8, 32], strides = [1, 1]} : vector<64x32xf32> to vector<8x32xf32>
    %58 = arith.mulf %49, %42 : vector<8x32xf32>
    %59 = arith.addf %57, %58 : vector<8x32xf32>
    %60 = math.tanh %59 : vector<8x32xf32>
    %cst_56 = arith.constant 1.000000e+00 : f32
    %61 = vector.broadcast %cst_56 : f32 to vector<8x32xf32>
    %62 = arith.subf %61, %56 : vector<8x32xf32>
    %63 = arith.mulf %62, %60 : vector<8x32xf32>
    %64 = arith.mulf %56, %2 : vector<8x32xf32>
    %65 = arith.addf %63, %64 : vector<8x32xf32>
    %cst_57 = arith.constant dense<0.000000e+00> : vector<8x32xf32>
    %66 = tpu.matmul %65, %10, %cst_57 {dimension_numbers = #tpu.dot_dimension_numbers<[1], [0], [0], [1], [0, 0, 1, 1], [], []>} : vector<8x32xf32>, vector<32x32xf32>, vector<8x32xf32> -> vector<8x32xf32>
    %cst_58 = arith.constant dense<0.000000e+00> : vector<8x32xf32>
    %67 = tpu.matmul %65, %12, %cst_58 {dimension_numbers = #tpu.dot_dimension_numbers<[1], [0], [0], [1], [0, 0, 1, 1], [], []>} : vector<8x32xf32>, vector<32x32xf32>, vector<8x32xf32> -> vector<8x32xf32>
    %cst_59 = arith.constant dense<0.000000e+00> : vector<8x32xf32>
    %68 = tpu.matmul %65, %14, %cst_59 {dimension_numbers = #tpu.dot_dimension_numbers<[1], [0], [0], [1], [0, 0, 1, 1], [], []>} : vector<8x32xf32>, vector<32x32xf32>, vector<8x32xf32> -> vector<8x32xf32>
    %69 = vector.broadcast %28 : vector<1x32xf32> to vector<8x32xf32>
    %70 = arith.addf %68, %69 : vector<8x32xf32>
    %71 = vector.extract_strided_slice %31 {offsets = [8, 0], sizes = [8, 32], strides = [1, 1]} : vector<64x32xf32> to vector<8x32xf32>
    %72 = arith.addf %71, %66 : vector<8x32xf32>
    %73 = arith.negf %72 : vector<8x32xf32>
    %74 = math.exp %73 : vector<8x32xf32>
    %cst_60 = arith.constant 1.000000e+00 : f32
    %75 = vector.broadcast %cst_60 : f32 to vector<8x32xf32>
    %76 = arith.addf %75, %74 : vector<8x32xf32>
    %77 = arith.divf %75, %76 : vector<8x32xf32>
    %78 = vector.extract_strided_slice %34 {offsets = [8, 0], sizes = [8, 32], strides = [1, 1]} : vector<64x32xf32> to vector<8x32xf32>
    %79 = arith.addf %78, %67 : vector<8x32xf32>
    %80 = arith.negf %79 : vector<8x32xf32>
    %81 = math.exp %80 : vector<8x32xf32>
    %cst_61 = arith.constant 1.000000e+00 : f32
    %82 = vector.broadcast %cst_61 : f32 to vector<8x32xf32>
    %83 = arith.addf %82, %81 : vector<8x32xf32>
    %84 = arith.divf %82, %83 : vector<8x32xf32>
    %85 = vector.extract_strided_slice %37 {offsets = [8, 0], sizes = [8, 32], strides = [1, 1]} : vector<64x32xf32> to vector<8x32xf32>
    %86 = arith.mulf %77, %70 : vector<8x32xf32>
    %87 = arith.addf %85, %86 : vector<8x32xf32>
    %88 = math.tanh %87 : vector<8x32xf32>
    %cst_62 = arith.constant 1.000000e+00 : f32
    %89 = vector.broadcast %cst_62 : f32 to vector<8x32xf32>
    %90 = arith.subf %89, %84 : vector<8x32xf32>
    %91 = arith.mulf %90, %88 : vector<8x32xf32>
    %92 = arith.mulf %84, %65 : vector<8x32xf32>
    %93 = arith.addf %91, %92 : vector<8x32xf32>
    %cst_63 = arith.constant dense<0.000000e+00> : vector<8x32xf32>
    %94 = tpu.matmul %93, %10, %cst_63 {dimension_numbers = #tpu.dot_dimension_numbers<[1], [0], [0], [1], [0, 0, 1, 1], [], []>} : vector<8x32xf32>, vector<32x32xf32>, vector<8x32xf32> -> vector<8x32xf32>
    %cst_64 = arith.constant dense<0.000000e+00> : vector<8x32xf32>
    %95 = tpu.matmul %93, %12, %cst_64 {dimension_numbers = #tpu.dot_dimension_numbers<[1], [0], [0], [1], [0, 0, 1, 1], [], []>} : vector<8x32xf32>, vector<32x32xf32>, vector<8x32xf32> -> vector<8x32xf32>
    %cst_65 = arith.constant dense<0.000000e+00> : vector<8x32xf32>
    %96 = tpu.matmul %93, %14, %cst_65 {dimension_numbers = #tpu.dot_dimension_numbers<[1], [0], [0], [1], [0, 0, 1, 1], [], []>} : vector<8x32xf32>, vector<32x32xf32>, vector<8x32xf32> -> vector<8x32xf32>
    %97 = vector.broadcast %28 : vector<1x32xf32> to vector<8x32xf32>
    %98 = arith.addf %96, %97 : vector<8x32xf32>
    %99 = vector.extract_strided_slice %31 {offsets = [16, 0], sizes = [8, 32], strides = [1, 1]} : vector<64x32xf32> to vector<8x32xf32>
    %100 = arith.addf %99, %94 : vector<8x32xf32>
    %101 = arith.negf %100 : vector<8x32xf32>
    %102 = math.exp %101 : vector<8x32xf32>
    %cst_66 = arith.constant 1.000000e+00 : f32
    %103 = vector.broadcast %cst_66 : f32 to vector<8x32xf32>
    %104 = arith.addf %103, %102 : vector<8x32xf32>
    %105 = arith.divf %103, %104 : vector<8x32xf32>
    %106 = vector.extract_strided_slice %34 {offsets = [16, 0], sizes = [8, 32], strides = [1, 1]} : vector<64x32xf32> to vector<8x32xf32>
    %107 = arith.addf %106, %95 : vector<8x32xf32>
    %108 = arith.negf %107 : vector<8x32xf32>
    %109 = math.exp %108 : vector<8x32xf32>
    %cst_67 = arith.constant 1.000000e+00 : f32
    %110 = vector.broadcast %cst_67 : f32 to vector<8x32xf32>
    %111 = arith.addf %110, %109 : vector<8x32xf32>
    %112 = arith.divf %110, %111 : vector<8x32xf32>
    %113 = vector.extract_strided_slice %37 {offsets = [16, 0], sizes = [8, 32], strides = [1, 1]} : vector<64x32xf32> to vector<8x32xf32>
    %114 = arith.mulf %105, %98 : vector<8x32xf32>
    %115 = arith.addf %113, %114 : vector<8x32xf32>
    %116 = math.tanh %115 : vector<8x32xf32>
    %cst_68 = arith.constant 1.000000e+00 : f32
    %117 = vector.broadcast %cst_68 : f32 to vector<8x32xf32>
    %118 = arith.subf %117, %112 : vector<8x32xf32>
    %119 = arith.mulf %118, %116 : vector<8x32xf32>
    %120 = arith.mulf %112, %93 : vector<8x32xf32>
    %121 = arith.addf %119, %120 : vector<8x32xf32>
    %cst_69 = arith.constant dense<0.000000e+00> : vector<8x32xf32>
    %122 = tpu.matmul %121, %10, %cst_69 {dimension_numbers = #tpu.dot_dimension_numbers<[1], [0], [0], [1], [0, 0, 1, 1], [], []>} : vector<8x32xf32>, vector<32x32xf32>, vector<8x32xf32> -> vector<8x32xf32>
    %cst_70 = arith.constant dense<0.000000e+00> : vector<8x32xf32>
    %123 = tpu.matmul %121, %12, %cst_70 {dimension_numbers = #tpu.dot_dimension_numbers<[1], [0], [0], [1], [0, 0, 1, 1], [], []>} : vector<8x32xf32>, vector<32x32xf32>, vector<8x32xf32> -> vector<8x32xf32>
    %cst_71 = arith.constant dense<0.000000e+00> : vector<8x32xf32>
    %124 = tpu.matmul %121, %14, %cst_71 {dimension_numbers = #tpu.dot_dimension_numbers<[1], [0], [0], [1], [0, 0, 1, 1], [], []>} : vector<8x32xf32>, vector<32x32xf32>, vector<8x32xf32> -> vector<8x32xf32>
    %125 = vector.broadcast %28 : vector<1x32xf32> to vector<8x32xf32>
    %126 = arith.addf %124, %125 : vector<8x32xf32>
    %127 = vector.extract_strided_slice %31 {offsets = [24, 0], sizes = [8, 32], strides = [1, 1]} : vector<64x32xf32> to vector<8x32xf32>
    %128 = arith.addf %127, %122 : vector<8x32xf32>
    %129 = arith.negf %128 : vector<8x32xf32>
    %130 = math.exp %129 : vector<8x32xf32>
    %cst_72 = arith.constant 1.000000e+00 : f32
    %131 = vector.broadcast %cst_72 : f32 to vector<8x32xf32>
    %132 = arith.addf %131, %130 : vector<8x32xf32>
    %133 = arith.divf %131, %132 : vector<8x32xf32>
    %134 = vector.extract_strided_slice %34 {offsets = [24, 0], sizes = [8, 32], strides = [1, 1]} : vector<64x32xf32> to vector<8x32xf32>
    %135 = arith.addf %134, %123 : vector<8x32xf32>
    %136 = arith.negf %135 : vector<8x32xf32>
    %137 = math.exp %136 : vector<8x32xf32>
    %cst_73 = arith.constant 1.000000e+00 : f32
    %138 = vector.broadcast %cst_73 : f32 to vector<8x32xf32>
    %139 = arith.addf %138, %137 : vector<8x32xf32>
    %140 = arith.divf %138, %139 : vector<8x32xf32>
    %141 = vector.extract_strided_slice %37 {offsets = [24, 0], sizes = [8, 32], strides = [1, 1]} : vector<64x32xf32> to vector<8x32xf32>
    %142 = arith.mulf %133, %126 : vector<8x32xf32>
    %143 = arith.addf %141, %142 : vector<8x32xf32>
    %144 = math.tanh %143 : vector<8x32xf32>
    %cst_74 = arith.constant 1.000000e+00 : f32
    %145 = vector.broadcast %cst_74 : f32 to vector<8x32xf32>
    %146 = arith.subf %145, %140 : vector<8x32xf32>
    %147 = arith.mulf %146, %144 : vector<8x32xf32>
    %148 = arith.mulf %140, %121 : vector<8x32xf32>
    %149 = arith.addf %147, %148 : vector<8x32xf32>
    %cst_75 = arith.constant dense<0.000000e+00> : vector<8x32xf32>
    %150 = tpu.matmul %149, %10, %cst_75 {dimension_numbers = #tpu.dot_dimension_numbers<[1], [0], [0], [1], [0, 0, 1, 1], [], []>} : vector<8x32xf32>, vector<32x32xf32>, vector<8x32xf32> -> vector<8x32xf32>
    %cst_76 = arith.constant dense<0.000000e+00> : vector<8x32xf32>
    %151 = tpu.matmul %149, %12, %cst_76 {dimension_numbers = #tpu.dot_dimension_numbers<[1], [0], [0], [1], [0, 0, 1, 1], [], []>} : vector<8x32xf32>, vector<32x32xf32>, vector<8x32xf32> -> vector<8x32xf32>
    %cst_77 = arith.constant dense<0.000000e+00> : vector<8x32xf32>
    %152 = tpu.matmul %149, %14, %cst_77 {dimension_numbers = #tpu.dot_dimension_numbers<[1], [0], [0], [1], [0, 0, 1, 1], [], []>} : vector<8x32xf32>, vector<32x32xf32>, vector<8x32xf32> -> vector<8x32xf32>
    %153 = vector.broadcast %28 : vector<1x32xf32> to vector<8x32xf32>
    %154 = arith.addf %152, %153 : vector<8x32xf32>
    %155 = vector.extract_strided_slice %31 {offsets = [32, 0], sizes = [8, 32], strides = [1, 1]} : vector<64x32xf32> to vector<8x32xf32>
    %156 = arith.addf %155, %150 : vector<8x32xf32>
    %157 = arith.negf %156 : vector<8x32xf32>
    %158 = math.exp %157 : vector<8x32xf32>
    %cst_78 = arith.constant 1.000000e+00 : f32
    %159 = vector.broadcast %cst_78 : f32 to vector<8x32xf32>
    %160 = arith.addf %159, %158 : vector<8x32xf32>
    %161 = arith.divf %159, %160 : vector<8x32xf32>
    %162 = vector.extract_strided_slice %34 {offsets = [32, 0], sizes = [8, 32], strides = [1, 1]} : vector<64x32xf32> to vector<8x32xf32>
    %163 = arith.addf %162, %151 : vector<8x32xf32>
    %164 = arith.negf %163 : vector<8x32xf32>
    %165 = math.exp %164 : vector<8x32xf32>
    %cst_79 = arith.constant 1.000000e+00 : f32
    %166 = vector.broadcast %cst_79 : f32 to vector<8x32xf32>
    %167 = arith.addf %166, %165 : vector<8x32xf32>
    %168 = arith.divf %166, %167 : vector<8x32xf32>
    %169 = vector.extract_strided_slice %37 {offsets = [32, 0], sizes = [8, 32], strides = [1, 1]} : vector<64x32xf32> to vector<8x32xf32>
    %170 = arith.mulf %161, %154 : vector<8x32xf32>
    %171 = arith.addf %169, %170 : vector<8x32xf32>
    %172 = math.tanh %171 : vector<8x32xf32>
    %cst_80 = arith.constant 1.000000e+00 : f32
    %173 = vector.broadcast %cst_80 : f32 to vector<8x32xf32>
    %174 = arith.subf %173, %168 : vector<8x32xf32>
    %175 = arith.mulf %174, %172 : vector<8x32xf32>
    %176 = arith.mulf %168, %149 : vector<8x32xf32>
    %177 = arith.addf %175, %176 : vector<8x32xf32>
    %cst_81 = arith.constant dense<0.000000e+00> : vector<8x32xf32>
    %178 = tpu.matmul %177, %10, %cst_81 {dimension_numbers = #tpu.dot_dimension_numbers<[1], [0], [0], [1], [0, 0, 1, 1], [], []>} : vector<8x32xf32>, vector<32x32xf32>, vector<8x32xf32> -> vector<8x32xf32>
    %cst_82 = arith.constant dense<0.000000e+00> : vector<8x32xf32>
    %179 = tpu.matmul %177, %12, %cst_82 {dimension_numbers = #tpu.dot_dimension_numbers<[1], [0], [0], [1], [0, 0, 1, 1], [], []>} : vector<8x32xf32>, vector<32x32xf32>, vector<8x32xf32> -> vector<8x32xf32>
    %cst_83 = arith.constant dense<0.000000e+00> : vector<8x32xf32>
    %180 = tpu.matmul %177, %14, %cst_83 {dimension_numbers = #tpu.dot_dimension_numbers<[1], [0], [0], [1], [0, 0, 1, 1], [], []>} : vector<8x32xf32>, vector<32x32xf32>, vector<8x32xf32> -> vector<8x32xf32>
    %181 = vector.broadcast %28 : vector<1x32xf32> to vector<8x32xf32>
    %182 = arith.addf %180, %181 : vector<8x32xf32>
    %183 = vector.extract_strided_slice %31 {offsets = [40, 0], sizes = [8, 32], strides = [1, 1]} : vector<64x32xf32> to vector<8x32xf32>
    %184 = arith.addf %183, %178 : vector<8x32xf32>
    %185 = arith.negf %184 : vector<8x32xf32>
    %186 = math.exp %185 : vector<8x32xf32>
    %cst_84 = arith.constant 1.000000e+00 : f32
    %187 = vector.broadcast %cst_84 : f32 to vector<8x32xf32>
    %188 = arith.addf %187, %186 : vector<8x32xf32>
    %189 = arith.divf %187, %188 : vector<8x32xf32>
    %190 = vector.extract_strided_slice %34 {offsets = [40, 0], sizes = [8, 32], strides = [1, 1]} : vector<64x32xf32> to vector<8x32xf32>
    %191 = arith.addf %190, %179 : vector<8x32xf32>
    %192 = arith.negf %191 : vector<8x32xf32>
    %193 = math.exp %192 : vector<8x32xf32>
    %cst_85 = arith.constant 1.000000e+00 : f32
    %194 = vector.broadcast %cst_85 : f32 to vector<8x32xf32>
    %195 = arith.addf %194, %193 : vector<8x32xf32>
    %196 = arith.divf %194, %195 : vector<8x32xf32>
    %197 = vector.extract_strided_slice %37 {offsets = [40, 0], sizes = [8, 32], strides = [1, 1]} : vector<64x32xf32> to vector<8x32xf32>
    %198 = arith.mulf %189, %182 : vector<8x32xf32>
    %199 = arith.addf %197, %198 : vector<8x32xf32>
    %200 = math.tanh %199 : vector<8x32xf32>
    %cst_86 = arith.constant 1.000000e+00 : f32
    %201 = vector.broadcast %cst_86 : f32 to vector<8x32xf32>
    %202 = arith.subf %201, %196 : vector<8x32xf32>
    %203 = arith.mulf %202, %200 : vector<8x32xf32>
    %204 = arith.mulf %196, %177 : vector<8x32xf32>
    %205 = arith.addf %203, %204 : vector<8x32xf32>
    %cst_87 = arith.constant dense<0.000000e+00> : vector<8x32xf32>
    %206 = tpu.matmul %205, %10, %cst_87 {dimension_numbers = #tpu.dot_dimension_numbers<[1], [0], [0], [1], [0, 0, 1, 1], [], []>} : vector<8x32xf32>, vector<32x32xf32>, vector<8x32xf32> -> vector<8x32xf32>
    %cst_88 = arith.constant dense<0.000000e+00> : vector<8x32xf32>
    %207 = tpu.matmul %205, %12, %cst_88 {dimension_numbers = #tpu.dot_dimension_numbers<[1], [0], [0], [1], [0, 0, 1, 1], [], []>} : vector<8x32xf32>, vector<32x32xf32>, vector<8x32xf32> -> vector<8x32xf32>
    %cst_89 = arith.constant dense<0.000000e+00> : vector<8x32xf32>
    %208 = tpu.matmul %205, %14, %cst_89 {dimension_numbers = #tpu.dot_dimension_numbers<[1], [0], [0], [1], [0, 0, 1, 1], [], []>} : vector<8x32xf32>, vector<32x32xf32>, vector<8x32xf32> -> vector<8x32xf32>
    %209 = vector.broadcast %28 : vector<1x32xf32> to vector<8x32xf32>
    %210 = arith.addf %208, %209 : vector<8x32xf32>
    %211 = vector.extract_strided_slice %31 {offsets = [48, 0], sizes = [8, 32], strides = [1, 1]} : vector<64x32xf32> to vector<8x32xf32>
    %212 = arith.addf %211, %206 : vector<8x32xf32>
    %213 = arith.negf %212 : vector<8x32xf32>
    %214 = math.exp %213 : vector<8x32xf32>
    %cst_90 = arith.constant 1.000000e+00 : f32
    %215 = vector.broadcast %cst_90 : f32 to vector<8x32xf32>
    %216 = arith.addf %215, %214 : vector<8x32xf32>
    %217 = arith.divf %215, %216 : vector<8x32xf32>
    %218 = vector.extract_strided_slice %34 {offsets = [48, 0], sizes = [8, 32], strides = [1, 1]} : vector<64x32xf32> to vector<8x32xf32>
    %219 = arith.addf %218, %207 : vector<8x32xf32>
    %220 = arith.negf %219 : vector<8x32xf32>
    %221 = math.exp %220 : vector<8x32xf32>
    %cst_91 = arith.constant 1.000000e+00 : f32
    %222 = vector.broadcast %cst_91 : f32 to vector<8x32xf32>
    %223 = arith.addf %222, %221 : vector<8x32xf32>
    %224 = arith.divf %222, %223 : vector<8x32xf32>
    %225 = vector.extract_strided_slice %37 {offsets = [48, 0], sizes = [8, 32], strides = [1, 1]} : vector<64x32xf32> to vector<8x32xf32>
    %226 = arith.mulf %217, %210 : vector<8x32xf32>
    %227 = arith.addf %225, %226 : vector<8x32xf32>
    %228 = math.tanh %227 : vector<8x32xf32>
    %cst_92 = arith.constant 1.000000e+00 : f32
    %229 = vector.broadcast %cst_92 : f32 to vector<8x32xf32>
    %230 = arith.subf %229, %224 : vector<8x32xf32>
    %231 = arith.mulf %230, %228 : vector<8x32xf32>
    %232 = arith.mulf %224, %205 : vector<8x32xf32>
    %233 = arith.addf %231, %232 : vector<8x32xf32>
    %cst_93 = arith.constant dense<0.000000e+00> : vector<8x32xf32>
    %234 = tpu.matmul %233, %10, %cst_93 {dimension_numbers = #tpu.dot_dimension_numbers<[1], [0], [0], [1], [0, 0, 1, 1], [], []>} : vector<8x32xf32>, vector<32x32xf32>, vector<8x32xf32> -> vector<8x32xf32>
    %cst_94 = arith.constant dense<0.000000e+00> : vector<8x32xf32>
    %235 = tpu.matmul %233, %12, %cst_94 {dimension_numbers = #tpu.dot_dimension_numbers<[1], [0], [0], [1], [0, 0, 1, 1], [], []>} : vector<8x32xf32>, vector<32x32xf32>, vector<8x32xf32> -> vector<8x32xf32>
    %cst_95 = arith.constant dense<0.000000e+00> : vector<8x32xf32>
    %236 = tpu.matmul %233, %14, %cst_95 {dimension_numbers = #tpu.dot_dimension_numbers<[1], [0], [0], [1], [0, 0, 1, 1], [], []>} : vector<8x32xf32>, vector<32x32xf32>, vector<8x32xf32> -> vector<8x32xf32>
    %237 = vector.broadcast %28 : vector<1x32xf32> to vector<8x32xf32>
    %238 = arith.addf %236, %237 : vector<8x32xf32>
    %239 = vector.extract_strided_slice %31 {offsets = [56, 0], sizes = [8, 32], strides = [1, 1]} : vector<64x32xf32> to vector<8x32xf32>
    %240 = arith.addf %239, %234 : vector<8x32xf32>
    %241 = arith.negf %240 : vector<8x32xf32>
    %242 = math.exp %241 : vector<8x32xf32>
    %cst_96 = arith.constant 1.000000e+00 : f32
    %243 = vector.broadcast %cst_96 : f32 to vector<8x32xf32>
    %244 = arith.addf %243, %242 : vector<8x32xf32>
    %245 = arith.divf %243, %244 : vector<8x32xf32>
    %246 = vector.extract_strided_slice %34 {offsets = [56, 0], sizes = [8, 32], strides = [1, 1]} : vector<64x32xf32> to vector<8x32xf32>
    %247 = arith.addf %246, %235 : vector<8x32xf32>
    %248 = arith.negf %247 : vector<8x32xf32>
    %249 = math.exp %248 : vector<8x32xf32>
    %cst_97 = arith.constant 1.000000e+00 : f32
    %250 = vector.broadcast %cst_97 : f32 to vector<8x32xf32>
    %251 = arith.addf %250, %249 : vector<8x32xf32>
    %252 = arith.divf %250, %251 : vector<8x32xf32>
    %253 = vector.extract_strided_slice %37 {offsets = [56, 0], sizes = [8, 32], strides = [1, 1]} : vector<64x32xf32> to vector<8x32xf32>
    %254 = arith.mulf %245, %238 : vector<8x32xf32>
    %255 = arith.addf %253, %254 : vector<8x32xf32>
    %256 = math.tanh %255 : vector<8x32xf32>
    %cst_98 = arith.constant 1.000000e+00 : f32
    %257 = vector.broadcast %cst_98 : f32 to vector<8x32xf32>
    %258 = arith.subf %257, %252 : vector<8x32xf32>
    %259 = arith.mulf %258, %256 : vector<8x32xf32>
    %260 = arith.mulf %252, %233 : vector<8x32xf32>
    %261 = arith.addf %259, %260 : vector<8x32xf32>
    %262 = tpu.concatenate %65, %93, %121, %149, %177, %205, %233, %261 in 0 : vector<8x32xf32>, vector<8x32xf32>, vector<8x32xf32>, vector<8x32xf32>, vector<8x32xf32>, vector<8x32xf32>, vector<8x32xf32>, vector<8x32xf32> -> vector<64x32xf32>
    %c1_99 = arith.constant 1 : index
    %c0_100 = arith.constant 0 : index
    %c0_101 = arith.constant 0 : index
    %c0_102 = arith.constant 0 : index
    %263 = vector.load %arg5[%c1_99, %c0_100, %c0_101, %c0_102] : memref<2x3x32x32xf32, #tpu.memory_space<vmem>>, vector<1x1x32x32xf32>
    %264 = vector.shape_cast %263 : vector<1x1x32x32xf32> to vector<32x32xf32>
    %c1_103 = arith.constant 1 : index
    %c1_104 = arith.constant 1 : index
    %c0_105 = arith.constant 0 : index
    %c0_106 = arith.constant 0 : index
    %265 = vector.load %arg5[%c1_103, %c1_104, %c0_105, %c0_106] : memref<2x3x32x32xf32, #tpu.memory_space<vmem>>, vector<1x1x32x32xf32>
    %266 = vector.shape_cast %265 : vector<1x1x32x32xf32> to vector<32x32xf32>
    %c1_107 = arith.constant 1 : index
    %c2_108 = arith.constant 2 : index
    %c0_109 = arith.constant 0 : index
    %c0_110 = arith.constant 0 : index
    %267 = vector.load %arg5[%c1_107, %c2_108, %c0_109, %c0_110] : memref<2x3x32x32xf32, #tpu.memory_space<vmem>>, vector<1x1x32x32xf32>
    %268 = vector.shape_cast %267 : vector<1x1x32x32xf32> to vector<32x32xf32>
    %c1_111 = arith.constant 1 : index
    %c0_112 = arith.constant 0 : index
    %c0_113 = arith.constant 0 : index
    %c0_114 = arith.constant 0 : index
    %269 = vector.load %arg6[%c1_111, %c0_112, %c0_113, %c0_114] : memref<2x3x32x32xf32, #tpu.memory_space<vmem>>, vector<1x1x32x32xf32>
    %270 = vector.shape_cast %269 : vector<1x1x32x32xf32> to vector<32x32xf32>
    %c1_115 = arith.constant 1 : index
    %c1_116 = arith.constant 1 : index
    %c0_117 = arith.constant 0 : index
    %c0_118 = arith.constant 0 : index
    %271 = vector.load %arg6[%c1_115, %c1_116, %c0_117, %c0_118] : memref<2x3x32x32xf32, #tpu.memory_space<vmem>>, vector<1x1x32x32xf32>
    %272 = vector.shape_cast %271 : vector<1x1x32x32xf32> to vector<32x32xf32>
    %c1_119 = arith.constant 1 : index
    %c2_120 = arith.constant 2 : index
    %c0_121 = arith.constant 0 : index
    %c0_122 = arith.constant 0 : index
    %273 = vector.load %arg6[%c1_119, %c2_120, %c0_121, %c0_122] : memref<2x3x32x32xf32, #tpu.memory_space<vmem>>, vector<1x1x32x32xf32>
    %274 = vector.shape_cast %273 : vector<1x1x32x32xf32> to vector<32x32xf32>
    %c1_123 = arith.constant 1 : index
    %c0_124 = arith.constant 0 : index
    %c0_125 = arith.constant 0 : index
    %c0_126 = arith.constant 0 : index
    %275 = vector.load %arg7[%c1_123, %c0_124, %c0_125, %c0_126] : memref<2x3x1x32xf32, #tpu.memory_space<vmem>>, vector<1x1x1x32xf32>
    %276 = vector.shape_cast %275 : vector<1x1x1x32xf32> to vector<1x32xf32>
    %c1_127 = arith.constant 1 : index
    %c0_128 = arith.constant 0 : index
    %c0_129 = arith.constant 0 : index
    %c0_130 = arith.constant 0 : index
    %277 = vector.load %arg8[%c1_127, %c0_128, %c0_129, %c0_130] : memref<2x3x1x32xf32, #tpu.memory_space<vmem>>, vector<1x1x1x32xf32>
    %278 = vector.shape_cast %277 : vector<1x1x1x32xf32> to vector<1x32xf32>
    %279 = arith.addf %276, %278 : vector<1x32xf32>
    %c1_131 = arith.constant 1 : index
    %c1_132 = arith.constant 1 : index
    %c0_133 = arith.constant 0 : index
    %c0_134 = arith.constant 0 : index
    %280 = vector.load %arg7[%c1_131, %c1_132, %c0_133, %c0_134] : memref<2x3x1x32xf32, #tpu.memory_space<vmem>>, vector<1x1x1x32xf32>
    %281 = vector.shape_cast %280 : vector<1x1x1x32xf32> to vector<1x32xf32>
    %c1_135 = arith.constant 1 : index
    %c1_136 = arith.constant 1 : index
    %c0_137 = arith.constant 0 : index
    %c0_138 = arith.constant 0 : index
    %282 = vector.load %arg8[%c1_135, %c1_136, %c0_137, %c0_138] : memref<2x3x1x32xf32, #tpu.memory_space<vmem>>, vector<1x1x1x32xf32>
    %283 = vector.shape_cast %282 : vector<1x1x1x32xf32> to vector<1x32xf32>
    %284 = arith.addf %281, %283 : vector<1x32xf32>
    %c1_139 = arith.constant 1 : index
    %c2_140 = arith.constant 2 : index
    %c0_141 = arith.constant 0 : index
    %c0_142 = arith.constant 0 : index
    %285 = vector.load %arg7[%c1_139, %c2_140, %c0_141, %c0_142] : memref<2x3x1x32xf32, #tpu.memory_space<vmem>>, vector<1x1x1x32xf32>
    %286 = vector.shape_cast %285 : vector<1x1x1x32xf32> to vector<1x32xf32>
    %c1_143 = arith.constant 1 : index
    %c2_144 = arith.constant 2 : index
    %c0_145 = arith.constant 0 : index
    %c0_146 = arith.constant 0 : index
    %287 = vector.load %arg8[%c1_143, %c2_144, %c0_145, %c0_146] : memref<2x3x1x32xf32, #tpu.memory_space<vmem>>, vector<1x1x1x32xf32>
    %288 = vector.shape_cast %287 : vector<1x1x1x32xf32> to vector<1x32xf32>
    %cst_147 = arith.constant dense<0.000000e+00> : vector<64x32xf32>
    %289 = tpu.matmul %262, %264, %cst_147 {dimension_numbers = #tpu.dot_dimension_numbers<[1], [0], [0], [1], [0, 0, 1, 1], [], []>} : vector<64x32xf32>, vector<32x32xf32>, vector<64x32xf32> -> vector<64x32xf32>
    %290 = vector.broadcast %279 : vector<1x32xf32> to vector<64x32xf32>
    %291 = arith.addf %289, %290 : vector<64x32xf32>
    %cst_148 = arith.constant dense<0.000000e+00> : vector<64x32xf32>
    %292 = tpu.matmul %262, %266, %cst_148 {dimension_numbers = #tpu.dot_dimension_numbers<[1], [0], [0], [1], [0, 0, 1, 1], [], []>} : vector<64x32xf32>, vector<32x32xf32>, vector<64x32xf32> -> vector<64x32xf32>
    %293 = vector.broadcast %284 : vector<1x32xf32> to vector<64x32xf32>
    %294 = arith.addf %292, %293 : vector<64x32xf32>
    %cst_149 = arith.constant dense<0.000000e+00> : vector<64x32xf32>
    %295 = tpu.matmul %262, %268, %cst_149 {dimension_numbers = #tpu.dot_dimension_numbers<[1], [0], [0], [1], [0, 0, 1, 1], [], []>} : vector<64x32xf32>, vector<32x32xf32>, vector<64x32xf32> -> vector<64x32xf32>
    %296 = vector.broadcast %286 : vector<1x32xf32> to vector<64x32xf32>
    %297 = arith.addf %295, %296 : vector<64x32xf32>
    %cst_150 = arith.constant dense<0.000000e+00> : vector<8x32xf32>
    %298 = tpu.matmul %2, %270, %cst_150 {dimension_numbers = #tpu.dot_dimension_numbers<[1], [0], [0], [1], [0, 0, 1, 1], [], []>} : vector<8x32xf32>, vector<32x32xf32>, vector<8x32xf32> -> vector<8x32xf32>
    %cst_151 = arith.constant dense<0.000000e+00> : vector<8x32xf32>
    %299 = tpu.matmul %2, %272, %cst_151 {dimension_numbers = #tpu.dot_dimension_numbers<[1], [0], [0], [1], [0, 0, 1, 1], [], []>} : vector<8x32xf32>, vector<32x32xf32>, vector<8x32xf32> -> vector<8x32xf32>
    %cst_152 = arith.constant dense<0.000000e+00> : vector<8x32xf32>
    %300 = tpu.matmul %2, %274, %cst_152 {dimension_numbers = #tpu.dot_dimension_numbers<[1], [0], [0], [1], [0, 0, 1, 1], [], []>} : vector<8x32xf32>, vector<32x32xf32>, vector<8x32xf32> -> vector<8x32xf32>
    %301 = vector.broadcast %288 : vector<1x32xf32> to vector<8x32xf32>
    %302 = arith.addf %300, %301 : vector<8x32xf32>
    %303 = vector.extract_strided_slice %291 {offsets = [0, 0], sizes = [8, 32], strides = [1, 1]} : vector<64x32xf32> to vector<8x32xf32>
    %304 = arith.addf %303, %298 : vector<8x32xf32>
    %305 = arith.negf %304 : vector<8x32xf32>
    %306 = math.exp %305 : vector<8x32xf32>
    %cst_153 = arith.constant 1.000000e+00 : f32
    %307 = vector.broadcast %cst_153 : f32 to vector<8x32xf32>
    %308 = arith.addf %307, %306 : vector<8x32xf32>
    %309 = arith.divf %307, %308 : vector<8x32xf32>
    %310 = vector.extract_strided_slice %294 {offsets = [0, 0], sizes = [8, 32], strides = [1, 1]} : vector<64x32xf32> to vector<8x32xf32>
    %311 = arith.addf %310, %299 : vector<8x32xf32>
    %312 = arith.negf %311 : vector<8x32xf32>
    %313 = math.exp %312 : vector<8x32xf32>
    %cst_154 = arith.constant 1.000000e+00 : f32
    %314 = vector.broadcast %cst_154 : f32 to vector<8x32xf32>
    %315 = arith.addf %314, %313 : vector<8x32xf32>
    %316 = arith.divf %314, %315 : vector<8x32xf32>
    %317 = vector.extract_strided_slice %297 {offsets = [0, 0], sizes = [8, 32], strides = [1, 1]} : vector<64x32xf32> to vector<8x32xf32>
    %318 = arith.mulf %309, %302 : vector<8x32xf32>
    %319 = arith.addf %317, %318 : vector<8x32xf32>
    %320 = math.tanh %319 : vector<8x32xf32>
    %cst_155 = arith.constant 1.000000e+00 : f32
    %321 = vector.broadcast %cst_155 : f32 to vector<8x32xf32>
    %322 = arith.subf %321, %316 : vector<8x32xf32>
    %323 = arith.mulf %322, %320 : vector<8x32xf32>
    %324 = arith.mulf %316, %2 : vector<8x32xf32>
    %325 = arith.addf %323, %324 : vector<8x32xf32>
    %cst_156 = arith.constant dense<0.000000e+00> : vector<8x32xf32>
    %326 = tpu.matmul %325, %270, %cst_156 {dimension_numbers = #tpu.dot_dimension_numbers<[1], [0], [0], [1], [0, 0, 1, 1], [], []>} : vector<8x32xf32>, vector<32x32xf32>, vector<8x32xf32> -> vector<8x32xf32>
    %cst_157 = arith.constant dense<0.000000e+00> : vector<8x32xf32>
    %327 = tpu.matmul %325, %272, %cst_157 {dimension_numbers = #tpu.dot_dimension_numbers<[1], [0], [0], [1], [0, 0, 1, 1], [], []>} : vector<8x32xf32>, vector<32x32xf32>, vector<8x32xf32> -> vector<8x32xf32>
    %cst_158 = arith.constant dense<0.000000e+00> : vector<8x32xf32>
    %328 = tpu.matmul %325, %274, %cst_158 {dimension_numbers = #tpu.dot_dimension_numbers<[1], [0], [0], [1], [0, 0, 1, 1], [], []>} : vector<8x32xf32>, vector<32x32xf32>, vector<8x32xf32> -> vector<8x32xf32>
    %329 = vector.broadcast %288 : vector<1x32xf32> to vector<8x32xf32>
    %330 = arith.addf %328, %329 : vector<8x32xf32>
    %331 = vector.extract_strided_slice %291 {offsets = [8, 0], sizes = [8, 32], strides = [1, 1]} : vector<64x32xf32> to vector<8x32xf32>
    %332 = arith.addf %331, %326 : vector<8x32xf32>
    %333 = arith.negf %332 : vector<8x32xf32>
    %334 = math.exp %333 : vector<8x32xf32>
    %cst_159 = arith.constant 1.000000e+00 : f32
    %335 = vector.broadcast %cst_159 : f32 to vector<8x32xf32>
    %336 = arith.addf %335, %334 : vector<8x32xf32>
    %337 = arith.divf %335, %336 : vector<8x32xf32>
    %338 = vector.extract_strided_slice %294 {offsets = [8, 0], sizes = [8, 32], strides = [1, 1]} : vector<64x32xf32> to vector<8x32xf32>
    %339 = arith.addf %338, %327 : vector<8x32xf32>
    %340 = arith.negf %339 : vector<8x32xf32>
    %341 = math.exp %340 : vector<8x32xf32>
    %cst_160 = arith.constant 1.000000e+00 : f32
    %342 = vector.broadcast %cst_160 : f32 to vector<8x32xf32>
    %343 = arith.addf %342, %341 : vector<8x32xf32>
    %344 = arith.divf %342, %343 : vector<8x32xf32>
    %345 = vector.extract_strided_slice %297 {offsets = [8, 0], sizes = [8, 32], strides = [1, 1]} : vector<64x32xf32> to vector<8x32xf32>
    %346 = arith.mulf %337, %330 : vector<8x32xf32>
    %347 = arith.addf %345, %346 : vector<8x32xf32>
    %348 = math.tanh %347 : vector<8x32xf32>
    %cst_161 = arith.constant 1.000000e+00 : f32
    %349 = vector.broadcast %cst_161 : f32 to vector<8x32xf32>
    %350 = arith.subf %349, %344 : vector<8x32xf32>
    %351 = arith.mulf %350, %348 : vector<8x32xf32>
    %352 = arith.mulf %344, %325 : vector<8x32xf32>
    %353 = arith.addf %351, %352 : vector<8x32xf32>
    %cst_162 = arith.constant dense<0.000000e+00> : vector<8x32xf32>
    %354 = tpu.matmul %353, %270, %cst_162 {dimension_numbers = #tpu.dot_dimension_numbers<[1], [0], [0], [1], [0, 0, 1, 1], [], []>} : vector<8x32xf32>, vector<32x32xf32>, vector<8x32xf32> -> vector<8x32xf32>
    %cst_163 = arith.constant dense<0.000000e+00> : vector<8x32xf32>
    %355 = tpu.matmul %353, %272, %cst_163 {dimension_numbers = #tpu.dot_dimension_numbers<[1], [0], [0], [1], [0, 0, 1, 1], [], []>} : vector<8x32xf32>, vector<32x32xf32>, vector<8x32xf32> -> vector<8x32xf32>
    %cst_164 = arith.constant dense<0.000000e+00> : vector<8x32xf32>
    %356 = tpu.matmul %353, %274, %cst_164 {dimension_numbers = #tpu.dot_dimension_numbers<[1], [0], [0], [1], [0, 0, 1, 1], [], []>} : vector<8x32xf32>, vector<32x32xf32>, vector<8x32xf32> -> vector<8x32xf32>
    %357 = vector.broadcast %288 : vector<1x32xf32> to vector<8x32xf32>
    %358 = arith.addf %356, %357 : vector<8x32xf32>
    %359 = vector.extract_strided_slice %291 {offsets = [16, 0], sizes = [8, 32], strides = [1, 1]} : vector<64x32xf32> to vector<8x32xf32>
    %360 = arith.addf %359, %354 : vector<8x32xf32>
    %361 = arith.negf %360 : vector<8x32xf32>
    %362 = math.exp %361 : vector<8x32xf32>
    %cst_165 = arith.constant 1.000000e+00 : f32
    %363 = vector.broadcast %cst_165 : f32 to vector<8x32xf32>
    %364 = arith.addf %363, %362 : vector<8x32xf32>
    %365 = arith.divf %363, %364 : vector<8x32xf32>
    %366 = vector.extract_strided_slice %294 {offsets = [16, 0], sizes = [8, 32], strides = [1, 1]} : vector<64x32xf32> to vector<8x32xf32>
    %367 = arith.addf %366, %355 : vector<8x32xf32>
    %368 = arith.negf %367 : vector<8x32xf32>
    %369 = math.exp %368 : vector<8x32xf32>
    %cst_166 = arith.constant 1.000000e+00 : f32
    %370 = vector.broadcast %cst_166 : f32 to vector<8x32xf32>
    %371 = arith.addf %370, %369 : vector<8x32xf32>
    %372 = arith.divf %370, %371 : vector<8x32xf32>
    %373 = vector.extract_strided_slice %297 {offsets = [16, 0], sizes = [8, 32], strides = [1, 1]} : vector<64x32xf32> to vector<8x32xf32>
    %374 = arith.mulf %365, %358 : vector<8x32xf32>
    %375 = arith.addf %373, %374 : vector<8x32xf32>
    %376 = math.tanh %375 : vector<8x32xf32>
    %cst_167 = arith.constant 1.000000e+00 : f32
    %377 = vector.broadcast %cst_167 : f32 to vector<8x32xf32>
    %378 = arith.subf %377, %372 : vector<8x32xf32>
    %379 = arith.mulf %378, %376 : vector<8x32xf32>
    %380 = arith.mulf %372, %353 : vector<8x32xf32>
    %381 = arith.addf %379, %380 : vector<8x32xf32>
    %cst_168 = arith.constant dense<0.000000e+00> : vector<8x32xf32>
    %382 = tpu.matmul %381, %270, %cst_168 {dimension_numbers = #tpu.dot_dimension_numbers<[1], [0], [0], [1], [0, 0, 1, 1], [], []>} : vector<8x32xf32>, vector<32x32xf32>, vector<8x32xf32> -> vector<8x32xf32>
    %cst_169 = arith.constant dense<0.000000e+00> : vector<8x32xf32>
    %383 = tpu.matmul %381, %272, %cst_169 {dimension_numbers = #tpu.dot_dimension_numbers<[1], [0], [0], [1], [0, 0, 1, 1], [], []>} : vector<8x32xf32>, vector<32x32xf32>, vector<8x32xf32> -> vector<8x32xf32>
    %cst_170 = arith.constant dense<0.000000e+00> : vector<8x32xf32>
    %384 = tpu.matmul %381, %274, %cst_170 {dimension_numbers = #tpu.dot_dimension_numbers<[1], [0], [0], [1], [0, 0, 1, 1], [], []>} : vector<8x32xf32>, vector<32x32xf32>, vector<8x32xf32> -> vector<8x32xf32>
    %385 = vector.broadcast %288 : vector<1x32xf32> to vector<8x32xf32>
    %386 = arith.addf %384, %385 : vector<8x32xf32>
    %387 = vector.extract_strided_slice %291 {offsets = [24, 0], sizes = [8, 32], strides = [1, 1]} : vector<64x32xf32> to vector<8x32xf32>
    %388 = arith.addf %387, %382 : vector<8x32xf32>
    %389 = arith.negf %388 : vector<8x32xf32>
    %390 = math.exp %389 : vector<8x32xf32>
    %cst_171 = arith.constant 1.000000e+00 : f32
    %391 = vector.broadcast %cst_171 : f32 to vector<8x32xf32>
    %392 = arith.addf %391, %390 : vector<8x32xf32>
    %393 = arith.divf %391, %392 : vector<8x32xf32>
    %394 = vector.extract_strided_slice %294 {offsets = [24, 0], sizes = [8, 32], strides = [1, 1]} : vector<64x32xf32> to vector<8x32xf32>
    %395 = arith.addf %394, %383 : vector<8x32xf32>
    %396 = arith.negf %395 : vector<8x32xf32>
    %397 = math.exp %396 : vector<8x32xf32>
    %cst_172 = arith.constant 1.000000e+00 : f32
    %398 = vector.broadcast %cst_172 : f32 to vector<8x32xf32>
    %399 = arith.addf %398, %397 : vector<8x32xf32>
    %400 = arith.divf %398, %399 : vector<8x32xf32>
    %401 = vector.extract_strided_slice %297 {offsets = [24, 0], sizes = [8, 32], strides = [1, 1]} : vector<64x32xf32> to vector<8x32xf32>
    %402 = arith.mulf %393, %386 : vector<8x32xf32>
    %403 = arith.addf %401, %402 : vector<8x32xf32>
    %404 = math.tanh %403 : vector<8x32xf32>
    %cst_173 = arith.constant 1.000000e+00 : f32
    %405 = vector.broadcast %cst_173 : f32 to vector<8x32xf32>
    %406 = arith.subf %405, %400 : vector<8x32xf32>
    %407 = arith.mulf %406, %404 : vector<8x32xf32>
    %408 = arith.mulf %400, %381 : vector<8x32xf32>
    %409 = arith.addf %407, %408 : vector<8x32xf32>
    %cst_174 = arith.constant dense<0.000000e+00> : vector<8x32xf32>
    %410 = tpu.matmul %409, %270, %cst_174 {dimension_numbers = #tpu.dot_dimension_numbers<[1], [0], [0], [1], [0, 0, 1, 1], [], []>} : vector<8x32xf32>, vector<32x32xf32>, vector<8x32xf32> -> vector<8x32xf32>
    %cst_175 = arith.constant dense<0.000000e+00> : vector<8x32xf32>
    %411 = tpu.matmul %409, %272, %cst_175 {dimension_numbers = #tpu.dot_dimension_numbers<[1], [0], [0], [1], [0, 0, 1, 1], [], []>} : vector<8x32xf32>, vector<32x32xf32>, vector<8x32xf32> -> vector<8x32xf32>
    %cst_176 = arith.constant dense<0.000000e+00> : vector<8x32xf32>
    %412 = tpu.matmul %409, %274, %cst_176 {dimension_numbers = #tpu.dot_dimension_numbers<[1], [0], [0], [1], [0, 0, 1, 1], [], []>} : vector<8x32xf32>, vector<32x32xf32>, vector<8x32xf32> -> vector<8x32xf32>
    %413 = vector.broadcast %288 : vector<1x32xf32> to vector<8x32xf32>
    %414 = arith.addf %412, %413 : vector<8x32xf32>
    %415 = vector.extract_strided_slice %291 {offsets = [32, 0], sizes = [8, 32], strides = [1, 1]} : vector<64x32xf32> to vector<8x32xf32>
    %416 = arith.addf %415, %410 : vector<8x32xf32>
    %417 = arith.negf %416 : vector<8x32xf32>
    %418 = math.exp %417 : vector<8x32xf32>
    %cst_177 = arith.constant 1.000000e+00 : f32
    %419 = vector.broadcast %cst_177 : f32 to vector<8x32xf32>
    %420 = arith.addf %419, %418 : vector<8x32xf32>
    %421 = arith.divf %419, %420 : vector<8x32xf32>
    %422 = vector.extract_strided_slice %294 {offsets = [32, 0], sizes = [8, 32], strides = [1, 1]} : vector<64x32xf32> to vector<8x32xf32>
    %423 = arith.addf %422, %411 : vector<8x32xf32>
    %424 = arith.negf %423 : vector<8x32xf32>
    %425 = math.exp %424 : vector<8x32xf32>
    %cst_178 = arith.constant 1.000000e+00 : f32
    %426 = vector.broadcast %cst_178 : f32 to vector<8x32xf32>
    %427 = arith.addf %426, %425 : vector<8x32xf32>
    %428 = arith.divf %426, %427 : vector<8x32xf32>
    %429 = vector.extract_strided_slice %297 {offsets = [32, 0], sizes = [8, 32], strides = [1, 1]} : vector<64x32xf32> to vector<8x32xf32>
    %430 = arith.mulf %421, %414 : vector<8x32xf32>
    %431 = arith.addf %429, %430 : vector<8x32xf32>
    %432 = math.tanh %431 : vector<8x32xf32>
    %cst_179 = arith.constant 1.000000e+00 : f32
    %433 = vector.broadcast %cst_179 : f32 to vector<8x32xf32>
    %434 = arith.subf %433, %428 : vector<8x32xf32>
    %435 = arith.mulf %434, %432 : vector<8x32xf32>
    %436 = arith.mulf %428, %409 : vector<8x32xf32>
    %437 = arith.addf %435, %436 : vector<8x32xf32>
    %cst_180 = arith.constant dense<0.000000e+00> : vector<8x32xf32>
    %438 = tpu.matmul %437, %270, %cst_180 {dimension_numbers = #tpu.dot_dimension_numbers<[1], [0], [0], [1], [0, 0, 1, 1], [], []>} : vector<8x32xf32>, vector<32x32xf32>, vector<8x32xf32> -> vector<8x32xf32>
    %cst_181 = arith.constant dense<0.000000e+00> : vector<8x32xf32>
    %439 = tpu.matmul %437, %272, %cst_181 {dimension_numbers = #tpu.dot_dimension_numbers<[1], [0], [0], [1], [0, 0, 1, 1], [], []>} : vector<8x32xf32>, vector<32x32xf32>, vector<8x32xf32> -> vector<8x32xf32>
    %cst_182 = arith.constant dense<0.000000e+00> : vector<8x32xf32>
    %440 = tpu.matmul %437, %274, %cst_182 {dimension_numbers = #tpu.dot_dimension_numbers<[1], [0], [0], [1], [0, 0, 1, 1], [], []>} : vector<8x32xf32>, vector<32x32xf32>, vector<8x32xf32> -> vector<8x32xf32>
    %441 = vector.broadcast %288 : vector<1x32xf32> to vector<8x32xf32>
    %442 = arith.addf %440, %441 : vector<8x32xf32>
    %443 = vector.extract_strided_slice %291 {offsets = [40, 0], sizes = [8, 32], strides = [1, 1]} : vector<64x32xf32> to vector<8x32xf32>
    %444 = arith.addf %443, %438 : vector<8x32xf32>
    %445 = arith.negf %444 : vector<8x32xf32>
    %446 = math.exp %445 : vector<8x32xf32>
    %cst_183 = arith.constant 1.000000e+00 : f32
    %447 = vector.broadcast %cst_183 : f32 to vector<8x32xf32>
    %448 = arith.addf %447, %446 : vector<8x32xf32>
    %449 = arith.divf %447, %448 : vector<8x32xf32>
    %450 = vector.extract_strided_slice %294 {offsets = [40, 0], sizes = [8, 32], strides = [1, 1]} : vector<64x32xf32> to vector<8x32xf32>
    %451 = arith.addf %450, %439 : vector<8x32xf32>
    %452 = arith.negf %451 : vector<8x32xf32>
    %453 = math.exp %452 : vector<8x32xf32>
    %cst_184 = arith.constant 1.000000e+00 : f32
    %454 = vector.broadcast %cst_184 : f32 to vector<8x32xf32>
    %455 = arith.addf %454, %453 : vector<8x32xf32>
    %456 = arith.divf %454, %455 : vector<8x32xf32>
    %457 = vector.extract_strided_slice %297 {offsets = [40, 0], sizes = [8, 32], strides = [1, 1]} : vector<64x32xf32> to vector<8x32xf32>
    %458 = arith.mulf %449, %442 : vector<8x32xf32>
    %459 = arith.addf %457, %458 : vector<8x32xf32>
    %460 = math.tanh %459 : vector<8x32xf32>
    %cst_185 = arith.constant 1.000000e+00 : f32
    %461 = vector.broadcast %cst_185 : f32 to vector<8x32xf32>
    %462 = arith.subf %461, %456 : vector<8x32xf32>
    %463 = arith.mulf %462, %460 : vector<8x32xf32>
    %464 = arith.mulf %456, %437 : vector<8x32xf32>
    %465 = arith.addf %463, %464 : vector<8x32xf32>
    %cst_186 = arith.constant dense<0.000000e+00> : vector<8x32xf32>
    %466 = tpu.matmul %465, %270, %cst_186 {dimension_numbers = #tpu.dot_dimension_numbers<[1], [0], [0], [1], [0, 0, 1, 1], [], []>} : vector<8x32xf32>, vector<32x32xf32>, vector<8x32xf32> -> vector<8x32xf32>
    %cst_187 = arith.constant dense<0.000000e+00> : vector<8x32xf32>
    %467 = tpu.matmul %465, %272, %cst_187 {dimension_numbers = #tpu.dot_dimension_numbers<[1], [0], [0], [1], [0, 0, 1, 1], [], []>} : vector<8x32xf32>, vector<32x32xf32>, vector<8x32xf32> -> vector<8x32xf32>
    %cst_188 = arith.constant dense<0.000000e+00> : vector<8x32xf32>
    %468 = tpu.matmul %465, %274, %cst_188 {dimension_numbers = #tpu.dot_dimension_numbers<[1], [0], [0], [1], [0, 0, 1, 1], [], []>} : vector<8x32xf32>, vector<32x32xf32>, vector<8x32xf32> -> vector<8x32xf32>
    %469 = vector.broadcast %288 : vector<1x32xf32> to vector<8x32xf32>
    %470 = arith.addf %468, %469 : vector<8x32xf32>
    %471 = vector.extract_strided_slice %291 {offsets = [48, 0], sizes = [8, 32], strides = [1, 1]} : vector<64x32xf32> to vector<8x32xf32>
    %472 = arith.addf %471, %466 : vector<8x32xf32>
    %473 = arith.negf %472 : vector<8x32xf32>
    %474 = math.exp %473 : vector<8x32xf32>
    %cst_189 = arith.constant 1.000000e+00 : f32
    %475 = vector.broadcast %cst_189 : f32 to vector<8x32xf32>
    %476 = arith.addf %475, %474 : vector<8x32xf32>
    %477 = arith.divf %475, %476 : vector<8x32xf32>
    %478 = vector.extract_strided_slice %294 {offsets = [48, 0], sizes = [8, 32], strides = [1, 1]} : vector<64x32xf32> to vector<8x32xf32>
    %479 = arith.addf %478, %467 : vector<8x32xf32>
    %480 = arith.negf %479 : vector<8x32xf32>
    %481 = math.exp %480 : vector<8x32xf32>
    %cst_190 = arith.constant 1.000000e+00 : f32
    %482 = vector.broadcast %cst_190 : f32 to vector<8x32xf32>
    %483 = arith.addf %482, %481 : vector<8x32xf32>
    %484 = arith.divf %482, %483 : vector<8x32xf32>
    %485 = vector.extract_strided_slice %297 {offsets = [48, 0], sizes = [8, 32], strides = [1, 1]} : vector<64x32xf32> to vector<8x32xf32>
    %486 = arith.mulf %477, %470 : vector<8x32xf32>
    %487 = arith.addf %485, %486 : vector<8x32xf32>
    %488 = math.tanh %487 : vector<8x32xf32>
    %cst_191 = arith.constant 1.000000e+00 : f32
    %489 = vector.broadcast %cst_191 : f32 to vector<8x32xf32>
    %490 = arith.subf %489, %484 : vector<8x32xf32>
    %491 = arith.mulf %490, %488 : vector<8x32xf32>
    %492 = arith.mulf %484, %465 : vector<8x32xf32>
    %493 = arith.addf %491, %492 : vector<8x32xf32>
    %cst_192 = arith.constant dense<0.000000e+00> : vector<8x32xf32>
    %494 = tpu.matmul %493, %270, %cst_192 {dimension_numbers = #tpu.dot_dimension_numbers<[1], [0], [0], [1], [0, 0, 1, 1], [], []>} : vector<8x32xf32>, vector<32x32xf32>, vector<8x32xf32> -> vector<8x32xf32>
    %cst_193 = arith.constant dense<0.000000e+00> : vector<8x32xf32>
    %495 = tpu.matmul %493, %272, %cst_193 {dimension_numbers = #tpu.dot_dimension_numbers<[1], [0], [0], [1], [0, 0, 1, 1], [], []>} : vector<8x32xf32>, vector<32x32xf32>, vector<8x32xf32> -> vector<8x32xf32>
    %cst_194 = arith.constant dense<0.000000e+00> : vector<8x32xf32>
    %496 = tpu.matmul %493, %274, %cst_194 {dimension_numbers = #tpu.dot_dimension_numbers<[1], [0], [0], [1], [0, 0, 1, 1], [], []>} : vector<8x32xf32>, vector<32x32xf32>, vector<8x32xf32> -> vector<8x32xf32>
    %497 = vector.broadcast %288 : vector<1x32xf32> to vector<8x32xf32>
    %498 = arith.addf %496, %497 : vector<8x32xf32>
    %499 = vector.extract_strided_slice %291 {offsets = [56, 0], sizes = [8, 32], strides = [1, 1]} : vector<64x32xf32> to vector<8x32xf32>
    %500 = arith.addf %499, %494 : vector<8x32xf32>
    %501 = arith.negf %500 : vector<8x32xf32>
    %502 = math.exp %501 : vector<8x32xf32>
    %cst_195 = arith.constant 1.000000e+00 : f32
    %503 = vector.broadcast %cst_195 : f32 to vector<8x32xf32>
    %504 = arith.addf %503, %502 : vector<8x32xf32>
    %505 = arith.divf %503, %504 : vector<8x32xf32>
    %506 = vector.extract_strided_slice %294 {offsets = [56, 0], sizes = [8, 32], strides = [1, 1]} : vector<64x32xf32> to vector<8x32xf32>
    %507 = arith.addf %506, %495 : vector<8x32xf32>
    %508 = arith.negf %507 : vector<8x32xf32>
    %509 = math.exp %508 : vector<8x32xf32>
    %cst_196 = arith.constant 1.000000e+00 : f32
    %510 = vector.broadcast %cst_196 : f32 to vector<8x32xf32>
    %511 = arith.addf %510, %509 : vector<8x32xf32>
    %512 = arith.divf %510, %511 : vector<8x32xf32>
    %513 = vector.extract_strided_slice %297 {offsets = [56, 0], sizes = [8, 32], strides = [1, 1]} : vector<64x32xf32> to vector<8x32xf32>
    %514 = arith.mulf %505, %498 : vector<8x32xf32>
    %515 = arith.addf %513, %514 : vector<8x32xf32>
    %516 = math.tanh %515 : vector<8x32xf32>
    %cst_197 = arith.constant 1.000000e+00 : f32
    %517 = vector.broadcast %cst_197 : f32 to vector<8x32xf32>
    %518 = arith.subf %517, %512 : vector<8x32xf32>
    %519 = arith.mulf %518, %516 : vector<8x32xf32>
    %520 = arith.mulf %512, %493 : vector<8x32xf32>
    %521 = arith.addf %519, %520 : vector<8x32xf32>
    %c0_198 = arith.constant 0 : index
    %c0_199 = arith.constant 0 : index
    %522 = vector.load %arg4[%c0_198, %c0_199] : memref<32x64xf32, #tpu.memory_space<vmem>>, vector<32x64xf32>
    %cst_200 = arith.constant dense<0.000000e+00> : vector<8x64xf32>
    %523 = tpu.matmul %261, %522, %cst_200 {dimension_numbers = #tpu.dot_dimension_numbers<[1], [0], [0], [1], [0, 0, 1, 1], [], []>} : vector<8x32xf32>, vector<32x64xf32>, vector<8x64xf32> -> vector<8x64xf32>
    %c0_201 = arith.constant 0 : index
    %c0_202 = arith.constant 0 : index
    %c0_203 = arith.constant 0 : index
    %524 = vector.load %arg3[%c0_201, %c0_202, %c0_203] : memref<2x8x64xf32, #tpu.memory_space<vmem>>, vector<1x8x64xf32>
    %525 = vector.shape_cast %524 : vector<1x8x64xf32> to vector<8x64xf32>
    %526 = arith.addf %523, %525 : vector<8x64xf32>
    %cst_204 = arith.constant dense<0.000000e+00> : vector<8x64xf32>
    %527 = tpu.matmul %521, %522, %cst_204 {dimension_numbers = #tpu.dot_dimension_numbers<[1], [0], [0], [1], [0, 0, 1, 1], [], []>} : vector<8x32xf32>, vector<32x64xf32>, vector<8x64xf32> -> vector<8x64xf32>
    %c1_205 = arith.constant 1 : index
    %c0_206 = arith.constant 0 : index
    %c0_207 = arith.constant 0 : index
    %528 = vector.load %arg3[%c1_205, %c0_206, %c0_207] : memref<2x8x64xf32, #tpu.memory_space<vmem>>, vector<1x8x64xf32>
    %529 = vector.shape_cast %528 : vector<1x8x64xf32> to vector<8x64xf32>
    %530 = arith.addf %527, %529 : vector<8x64xf32>
    %c0_208 = arith.constant 0 : index
    %c0_209 = arith.constant 0 : index
    %c0_210 = arith.constant 0 : index
    %531 = vector.load %arg2[%c0_208, %c0_209, %c0_210] : memref<8x8x64xf32, #tpu.memory_space<vmem>>, vector<8x8x64xf32>
    %532 = vector.shape_cast %531 : vector<8x8x64xf32> to vector<64x64xf32>
    %c0_211 = arith.constant 0 : index
    %c0_212 = arith.constant 0 : index
    %c0_213 = arith.constant 0 : index
    %c0_214 = arith.constant 0 : index
    %533 = vector.load %arg9[%c0_211, %c0_212, %c0_213, %c0_214] : memref<2x3x64x64xf32, #tpu.memory_space<vmem>>, vector<1x1x64x64xf32>
    %534 = vector.shape_cast %533 : vector<1x1x64x64xf32> to vector<64x64xf32>
    %c0_215 = arith.constant 0 : index
    %c1_216 = arith.constant 1 : index
    %c0_217 = arith.constant 0 : index
    %c0_218 = arith.constant 0 : index
    %535 = vector.load %arg9[%c0_215, %c1_216, %c0_217, %c0_218] : memref<2x3x64x64xf32, #tpu.memory_space<vmem>>, vector<1x1x64x64xf32>
    %536 = vector.shape_cast %535 : vector<1x1x64x64xf32> to vector<64x64xf32>
    %c0_219 = arith.constant 0 : index
    %c2_220 = arith.constant 2 : index
    %c0_221 = arith.constant 0 : index
    %c0_222 = arith.constant 0 : index
    %537 = vector.load %arg9[%c0_219, %c2_220, %c0_221, %c0_222] : memref<2x3x64x64xf32, #tpu.memory_space<vmem>>, vector<1x1x64x64xf32>
    %538 = vector.shape_cast %537 : vector<1x1x64x64xf32> to vector<64x64xf32>
    %c0_223 = arith.constant 0 : index
    %c0_224 = arith.constant 0 : index
    %c0_225 = arith.constant 0 : index
    %c0_226 = arith.constant 0 : index
    %539 = vector.load %arg10[%c0_223, %c0_224, %c0_225, %c0_226] : memref<2x3x64x64xf32, #tpu.memory_space<vmem>>, vector<1x1x64x64xf32>
    %540 = vector.shape_cast %539 : vector<1x1x64x64xf32> to vector<64x64xf32>
    %c0_227 = arith.constant 0 : index
    %c1_228 = arith.constant 1 : index
    %c0_229 = arith.constant 0 : index
    %c0_230 = arith.constant 0 : index
    %541 = vector.load %arg10[%c0_227, %c1_228, %c0_229, %c0_230] : memref<2x3x64x64xf32, #tpu.memory_space<vmem>>, vector<1x1x64x64xf32>
    %542 = vector.shape_cast %541 : vector<1x1x64x64xf32> to vector<64x64xf32>
    %c0_231 = arith.constant 0 : index
    %c2_232 = arith.constant 2 : index
    %c0_233 = arith.constant 0 : index
    %c0_234 = arith.constant 0 : index
    %543 = vector.load %arg10[%c0_231, %c2_232, %c0_233, %c0_234] : memref<2x3x64x64xf32, #tpu.memory_space<vmem>>, vector<1x1x64x64xf32>
    %544 = vector.shape_cast %543 : vector<1x1x64x64xf32> to vector<64x64xf32>
    %c0_235 = arith.constant 0 : index
    %c0_236 = arith.constant 0 : index
    %c0_237 = arith.constant 0 : index
    %c0_238 = arith.constant 0 : index
    %545 = vector.load %arg11[%c0_235, %c0_236, %c0_237, %c0_238] : memref<2x3x1x64xf32, #tpu.memory_space<vmem>>, vector<1x1x1x64xf32>
    %546 = vector.shape_cast %545 : vector<1x1x1x64xf32> to vector<1x64xf32>
    %c0_239 = arith.constant 0 : index
    %c0_240 = arith.constant 0 : index
    %c0_241 = arith.constant 0 : index
    %c0_242 = arith.constant 0 : index
    %547 = vector.load %arg12[%c0_239, %c0_240, %c0_241, %c0_242] : memref<2x3x1x64xf32, #tpu.memory_space<vmem>>, vector<1x1x1x64xf32>
    %548 = vector.shape_cast %547 : vector<1x1x1x64xf32> to vector<1x64xf32>
    %549 = arith.addf %546, %548 : vector<1x64xf32>
    %c0_243 = arith.constant 0 : index
    %c1_244 = arith.constant 1 : index
    %c0_245 = arith.constant 0 : index
    %c0_246 = arith.constant 0 : index
    %550 = vector.load %arg11[%c0_243, %c1_244, %c0_245, %c0_246] : memref<2x3x1x64xf32, #tpu.memory_space<vmem>>, vector<1x1x1x64xf32>
    %551 = vector.shape_cast %550 : vector<1x1x1x64xf32> to vector<1x64xf32>
    %c0_247 = arith.constant 0 : index
    %c1_248 = arith.constant 1 : index
    %c0_249 = arith.constant 0 : index
    %c0_250 = arith.constant 0 : index
    %552 = vector.load %arg12[%c0_247, %c1_248, %c0_249, %c0_250] : memref<2x3x1x64xf32, #tpu.memory_space<vmem>>, vector<1x1x1x64xf32>
    %553 = vector.shape_cast %552 : vector<1x1x1x64xf32> to vector<1x64xf32>
    %554 = arith.addf %551, %553 : vector<1x64xf32>
    %c0_251 = arith.constant 0 : index
    %c2_252 = arith.constant 2 : index
    %c0_253 = arith.constant 0 : index
    %c0_254 = arith.constant 0 : index
    %555 = vector.load %arg11[%c0_251, %c2_252, %c0_253, %c0_254] : memref<2x3x1x64xf32, #tpu.memory_space<vmem>>, vector<1x1x1x64xf32>
    %556 = vector.shape_cast %555 : vector<1x1x1x64xf32> to vector<1x64xf32>
    %c0_255 = arith.constant 0 : index
    %c2_256 = arith.constant 2 : index
    %c0_257 = arith.constant 0 : index
    %c0_258 = arith.constant 0 : index
    %557 = vector.load %arg12[%c0_255, %c2_256, %c0_257, %c0_258] : memref<2x3x1x64xf32, #tpu.memory_space<vmem>>, vector<1x1x1x64xf32>
    %558 = vector.shape_cast %557 : vector<1x1x1x64xf32> to vector<1x64xf32>
    %cst_259 = arith.constant dense<0.000000e+00> : vector<64x64xf32>
    %559 = tpu.matmul %532, %534, %cst_259 {dimension_numbers = #tpu.dot_dimension_numbers<[1], [0], [0], [1], [0, 0, 1, 1], [], []>} : vector<64x64xf32>, vector<64x64xf32>, vector<64x64xf32> -> vector<64x64xf32>
    %560 = vector.broadcast %549 : vector<1x64xf32> to vector<64x64xf32>
    %561 = arith.addf %559, %560 : vector<64x64xf32>
    %cst_260 = arith.constant dense<0.000000e+00> : vector<64x64xf32>
    %562 = tpu.matmul %532, %536, %cst_260 {dimension_numbers = #tpu.dot_dimension_numbers<[1], [0], [0], [1], [0, 0, 1, 1], [], []>} : vector<64x64xf32>, vector<64x64xf32>, vector<64x64xf32> -> vector<64x64xf32>
    %563 = vector.broadcast %554 : vector<1x64xf32> to vector<64x64xf32>
    %564 = arith.addf %562, %563 : vector<64x64xf32>
    %cst_261 = arith.constant dense<0.000000e+00> : vector<64x64xf32>
    %565 = tpu.matmul %532, %538, %cst_261 {dimension_numbers = #tpu.dot_dimension_numbers<[1], [0], [0], [1], [0, 0, 1, 1], [], []>} : vector<64x64xf32>, vector<64x64xf32>, vector<64x64xf32> -> vector<64x64xf32>
    %566 = vector.broadcast %556 : vector<1x64xf32> to vector<64x64xf32>
    %567 = arith.addf %565, %566 : vector<64x64xf32>
    %cst_262 = arith.constant dense<0.000000e+00> : vector<8x64xf32>
    %568 = tpu.matmul %526, %540, %cst_262 {dimension_numbers = #tpu.dot_dimension_numbers<[1], [0], [0], [1], [0, 0, 1, 1], [], []>} : vector<8x64xf32>, vector<64x64xf32>, vector<8x64xf32> -> vector<8x64xf32>
    %cst_263 = arith.constant dense<0.000000e+00> : vector<8x64xf32>
    %569 = tpu.matmul %526, %542, %cst_263 {dimension_numbers = #tpu.dot_dimension_numbers<[1], [0], [0], [1], [0, 0, 1, 1], [], []>} : vector<8x64xf32>, vector<64x64xf32>, vector<8x64xf32> -> vector<8x64xf32>
    %cst_264 = arith.constant dense<0.000000e+00> : vector<8x64xf32>
    %570 = tpu.matmul %526, %544, %cst_264 {dimension_numbers = #tpu.dot_dimension_numbers<[1], [0], [0], [1], [0, 0, 1, 1], [], []>} : vector<8x64xf32>, vector<64x64xf32>, vector<8x64xf32> -> vector<8x64xf32>
    %571 = vector.broadcast %558 : vector<1x64xf32> to vector<8x64xf32>
    %572 = arith.addf %570, %571 : vector<8x64xf32>
    %573 = vector.extract_strided_slice %561 {offsets = [0, 0], sizes = [8, 64], strides = [1, 1]} : vector<64x64xf32> to vector<8x64xf32>
    %574 = arith.addf %573, %568 : vector<8x64xf32>
    %575 = arith.negf %574 : vector<8x64xf32>
    %576 = math.exp %575 : vector<8x64xf32>
    %cst_265 = arith.constant 1.000000e+00 : f32
    %577 = vector.broadcast %cst_265 : f32 to vector<8x64xf32>
    %578 = arith.addf %577, %576 : vector<8x64xf32>
    %579 = arith.divf %577, %578 : vector<8x64xf32>
    %580 = vector.extract_strided_slice %564 {offsets = [0, 0], sizes = [8, 64], strides = [1, 1]} : vector<64x64xf32> to vector<8x64xf32>
    %581 = arith.addf %580, %569 : vector<8x64xf32>
    %582 = arith.negf %581 : vector<8x64xf32>
    %583 = math.exp %582 : vector<8x64xf32>
    %cst_266 = arith.constant 1.000000e+00 : f32
    %584 = vector.broadcast %cst_266 : f32 to vector<8x64xf32>
    %585 = arith.addf %584, %583 : vector<8x64xf32>
    %586 = arith.divf %584, %585 : vector<8x64xf32>
    %587 = vector.extract_strided_slice %567 {offsets = [0, 0], sizes = [8, 64], strides = [1, 1]} : vector<64x64xf32> to vector<8x64xf32>
    %588 = arith.mulf %579, %572 : vector<8x64xf32>
    %589 = arith.addf %587, %588 : vector<8x64xf32>
    %590 = math.tanh %589 : vector<8x64xf32>
    %cst_267 = arith.constant 1.000000e+00 : f32
    %591 = vector.broadcast %cst_267 : f32 to vector<8x64xf32>
    %592 = arith.subf %591, %586 : vector<8x64xf32>
    %593 = arith.mulf %592, %590 : vector<8x64xf32>
    %594 = arith.mulf %586, %526 : vector<8x64xf32>
    %595 = arith.addf %593, %594 : vector<8x64xf32>
    %cst_268 = arith.constant dense<0.000000e+00> : vector<8x64xf32>
    %596 = tpu.matmul %595, %540, %cst_268 {dimension_numbers = #tpu.dot_dimension_numbers<[1], [0], [0], [1], [0, 0, 1, 1], [], []>} : vector<8x64xf32>, vector<64x64xf32>, vector<8x64xf32> -> vector<8x64xf32>
    %cst_269 = arith.constant dense<0.000000e+00> : vector<8x64xf32>
    %597 = tpu.matmul %595, %542, %cst_269 {dimension_numbers = #tpu.dot_dimension_numbers<[1], [0], [0], [1], [0, 0, 1, 1], [], []>} : vector<8x64xf32>, vector<64x64xf32>, vector<8x64xf32> -> vector<8x64xf32>
    %cst_270 = arith.constant dense<0.000000e+00> : vector<8x64xf32>
    %598 = tpu.matmul %595, %544, %cst_270 {dimension_numbers = #tpu.dot_dimension_numbers<[1], [0], [0], [1], [0, 0, 1, 1], [], []>} : vector<8x64xf32>, vector<64x64xf32>, vector<8x64xf32> -> vector<8x64xf32>
    %599 = vector.broadcast %558 : vector<1x64xf32> to vector<8x64xf32>
    %600 = arith.addf %598, %599 : vector<8x64xf32>
    %601 = vector.extract_strided_slice %561 {offsets = [8, 0], sizes = [8, 64], strides = [1, 1]} : vector<64x64xf32> to vector<8x64xf32>
    %602 = arith.addf %601, %596 : vector<8x64xf32>
    %603 = arith.negf %602 : vector<8x64xf32>
    %604 = math.exp %603 : vector<8x64xf32>
    %cst_271 = arith.constant 1.000000e+00 : f32
    %605 = vector.broadcast %cst_271 : f32 to vector<8x64xf32>
    %606 = arith.addf %605, %604 : vector<8x64xf32>
    %607 = arith.divf %605, %606 : vector<8x64xf32>
    %608 = vector.extract_strided_slice %564 {offsets = [8, 0], sizes = [8, 64], strides = [1, 1]} : vector<64x64xf32> to vector<8x64xf32>
    %609 = arith.addf %608, %597 : vector<8x64xf32>
    %610 = arith.negf %609 : vector<8x64xf32>
    %611 = math.exp %610 : vector<8x64xf32>
    %cst_272 = arith.constant 1.000000e+00 : f32
    %612 = vector.broadcast %cst_272 : f32 to vector<8x64xf32>
    %613 = arith.addf %612, %611 : vector<8x64xf32>
    %614 = arith.divf %612, %613 : vector<8x64xf32>
    %615 = vector.extract_strided_slice %567 {offsets = [8, 0], sizes = [8, 64], strides = [1, 1]} : vector<64x64xf32> to vector<8x64xf32>
    %616 = arith.mulf %607, %600 : vector<8x64xf32>
    %617 = arith.addf %615, %616 : vector<8x64xf32>
    %618 = math.tanh %617 : vector<8x64xf32>
    %cst_273 = arith.constant 1.000000e+00 : f32
    %619 = vector.broadcast %cst_273 : f32 to vector<8x64xf32>
    %620 = arith.subf %619, %614 : vector<8x64xf32>
    %621 = arith.mulf %620, %618 : vector<8x64xf32>
    %622 = arith.mulf %614, %595 : vector<8x64xf32>
    %623 = arith.addf %621, %622 : vector<8x64xf32>
    %cst_274 = arith.constant dense<0.000000e+00> : vector<8x64xf32>
    %624 = tpu.matmul %623, %540, %cst_274 {dimension_numbers = #tpu.dot_dimension_numbers<[1], [0], [0], [1], [0, 0, 1, 1], [], []>} : vector<8x64xf32>, vector<64x64xf32>, vector<8x64xf32> -> vector<8x64xf32>
    %cst_275 = arith.constant dense<0.000000e+00> : vector<8x64xf32>
    %625 = tpu.matmul %623, %542, %cst_275 {dimension_numbers = #tpu.dot_dimension_numbers<[1], [0], [0], [1], [0, 0, 1, 1], [], []>} : vector<8x64xf32>, vector<64x64xf32>, vector<8x64xf32> -> vector<8x64xf32>
    %cst_276 = arith.constant dense<0.000000e+00> : vector<8x64xf32>
    %626 = tpu.matmul %623, %544, %cst_276 {dimension_numbers = #tpu.dot_dimension_numbers<[1], [0], [0], [1], [0, 0, 1, 1], [], []>} : vector<8x64xf32>, vector<64x64xf32>, vector<8x64xf32> -> vector<8x64xf32>
    %627 = vector.broadcast %558 : vector<1x64xf32> to vector<8x64xf32>
    %628 = arith.addf %626, %627 : vector<8x64xf32>
    %629 = vector.extract_strided_slice %561 {offsets = [16, 0], sizes = [8, 64], strides = [1, 1]} : vector<64x64xf32> to vector<8x64xf32>
    %630 = arith.addf %629, %624 : vector<8x64xf32>
    %631 = arith.negf %630 : vector<8x64xf32>
    %632 = math.exp %631 : vector<8x64xf32>
    %cst_277 = arith.constant 1.000000e+00 : f32
    %633 = vector.broadcast %cst_277 : f32 to vector<8x64xf32>
    %634 = arith.addf %633, %632 : vector<8x64xf32>
    %635 = arith.divf %633, %634 : vector<8x64xf32>
    %636 = vector.extract_strided_slice %564 {offsets = [16, 0], sizes = [8, 64], strides = [1, 1]} : vector<64x64xf32> to vector<8x64xf32>
    %637 = arith.addf %636, %625 : vector<8x64xf32>
    %638 = arith.negf %637 : vector<8x64xf32>
    %639 = math.exp %638 : vector<8x64xf32>
    %cst_278 = arith.constant 1.000000e+00 : f32
    %640 = vector.broadcast %cst_278 : f32 to vector<8x64xf32>
    %641 = arith.addf %640, %639 : vector<8x64xf32>
    %642 = arith.divf %640, %641 : vector<8x64xf32>
    %643 = vector.extract_strided_slice %567 {offsets = [16, 0], sizes = [8, 64], strides = [1, 1]} : vector<64x64xf32> to vector<8x64xf32>
    %644 = arith.mulf %635, %628 : vector<8x64xf32>
    %645 = arith.addf %643, %644 : vector<8x64xf32>
    %646 = math.tanh %645 : vector<8x64xf32>
    %cst_279 = arith.constant 1.000000e+00 : f32
    %647 = vector.broadcast %cst_279 : f32 to vector<8x64xf32>
    %648 = arith.subf %647, %642 : vector<8x64xf32>
    %649 = arith.mulf %648, %646 : vector<8x64xf32>
    %650 = arith.mulf %642, %623 : vector<8x64xf32>
    %651 = arith.addf %649, %650 : vector<8x64xf32>
    %cst_280 = arith.constant dense<0.000000e+00> : vector<8x64xf32>
    %652 = tpu.matmul %651, %540, %cst_280 {dimension_numbers = #tpu.dot_dimension_numbers<[1], [0], [0], [1], [0, 0, 1, 1], [], []>} : vector<8x64xf32>, vector<64x64xf32>, vector<8x64xf32> -> vector<8x64xf32>
    %cst_281 = arith.constant dense<0.000000e+00> : vector<8x64xf32>
    %653 = tpu.matmul %651, %542, %cst_281 {dimension_numbers = #tpu.dot_dimension_numbers<[1], [0], [0], [1], [0, 0, 1, 1], [], []>} : vector<8x64xf32>, vector<64x64xf32>, vector<8x64xf32> -> vector<8x64xf32>
    %cst_282 = arith.constant dense<0.000000e+00> : vector<8x64xf32>
    %654 = tpu.matmul %651, %544, %cst_282 {dimension_numbers = #tpu.dot_dimension_numbers<[1], [0], [0], [1], [0, 0, 1, 1], [], []>} : vector<8x64xf32>, vector<64x64xf32>, vector<8x64xf32> -> vector<8x64xf32>
    %655 = vector.broadcast %558 : vector<1x64xf32> to vector<8x64xf32>
    %656 = arith.addf %654, %655 : vector<8x64xf32>
    %657 = vector.extract_strided_slice %561 {offsets = [24, 0], sizes = [8, 64], strides = [1, 1]} : vector<64x64xf32> to vector<8x64xf32>
    %658 = arith.addf %657, %652 : vector<8x64xf32>
    %659 = arith.negf %658 : vector<8x64xf32>
    %660 = math.exp %659 : vector<8x64xf32>
    %cst_283 = arith.constant 1.000000e+00 : f32
    %661 = vector.broadcast %cst_283 : f32 to vector<8x64xf32>
    %662 = arith.addf %661, %660 : vector<8x64xf32>
    %663 = arith.divf %661, %662 : vector<8x64xf32>
    %664 = vector.extract_strided_slice %564 {offsets = [24, 0], sizes = [8, 64], strides = [1, 1]} : vector<64x64xf32> to vector<8x64xf32>
    %665 = arith.addf %664, %653 : vector<8x64xf32>
    %666 = arith.negf %665 : vector<8x64xf32>
    %667 = math.exp %666 : vector<8x64xf32>
    %cst_284 = arith.constant 1.000000e+00 : f32
    %668 = vector.broadcast %cst_284 : f32 to vector<8x64xf32>
    %669 = arith.addf %668, %667 : vector<8x64xf32>
    %670 = arith.divf %668, %669 : vector<8x64xf32>
    %671 = vector.extract_strided_slice %567 {offsets = [24, 0], sizes = [8, 64], strides = [1, 1]} : vector<64x64xf32> to vector<8x64xf32>
    %672 = arith.mulf %663, %656 : vector<8x64xf32>
    %673 = arith.addf %671, %672 : vector<8x64xf32>
    %674 = math.tanh %673 : vector<8x64xf32>
    %cst_285 = arith.constant 1.000000e+00 : f32
    %675 = vector.broadcast %cst_285 : f32 to vector<8x64xf32>
    %676 = arith.subf %675, %670 : vector<8x64xf32>
    %677 = arith.mulf %676, %674 : vector<8x64xf32>
    %678 = arith.mulf %670, %651 : vector<8x64xf32>
    %679 = arith.addf %677, %678 : vector<8x64xf32>
    %cst_286 = arith.constant dense<0.000000e+00> : vector<8x64xf32>
    %680 = tpu.matmul %679, %540, %cst_286 {dimension_numbers = #tpu.dot_dimension_numbers<[1], [0], [0], [1], [0, 0, 1, 1], [], []>} : vector<8x64xf32>, vector<64x64xf32>, vector<8x64xf32> -> vector<8x64xf32>
    %cst_287 = arith.constant dense<0.000000e+00> : vector<8x64xf32>
    %681 = tpu.matmul %679, %542, %cst_287 {dimension_numbers = #tpu.dot_dimension_numbers<[1], [0], [0], [1], [0, 0, 1, 1], [], []>} : vector<8x64xf32>, vector<64x64xf32>, vector<8x64xf32> -> vector<8x64xf32>
    %cst_288 = arith.constant dense<0.000000e+00> : vector<8x64xf32>
    %682 = tpu.matmul %679, %544, %cst_288 {dimension_numbers = #tpu.dot_dimension_numbers<[1], [0], [0], [1], [0, 0, 1, 1], [], []>} : vector<8x64xf32>, vector<64x64xf32>, vector<8x64xf32> -> vector<8x64xf32>
    %683 = vector.broadcast %558 : vector<1x64xf32> to vector<8x64xf32>
    %684 = arith.addf %682, %683 : vector<8x64xf32>
    %685 = vector.extract_strided_slice %561 {offsets = [32, 0], sizes = [8, 64], strides = [1, 1]} : vector<64x64xf32> to vector<8x64xf32>
    %686 = arith.addf %685, %680 : vector<8x64xf32>
    %687 = arith.negf %686 : vector<8x64xf32>
    %688 = math.exp %687 : vector<8x64xf32>
    %cst_289 = arith.constant 1.000000e+00 : f32
    %689 = vector.broadcast %cst_289 : f32 to vector<8x64xf32>
    %690 = arith.addf %689, %688 : vector<8x64xf32>
    %691 = arith.divf %689, %690 : vector<8x64xf32>
    %692 = vector.extract_strided_slice %564 {offsets = [32, 0], sizes = [8, 64], strides = [1, 1]} : vector<64x64xf32> to vector<8x64xf32>
    %693 = arith.addf %692, %681 : vector<8x64xf32>
    %694 = arith.negf %693 : vector<8x64xf32>
    %695 = math.exp %694 : vector<8x64xf32>
    %cst_290 = arith.constant 1.000000e+00 : f32
    %696 = vector.broadcast %cst_290 : f32 to vector<8x64xf32>
    %697 = arith.addf %696, %695 : vector<8x64xf32>
    %698 = arith.divf %696, %697 : vector<8x64xf32>
    %699 = vector.extract_strided_slice %567 {offsets = [32, 0], sizes = [8, 64], strides = [1, 1]} : vector<64x64xf32> to vector<8x64xf32>
    %700 = arith.mulf %691, %684 : vector<8x64xf32>
    %701 = arith.addf %699, %700 : vector<8x64xf32>
    %702 = math.tanh %701 : vector<8x64xf32>
    %cst_291 = arith.constant 1.000000e+00 : f32
    %703 = vector.broadcast %cst_291 : f32 to vector<8x64xf32>
    %704 = arith.subf %703, %698 : vector<8x64xf32>
    %705 = arith.mulf %704, %702 : vector<8x64xf32>
    %706 = arith.mulf %698, %679 : vector<8x64xf32>
    %707 = arith.addf %705, %706 : vector<8x64xf32>
    %cst_292 = arith.constant dense<0.000000e+00> : vector<8x64xf32>
    %708 = tpu.matmul %707, %540, %cst_292 {dimension_numbers = #tpu.dot_dimension_numbers<[1], [0], [0], [1], [0, 0, 1, 1], [], []>} : vector<8x64xf32>, vector<64x64xf32>, vector<8x64xf32> -> vector<8x64xf32>
    %cst_293 = arith.constant dense<0.000000e+00> : vector<8x64xf32>
    %709 = tpu.matmul %707, %542, %cst_293 {dimension_numbers = #tpu.dot_dimension_numbers<[1], [0], [0], [1], [0, 0, 1, 1], [], []>} : vector<8x64xf32>, vector<64x64xf32>, vector<8x64xf32> -> vector<8x64xf32>
    %cst_294 = arith.constant dense<0.000000e+00> : vector<8x64xf32>
    %710 = tpu.matmul %707, %544, %cst_294 {dimension_numbers = #tpu.dot_dimension_numbers<[1], [0], [0], [1], [0, 0, 1, 1], [], []>} : vector<8x64xf32>, vector<64x64xf32>, vector<8x64xf32> -> vector<8x64xf32>
    %711 = vector.broadcast %558 : vector<1x64xf32> to vector<8x64xf32>
    %712 = arith.addf %710, %711 : vector<8x64xf32>
    %713 = vector.extract_strided_slice %561 {offsets = [40, 0], sizes = [8, 64], strides = [1, 1]} : vector<64x64xf32> to vector<8x64xf32>
    %714 = arith.addf %713, %708 : vector<8x64xf32>
    %715 = arith.negf %714 : vector<8x64xf32>
    %716 = math.exp %715 : vector<8x64xf32>
    %cst_295 = arith.constant 1.000000e+00 : f32
    %717 = vector.broadcast %cst_295 : f32 to vector<8x64xf32>
    %718 = arith.addf %717, %716 : vector<8x64xf32>
    %719 = arith.divf %717, %718 : vector<8x64xf32>
    %720 = vector.extract_strided_slice %564 {offsets = [40, 0], sizes = [8, 64], strides = [1, 1]} : vector<64x64xf32> to vector<8x64xf32>
    %721 = arith.addf %720, %709 : vector<8x64xf32>
    %722 = arith.negf %721 : vector<8x64xf32>
    %723 = math.exp %722 : vector<8x64xf32>
    %cst_296 = arith.constant 1.000000e+00 : f32
    %724 = vector.broadcast %cst_296 : f32 to vector<8x64xf32>
    %725 = arith.addf %724, %723 : vector<8x64xf32>
    %726 = arith.divf %724, %725 : vector<8x64xf32>
    %727 = vector.extract_strided_slice %567 {offsets = [40, 0], sizes = [8, 64], strides = [1, 1]} : vector<64x64xf32> to vector<8x64xf32>
    %728 = arith.mulf %719, %712 : vector<8x64xf32>
    %729 = arith.addf %727, %728 : vector<8x64xf32>
    %730 = math.tanh %729 : vector<8x64xf32>
    %cst_297 = arith.constant 1.000000e+00 : f32
    %731 = vector.broadcast %cst_297 : f32 to vector<8x64xf32>
    %732 = arith.subf %731, %726 : vector<8x64xf32>
    %733 = arith.mulf %732, %730 : vector<8x64xf32>
    %734 = arith.mulf %726, %707 : vector<8x64xf32>
    %735 = arith.addf %733, %734 : vector<8x64xf32>
    %cst_298 = arith.constant dense<0.000000e+00> : vector<8x64xf32>
    %736 = tpu.matmul %735, %540, %cst_298 {dimension_numbers = #tpu.dot_dimension_numbers<[1], [0], [0], [1], [0, 0, 1, 1], [], []>} : vector<8x64xf32>, vector<64x64xf32>, vector<8x64xf32> -> vector<8x64xf32>
    %cst_299 = arith.constant dense<0.000000e+00> : vector<8x64xf32>
    %737 = tpu.matmul %735, %542, %cst_299 {dimension_numbers = #tpu.dot_dimension_numbers<[1], [0], [0], [1], [0, 0, 1, 1], [], []>} : vector<8x64xf32>, vector<64x64xf32>, vector<8x64xf32> -> vector<8x64xf32>
    %cst_300 = arith.constant dense<0.000000e+00> : vector<8x64xf32>
    %738 = tpu.matmul %735, %544, %cst_300 {dimension_numbers = #tpu.dot_dimension_numbers<[1], [0], [0], [1], [0, 0, 1, 1], [], []>} : vector<8x64xf32>, vector<64x64xf32>, vector<8x64xf32> -> vector<8x64xf32>
    %739 = vector.broadcast %558 : vector<1x64xf32> to vector<8x64xf32>
    %740 = arith.addf %738, %739 : vector<8x64xf32>
    %741 = vector.extract_strided_slice %561 {offsets = [48, 0], sizes = [8, 64], strides = [1, 1]} : vector<64x64xf32> to vector<8x64xf32>
    %742 = arith.addf %741, %736 : vector<8x64xf32>
    %743 = arith.negf %742 : vector<8x64xf32>
    %744 = math.exp %743 : vector<8x64xf32>
    %cst_301 = arith.constant 1.000000e+00 : f32
    %745 = vector.broadcast %cst_301 : f32 to vector<8x64xf32>
    %746 = arith.addf %745, %744 : vector<8x64xf32>
    %747 = arith.divf %745, %746 : vector<8x64xf32>
    %748 = vector.extract_strided_slice %564 {offsets = [48, 0], sizes = [8, 64], strides = [1, 1]} : vector<64x64xf32> to vector<8x64xf32>
    %749 = arith.addf %748, %737 : vector<8x64xf32>
    %750 = arith.negf %749 : vector<8x64xf32>
    %751 = math.exp %750 : vector<8x64xf32>
    %cst_302 = arith.constant 1.000000e+00 : f32
    %752 = vector.broadcast %cst_302 : f32 to vector<8x64xf32>
    %753 = arith.addf %752, %751 : vector<8x64xf32>
    %754 = arith.divf %752, %753 : vector<8x64xf32>
    %755 = vector.extract_strided_slice %567 {offsets = [48, 0], sizes = [8, 64], strides = [1, 1]} : vector<64x64xf32> to vector<8x64xf32>
    %756 = arith.mulf %747, %740 : vector<8x64xf32>
    %757 = arith.addf %755, %756 : vector<8x64xf32>
    %758 = math.tanh %757 : vector<8x64xf32>
    %cst_303 = arith.constant 1.000000e+00 : f32
    %759 = vector.broadcast %cst_303 : f32 to vector<8x64xf32>
    %760 = arith.subf %759, %754 : vector<8x64xf32>
    %761 = arith.mulf %760, %758 : vector<8x64xf32>
    %762 = arith.mulf %754, %735 : vector<8x64xf32>
    %763 = arith.addf %761, %762 : vector<8x64xf32>
    %cst_304 = arith.constant dense<0.000000e+00> : vector<8x64xf32>
    %764 = tpu.matmul %763, %540, %cst_304 {dimension_numbers = #tpu.dot_dimension_numbers<[1], [0], [0], [1], [0, 0, 1, 1], [], []>} : vector<8x64xf32>, vector<64x64xf32>, vector<8x64xf32> -> vector<8x64xf32>
    %cst_305 = arith.constant dense<0.000000e+00> : vector<8x64xf32>
    %765 = tpu.matmul %763, %542, %cst_305 {dimension_numbers = #tpu.dot_dimension_numbers<[1], [0], [0], [1], [0, 0, 1, 1], [], []>} : vector<8x64xf32>, vector<64x64xf32>, vector<8x64xf32> -> vector<8x64xf32>
    %cst_306 = arith.constant dense<0.000000e+00> : vector<8x64xf32>
    %766 = tpu.matmul %763, %544, %cst_306 {dimension_numbers = #tpu.dot_dimension_numbers<[1], [0], [0], [1], [0, 0, 1, 1], [], []>} : vector<8x64xf32>, vector<64x64xf32>, vector<8x64xf32> -> vector<8x64xf32>
    %767 = vector.broadcast %558 : vector<1x64xf32> to vector<8x64xf32>
    %768 = arith.addf %766, %767 : vector<8x64xf32>
    %769 = vector.extract_strided_slice %561 {offsets = [56, 0], sizes = [8, 64], strides = [1, 1]} : vector<64x64xf32> to vector<8x64xf32>
    %770 = arith.addf %769, %764 : vector<8x64xf32>
    %771 = arith.negf %770 : vector<8x64xf32>
    %772 = math.exp %771 : vector<8x64xf32>
    %cst_307 = arith.constant 1.000000e+00 : f32
    %773 = vector.broadcast %cst_307 : f32 to vector<8x64xf32>
    %774 = arith.addf %773, %772 : vector<8x64xf32>
    %775 = arith.divf %773, %774 : vector<8x64xf32>
    %776 = vector.extract_strided_slice %564 {offsets = [56, 0], sizes = [8, 64], strides = [1, 1]} : vector<64x64xf32> to vector<8x64xf32>
    %777 = arith.addf %776, %765 : vector<8x64xf32>
    %778 = arith.negf %777 : vector<8x64xf32>
    %779 = math.exp %778 : vector<8x64xf32>
    %cst_308 = arith.constant 1.000000e+00 : f32
    %780 = vector.broadcast %cst_308 : f32 to vector<8x64xf32>
    %781 = arith.addf %780, %779 : vector<8x64xf32>
    %782 = arith.divf %780, %781 : vector<8x64xf32>
    %783 = vector.extract_strided_slice %567 {offsets = [56, 0], sizes = [8, 64], strides = [1, 1]} : vector<64x64xf32> to vector<8x64xf32>
    %784 = arith.mulf %775, %768 : vector<8x64xf32>
    %785 = arith.addf %783, %784 : vector<8x64xf32>
    %786 = math.tanh %785 : vector<8x64xf32>
    %cst_309 = arith.constant 1.000000e+00 : f32
    %787 = vector.broadcast %cst_309 : f32 to vector<8x64xf32>
    %788 = arith.subf %787, %782 : vector<8x64xf32>
    %789 = arith.mulf %788, %786 : vector<8x64xf32>
    %790 = arith.mulf %782, %763 : vector<8x64xf32>
    %791 = arith.addf %789, %790 : vector<8x64xf32>
    %792 = tpu.concatenate %595, %623, %651, %679, %707, %735, %763, %791 in 0 : vector<8x64xf32>, vector<8x64xf32>, vector<8x64xf32>, vector<8x64xf32>, vector<8x64xf32>, vector<8x64xf32>, vector<8x64xf32>, vector<8x64xf32> -> vector<64x64xf32>
    %c1_310 = arith.constant 1 : index
    %c0_311 = arith.constant 0 : index
    %c0_312 = arith.constant 0 : index
    %c0_313 = arith.constant 0 : index
    %793 = vector.load %arg9[%c1_310, %c0_311, %c0_312, %c0_313] : memref<2x3x64x64xf32, #tpu.memory_space<vmem>>, vector<1x1x64x64xf32>
    %794 = vector.shape_cast %793 : vector<1x1x64x64xf32> to vector<64x64xf32>
    %c1_314 = arith.constant 1 : index
    %c1_315 = arith.constant 1 : index
    %c0_316 = arith.constant 0 : index
    %c0_317 = arith.constant 0 : index
    %795 = vector.load %arg9[%c1_314, %c1_315, %c0_316, %c0_317] : memref<2x3x64x64xf32, #tpu.memory_space<vmem>>, vector<1x1x64x64xf32>
    %796 = vector.shape_cast %795 : vector<1x1x64x64xf32> to vector<64x64xf32>
    %c1_318 = arith.constant 1 : index
    %c2_319 = arith.constant 2 : index
    %c0_320 = arith.constant 0 : index
    %c0_321 = arith.constant 0 : index
    %797 = vector.load %arg9[%c1_318, %c2_319, %c0_320, %c0_321] : memref<2x3x64x64xf32, #tpu.memory_space<vmem>>, vector<1x1x64x64xf32>
    %798 = vector.shape_cast %797 : vector<1x1x64x64xf32> to vector<64x64xf32>
    %c1_322 = arith.constant 1 : index
    %c0_323 = arith.constant 0 : index
    %c0_324 = arith.constant 0 : index
    %c0_325 = arith.constant 0 : index
    %799 = vector.load %arg10[%c1_322, %c0_323, %c0_324, %c0_325] : memref<2x3x64x64xf32, #tpu.memory_space<vmem>>, vector<1x1x64x64xf32>
    %800 = vector.shape_cast %799 : vector<1x1x64x64xf32> to vector<64x64xf32>
    %c1_326 = arith.constant 1 : index
    %c1_327 = arith.constant 1 : index
    %c0_328 = arith.constant 0 : index
    %c0_329 = arith.constant 0 : index
    %801 = vector.load %arg10[%c1_326, %c1_327, %c0_328, %c0_329] : memref<2x3x64x64xf32, #tpu.memory_space<vmem>>, vector<1x1x64x64xf32>
    %802 = vector.shape_cast %801 : vector<1x1x64x64xf32> to vector<64x64xf32>
    %c1_330 = arith.constant 1 : index
    %c2_331 = arith.constant 2 : index
    %c0_332 = arith.constant 0 : index
    %c0_333 = arith.constant 0 : index
    %803 = vector.load %arg10[%c1_330, %c2_331, %c0_332, %c0_333] : memref<2x3x64x64xf32, #tpu.memory_space<vmem>>, vector<1x1x64x64xf32>
    %804 = vector.shape_cast %803 : vector<1x1x64x64xf32> to vector<64x64xf32>
    %c1_334 = arith.constant 1 : index
    %c0_335 = arith.constant 0 : index
    %c0_336 = arith.constant 0 : index
    %c0_337 = arith.constant 0 : index
    %805 = vector.load %arg11[%c1_334, %c0_335, %c0_336, %c0_337] : memref<2x3x1x64xf32, #tpu.memory_space<vmem>>, vector<1x1x1x64xf32>
    %806 = vector.shape_cast %805 : vector<1x1x1x64xf32> to vector<1x64xf32>
    %c1_338 = arith.constant 1 : index
    %c0_339 = arith.constant 0 : index
    %c0_340 = arith.constant 0 : index
    %c0_341 = arith.constant 0 : index
    %807 = vector.load %arg12[%c1_338, %c0_339, %c0_340, %c0_341] : memref<2x3x1x64xf32, #tpu.memory_space<vmem>>, vector<1x1x1x64xf32>
    %808 = vector.shape_cast %807 : vector<1x1x1x64xf32> to vector<1x64xf32>
    %809 = arith.addf %806, %808 : vector<1x64xf32>
    %c1_342 = arith.constant 1 : index
    %c1_343 = arith.constant 1 : index
    %c0_344 = arith.constant 0 : index
    %c0_345 = arith.constant 0 : index
    %810 = vector.load %arg11[%c1_342, %c1_343, %c0_344, %c0_345] : memref<2x3x1x64xf32, #tpu.memory_space<vmem>>, vector<1x1x1x64xf32>
    %811 = vector.shape_cast %810 : vector<1x1x1x64xf32> to vector<1x64xf32>
    %c1_346 = arith.constant 1 : index
    %c1_347 = arith.constant 1 : index
    %c0_348 = arith.constant 0 : index
    %c0_349 = arith.constant 0 : index
    %812 = vector.load %arg12[%c1_346, %c1_347, %c0_348, %c0_349] : memref<2x3x1x64xf32, #tpu.memory_space<vmem>>, vector<1x1x1x64xf32>
    %813 = vector.shape_cast %812 : vector<1x1x1x64xf32> to vector<1x64xf32>
    %814 = arith.addf %811, %813 : vector<1x64xf32>
    %c1_350 = arith.constant 1 : index
    %c2_351 = arith.constant 2 : index
    %c0_352 = arith.constant 0 : index
    %c0_353 = arith.constant 0 : index
    %815 = vector.load %arg11[%c1_350, %c2_351, %c0_352, %c0_353] : memref<2x3x1x64xf32, #tpu.memory_space<vmem>>, vector<1x1x1x64xf32>
    %816 = vector.shape_cast %815 : vector<1x1x1x64xf32> to vector<1x64xf32>
    %c1_354 = arith.constant 1 : index
    %c2_355 = arith.constant 2 : index
    %c0_356 = arith.constant 0 : index
    %c0_357 = arith.constant 0 : index
    %817 = vector.load %arg12[%c1_354, %c2_355, %c0_356, %c0_357] : memref<2x3x1x64xf32, #tpu.memory_space<vmem>>, vector<1x1x1x64xf32>
    %818 = vector.shape_cast %817 : vector<1x1x1x64xf32> to vector<1x64xf32>
    %cst_358 = arith.constant dense<0.000000e+00> : vector<64x64xf32>
    %819 = tpu.matmul %792, %794, %cst_358 {dimension_numbers = #tpu.dot_dimension_numbers<[1], [0], [0], [1], [0, 0, 1, 1], [], []>} : vector<64x64xf32>, vector<64x64xf32>, vector<64x64xf32> -> vector<64x64xf32>
    %820 = vector.broadcast %809 : vector<1x64xf32> to vector<64x64xf32>
    %821 = arith.addf %819, %820 : vector<64x64xf32>
    %cst_359 = arith.constant dense<0.000000e+00> : vector<64x64xf32>
    %822 = tpu.matmul %792, %796, %cst_359 {dimension_numbers = #tpu.dot_dimension_numbers<[1], [0], [0], [1], [0, 0, 1, 1], [], []>} : vector<64x64xf32>, vector<64x64xf32>, vector<64x64xf32> -> vector<64x64xf32>
    %823 = vector.broadcast %814 : vector<1x64xf32> to vector<64x64xf32>
    %824 = arith.addf %822, %823 : vector<64x64xf32>
    %cst_360 = arith.constant dense<0.000000e+00> : vector<64x64xf32>
    %825 = tpu.matmul %792, %798, %cst_360 {dimension_numbers = #tpu.dot_dimension_numbers<[1], [0], [0], [1], [0, 0, 1, 1], [], []>} : vector<64x64xf32>, vector<64x64xf32>, vector<64x64xf32> -> vector<64x64xf32>
    %826 = vector.broadcast %816 : vector<1x64xf32> to vector<64x64xf32>
    %827 = arith.addf %825, %826 : vector<64x64xf32>
    %cst_361 = arith.constant dense<0.000000e+00> : vector<8x64xf32>
    %828 = tpu.matmul %530, %800, %cst_361 {dimension_numbers = #tpu.dot_dimension_numbers<[1], [0], [0], [1], [0, 0, 1, 1], [], []>} : vector<8x64xf32>, vector<64x64xf32>, vector<8x64xf32> -> vector<8x64xf32>
    %cst_362 = arith.constant dense<0.000000e+00> : vector<8x64xf32>
    %829 = tpu.matmul %530, %802, %cst_362 {dimension_numbers = #tpu.dot_dimension_numbers<[1], [0], [0], [1], [0, 0, 1, 1], [], []>} : vector<8x64xf32>, vector<64x64xf32>, vector<8x64xf32> -> vector<8x64xf32>
    %cst_363 = arith.constant dense<0.000000e+00> : vector<8x64xf32>
    %830 = tpu.matmul %530, %804, %cst_363 {dimension_numbers = #tpu.dot_dimension_numbers<[1], [0], [0], [1], [0, 0, 1, 1], [], []>} : vector<8x64xf32>, vector<64x64xf32>, vector<8x64xf32> -> vector<8x64xf32>
    %831 = vector.broadcast %818 : vector<1x64xf32> to vector<8x64xf32>
    %832 = arith.addf %830, %831 : vector<8x64xf32>
    %833 = vector.extract_strided_slice %821 {offsets = [0, 0], sizes = [8, 64], strides = [1, 1]} : vector<64x64xf32> to vector<8x64xf32>
    %834 = arith.addf %833, %828 : vector<8x64xf32>
    %835 = arith.negf %834 : vector<8x64xf32>
    %836 = math.exp %835 : vector<8x64xf32>
    %cst_364 = arith.constant 1.000000e+00 : f32
    %837 = vector.broadcast %cst_364 : f32 to vector<8x64xf32>
    %838 = arith.addf %837, %836 : vector<8x64xf32>
    %839 = arith.divf %837, %838 : vector<8x64xf32>
    %840 = vector.extract_strided_slice %824 {offsets = [0, 0], sizes = [8, 64], strides = [1, 1]} : vector<64x64xf32> to vector<8x64xf32>
    %841 = arith.addf %840, %829 : vector<8x64xf32>
    %842 = arith.negf %841 : vector<8x64xf32>
    %843 = math.exp %842 : vector<8x64xf32>
    %cst_365 = arith.constant 1.000000e+00 : f32
    %844 = vector.broadcast %cst_365 : f32 to vector<8x64xf32>
    %845 = arith.addf %844, %843 : vector<8x64xf32>
    %846 = arith.divf %844, %845 : vector<8x64xf32>
    %847 = vector.extract_strided_slice %827 {offsets = [0, 0], sizes = [8, 64], strides = [1, 1]} : vector<64x64xf32> to vector<8x64xf32>
    %848 = arith.mulf %839, %832 : vector<8x64xf32>
    %849 = arith.addf %847, %848 : vector<8x64xf32>
    %850 = math.tanh %849 : vector<8x64xf32>
    %cst_366 = arith.constant 1.000000e+00 : f32
    %851 = vector.broadcast %cst_366 : f32 to vector<8x64xf32>
    %852 = arith.subf %851, %846 : vector<8x64xf32>
    %853 = arith.mulf %852, %850 : vector<8x64xf32>
    %854 = arith.mulf %846, %530 : vector<8x64xf32>
    %855 = arith.addf %853, %854 : vector<8x64xf32>
    %cst_367 = arith.constant dense<0.000000e+00> : vector<8x64xf32>
    %856 = tpu.matmul %855, %800, %cst_367 {dimension_numbers = #tpu.dot_dimension_numbers<[1], [0], [0], [1], [0, 0, 1, 1], [], []>} : vector<8x64xf32>, vector<64x64xf32>, vector<8x64xf32> -> vector<8x64xf32>
    %cst_368 = arith.constant dense<0.000000e+00> : vector<8x64xf32>
    %857 = tpu.matmul %855, %802, %cst_368 {dimension_numbers = #tpu.dot_dimension_numbers<[1], [0], [0], [1], [0, 0, 1, 1], [], []>} : vector<8x64xf32>, vector<64x64xf32>, vector<8x64xf32> -> vector<8x64xf32>
    %cst_369 = arith.constant dense<0.000000e+00> : vector<8x64xf32>
    %858 = tpu.matmul %855, %804, %cst_369 {dimension_numbers = #tpu.dot_dimension_numbers<[1], [0], [0], [1], [0, 0, 1, 1], [], []>} : vector<8x64xf32>, vector<64x64xf32>, vector<8x64xf32> -> vector<8x64xf32>
    %859 = vector.broadcast %818 : vector<1x64xf32> to vector<8x64xf32>
    %860 = arith.addf %858, %859 : vector<8x64xf32>
    %861 = vector.extract_strided_slice %821 {offsets = [8, 0], sizes = [8, 64], strides = [1, 1]} : vector<64x64xf32> to vector<8x64xf32>
    %862 = arith.addf %861, %856 : vector<8x64xf32>
    %863 = arith.negf %862 : vector<8x64xf32>
    %864 = math.exp %863 : vector<8x64xf32>
    %cst_370 = arith.constant 1.000000e+00 : f32
    %865 = vector.broadcast %cst_370 : f32 to vector<8x64xf32>
    %866 = arith.addf %865, %864 : vector<8x64xf32>
    %867 = arith.divf %865, %866 : vector<8x64xf32>
    %868 = vector.extract_strided_slice %824 {offsets = [8, 0], sizes = [8, 64], strides = [1, 1]} : vector<64x64xf32> to vector<8x64xf32>
    %869 = arith.addf %868, %857 : vector<8x64xf32>
    %870 = arith.negf %869 : vector<8x64xf32>
    %871 = math.exp %870 : vector<8x64xf32>
    %cst_371 = arith.constant 1.000000e+00 : f32
    %872 = vector.broadcast %cst_371 : f32 to vector<8x64xf32>
    %873 = arith.addf %872, %871 : vector<8x64xf32>
    %874 = arith.divf %872, %873 : vector<8x64xf32>
    %875 = vector.extract_strided_slice %827 {offsets = [8, 0], sizes = [8, 64], strides = [1, 1]} : vector<64x64xf32> to vector<8x64xf32>
    %876 = arith.mulf %867, %860 : vector<8x64xf32>
    %877 = arith.addf %875, %876 : vector<8x64xf32>
    %878 = math.tanh %877 : vector<8x64xf32>
    %cst_372 = arith.constant 1.000000e+00 : f32
    %879 = vector.broadcast %cst_372 : f32 to vector<8x64xf32>
    %880 = arith.subf %879, %874 : vector<8x64xf32>
    %881 = arith.mulf %880, %878 : vector<8x64xf32>
    %882 = arith.mulf %874, %855 : vector<8x64xf32>
    %883 = arith.addf %881, %882 : vector<8x64xf32>
    %cst_373 = arith.constant dense<0.000000e+00> : vector<8x64xf32>
    %884 = tpu.matmul %883, %800, %cst_373 {dimension_numbers = #tpu.dot_dimension_numbers<[1], [0], [0], [1], [0, 0, 1, 1], [], []>} : vector<8x64xf32>, vector<64x64xf32>, vector<8x64xf32> -> vector<8x64xf32>
    %cst_374 = arith.constant dense<0.000000e+00> : vector<8x64xf32>
    %885 = tpu.matmul %883, %802, %cst_374 {dimension_numbers = #tpu.dot_dimension_numbers<[1], [0], [0], [1], [0, 0, 1, 1], [], []>} : vector<8x64xf32>, vector<64x64xf32>, vector<8x64xf32> -> vector<8x64xf32>
    %cst_375 = arith.constant dense<0.000000e+00> : vector<8x64xf32>
    %886 = tpu.matmul %883, %804, %cst_375 {dimension_numbers = #tpu.dot_dimension_numbers<[1], [0], [0], [1], [0, 0, 1, 1], [], []>} : vector<8x64xf32>, vector<64x64xf32>, vector<8x64xf32> -> vector<8x64xf32>
    %887 = vector.broadcast %818 : vector<1x64xf32> to vector<8x64xf32>
    %888 = arith.addf %886, %887 : vector<8x64xf32>
    %889 = vector.extract_strided_slice %821 {offsets = [16, 0], sizes = [8, 64], strides = [1, 1]} : vector<64x64xf32> to vector<8x64xf32>
    %890 = arith.addf %889, %884 : vector<8x64xf32>
    %891 = arith.negf %890 : vector<8x64xf32>
    %892 = math.exp %891 : vector<8x64xf32>
    %cst_376 = arith.constant 1.000000e+00 : f32
    %893 = vector.broadcast %cst_376 : f32 to vector<8x64xf32>
    %894 = arith.addf %893, %892 : vector<8x64xf32>
    %895 = arith.divf %893, %894 : vector<8x64xf32>
    %896 = vector.extract_strided_slice %824 {offsets = [16, 0], sizes = [8, 64], strides = [1, 1]} : vector<64x64xf32> to vector<8x64xf32>
    %897 = arith.addf %896, %885 : vector<8x64xf32>
    %898 = arith.negf %897 : vector<8x64xf32>
    %899 = math.exp %898 : vector<8x64xf32>
    %cst_377 = arith.constant 1.000000e+00 : f32
    %900 = vector.broadcast %cst_377 : f32 to vector<8x64xf32>
    %901 = arith.addf %900, %899 : vector<8x64xf32>
    %902 = arith.divf %900, %901 : vector<8x64xf32>
    %903 = vector.extract_strided_slice %827 {offsets = [16, 0], sizes = [8, 64], strides = [1, 1]} : vector<64x64xf32> to vector<8x64xf32>
    %904 = arith.mulf %895, %888 : vector<8x64xf32>
    %905 = arith.addf %903, %904 : vector<8x64xf32>
    %906 = math.tanh %905 : vector<8x64xf32>
    %cst_378 = arith.constant 1.000000e+00 : f32
    %907 = vector.broadcast %cst_378 : f32 to vector<8x64xf32>
    %908 = arith.subf %907, %902 : vector<8x64xf32>
    %909 = arith.mulf %908, %906 : vector<8x64xf32>
    %910 = arith.mulf %902, %883 : vector<8x64xf32>
    %911 = arith.addf %909, %910 : vector<8x64xf32>
    %cst_379 = arith.constant dense<0.000000e+00> : vector<8x64xf32>
    %912 = tpu.matmul %911, %800, %cst_379 {dimension_numbers = #tpu.dot_dimension_numbers<[1], [0], [0], [1], [0, 0, 1, 1], [], []>} : vector<8x64xf32>, vector<64x64xf32>, vector<8x64xf32> -> vector<8x64xf32>
    %cst_380 = arith.constant dense<0.000000e+00> : vector<8x64xf32>
    %913 = tpu.matmul %911, %802, %cst_380 {dimension_numbers = #tpu.dot_dimension_numbers<[1], [0], [0], [1], [0, 0, 1, 1], [], []>} : vector<8x64xf32>, vector<64x64xf32>, vector<8x64xf32> -> vector<8x64xf32>
    %cst_381 = arith.constant dense<0.000000e+00> : vector<8x64xf32>
    %914 = tpu.matmul %911, %804, %cst_381 {dimension_numbers = #tpu.dot_dimension_numbers<[1], [0], [0], [1], [0, 0, 1, 1], [], []>} : vector<8x64xf32>, vector<64x64xf32>, vector<8x64xf32> -> vector<8x64xf32>
    %915 = vector.broadcast %818 : vector<1x64xf32> to vector<8x64xf32>
    %916 = arith.addf %914, %915 : vector<8x64xf32>
    %917 = vector.extract_strided_slice %821 {offsets = [24, 0], sizes = [8, 64], strides = [1, 1]} : vector<64x64xf32> to vector<8x64xf32>
    %918 = arith.addf %917, %912 : vector<8x64xf32>
    %919 = arith.negf %918 : vector<8x64xf32>
    %920 = math.exp %919 : vector<8x64xf32>
    %cst_382 = arith.constant 1.000000e+00 : f32
    %921 = vector.broadcast %cst_382 : f32 to vector<8x64xf32>
    %922 = arith.addf %921, %920 : vector<8x64xf32>
    %923 = arith.divf %921, %922 : vector<8x64xf32>
    %924 = vector.extract_strided_slice %824 {offsets = [24, 0], sizes = [8, 64], strides = [1, 1]} : vector<64x64xf32> to vector<8x64xf32>
    %925 = arith.addf %924, %913 : vector<8x64xf32>
    %926 = arith.negf %925 : vector<8x64xf32>
    %927 = math.exp %926 : vector<8x64xf32>
    %cst_383 = arith.constant 1.000000e+00 : f32
    %928 = vector.broadcast %cst_383 : f32 to vector<8x64xf32>
    %929 = arith.addf %928, %927 : vector<8x64xf32>
    %930 = arith.divf %928, %929 : vector<8x64xf32>
    %931 = vector.extract_strided_slice %827 {offsets = [24, 0], sizes = [8, 64], strides = [1, 1]} : vector<64x64xf32> to vector<8x64xf32>
    %932 = arith.mulf %923, %916 : vector<8x64xf32>
    %933 = arith.addf %931, %932 : vector<8x64xf32>
    %934 = math.tanh %933 : vector<8x64xf32>
    %cst_384 = arith.constant 1.000000e+00 : f32
    %935 = vector.broadcast %cst_384 : f32 to vector<8x64xf32>
    %936 = arith.subf %935, %930 : vector<8x64xf32>
    %937 = arith.mulf %936, %934 : vector<8x64xf32>
    %938 = arith.mulf %930, %911 : vector<8x64xf32>
    %939 = arith.addf %937, %938 : vector<8x64xf32>
    %cst_385 = arith.constant dense<0.000000e+00> : vector<8x64xf32>
    %940 = tpu.matmul %939, %800, %cst_385 {dimension_numbers = #tpu.dot_dimension_numbers<[1], [0], [0], [1], [0, 0, 1, 1], [], []>} : vector<8x64xf32>, vector<64x64xf32>, vector<8x64xf32> -> vector<8x64xf32>
    %cst_386 = arith.constant dense<0.000000e+00> : vector<8x64xf32>
    %941 = tpu.matmul %939, %802, %cst_386 {dimension_numbers = #tpu.dot_dimension_numbers<[1], [0], [0], [1], [0, 0, 1, 1], [], []>} : vector<8x64xf32>, vector<64x64xf32>, vector<8x64xf32> -> vector<8x64xf32>
    %cst_387 = arith.constant dense<0.000000e+00> : vector<8x64xf32>
    %942 = tpu.matmul %939, %804, %cst_387 {dimension_numbers = #tpu.dot_dimension_numbers<[1], [0], [0], [1], [0, 0, 1, 1], [], []>} : vector<8x64xf32>, vector<64x64xf32>, vector<8x64xf32> -> vector<8x64xf32>
    %943 = vector.broadcast %818 : vector<1x64xf32> to vector<8x64xf32>
    %944 = arith.addf %942, %943 : vector<8x64xf32>
    %945 = vector.extract_strided_slice %821 {offsets = [32, 0], sizes = [8, 64], strides = [1, 1]} : vector<64x64xf32> to vector<8x64xf32>
    %946 = arith.addf %945, %940 : vector<8x64xf32>
    %947 = arith.negf %946 : vector<8x64xf32>
    %948 = math.exp %947 : vector<8x64xf32>
    %cst_388 = arith.constant 1.000000e+00 : f32
    %949 = vector.broadcast %cst_388 : f32 to vector<8x64xf32>
    %950 = arith.addf %949, %948 : vector<8x64xf32>
    %951 = arith.divf %949, %950 : vector<8x64xf32>
    %952 = vector.extract_strided_slice %824 {offsets = [32, 0], sizes = [8, 64], strides = [1, 1]} : vector<64x64xf32> to vector<8x64xf32>
    %953 = arith.addf %952, %941 : vector<8x64xf32>
    %954 = arith.negf %953 : vector<8x64xf32>
    %955 = math.exp %954 : vector<8x64xf32>
    %cst_389 = arith.constant 1.000000e+00 : f32
    %956 = vector.broadcast %cst_389 : f32 to vector<8x64xf32>
    %957 = arith.addf %956, %955 : vector<8x64xf32>
    %958 = arith.divf %956, %957 : vector<8x64xf32>
    %959 = vector.extract_strided_slice %827 {offsets = [32, 0], sizes = [8, 64], strides = [1, 1]} : vector<64x64xf32> to vector<8x64xf32>
    %960 = arith.mulf %951, %944 : vector<8x64xf32>
    %961 = arith.addf %959, %960 : vector<8x64xf32>
    %962 = math.tanh %961 : vector<8x64xf32>
    %cst_390 = arith.constant 1.000000e+00 : f32
    %963 = vector.broadcast %cst_390 : f32 to vector<8x64xf32>
    %964 = arith.subf %963, %958 : vector<8x64xf32>
    %965 = arith.mulf %964, %962 : vector<8x64xf32>
    %966 = arith.mulf %958, %939 : vector<8x64xf32>
    %967 = arith.addf %965, %966 : vector<8x64xf32>
    %cst_391 = arith.constant dense<0.000000e+00> : vector<8x64xf32>
    %968 = tpu.matmul %967, %800, %cst_391 {dimension_numbers = #tpu.dot_dimension_numbers<[1], [0], [0], [1], [0, 0, 1, 1], [], []>} : vector<8x64xf32>, vector<64x64xf32>, vector<8x64xf32> -> vector<8x64xf32>
    %cst_392 = arith.constant dense<0.000000e+00> : vector<8x64xf32>
    %969 = tpu.matmul %967, %802, %cst_392 {dimension_numbers = #tpu.dot_dimension_numbers<[1], [0], [0], [1], [0, 0, 1, 1], [], []>} : vector<8x64xf32>, vector<64x64xf32>, vector<8x64xf32> -> vector<8x64xf32>
    %cst_393 = arith.constant dense<0.000000e+00> : vector<8x64xf32>
    %970 = tpu.matmul %967, %804, %cst_393 {dimension_numbers = #tpu.dot_dimension_numbers<[1], [0], [0], [1], [0, 0, 1, 1], [], []>} : vector<8x64xf32>, vector<64x64xf32>, vector<8x64xf32> -> vector<8x64xf32>
    %971 = vector.broadcast %818 : vector<1x64xf32> to vector<8x64xf32>
    %972 = arith.addf %970, %971 : vector<8x64xf32>
    %973 = vector.extract_strided_slice %821 {offsets = [40, 0], sizes = [8, 64], strides = [1, 1]} : vector<64x64xf32> to vector<8x64xf32>
    %974 = arith.addf %973, %968 : vector<8x64xf32>
    %975 = arith.negf %974 : vector<8x64xf32>
    %976 = math.exp %975 : vector<8x64xf32>
    %cst_394 = arith.constant 1.000000e+00 : f32
    %977 = vector.broadcast %cst_394 : f32 to vector<8x64xf32>
    %978 = arith.addf %977, %976 : vector<8x64xf32>
    %979 = arith.divf %977, %978 : vector<8x64xf32>
    %980 = vector.extract_strided_slice %824 {offsets = [40, 0], sizes = [8, 64], strides = [1, 1]} : vector<64x64xf32> to vector<8x64xf32>
    %981 = arith.addf %980, %969 : vector<8x64xf32>
    %982 = arith.negf %981 : vector<8x64xf32>
    %983 = math.exp %982 : vector<8x64xf32>
    %cst_395 = arith.constant 1.000000e+00 : f32
    %984 = vector.broadcast %cst_395 : f32 to vector<8x64xf32>
    %985 = arith.addf %984, %983 : vector<8x64xf32>
    %986 = arith.divf %984, %985 : vector<8x64xf32>
    %987 = vector.extract_strided_slice %827 {offsets = [40, 0], sizes = [8, 64], strides = [1, 1]} : vector<64x64xf32> to vector<8x64xf32>
    %988 = arith.mulf %979, %972 : vector<8x64xf32>
    %989 = arith.addf %987, %988 : vector<8x64xf32>
    %990 = math.tanh %989 : vector<8x64xf32>
    %cst_396 = arith.constant 1.000000e+00 : f32
    %991 = vector.broadcast %cst_396 : f32 to vector<8x64xf32>
    %992 = arith.subf %991, %986 : vector<8x64xf32>
    %993 = arith.mulf %992, %990 : vector<8x64xf32>
    %994 = arith.mulf %986, %967 : vector<8x64xf32>
    %995 = arith.addf %993, %994 : vector<8x64xf32>
    %cst_397 = arith.constant dense<0.000000e+00> : vector<8x64xf32>
    %996 = tpu.matmul %995, %800, %cst_397 {dimension_numbers = #tpu.dot_dimension_numbers<[1], [0], [0], [1], [0, 0, 1, 1], [], []>} : vector<8x64xf32>, vector<64x64xf32>, vector<8x64xf32> -> vector<8x64xf32>
    %cst_398 = arith.constant dense<0.000000e+00> : vector<8x64xf32>
    %997 = tpu.matmul %995, %802, %cst_398 {dimension_numbers = #tpu.dot_dimension_numbers<[1], [0], [0], [1], [0, 0, 1, 1], [], []>} : vector<8x64xf32>, vector<64x64xf32>, vector<8x64xf32> -> vector<8x64xf32>
    %cst_399 = arith.constant dense<0.000000e+00> : vector<8x64xf32>
    %998 = tpu.matmul %995, %804, %cst_399 {dimension_numbers = #tpu.dot_dimension_numbers<[1], [0], [0], [1], [0, 0, 1, 1], [], []>} : vector<8x64xf32>, vector<64x64xf32>, vector<8x64xf32> -> vector<8x64xf32>
    %999 = vector.broadcast %818 : vector<1x64xf32> to vector<8x64xf32>
    %1000 = arith.addf %998, %999 : vector<8x64xf32>
    %1001 = vector.extract_strided_slice %821 {offsets = [48, 0], sizes = [8, 64], strides = [1, 1]} : vector<64x64xf32> to vector<8x64xf32>
    %1002 = arith.addf %1001, %996 : vector<8x64xf32>
    %1003 = arith.negf %1002 : vector<8x64xf32>
    %1004 = math.exp %1003 : vector<8x64xf32>
    %cst_400 = arith.constant 1.000000e+00 : f32
    %1005 = vector.broadcast %cst_400 : f32 to vector<8x64xf32>
    %1006 = arith.addf %1005, %1004 : vector<8x64xf32>
    %1007 = arith.divf %1005, %1006 : vector<8x64xf32>
    %1008 = vector.extract_strided_slice %824 {offsets = [48, 0], sizes = [8, 64], strides = [1, 1]} : vector<64x64xf32> to vector<8x64xf32>
    %1009 = arith.addf %1008, %997 : vector<8x64xf32>
    %1010 = arith.negf %1009 : vector<8x64xf32>
    %1011 = math.exp %1010 : vector<8x64xf32>
    %cst_401 = arith.constant 1.000000e+00 : f32
    %1012 = vector.broadcast %cst_401 : f32 to vector<8x64xf32>
    %1013 = arith.addf %1012, %1011 : vector<8x64xf32>
    %1014 = arith.divf %1012, %1013 : vector<8x64xf32>
    %1015 = vector.extract_strided_slice %827 {offsets = [48, 0], sizes = [8, 64], strides = [1, 1]} : vector<64x64xf32> to vector<8x64xf32>
    %1016 = arith.mulf %1007, %1000 : vector<8x64xf32>
    %1017 = arith.addf %1015, %1016 : vector<8x64xf32>
    %1018 = math.tanh %1017 : vector<8x64xf32>
    %cst_402 = arith.constant 1.000000e+00 : f32
    %1019 = vector.broadcast %cst_402 : f32 to vector<8x64xf32>
    %1020 = arith.subf %1019, %1014 : vector<8x64xf32>
    %1021 = arith.mulf %1020, %1018 : vector<8x64xf32>
    %1022 = arith.mulf %1014, %995 : vector<8x64xf32>
    %1023 = arith.addf %1021, %1022 : vector<8x64xf32>
    %cst_403 = arith.constant dense<0.000000e+00> : vector<8x64xf32>
    %1024 = tpu.matmul %1023, %800, %cst_403 {dimension_numbers = #tpu.dot_dimension_numbers<[1], [0], [0], [1], [0, 0, 1, 1], [], []>} : vector<8x64xf32>, vector<64x64xf32>, vector<8x64xf32> -> vector<8x64xf32>
    %cst_404 = arith.constant dense<0.000000e+00> : vector<8x64xf32>
    %1025 = tpu.matmul %1023, %802, %cst_404 {dimension_numbers = #tpu.dot_dimension_numbers<[1], [0], [0], [1], [0, 0, 1, 1], [], []>} : vector<8x64xf32>, vector<64x64xf32>, vector<8x64xf32> -> vector<8x64xf32>
    %cst_405 = arith.constant dense<0.000000e+00> : vector<8x64xf32>
    %1026 = tpu.matmul %1023, %804, %cst_405 {dimension_numbers = #tpu.dot_dimension_numbers<[1], [0], [0], [1], [0, 0, 1, 1], [], []>} : vector<8x64xf32>, vector<64x64xf32>, vector<8x64xf32> -> vector<8x64xf32>
    %1027 = vector.broadcast %818 : vector<1x64xf32> to vector<8x64xf32>
    %1028 = arith.addf %1026, %1027 : vector<8x64xf32>
    %1029 = vector.extract_strided_slice %821 {offsets = [56, 0], sizes = [8, 64], strides = [1, 1]} : vector<64x64xf32> to vector<8x64xf32>
    %1030 = arith.addf %1029, %1024 : vector<8x64xf32>
    %1031 = arith.negf %1030 : vector<8x64xf32>
    %1032 = math.exp %1031 : vector<8x64xf32>
    %cst_406 = arith.constant 1.000000e+00 : f32
    %1033 = vector.broadcast %cst_406 : f32 to vector<8x64xf32>
    %1034 = arith.addf %1033, %1032 : vector<8x64xf32>
    %1035 = arith.divf %1033, %1034 : vector<8x64xf32>
    %1036 = vector.extract_strided_slice %824 {offsets = [56, 0], sizes = [8, 64], strides = [1, 1]} : vector<64x64xf32> to vector<8x64xf32>
    %1037 = arith.addf %1036, %1025 : vector<8x64xf32>
    %1038 = arith.negf %1037 : vector<8x64xf32>
    %1039 = math.exp %1038 : vector<8x64xf32>
    %cst_407 = arith.constant 1.000000e+00 : f32
    %1040 = vector.broadcast %cst_407 : f32 to vector<8x64xf32>
    %1041 = arith.addf %1040, %1039 : vector<8x64xf32>
    %1042 = arith.divf %1040, %1041 : vector<8x64xf32>
    %1043 = vector.extract_strided_slice %827 {offsets = [56, 0], sizes = [8, 64], strides = [1, 1]} : vector<64x64xf32> to vector<8x64xf32>
    %1044 = arith.mulf %1035, %1028 : vector<8x64xf32>
    %1045 = arith.addf %1043, %1044 : vector<8x64xf32>
    %1046 = math.tanh %1045 : vector<8x64xf32>
    %cst_408 = arith.constant 1.000000e+00 : f32
    %1047 = vector.broadcast %cst_408 : f32 to vector<8x64xf32>
    %1048 = arith.subf %1047, %1042 : vector<8x64xf32>
    %1049 = arith.mulf %1048, %1046 : vector<8x64xf32>
    %1050 = arith.mulf %1042, %1023 : vector<8x64xf32>
    %1051 = arith.addf %1049, %1050 : vector<8x64xf32>
    %1052 = tpu.concatenate %855, %883, %911, %939, %967, %995, %1023, %1051 in 0 : vector<8x64xf32>, vector<8x64xf32>, vector<8x64xf32>, vector<8x64xf32>, vector<8x64xf32>, vector<8x64xf32>, vector<8x64xf32>, vector<8x64xf32> -> vector<64x64xf32>
    %c0_409 = arith.constant 0 : index
    %c0_410 = arith.constant 0 : index
    %1053 = vector.load %arg13[%c0_409, %c0_410] : memref<64x1xf32, #tpu.memory_space<vmem>>, vector<64x1xf32>
    %cst_411 = arith.constant dense<0.000000e+00> : vector<64x1xf32>
    %1054 = tpu.matmul %1052, %1053, %cst_411 {dimension_numbers = #tpu.dot_dimension_numbers<[1], [0], [0], [1], [0, 0, 1, 1], [], []>} : vector<64x64xf32>, vector<64x1xf32>, vector<64x1xf32> -> vector<64x1xf32>
    %c0_412 = arith.constant 0 : index
    %c0_413 = arith.constant 0 : index
    %1055 = vector.load %arg14[%c0_412, %c0_413] : memref<1x1xf32, #tpu.memory_space<vmem>>, vector<1x1xf32>
    %1056 = vector.broadcast %1055 : vector<1x1xf32> to vector<64x1xf32>
    %1057 = arith.addf %1054, %1056 : vector<64x1xf32>
    %1058 = vector.shape_cast %1057 : vector<64x1xf32> to vector<8x8x1xf32>
    %c0_414 = arith.constant 0 : index
    %c0_415 = arith.constant 0 : index
    %c0_416 = arith.constant 0 : index
    %1059 = vector.load %arg15[%c0_414, %c0_415, %c0_416] : memref<8x8x1xf32, #tpu.memory_space<vmem>>, vector<8x8x1xf32>
    tpu.vector_store %arg15[%c0_414, %c0_415, %c0_416], %1058 {strides = array<i32>} : memref<8x8x1xf32, #tpu.memory_space<vmem>>, vector<8x8x1xf32>,
    return
  }
  func.func @transform_0(%arg0: i32) -> (i32, i32, i32) {
    %c0_i32 = arith.constant 0 : i32
    %c0_i32_0 = arith.constant 0 : i32
    %c0_i32_1 = arith.constant 0 : i32
    return %c0_i32, %arg0, %c0_i32_0 : i32, i32, i32
  }
  func.func @transform_1(%arg0: i32) -> (i32, i32, i32) {
    %c0_i32 = arith.constant 0 : i32
    %c0_i32_0 = arith.constant 0 : i32
    %c0_i32_1 = arith.constant 0 : i32
    return %c0_i32, %arg0, %c0_i32_0 : i32, i32, i32
  }
  func.func @transform_2(%arg0: i32) -> (i32, i32, i32) {
    %c0_i32 = arith.constant 0 : i32
    %c0_i32_0 = arith.constant 0 : i32
    %c0_i32_1 = arith.constant 0 : i32
    return %c0_i32, %arg0, %c0_i32_0 : i32, i32, i32
  }
  func.func @transform_3(%arg0: i32) -> (i32, i32) {
    %c0_i32 = arith.constant 0 : i32
    %c0_i32_0 = arith.constant 0 : i32
    %c0_i32_1 = arith.constant 0 : i32
    return %c0_i32, %c0_i32_0 : i32, i32
  }
  func.func @transform_4(%arg0: i32) -> (i32, i32, i32, i32) {
    %c0_i32 = arith.constant 0 : i32
    %c0_i32_0 = arith.constant 0 : i32
    %c0_i32_1 = arith.constant 0 : i32
    %c0_i32_2 = arith.constant 0 : i32
    %c0_i32_3 = arith.constant 0 : i32
    return %c0_i32, %c0_i32_0, %c0_i32_1, %c0_i32_2 : i32, i32, i32, i32
  }
  func.func @transform_5(%arg0: i32) -> (i32, i32, i32, i32) {
    %c0_i32 = arith.constant 0 : i32
    %c0_i32_0 = arith.constant 0 : i32
    %c0_i32_1 = arith.constant 0 : i32
    %c0_i32_2 = arith.constant 0 : i32
    %c0_i32_3 = arith.constant 0 : i32
    return %c0_i32, %c0_i32_0, %c0_i32_1, %c0_i32_2 : i32, i32, i32, i32
  }
  func.func @transform_6(%arg0: i32) -> (i32, i32, i32, i32) {
    %c0_i32 = arith.constant 0 : i32
    %c0_i32_0 = arith.constant 0 : i32
    %c0_i32_1 = arith.constant 0 : i32
    %c0_i32_2 = arith.constant 0 : i32
    %c0_i32_3 = arith.constant 0 : i32
    return %c0_i32, %c0_i32_0, %c0_i32_1, %c0_i32_2 : i32, i32, i32, i32
  }
  func.func @transform_7(%arg0: i32) -> (i32, i32, i32, i32) {
    %c0_i32 = arith.constant 0 : i32
    %c0_i32_0 = arith.constant 0 : i32
    %c0_i32_1 = arith.constant 0 : i32
    %c0_i32_2 = arith.constant 0 : i32
    %c0_i32_3 = arith.constant 0 : i32
    return %c0_i32, %c0_i32_0, %c0_i32_1, %c0_i32_2 : i32, i32, i32, i32
  }
  func.func @transform_8(%arg0: i32) -> (i32, i32, i32, i32) {
    %c0_i32 = arith.constant 0 : i32
    %c0_i32_0 = arith.constant 0 : i32
    %c0_i32_1 = arith.constant 0 : i32
    %c0_i32_2 = arith.constant 0 : i32
    %c0_i32_3 = arith.constant 0 : i32
    return %c0_i32, %c0_i32_0, %c0_i32_1, %c0_i32_2 : i32, i32, i32, i32
  }
  func.func @transform_9(%arg0: i32) -> (i32, i32, i32, i32) {
    %c0_i32 = arith.constant 0 : i32
    %c0_i32_0 = arith.constant 0 : i32
    %c0_i32_1 = arith.constant 0 : i32
    %c0_i32_2 = arith.constant 0 : i32
    %c0_i32_3 = arith.constant 0 : i32
    return %c0_i32, %c0_i32_0, %c0_i32_1, %c0_i32_2 : i32, i32, i32, i32
  }
  func.func @transform_10(%arg0: i32) -> (i32, i32, i32, i32) {
    %c0_i32 = arith.constant 0 : i32
    %c0_i32_0 = arith.constant 0 : i32
    %c0_i32_1 = arith.constant 0 : i32
    %c0_i32_2 = arith.constant 0 : i32
    %c0_i32_3 = arith.constant 0 : i32
    return %c0_i32, %c0_i32_0, %c0_i32_1, %c0_i32_2 : i32, i32, i32, i32
  }
  func.func @transform_11(%arg0: i32) -> (i32, i32, i32, i32) {
    %c0_i32 = arith.constant 0 : i32
    %c0_i32_0 = arith.constant 0 : i32
    %c0_i32_1 = arith.constant 0 : i32
    %c0_i32_2 = arith.constant 0 : i32
    %c0_i32_3 = arith.constant 0 : i32
    return %c0_i32, %c0_i32_0, %c0_i32_1, %c0_i32_2 : i32, i32, i32, i32
  }
  func.func @transform_12(%arg0: i32) -> (i32, i32) {
    %c0_i32 = arith.constant 0 : i32
    %c0_i32_0 = arith.constant 0 : i32
    %c0_i32_1 = arith.constant 0 : i32
    return %c0_i32, %c0_i32_0 : i32, i32
  }
  func.func @transform_13(%arg0: i32) -> (i32, i32) {
    %c0_i32 = arith.constant 0 : i32
    %c0_i32_0 = arith.constant 0 : i32
    %c0_i32_1 = arith.constant 0 : i32
    return %c0_i32, %c0_i32_0 : i32, i32
  }
  func.func @transform_14(%arg0: i32) -> (i32, i32, i32) {
    %c0_i32 = arith.constant 0 : i32
    %c0_i32_0 = arith.constant 0 : i32
    %c0_i32_1 = arith.constant 0 : i32
    return %c0_i32, %arg0, %c0_i32_0 : i32, i32, i32
  }
}

</mosaic_0001>

<llo_original>
// kernel: client_forward.1
$region0: #{client_forward.1}
  #allocation0 [shape = 'u32[]', space=smem, size = 0x4, offset = 0x4, fixed_abs, tag = 'smem constant byte address 0x4 - core index']
  #allocation1 [shape = 'u32[72,128]{1,0:T(1,128)}', space=vmem, size = 0x9000, scoped, tag = 'internal scratch']
  #allocation2 [shape = 'f32[1,1]{1,0:T(1,128)S(1)}', space=vmem, size = 0x200, scoped, tag = 'scoped memory for client_forward.1']
  %s0 = inlined_call_operand.vmem [shape: f32[8,8,32], index: 0, kind: input, shape index: {}]
  %s1 = inlined_call_operand.vmem [shape: f32[8,8,64], index: 1, kind: input, shape index: {}]
  %s2 = inlined_call_operand.vmem [shape: f32[2,8,64], index: 2, kind: input, shape index: {}]
  %s3 = inlined_call_operand.vmem [shape: f32[32,64], index: 3, kind: input, shape index: {}]
  %s4 = inlined_call_operand.vmem [shape: f32[2,3,32,32], index: 4, kind: input, shape index: {}]
  %s5 = inlined_call_operand.vmem [shape: f32[2,3,32,32], index: 5, kind: input, shape index: {}]
  %s6 = inlined_call_operand.vmem [shape: f32[2,3,1,32], index: 6, kind: input, shape index: {}]
  %s7 = inlined_call_operand.vmem [shape: f32[2,3,1,32], index: 7, kind: input, shape index: {}]
  %s8 = inlined_call_operand.vmem [shape: f32[2,3,64,64], index: 8, kind: input, shape index: {}]
  %s9 = inlined_call_operand.vmem [shape: f32[2,3,64,64], index: 9, kind: input, shape index: {}]
  %s10 = inlined_call_operand.vmem [shape: f32[2,3,1,64], index: 10, kind: input, shape index: {}]
  %s11 = inlined_call_operand.vmem [shape: f32[2,3,1,64], index: 11, kind: input, shape index: {}]
  %s12 = inlined_call_operand.vmem [shape: f32[64,1], index: 12, kind: input, shape index: {}]
  %s13 = inlined_call_operand.<no memory space> [shape: f32[1,1], index: 13, kind: input, shape index: {}]
  %s14 = inlined_call_operand.vmem [shape: f32[8,8,1], index: 14, kind: output, shape index: {}]
  %s15 = sld [smem:[#allocation0]]
  $region66: #{client_forward.1} parent=0
    _
  %s17 = ssub.s32 1, %s15
  %s18 = scalar_select 0, %s17, %s15
  %v19 = vstv %s13
  %20 = vst [vmem:[#allocation2] sm:$0x1] %v19
  // Predicated region
  $region2: #{client_forward.1} parent=0 // pred_check
    _
  $region3: #{client_forward.1} parent=0 // pred_check_branch
    %22 = sbr.rel (0) target = $region5
  $region4: #{client_forward.1} parent=0 // pred_region
    _
  $region5: #{client_forward.1} parent=0 // pred_fallthru
    _
  // Predicated region
  $region6: #{client_forward.1} parent=0 // pred_check
    _
  $region7: #{client_forward.1} parent=0 // pred_check_branch
    %24 = sbr.rel (0) target = $region9
  $region8: #{client_forward.1} parent=0 // pred_region
    _
  $region9: #{client_forward.1} parent=0 // pred_fallthru
    _
  // Predicated region
  $region10: #{client_forward.1} parent=0 // pred_check
    _
  $region11: #{client_forward.1} parent=0 // pred_check_branch
    %26 = sbr.rel (0) target = $region13
  $region12: #{client_forward.1} parent=0 // pred_region
    _
  $region13: #{client_forward.1} parent=0 // pred_fallthru
    _
  // Predicated region
  $region14: #{client_forward.1} parent=0 // pred_check
    _
  $region15: #{client_forward.1} parent=0 // pred_check_branch
    %28 = sbr.rel (0) target = $region17
  $region16: #{client_forward.1} parent=0 // pred_region
    _
  $region17: #{client_forward.1} parent=0 // pred_fallthru
    _
  // Predicated region
  $region18: #{client_forward.1} parent=0 // pred_check
    _
  $region19: #{client_forward.1} parent=0 // pred_check_branch
    %30 = sbr.rel (0) target = $region21
  $region20: #{client_forward.1} parent=0 // pred_region
    _
  $region21: #{client_forward.1} parent=0 // pred_fallthru
    _
  // Predicated region
  $region22: #{client_forward.1} parent=0 // pred_check
    _
  $region23: #{client_forward.1} parent=0 // pred_check_branch
    %32 = sbr.rel (0) target = $region25
  $region24: #{client_forward.1} parent=0 // pred_region
    _
  $region25: #{client_forward.1} parent=0 // pred_fallthru
    _
  // Predicated region
  $region26: #{client_forward.1} parent=0 // pred_check
    _
  $region27: #{client_forward.1} parent=0 // pred_check_branch
    %34 = sbr.rel (0) target = $region29
  $region28: #{client_forward.1} parent=0 // pred_region
    _
  $region29: #{client_forward.1} parent=0 // pred_fallthru
    _
  // Predicated region
  $region30: #{client_forward.1} parent=0 // pred_check
    _
  $region31: #{client_forward.1} parent=0 // pred_check_branch
    %36 = sbr.rel (0) target = $region33
  $region32: #{client_forward.1} parent=0 // pred_region
    _
  $region33: #{client_forward.1} parent=0 // pred_fallthru
    _
  // Predicated region
  $region34: #{client_forward.1} parent=0 // pred_check
    _
  $region35: #{client_forward.1} parent=0 // pred_check_branch
    %38 = sbr.rel (0) target = $region37
  $region36: #{client_forward.1} parent=0 // pred_region
    _
  $region37: #{client_forward.1} parent=0 // pred_fallthru
    _
  // Predicated region
  $region38: #{client_forward.1} parent=0 // pred_check
    _
  $region39: #{client_forward.1} parent=0 // pred_check_branch
    %40 = sbr.rel (0) target = $region41
  $region40: #{client_forward.1} parent=0 // pred_region
    _
  $region41: #{client_forward.1} parent=0 // pred_fallthru
    _
  // Predicated region
  $region42: #{client_forward.1} parent=0 // pred_check
    _
  $region43: #{client_forward.1} parent=0 // pred_check_branch
    %42 = sbr.rel (0) target = $region45
  $region44: #{client_forward.1} parent=0 // pred_region
    _
  $region45: #{client_forward.1} parent=0 // pred_fallthru
    _
  // Predicated region
  $region46: #{client_forward.1} parent=0 // pred_check
    _
  $region47: #{client_forward.1} parent=0 // pred_check_branch
    %44 = sbr.rel (0) target = $region49
  $region48: #{client_forward.1} parent=0 // pred_region
    _
  $region49: #{client_forward.1} parent=0 // pred_fallthru
    _
  // Predicated region
  $region50: #{client_forward.1} parent=0 // pred_check
    _
  $region51: #{client_forward.1} parent=0 // pred_check_branch
    %46 = sbr.rel (0) target = $region53
  $region52: #{client_forward.1} parent=0 // pred_region
    _
  $region53: #{client_forward.1} parent=0 // pred_fallthru
    _
  // Predicated region
  $region54: #{client_forward.1} parent=0 // pred_check
    _
  $region55: #{client_forward.1} parent=0 // pred_check_branch
    %48 = sbr.rel (0) target = $region57
  $region56: #{client_forward.1} parent=0 // pred_region
    _
  $region57: #{client_forward.1} parent=0 // pred_fallthru
    _
  %v49 = vld [vmem:[%s0] sm:$0xff]
  %v50 = vld [vmem:[%s0 + $0x8] sm:$0xff]
  %v51 = vld [vmem:[%s0 + $0x10] sm:$0xff]
  %v52 = vld [vmem:[%s0 + $0x18] sm:$0xff]
  %v53 = vld [vmem:[%s0 + $0x20] sm:$0xff]
  %v54 = vld [vmem:[%s0 + $0x28] sm:$0xff]
  %v55 = vld [vmem:[%s0 + $0x30] sm:$0xff]
  %v56 = vld [vmem:[%s0 + $0x38] sm:$0xff]
  %v57 = vld [vmem:[%s4] sm:$0xff]
  %v58 = vld [vmem:[%s4 + $0x8] sm:$0xff]
  %v59 = vld [vmem:[%s4 + $0x10] sm:$0xff]
  %v60 = vld [vmem:[%s4 + $0x18] sm:$0xff]
  %s61 = scalar_lea.vmem %s4, 32
  %v62 = vld [vmem:[%s61] sm:$0xff]
  %v63 = vld [vmem:[%s61 + $0x8] sm:$0xff]
  %v64 = vld [vmem:[%s61 + $0x10] sm:$0xff]
  %v65 = vld [vmem:[%s61 + $0x18] sm:$0xff]
  %s66 = scalar_lea.vmem %s4, 64
  %v67 = vld [vmem:[%s66] sm:$0xff]
  %v68 = vld [vmem:[%s66 + $0x8] sm:$0xff]
  %v69 = vld [vmem:[%s66 + $0x10] sm:$0xff]
  %v70 = vld [vmem:[%s66 + $0x18] sm:$0xff]
  %v71 = vld [vmem:[%s5] sm:$0xff]
  %v72 = vld [vmem:[%s5 + $0x8] sm:$0xff]
  %v73 = vld [vmem:[%s5 + $0x10] sm:$0xff]
  %v74 = vld [vmem:[%s5 + $0x18] sm:$0xff]
  %s75 = scalar_lea.vmem %s5, 32
  %v76 = vld [vmem:[%s75] sm:$0xff]
  %v77 = vld [vmem:[%s75 + $0x8] sm:$0xff]
  %v78 = vld [vmem:[%s75 + $0x10] sm:$0xff]
  %v79 = vld [vmem:[%s75 + $0x18] sm:$0xff]
  %s80 = scalar_lea.vmem %s5, 64
  %v81 = vld [vmem:[%s80] sm:$0xff]
  %v82 = vld [vmem:[%s80 + $0x8] sm:$0xff]
  %v83 = vld [vmem:[%s80 + $0x10] sm:$0xff]
  %v84 = vld [vmem:[%s80 + $0x18] sm:$0xff]
  %v85 = vld [vmem:[%s6] sm:$0x1]
  %v86 = vld [vmem:[%s7] sm:$0x1]
  %v87 = vadd.f32 %v85, %v86
  %s88 = scalar_lea.vmem %s6, 1
  %v89 = vld [vmem:[%s88] sm:$0x1]
  %s90 = scalar_lea.vmem %s7, 1
  %v91 = vld [vmem:[%s90] sm:$0x1]
  %v92 = vadd.f32 %v89, %v91
  %s93 = scalar_lea.vmem %s6, 2
  %v94 = vld [vmem:[%s93] sm:$0x1]
  %s95 = scalar_lea.vmem %s7, 2
  %v96 = vld [vmem:[%s95] sm:$0x1]
  %v98 = vperm.slane %v87, 0
  %vm100 = vcmask 261120
  %v102 = vsel %vm100, %v49, 0
  %v105 = vsel %vm100, %v50, 0
  %v108 = vsel %vm100, %v51, 0
  %v111 = vsel %vm100, %v52, 0
  %v114 = vsel %vm100, %v53, 0
  %v117 = vsel %vm100, %v54, 0
  %v120 = vsel %vm100, %v55, 0
  %v123 = vsel %vm100, %v56, 0
  %125 = vmatpush.msra.mxu0 0.0
  %126 = vmatpush.msra.mxu0 0.0
  %127 = vmatpush.msra.mxu0 0.0
  %128 = vmatpush.msra.mxu0 0.0
  %129 = vmatpush.msra.mxu0 0.0
  %130 = vmatpush.msra.mxu0 0.0
  %131 = vmatpush.msra.mxu0 0.0
  %132 = vmatpush.msra.mxu0 0.0
  %133 = vmatpush.msra.mxu0 0.0
  %134 = vmatpush.msra.mxu0 0.0
  %135 = vmatpush.msra.mxu0 0.0
  %136 = vmatpush.msra.mxu0 0.0
  %137 = vmatpush.msra.mxu0 %v60
  %138 = vmatpush.msra.mxu0 %v59
  %139 = vmatpush.msra.mxu0 %v58
  %140 = vmatpush.msra.mxu0 %v57
  %141 = vmatmul.f32.gmra.mxu0 %v102
  %v142 = vpop.f32.mrf.mxu0
  %v143 = vadd.f32 %v98, %v142
  %144 = vmatmul.f32.gmra.mxu0 %v105
  %v145 = vpop.f32.mrf.mxu0
  %v146 = vadd.f32 %v98, %v145
  %147 = vmatmul.f32.gmra.mxu0 %v108
  %v148 = vpop.f32.mrf.mxu0
  %v149 = vadd.f32 %v98, %v148
  %150 = vmatmul.f32.gmra.mxu0 %v111
  %v151 = vpop.f32.mrf.mxu0
  %v152 = vadd.f32 %v98, %v151
  %153 = vmatmul.f32.gmra.mxu0 %v114
  %v154 = vpop.f32.mrf.mxu0
  %v155 = vadd.f32 %v98, %v154
  %156 = vmatmul.f32.gmra.mxu0 %v117
  %v157 = vpop.f32.mrf.mxu0
  %v158 = vadd.f32 %v98, %v157
  %159 = vmatmul.f32.gmra.mxu0 %v120
  %v160 = vpop.f32.mrf.mxu0
  %v161 = vadd.f32 %v98, %v160
  %162 = vmatmul.f32.gmra.mxu0 %v123
  %v163 = vpop.f32.mrf.mxu0
  %v164 = vadd.f32 %v98, %v163
  %165 = vdwg.mxu0
  %v167 = vperm.slane %v92, 0
  %169 = vmatpush.msra.mxu0 0.0
  %170 = vmatpush.msra.mxu0 0.0
  %171 = vmatpush.msra.mxu0 0.0
  %172 = vmatpush.msra.mxu0 0.0
  %173 = vmatpush.msra.mxu0 0.0
  %174 = vmatpush.msra.mxu0 0.0
  %175 = vmatpush.msra.mxu0 0.0
  %176 = vmatpush.msra.mxu0 0.0
  %177 = vmatpush.msra.mxu0 0.0
  %178 = vmatpush.msra.mxu0 0.0
  %179 = vmatpush.msra.mxu0 0.0
  %180 = vmatpush.msra.mxu0 0.0
  %181 = vmatpush.msra.mxu0 %v65
  %182 = vmatpush.msra.mxu0 %v64
  %183 = vmatpush.msra.mxu0 %v63
  %184 = vmatpush.msra.mxu0 %v62
  %185 = vmatmul.f32.gmra.mxu0 %v102
  %v186 = vpop.f32.mrf.mxu0
  %v187 = vadd.f32 %v167, %v186
  %188 = vmatmul.f32.gmra.mxu0 %v105
  %v189 = vpop.f32.mrf.mxu0
  %v190 = vadd.f32 %v167, %v189
  %191 = vmatmul.f32.gmra.mxu0 %v108
  %v192 = vpop.f32.mrf.mxu0
  %v193 = vadd.f32 %v167, %v192
  %194 = vmatmul.f32.gmra.mxu0 %v111
  %v195 = vpop.f32.mrf.mxu0
  %v196 = vadd.f32 %v167, %v195
  %197 = vmatmul.f32.gmra.mxu0 %v114
  %v198 = vpop.f32.mrf.mxu0
  %v199 = vadd.f32 %v167, %v198
  %200 = vmatmul.f32.gmra.mxu0 %v117
  %v201 = vpop.f32.mrf.mxu0
  %v202 = vadd.f32 %v167, %v201
  %203 = vmatmul.f32.gmra.mxu0 %v120
  %v204 = vpop.f32.mrf.mxu0
  %v205 = vadd.f32 %v167, %v204
  %206 = vmatmul.f32.gmra.mxu0 %v123
  %v207 = vpop.f32.mrf.mxu0
  %v208 = vadd.f32 %v167, %v207
  %209 = vdwg.mxu0
  %v211 = vperm.slane %v94, 0
  %213 = vmatpush.msra.mxu0 0.0
  %214 = vmatpush.msra.mxu0 0.0
  %215 = vmatpush.msra.mxu0 0.0
  %216 = vmatpush.msra.mxu0 0.0
  %217 = vmatpush.msra.mxu0 0.0
  %218 = vmatpush.msra.mxu0 0.0
  %219 = vmatpush.msra.mxu0 0.0
  %220 = vmatpush.msra.mxu0 0.0
  %221 = vmatpush.msra.mxu0 0.0
  %222 = vmatpush.msra.mxu0 0.0
  %223 = vmatpush.msra.mxu0 0.0
  %224 = vmatpush.msra.mxu0 0.0
  %225 = vmatpush.msra.mxu0 %v70
  %226 = vmatpush.msra.mxu0 %v69
  %227 = vmatpush.msra.mxu0 %v68
  %228 = vmatpush.msra.mxu0 %v67
  %229 = vmatmul.f32.gmra.mxu0 %v102
  %v230 = vpop.f32.mrf.mxu0
  %v231 = vadd.f32 %v211, %v230
  %232 = vmatmul.f32.gmra.mxu0 %v105
  %v233 = vpop.f32.mrf.mxu0
  %v234 = vadd.f32 %v211, %v233
  %235 = vmatmul.f32.gmra.mxu0 %v108
  %v236 = vpop.f32.mrf.mxu0
  %v237 = vadd.f32 %v211, %v236
  %238 = vmatmul.f32.gmra.mxu0 %v111
  %v239 = vpop.f32.mrf.mxu0
  %v240 = vadd.f32 %v211, %v239
  %241 = vmatmul.f32.gmra.mxu0 %v114
  %v242 = vpop.f32.mrf.mxu0
  %v243 = vadd.f32 %v211, %v242
  %244 = vmatmul.f32.gmra.mxu0 %v117
  %v245 = vpop.f32.mrf.mxu0
  %v246 = vadd.f32 %v211, %v245
  %247 = vmatmul.f32.gmra.mxu0 %v120
  %v248 = vpop.f32.mrf.mxu0
  %v249 = vadd.f32 %v211, %v248
  %250 = vmatmul.f32.gmra.mxu0 %v123
  %v251 = vpop.f32.mrf.mxu0
  %v252 = vadd.f32 %v211, %v251
  %253 = vdwg.mxu0
  %v255 = vsel %vm100, 0.0, 0
  %257 = vmatpush.msra.mxu0 0.0
  %258 = vmatpush.msra.mxu0 0.0
  %259 = vmatpush.msra.mxu0 0.0
  %260 = vmatpush.msra.mxu0 0.0
  %261 = vmatpush.msra.mxu0 0.0
  %262 = vmatpush.msra.mxu0 0.0
  %263 = vmatpush.msra.mxu0 0.0
  %264 = vmatpush.msra.mxu0 0.0
  %265 = vmatpush.msra.mxu0 0.0
  %266 = vmatpush.msra.mxu0 0.0
  %267 = vmatpush.msra.mxu0 0.0
  %268 = vmatpush.msra.mxu0 0.0
  %269 = vmatpush.msra.mxu0 %v74
  %270 = vmatpush.msra.mxu0 %v73
  %271 = vmatpush.msra.mxu0 %v72
  %272 = vmatpush.msra.mxu0 %v71
  %273 = vmatmul.f32.gmra.mxu0 %v255
  %v274 = vpop.f32.mrf.mxu0
  %v275 = vadd.f32 0.0, %v274
  %276 = vdwg.mxu0
  %277 = vmatpush.msra.mxu0 0.0
  %278 = vmatpush.msra.mxu0 0.0
  %279 = vmatpush.msra.mxu0 0.0
  %280 = vmatpush.msra.mxu0 0.0
  %281 = vmatpush.msra.mxu0 0.0
  %282 = vmatpush.msra.mxu0 0.0
  %283 = vmatpush.msra.mxu0 0.0
  %284 = vmatpush.msra.mxu0 0.0
  %285 = vmatpush.msra.mxu0 0.0
  %286 = vmatpush.msra.mxu0 0.0
  %287 = vmatpush.msra.mxu0 0.0
  %288 = vmatpush.msra.mxu0 0.0
  %289 = vmatpush.msra.mxu0 %v79
  %290 = vmatpush.msra.mxu0 %v78
  %291 = vmatpush.msra.mxu0 %v77
  %292 = vmatpush.msra.mxu0 %v76
  %293 = vmatmul.f32.gmra.mxu0 %v255
  %v294 = vpop.f32.mrf.mxu0
  %v295 = vadd.f32 0.0, %v294
  %296 = vdwg.mxu0
  %v298 = vperm.slane %v96, 0
  %300 = vmatpush.msra.mxu0 0.0
  %301 = vmatpush.msra.mxu0 0.0
  %302 = vmatpush.msra.mxu0 0.0
  %303 = vmatpush.msra.mxu0 0.0
  %304 = vmatpush.msra.mxu0 0.0
  %305 = vmatpush.msra.mxu0 0.0
  %306 = vmatpush.msra.mxu0 0.0
  %307 = vmatpush.msra.mxu0 0.0
  %308 = vmatpush.msra.mxu0 0.0
  %309 = vmatpush.msra.mxu0 0.0
  %310 = vmatpush.msra.mxu0 0.0
  %311 = vmatpush.msra.mxu0 0.0
  %312 = vmatpush.msra.mxu0 %v84
  %313 = vmatpush.msra.mxu0 %v83
  %314 = vmatpush.msra.mxu0 %v82
  %315 = vmatpush.msra.mxu0 %v81
  %316 = vmatmul.f32.gmra.mxu0 %v255
  %v317 = vpop.f32.mrf.mxu0
  %v318 = vadd.f32 %v298, %v317
  %319 = vdwg.mxu0
  %v320 = vadd.f32 %v143, %v275
  %v321 = vxor.u32 %v320, 2147483648
  %v322 = vmul.f32 %v321, 1.442695
  %v323 = vpow.pop %v322
  %v324 = vadd.f32 %v323, 1.0
  %v325 = vrcp.pop %v324
  %v326 = vmul.f32 %v324, %v325
  %v327 = vsub.f32 1.0, %v326
  %v328 = vmul.f32 %v325, %v327
  %v329 = vadd.f32 %v325, %v328
  %vm330 = vweird.f32 %v324
  %vm331 = vweird.f32 %v325
  %vm332 = vmor %vm330, %vm331
  %v333 = vsel %vm332, %v325, %v329
  %v334 = vand.u32 2147483647, %v324
  %vm335 = vcmp.eq.f32.partialorder %v334, 8.507059e+37
  %v336 = vand.u32 %v324, 2147483648
  %v337 = vor.u32 1.1754944e-38, %v336
  %v338 = vsel %vm335, %v337, %v333
  %v339 = vmul.f32 1.0, %v338
  %v340 = vadd.f32 %v187, %v295
  %v341 = vxor.u32 %v340, 2147483648
  %v342 = vmul.f32 %v341, 1.442695
  %v343 = vpow.pop %v342
  %v344 = vadd.f32 %v343, 1.0
  %v345 = vrcp.pop %v344
  %v346 = vmul.f32 %v344, %v345
  %v347 = vsub.f32 1.0, %v346
  %v348 = vmul.f32 %v345, %v347
  %v349 = vadd.f32 %v345, %v348
  %vm350 = vweird.f32 %v344
  %vm351 = vweird.f32 %v345
  %vm352 = vmor %vm350, %vm351
  %v353 = vsel %vm352, %v345, %v349
  %v354 = vand.u32 2147483647, %v344
  %vm355 = vcmp.eq.f32.partialorder %v354, 8.507059e+37
  %v356 = vand.u32 %v344, 2147483648
  %v357 = vor.u32 1.1754944e-38, %v356
  %v358 = vsel %vm355, %v357, %v353
  %v359 = vmul.f32 1.0, %v358
  %v360 = vmul.f32 %v339, %v318
  %v361 = vadd.f32 %v231, %v360
  %v362 = vtanh.pop %v361
  %v363 = vsub.f32 1.0, %v359
  %v364 = vmul.f32 %v363, %v362
  %v365 = vmul.f32 %v359, 0.0
  %v366 = vadd.f32 %v364, %v365
  %v368 = vsel %vm100, %v366, 0
  %370 = vmatpush.msra.mxu0 0.0
  %371 = vmatpush.msra.mxu0 0.0
  %372 = vmatpush.msra.mxu0 0.0
  %373 = vmatpush.msra.mxu0 0.0
  %374 = vmatpush.msra.mxu0 0.0
  %375 = vmatpush.msra.mxu0 0.0
  %376 = vmatpush.msra.mxu0 0.0
  %377 = vmatpush.msra.mxu0 0.0
  %378 = vmatpush.msra.mxu0 0.0
  %379 = vmatpush.msra.mxu0 0.0
  %380 = vmatpush.msra.mxu0 0.0
  %381 = vmatpush.msra.mxu0 0.0
  %382 = vmatpush.msra.mxu0 %v74
  %383 = vmatpush.msra.mxu0 %v73
  %384 = vmatpush.msra.mxu0 %v72
  %385 = vmatpush.msra.mxu0 %v71
  %386 = vmatmul.f32.gmra.mxu0 %v368
  %v387 = vpop.f32.mrf.mxu0
  %v388 = vadd.f32 0.0, %v387
  %389 = vdwg.mxu0
  %390 = vmatpush.msra.mxu0 0.0
  %391 = vmatpush.msra.mxu0 0.0
  %392 = vmatpush.msra.mxu0 0.0
  %393 = vmatpush.msra.mxu0 0.0
  %394 = vmatpush.msra.mxu0 0.0
  %395 = vmatpush.msra.mxu0 0.0
  %396 = vmatpush.msra.mxu0 0.0
  %397 = vmatpush.msra.mxu0 0.0
  %398 = vmatpush.msra.mxu0 0.0
  %399 = vmatpush.msra.mxu0 0.0
  %400 = vmatpush.msra.mxu0 0.0
  %401 = vmatpush.msra.mxu0 0.0
  %402 = vmatpush.msra.mxu0 %v79
  %403 = vmatpush.msra.mxu0 %v78
  %404 = vmatpush.msra.mxu0 %v77
  %405 = vmatpush.msra.mxu0 %v76
  %406 = vmatmul.f32.gmra.mxu0 %v368
  %v407 = vpop.f32.mrf.mxu0
  %v408 = vadd.f32 0.0, %v407
  %409 = vdwg.mxu0
  %410 = vmatpush.msra.mxu0 0.0
  %411 = vmatpush.msra.mxu0 0.0
  %412 = vmatpush.msra.mxu0 0.0
  %413 = vmatpush.msra.mxu0 0.0
  %414 = vmatpush.msra.mxu0 0.0
  %415 = vmatpush.msra.mxu0 0.0
  %416 = vmatpush.msra.mxu0 0.0
  %417 = vmatpush.msra.mxu0 0.0
  %418 = vmatpush.msra.mxu0 0.0
  %419 = vmatpush.msra.mxu0 0.0
  %420 = vmatpush.msra.mxu0 0.0
  %421 = vmatpush.msra.mxu0 0.0
  %422 = vmatpush.msra.mxu0 %v84
  %423 = vmatpush.msra.mxu0 %v83
  %424 = vmatpush.msra.mxu0 %v82
  %425 = vmatpush.msra.mxu0 %v81
  %426 = vmatmul.f32.gmra.mxu0 %v368
  %v427 = vpop.f32.mrf.mxu0
  %v428 = vadd.f32 %v298, %v427
  %429 = vdwg.mxu0
  %v430 = vadd.f32 %v146, %v388
  %v431 = vxor.u32 %v430, 2147483648
  %v432 = vmul.f32 %v431, 1.442695
  %v433 = vpow.pop %v432
  %v434 = vadd.f32 %v433, 1.0
  %v435 = vrcp.pop %v434
  %v436 = vmul.f32 %v434, %v435
  %v437 = vsub.f32 1.0, %v436
  %v438 = vmul.f32 %v435, %v437
  %v439 = vadd.f32 %v435, %v438
  %vm440 = vweird.f32 %v434
  %vm441 = vweird.f32 %v435
  %vm442 = vmor %vm440, %vm441
  %v443 = vsel %vm442, %v435, %v439
  %v444 = vand.u32 2147483647, %v434
  %vm445 = vcmp.eq.f32.partialorder %v444, 8.507059e+37
  %v446 = vand.u32 %v434, 2147483648
  %v447 = vor.u32 1.1754944e-38, %v446
  %v448 = vsel %vm445, %v447, %v443
  %v449 = vmul.f32 1.0, %v448
  %v450 = vadd.f32 %v190, %v408
  %v451 = vxor.u32 %v450, 2147483648
  %v452 = vmul.f32 %v451, 1.442695
  %v453 = vpow.pop %v452
  %v454 = vadd.f32 %v453, 1.0
  %v455 = vrcp.pop %v454
  %v456 = vmul.f32 %v454, %v455
  %v457 = vsub.f32 1.0, %v456
  %v458 = vmul.f32 %v455, %v457
  %v459 = vadd.f32 %v455, %v458
  %vm460 = vweird.f32 %v454
  %vm461 = vweird.f32 %v455
  %vm462 = vmor %vm460, %vm461
  %v463 = vsel %vm462, %v455, %v459
  %v464 = vand.u32 2147483647, %v454
  %vm465 = vcmp.eq.f32.partialorder %v464, 8.507059e+37
  %v466 = vand.u32 %v454, 2147483648
  %v467 = vor.u32 1.1754944e-38, %v466
  %v468 = vsel %vm465, %v467, %v463
  %v469 = vmul.f32 1.0, %v468
  %v470 = vmul.f32 %v449, %v428
  %v471 = vadd.f32 %v234, %v470
  %v472 = vtanh.pop %v471
  %v473 = vsub.f32 1.0, %v469
  %v474 = vmul.f32 %v473, %v472
  %v475 = vmul.f32 %v469, %v366
  %v476 = vadd.f32 %v474, %v475
  %v478 = vsel %vm100, %v476, 0
  %480 = vmatpush.msra.mxu0 0.0
  %481 = vmatpush.msra.mxu0 0.0
  %482 = vmatpush.msra.mxu0 0.0
  %483 = vmatpush.msra.mxu0 0.0
  %484 = vmatpush.msra.mxu0 0.0
  %485 = vmatpush.msra.mxu0 0.0
  %486 = vmatpush.msra.mxu0 0.0
  %487 = vmatpush.msra.mxu0 0.0
  %488 = vmatpush.msra.mxu0 0.0
  %489 = vmatpush.msra.mxu0 0.0
  %490 = vmatpush.msra.mxu0 0.0
  %491 = vmatpush.msra.mxu0 0.0
  %492 = vmatpush.msra.mxu0 %v74
  %493 = vmatpush.msra.mxu0 %v73
  %494 = vmatpush.msra.mxu0 %v72
  %495 = vmatpush.msra.mxu0 %v71
  %496 = vmatmul.f32.gmra.mxu0 %v478
  %v497 = vpop.f32.mrf.mxu0
  %v498 = vadd.f32 0.0, %v497
  %499 = vdwg.mxu0
  %500 = vmatpush.msra.mxu0 0.0
  %501 = vmatpush.msra.mxu0 0.0
  %502 = vmatpush.msra.mxu0 0.0
  %503 = vmatpush.msra.mxu0 0.0
  %504 = vmatpush.msra.mxu0 0.0
  %505 = vmatpush.msra.mxu0 0.0
  %506 = vmatpush.msra.mxu0 0.0
  %507 = vmatpush.msra.mxu0 0.0
  %508 = vmatpush.msra.mxu0 0.0
  %509 = vmatpush.msra.mxu0 0.0
  %510 = vmatpush.msra.mxu0 0.0
  %511 = vmatpush.msra.mxu0 0.0
  %512 = vmatpush.msra.mxu0 %v79
  %513 = vmatpush.msra.mxu0 %v78
  %514 = vmatpush.msra.mxu0 %v77
  %515 = vmatpush.msra.mxu0 %v76
  %516 = vmatmul.f32.gmra.mxu0 %v478
  %v517 = vpop.f32.mrf.mxu0
  %v518 = vadd.f32 0.0, %v517
  %519 = vdwg.mxu0
  %520 = vmatpush.msra.mxu0 0.0
  %521 = vmatpush.msra.mxu0 0.0
  %522 = vmatpush.msra.mxu0 0.0
  %523 = vmatpush.msra.mxu0 0.0
  %524 = vmatpush.msra.mxu0 0.0
  %525 = vmatpush.msra.mxu0 0.0
  %526 = vmatpush.msra.mxu0 0.0
  %527 = vmatpush.msra.mxu0 0.0
  %528 = vmatpush.msra.mxu0 0.0
  %529 = vmatpush.msra.mxu0 0.0
  %530 = vmatpush.msra.mxu0 0.0
  %531 = vmatpush.msra.mxu0 0.0
  %532 = vmatpush.msra.mxu0 %v84
  %533 = vmatpush.msra.mxu0 %v83
  %534 = vmatpush.msra.mxu0 %v82
  %535 = vmatpush.msra.mxu0 %v81
  %536 = vmatmul.f32.gmra.mxu0 %v478
  %v537 = vpop.f32.mrf.mxu0
  %v538 = vadd.f32 %v298, %v537
  %539 = vdwg.mxu0
  %v540 = vadd.f32 %v149, %v498
  %v541 = vxor.u32 %v540, 2147483648
  %v542 = vmul.f32 %v541, 1.442695
  %v543 = vpow.pop %v542
  %v544 = vadd.f32 %v543, 1.0
  %v545 = vrcp.pop %v544
  %v546 = vmul.f32 %v544, %v545
  %v547 = vsub.f32 1.0, %v546
  %v548 = vmul.f32 %v545, %v547
  %v549 = vadd.f32 %v545, %v548
  %vm550 = vweird.f32 %v544
  %vm551 = vweird.f32 %v545
  %vm552 = vmor %vm550, %vm551
  %v553 = vsel %vm552, %v545, %v549
  %v554 = vand.u32 2147483647, %v544
  %vm555 = vcmp.eq.f32.partialorder %v554, 8.507059e+37
  %v556 = vand.u32 %v544, 2147483648
  %v557 = vor.u32 1.1754944e-38, %v556
  %v558 = vsel %vm555, %v557, %v553
  %v559 = vmul.f32 1.0, %v558
  %v560 = vadd.f32 %v193, %v518
  %v561 = vxor.u32 %v560, 2147483648
  %v562 = vmul.f32 %v561, 1.442695
  %v563 = vpow.pop %v562
  %v564 = vadd.f32 %v563, 1.0
  %v565 = vrcp.pop %v564
  %v566 = vmul.f32 %v564, %v565
  %v567 = vsub.f32 1.0, %v566
  %v568 = vmul.f32 %v565, %v567
  %v569 = vadd.f32 %v565, %v568
  %vm570 = vweird.f32 %v564
  %vm571 = vweird.f32 %v565
  %vm572 = vmor %vm570, %vm571
  %v573 = vsel %vm572, %v565, %v569
  %v574 = vand.u32 2147483647, %v564
  %vm575 = vcmp.eq.f32.partialorder %v574, 8.507059e+37
  %v576 = vand.u32 %v564, 2147483648
  %v577 = vor.u32 1.1754944e-38, %v576
  %v578 = vsel %vm575, %v577, %v573
  %v579 = vmul.f32 1.0, %v578
  %v580 = vmul.f32 %v559, %v538
  %v581 = vadd.f32 %v237, %v580
  %v582 = vtanh.pop %v581
  %v583 = vsub.f32 1.0, %v579
  %v584 = vmul.f32 %v583, %v582
  %v585 = vmul.f32 %v579, %v476
  %v586 = vadd.f32 %v584, %v585
  %v588 = vsel %vm100, %v586, 0
  %590 = vmatpush.msra.mxu0 0.0
  %591 = vmatpush.msra.mxu0 0.0
  %592 = vmatpush.msra.mxu0 0.0
  %593 = vmatpush.msra.mxu0 0.0
  %594 = vmatpush.msra.mxu0 0.0
  %595 = vmatpush.msra.mxu0 0.0
  %596 = vmatpush.msra.mxu0 0.0
  %597 = vmatpush.msra.mxu0 0.0
  %598 = vmatpush.msra.mxu0 0.0
  %599 = vmatpush.msra.mxu0 0.0
  %600 = vmatpush.msra.mxu0 0.0
  %601 = vmatpush.msra.mxu0 0.0
  %602 = vmatpush.msra.mxu0 %v74
  %603 = vmatpush.msra.mxu0 %v73
  %604 = vmatpush.msra.mxu0 %v72
  %605 = vmatpush.msra.mxu0 %v71
  %606 = vmatmul.f32.gmra.mxu0 %v588
  %v607 = vpop.f32.mrf.mxu0
  %v608 = vadd.f32 0.0, %v607
  %609 = vdwg.mxu0
  %610 = vmatpush.msra.mxu0 0.0
  %611 = vmatpush.msra.mxu0 0.0
  %612 = vmatpush.msra.mxu0 0.0
  %613 = vmatpush.msra.mxu0 0.0
  %614 = vmatpush.msra.mxu0 0.0
  %615 = vmatpush.msra.mxu0 0.0
  %616 = vmatpush.msra.mxu0 0.0
  %617 = vmatpush.msra.mxu0 0.0
  %618 = vmatpush.msra.mxu0 0.0
  %619 = vmatpush.msra.mxu0 0.0
  %620 = vmatpush.msra.mxu0 0.0
  %621 = vmatpush.msra.mxu0 0.0
  %622 = vmatpush.msra.mxu0 %v79
  %623 = vmatpush.msra.mxu0 %v78
  %624 = vmatpush.msra.mxu0 %v77
  %625 = vmatpush.msra.mxu0 %v76
  %626 = vmatmul.f32.gmra.mxu0 %v588
  %v627 = vpop.f32.mrf.mxu0
  %v628 = vadd.f32 0.0, %v627
  %629 = vdwg.mxu0
  %630 = vmatpush.msra.mxu0 0.0
  %631 = vmatpush.msra.mxu0 0.0
  %632 = vmatpush.msra.mxu0 0.0
  %633 = vmatpush.msra.mxu0 0.0
  %634 = vmatpush.msra.mxu0 0.0
  %635 = vmatpush.msra.mxu0 0.0
  %636 = vmatpush.msra.mxu0 0.0
  %637 = vmatpush.msra.mxu0 0.0
  %638 = vmatpush.msra.mxu0 0.0
  %639 = vmatpush.msra.mxu0 0.0
  %640 = vmatpush.msra.mxu0 0.0
  %641 = vmatpush.msra.mxu0 0.0
  %642 = vmatpush.msra.mxu0 %v84
  %643 = vmatpush.msra.mxu0 %v83
  %644 = vmatpush.msra.mxu0 %v82
  %645 = vmatpush.msra.mxu0 %v81
  %646 = vmatmul.f32.gmra.mxu0 %v588
  %v647 = vpop.f32.mrf.mxu0
  %v648 = vadd.f32 %v298, %v647
  %649 = vdwg.mxu0
  %v650 = vadd.f32 %v152, %v608
  %v651 = vxor.u32 %v650, 2147483648
  %v652 = vmul.f32 %v651, 1.442695
  %v653 = vpow.pop %v652
  %v654 = vadd.f32 %v653, 1.0
  %v655 = vrcp.pop %v654
  %v656 = vmul.f32 %v654, %v655
  %v657 = vsub.f32 1.0, %v656
  %v658 = vmul.f32 %v655, %v657
  %v659 = vadd.f32 %v655, %v658
  %vm660 = vweird.f32 %v654
  %vm661 = vweird.f32 %v655
  %vm662 = vmor %vm660, %vm661
  %v663 = vsel %vm662, %v655, %v659
  %v664 = vand.u32 2147483647, %v654
  %vm665 = vcmp.eq.f32.partialorder %v664, 8.507059e+37
  %v666 = vand.u32 %v654, 2147483648
  %v667 = vor.u32 1.1754944e-38, %v666
  %v668 = vsel %vm665, %v667, %v663
  %v669 = vmul.f32 1.0, %v668
  %v670 = vadd.f32 %v196, %v628
  %v671 = vxor.u32 %v670, 2147483648
  %v672 = vmul.f32 %v671, 1.442695
  %v673 = vpow.pop %v672
  %v674 = vadd.f32 %v673, 1.0
  %v675 = vrcp.pop %v674
  %v676 = vmul.f32 %v674, %v675
  %v677 = vsub.f32 1.0, %v676
  %v678 = vmul.f32 %v675, %v677
  %v679 = vadd.f32 %v675, %v678
  %vm680 = vweird.f32 %v674
  %vm681 = vweird.f32 %v675
  %vm682 = vmor %vm680, %vm681
  %v683 = vsel %vm682, %v675, %v679
  %v684 = vand.u32 2147483647, %v674
  %vm685 = vcmp.eq.f32.partialorder %v684, 8.507059e+37
  %v686 = vand.u32 %v674, 2147483648
  %v687 = vor.u32 1.1754944e-38, %v686
  %v688 = vsel %vm685, %v687, %v683
  %v689 = vmul.f32 1.0, %v688
  %v690 = vmul.f32 %v669, %v648
  %v691 = vadd.f32 %v240, %v690
  %v692 = vtanh.pop %v691
  %v693 = vsub.f32 1.0, %v689
  %v694 = vmul.f32 %v693, %v692
  %v695 = vmul.f32 %v689, %v586
  %v696 = vadd.f32 %v694, %v695
  %v698 = vsel %vm100, %v696, 0
  %700 = vmatpush.msra.mxu0 0.0
  %701 = vmatpush.msra.mxu0 0.0
  %702 = vmatpush.msra.mxu0 0.0
  %703 = vmatpush.msra.mxu0 0.0
  %704 = vmatpush.msra.mxu0 0.0
  %705 = vmatpush.msra.mxu0 0.0
  %706 = vmatpush.msra.mxu0 0.0
  %707 = vmatpush.msra.mxu0 0.0
  %708 = vmatpush.msra.mxu0 0.0
  %709 = vmatpush.msra.mxu0 0.0
  %710 = vmatpush.msra.mxu0 0.0
  %711 = vmatpush.msra.mxu0 0.0
  %712 = vmatpush.msra.mxu0 %v74
  %713 = vmatpush.msra.mxu0 %v73
  %714 = vmatpush.msra.mxu0 %v72
  %715 = vmatpush.msra.mxu0 %v71
  %716 = vmatmul.f32.gmra.mxu0 %v698
  %v717 = vpop.f32.mrf.mxu0
  %v718 = vadd.f32 0.0, %v717
  %719 = vdwg.mxu0
  %720 = vmatpush.msra.mxu0 0.0
  %721 = vmatpush.msra.mxu0 0.0
  %722 = vmatpush.msra.mxu0 0.0
  %723 = vmatpush.msra.mxu0 0.0
  %724 = vmatpush.msra.mxu0 0.0
  %725 = vmatpush.msra.mxu0 0.0
  %726 = vmatpush.msra.mxu0 0.0
  %727 = vmatpush.msra.mxu0 0.0
  %728 = vmatpush.msra.mxu0 0.0
  %729 = vmatpush.msra.mxu0 0.0
  %730 = vmatpush.msra.mxu0 0.0
  %731 = vmatpush.msra.mxu0 0.0
  %732 = vmatpush.msra.mxu0 %v79
  %733 = vmatpush.msra.mxu0 %v78
  %734 = vmatpush.msra.mxu0 %v77
  %735 = vmatpush.msra.mxu0 %v76
  %736 = vmatmul.f32.gmra.mxu0 %v698
  %v737 = vpop.f32.mrf.mxu0
  %v738 = vadd.f32 0.0, %v737
  %739 = vdwg.mxu0
  %740 = vmatpush.msra.mxu0 0.0
  %741 = vmatpush.msra.mxu0 0.0
  %742 = vmatpush.msra.mxu0 0.0
  %743 = vmatpush.msra.mxu0 0.0
  %744 = vmatpush.msra.mxu0 0.0
  %745 = vmatpush.msra.mxu0 0.0
  %746 = vmatpush.msra.mxu0 0.0
  %747 = vmatpush.msra.mxu0 0.0
  %748 = vmatpush.msra.mxu0 0.0
  %749 = vmatpush.msra.mxu0 0.0
  %750 = vmatpush.msra.mxu0 0.0
  %751 = vmatpush.msra.mxu0 0.0
  %752 = vmatpush.msra.mxu0 %v84
  %753 = vmatpush.msra.mxu0 %v83
  %754 = vmatpush.msra.mxu0 %v82
  %755 = vmatpush.msra.mxu0 %v81
  %756 = vmatmul.f32.gmra.mxu0 %v698
  %v757 = vpop.f32.mrf.mxu0
  %v758 = vadd.f32 %v298, %v757
  %759 = vdwg.mxu0
  %v760 = vadd.f32 %v155, %v718
  %v761 = vxor.u32 %v760, 2147483648
  %v762 = vmul.f32 %v761, 1.442695
  %v763 = vpow.pop %v762
  %v764 = vadd.f32 %v763, 1.0
  %v765 = vrcp.pop %v764
  %v766 = vmul.f32 %v764, %v765
  %v767 = vsub.f32 1.0, %v766
  %v768 = vmul.f32 %v765, %v767
  %v769 = vadd.f32 %v765, %v768
  %vm770 = vweird.f32 %v764
  %vm771 = vweird.f32 %v765
  %vm772 = vmor %vm770, %vm771
  %v773 = vsel %vm772, %v765, %v769
  %v774 = vand.u32 2147483647, %v764
  %vm775 = vcmp.eq.f32.partialorder %v774, 8.507059e+37
  %v776 = vand.u32 %v764, 2147483648
  %v777 = vor.u32 1.1754944e-38, %v776
  %v778 = vsel %vm775, %v777, %v773
  %v779 = vmul.f32 1.0, %v778
  %v780 = vadd.f32 %v199, %v738
  %v781 = vxor.u32 %v780, 2147483648
  %v782 = vmul.f32 %v781, 1.442695
  %v783 = vpow.pop %v782
  %v784 = vadd.f32 %v783, 1.0
  %v785 = vrcp.pop %v784
  %v786 = vmul.f32 %v784, %v785
  %v787 = vsub.f32 1.0, %v786
  %v788 = vmul.f32 %v785, %v787
  %v789 = vadd.f32 %v785, %v788
  %vm790 = vweird.f32 %v784
  %vm791 = vweird.f32 %v785
  %vm792 = vmor %vm790, %vm791
  %v793 = vsel %vm792, %v785, %v789
  %v794 = vand.u32 2147483647, %v784
  %vm795 = vcmp.eq.f32.partialorder %v794, 8.507059e+37
  %v796 = vand.u32 %v784, 2147483648
  %v797 = vor.u32 1.1754944e-38, %v796
  %v798 = vsel %vm795, %v797, %v793
  %v799 = vmul.f32 1.0, %v798
  %v800 = vmul.f32 %v779, %v758
  %v801 = vadd.f32 %v243, %v800
  %v802 = vtanh.pop %v801
  %v803 = vsub.f32 1.0, %v799
  %v804 = vmul.f32 %v803, %v802
  %v805 = vmul.f32 %v799, %v696
  %v806 = vadd.f32 %v804, %v805
  %v808 = vsel %vm100, %v806, 0
  %810 = vmatpush.msra.mxu0 0.0
  %811 = vmatpush.msra.mxu0 0.0
  %812 = vmatpush.msra.mxu0 0.0
  %813 = vmatpush.msra.mxu0 0.0
  %814 = vmatpush.msra.mxu0 0.0
  %815 = vmatpush.msra.mxu0 0.0
  %816 = vmatpush.msra.mxu0 0.0
  %817 = vmatpush.msra.mxu0 0.0
  %818 = vmatpush.msra.mxu0 0.0
  %819 = vmatpush.msra.mxu0 0.0
  %820 = vmatpush.msra.mxu0 0.0
  %821 = vmatpush.msra.mxu0 0.0
  %822 = vmatpush.msra.mxu0 %v74
  %823 = vmatpush.msra.mxu0 %v73
  %824 = vmatpush.msra.mxu0 %v72
  %825 = vmatpush.msra.mxu0 %v71
  %826 = vmatmul.f32.gmra.mxu0 %v808
  %v827 = vpop.f32.mrf.mxu0
  %v828 = vadd.f32 0.0, %v827
  %829 = vdwg.mxu0
  %830 = vmatpush.msra.mxu0 0.0
  %831 = vmatpush.msra.mxu0 0.0
  %832 = vmatpush.msra.mxu0 0.0
  %833 = vmatpush.msra.mxu0 0.0
  %834 = vmatpush.msra.mxu0 0.0
  %835 = vmatpush.msra.mxu0 0.0
  %836 = vmatpush.msra.mxu0 0.0
  %837 = vmatpush.msra.mxu0 0.0
  %838 = vmatpush.msra.mxu0 0.0
  %839 = vmatpush.msra.mxu0 0.0
  %840 = vmatpush.msra.mxu0 0.0
  %841 = vmatpush.msra.mxu0 0.0
  %842 = vmatpush.msra.mxu0 %v79
  %843 = vmatpush.msra.mxu0 %v78
  %844 = vmatpush.msra.mxu0 %v77
  %845 = vmatpush.msra.mxu0 %v76
  %846 = vmatmul.f32.gmra.mxu0 %v808
  %v847 = vpop.f32.mrf.mxu0
  %v848 = vadd.f32 0.0, %v847
  %849 = vdwg.mxu0
  %850 = vmatpush.msra.mxu0 0.0
  %851 = vmatpush.msra.mxu0 0.0
  %852 = vmatpush.msra.mxu0 0.0
  %853 = vmatpush.msra.mxu0 0.0
  %854 = vmatpush.msra.mxu0 0.0
  %855 = vmatpush.msra.mxu0 0.0
  %856 = vmatpush.msra.mxu0 0.0
  %857 = vmatpush.msra.mxu0 0.0
  %858 = vmatpush.msra.mxu0 0.0
  %859 = vmatpush.msra.mxu0 0.0
  %860 = vmatpush.msra.mxu0 0.0
  %861 = vmatpush.msra.mxu0 0.0
  %862 = vmatpush.msra.mxu0 %v84
  %863 = vmatpush.msra.mxu0 %v83
  %864 = vmatpush.msra.mxu0 %v82
  %865 = vmatpush.msra.mxu0 %v81
  %866 = vmatmul.f32.gmra.mxu0 %v808
  %v867 = vpop.f32.mrf.mxu0
  %v868 = vadd.f32 %v298, %v867
  %869 = vdwg.mxu0
  %v870 = vadd.f32 %v158, %v828
  %v871 = vxor.u32 %v870, 2147483648
  %v872 = vmul.f32 %v871, 1.442695
  %v873 = vpow.pop %v872
  %v874 = vadd.f32 %v873, 1.0
  %v875 = vrcp.pop %v874
  %v876 = vmul.f32 %v874, %v875
  %v877 = vsub.f32 1.0, %v876
  %v878 = vmul.f32 %v875, %v877
  %v879 = vadd.f32 %v875, %v878
  %vm880 = vweird.f32 %v874
  %vm881 = vweird.f32 %v875
  %vm882 = vmor %vm880, %vm881
  %v883 = vsel %vm882, %v875, %v879
  %v884 = vand.u32 2147483647, %v874
  %vm885 = vcmp.eq.f32.partialorder %v884, 8.507059e+37
  %v886 = vand.u32 %v874, 2147483648
  %v887 = vor.u32 1.1754944e-38, %v886
  %v888 = vsel %vm885, %v887, %v883
  %v889 = vmul.f32 1.0, %v888
  %v890 = vadd.f32 %v202, %v848
  %v891 = vxor.u32 %v890, 2147483648
  %v892 = vmul.f32 %v891, 1.442695
  %v893 = vpow.pop %v892
  %v894 = vadd.f32 %v893, 1.0
  %v895 = vrcp.pop %v894
  %v896 = vmul.f32 %v894, %v895
  %v897 = vsub.f32 1.0, %v896
  %v898 = vmul.f32 %v895, %v897
  %v899 = vadd.f32 %v895, %v898
  %vm900 = vweird.f32 %v894
  %vm901 = vweird.f32 %v895
  %vm902 = vmor %vm900, %vm901
  %v903 = vsel %vm902, %v895, %v899
  %v904 = vand.u32 2147483647, %v894
  %vm905 = vcmp.eq.f32.partialorder %v904, 8.507059e+37
  %v906 = vand.u32 %v894, 2147483648
  %v907 = vor.u32 1.1754944e-38, %v906
  %v908 = vsel %vm905, %v907, %v903
  %v909 = vmul.f32 1.0, %v908
  %v910 = vmul.f32 %v889, %v868
  %v911 = vadd.f32 %v246, %v910
  %v912 = vtanh.pop %v911
  %v913 = vsub.f32 1.0, %v909
  %v914 = vmul.f32 %v913, %v912
  %v915 = vmul.f32 %v909, %v806
  %v916 = vadd.f32 %v914, %v915
  %v918 = vsel %vm100, %v916, 0
  %920 = vmatpush.msra.mxu0 0.0
  %921 = vmatpush.msra.mxu0 0.0
  %922 = vmatpush.msra.mxu0 0.0
  %923 = vmatpush.msra.mxu0 0.0
  %924 = vmatpush.msra.mxu0 0.0
  %925 = vmatpush.msra.mxu0 0.0
  %926 = vmatpush.msra.mxu0 0.0
  %927 = vmatpush.msra.mxu0 0.0
  %928 = vmatpush.msra.mxu0 0.0
  %929 = vmatpush.msra.mxu0 0.0
  %930 = vmatpush.msra.mxu0 0.0
  %931 = vmatpush.msra.mxu0 0.0
  %932 = vmatpush.msra.mxu0 %v74
  %933 = vmatpush.msra.mxu0 %v73
  %934 = vmatpush.msra.mxu0 %v72
  %935 = vmatpush.msra.mxu0 %v71
  %936 = vmatmul.f32.gmra.mxu0 %v918
  %v937 = vpop.f32.mrf.mxu0
  %v938 = vadd.f32 0.0, %v937
  %939 = vdwg.mxu0
  %940 = vmatpush.msra.mxu0 0.0
  %941 = vmatpush.msra.mxu0 0.0
  %942 = vmatpush.msra.mxu0 0.0
  %943 = vmatpush.msra.mxu0 0.0
  %944 = vmatpush.msra.mxu0 0.0
  %945 = vmatpush.msra.mxu0 0.0
  %946 = vmatpush.msra.mxu0 0.0
  %947 = vmatpush.msra.mxu0 0.0
  %948 = vmatpush.msra.mxu0 0.0
  %949 = vmatpush.msra.mxu0 0.0
  %950 = vmatpush.msra.mxu0 0.0
  %951 = vmatpush.msra.mxu0 0.0
  %952 = vmatpush.msra.mxu0 %v79
  %953 = vmatpush.msra.mxu0 %v78
  %954 = vmatpush.msra.mxu0 %v77
  %955 = vmatpush.msra.mxu0 %v76
  %956 = vmatmul.f32.gmra.mxu0 %v918
  %v957 = vpop.f32.mrf.mxu0
  %v958 = vadd.f32 0.0, %v957
  %959 = vdwg.mxu0
  %960 = vmatpush.msra.mxu0 0.0
  %961 = vmatpush.msra.mxu0 0.0
  %962 = vmatpush.msra.mxu0 0.0
  %963 = vmatpush.msra.mxu0 0.0
  %964 = vmatpush.msra.mxu0 0.0
  %965 = vmatpush.msra.mxu0 0.0
  %966 = vmatpush.msra.mxu0 0.0
  %967 = vmatpush.msra.mxu0 0.0
  %968 = vmatpush.msra.mxu0 0.0
  %969 = vmatpush.msra.mxu0 0.0
  %970 = vmatpush.msra.mxu0 0.0
  %971 = vmatpush.msra.mxu0 0.0
  %972 = vmatpush.msra.mxu0 %v84
  %973 = vmatpush.msra.mxu0 %v83
  %974 = vmatpush.msra.mxu0 %v82
  %975 = vmatpush.msra.mxu0 %v81
  %976 = vmatmul.f32.gmra.mxu0 %v918
  %v977 = vpop.f32.mrf.mxu0
  %v978 = vadd.f32 %v298, %v977
  %979 = vdwg.mxu0
  %v980 = vadd.f32 %v161, %v938
  %v981 = vxor.u32 %v980, 2147483648
  %v982 = vmul.f32 %v981, 1.442695
  %v983 = vpow.pop %v982
  %v984 = vadd.f32 %v983, 1.0
  %v985 = vrcp.pop %v984
  %v986 = vmul.f32 %v984, %v985
  %v987 = vsub.f32 1.0, %v986
  %v988 = vmul.f32 %v985, %v987
  %v989 = vadd.f32 %v985, %v988
  %vm990 = vweird.f32 %v984
  %vm991 = vweird.f32 %v985
  %vm992 = vmor %vm990, %vm991
  %v993 = vsel %vm992, %v985, %v989
  %v994 = vand.u32 2147483647, %v984
  %vm995 = vcmp.eq.f32.partialorder %v994, 8.507059e+37
  %v996 = vand.u32 %v984, 2147483648
  %v997 = vor.u32 1.1754944e-38, %v996
  %v998 = vsel %vm995, %v997, %v993
  %v999 = vmul.f32 1.0, %v998
  %v1000 = vadd.f32 %v205, %v958
  %v1001 = vxor.u32 %v1000, 2147483648
  %v1002 = vmul.f32 %v1001, 1.442695
  %v1003 = vpow.pop %v1002
  %v1004 = vadd.f32 %v1003, 1.0
  %v1005 = vrcp.pop %v1004
  %v1006 = vmul.f32 %v1004, %v1005
  %v1007 = vsub.f32 1.0, %v1006
  %v1008 = vmul.f32 %v1005, %v1007
  %v1009 = vadd.f32 %v1005, %v1008
  %vm1010 = vweird.f32 %v1004
  %vm1011 = vweird.f32 %v1005
  %vm1012 = vmor %vm1010, %vm1011
  %v1013 = vsel %vm1012, %v1005, %v1009
  %v1014 = vand.u32 2147483647, %v1004
  %vm1015 = vcmp.eq.f32.partialorder %v1014, 8.507059e+37
  %v1016 = vand.u32 %v1004, 2147483648
  %v1017 = vor.u32 1.1754944e-38, %v1016
  %v1018 = vsel %vm1015, %v1017, %v1013
  %v1019 = vmul.f32 1.0, %v1018
  %v1020 = vmul.f32 %v999, %v978
  %v1021 = vadd.f32 %v249, %v1020
  %v1022 = vtanh.pop %v1021
  %v1023 = vsub.f32 1.0, %v1019
  %v1024 = vmul.f32 %v1023, %v1022
  %v1025 = vmul.f32 %v1019, %v916
  %v1026 = vadd.f32 %v1024, %v1025
  %v1028 = vsel %vm100, %v1026, 0
  %1030 = vmatpush.msra.mxu0 0.0
  %1031 = vmatpush.msra.mxu0 0.0
  %1032 = vmatpush.msra.mxu0 0.0
  %1033 = vmatpush.msra.mxu0 0.0
  %1034 = vmatpush.msra.mxu0 0.0
  %1035 = vmatpush.msra.mxu0 0.0
  %1036 = vmatpush.msra.mxu0 0.0
  %1037 = vmatpush.msra.mxu0 0.0
  %1038 = vmatpush.msra.mxu0 0.0
  %1039 = vmatpush.msra.mxu0 0.0
  %1040 = vmatpush.msra.mxu0 0.0
  %1041 = vmatpush.msra.mxu0 0.0
  %1042 = vmatpush.msra.mxu0 %v74
  %1043 = vmatpush.msra.mxu0 %v73
  %1044 = vmatpush.msra.mxu0 %v72
  %1045 = vmatpush.msra.mxu0 %v71
  %1046 = vmatmul.f32.gmra.mxu0 %v1028
  %v1047 = vpop.f32.mrf.mxu0
  %v1048 = vadd.f32 0.0, %v1047
  %1049 = vdwg.mxu0
  %1050 = vmatpush.msra.mxu0 0.0
  %1051 = vmatpush.msra.mxu0 0.0
  %1052 = vmatpush.msra.mxu0 0.0
  %1053 = vmatpush.msra.mxu0 0.0
  %1054 = vmatpush.msra.mxu0 0.0
  %1055 = vmatpush.msra.mxu0 0.0
  %1056 = vmatpush.msra.mxu0 0.0
  %1057 = vmatpush.msra.mxu0 0.0
  %1058 = vmatpush.msra.mxu0 0.0
  %1059 = vmatpush.msra.mxu0 0.0
  %1060 = vmatpush.msra.mxu0 0.0
  %1061 = vmatpush.msra.mxu0 0.0
  %1062 = vmatpush.msra.mxu0 %v79
  %1063 = vmatpush.msra.mxu0 %v78
  %1064 = vmatpush.msra.mxu0 %v77
  %1065 = vmatpush.msra.mxu0 %v76
  %1066 = vmatmul.f32.gmra.mxu0 %v1028
  %v1067 = vpop.f32.mrf.mxu0
  %v1068 = vadd.f32 0.0, %v1067
  %1069 = vdwg.mxu0
  %1070 = vmatpush.msra.mxu0 0.0
  %1071 = vmatpush.msra.mxu0 0.0
  %1072 = vmatpush.msra.mxu0 0.0
  %1073 = vmatpush.msra.mxu0 0.0
  %1074 = vmatpush.msra.mxu0 0.0
  %1075 = vmatpush.msra.mxu0 0.0
  %1076 = vmatpush.msra.mxu0 0.0
  %1077 = vmatpush.msra.mxu0 0.0
  %1078 = vmatpush.msra.mxu0 0.0
  %1079 = vmatpush.msra.mxu0 0.0
  %1080 = vmatpush.msra.mxu0 0.0
  %1081 = vmatpush.msra.mxu0 0.0
  %1082 = vmatpush.msra.mxu0 %v84
  %1083 = vmatpush.msra.mxu0 %v83
  %1084 = vmatpush.msra.mxu0 %v82
  %1085 = vmatpush.msra.mxu0 %v81
  %1086 = vmatmul.f32.gmra.mxu0 %v1028
  %v1087 = vpop.f32.mrf.mxu0
  %v1088 = vadd.f32 %v298, %v1087
  %1089 = vdwg.mxu0
  %v1090 = vadd.f32 %v164, %v1048
  %v1091 = vxor.u32 %v1090, 2147483648
  %v1092 = vmul.f32 %v1091, 1.442695
  %v1093 = vpow.pop %v1092
  %v1094 = vadd.f32 %v1093, 1.0
  %v1095 = vrcp.pop %v1094
  %v1096 = vmul.f32 %v1094, %v1095
  %v1097 = vsub.f32 1.0, %v1096
  %v1098 = vmul.f32 %v1095, %v1097
  %v1099 = vadd.f32 %v1095, %v1098
  %vm1100 = vweird.f32 %v1094
  %vm1101 = vweird.f32 %v1095
  %vm1102 = vmor %vm1100, %vm1101
  %v1103 = vsel %vm1102, %v1095, %v1099
  %v1104 = vand.u32 2147483647, %v1094
  %vm1105 = vcmp.eq.f32.partialorder %v1104, 8.507059e+37
  %v1106 = vand.u32 %v1094, 2147483648
  %v1107 = vor.u32 1.1754944e-38, %v1106
  %v1108 = vsel %vm1105, %v1107, %v1103
  %v1109 = vmul.f32 1.0, %v1108
  %v1110 = vadd.f32 %v208, %v1068
  %v1111 = vxor.u32 %v1110, 2147483648
  %v1112 = vmul.f32 %v1111, 1.442695
  %v1113 = vpow.pop %v1112
  %v1114 = vadd.f32 %v1113, 1.0
  %v1115 = vrcp.pop %v1114
  %v1116 = vmul.f32 %v1114, %v1115
  %v1117 = vsub.f32 1.0, %v1116
  %v1118 = vmul.f32 %v1115, %v1117
  %v1119 = vadd.f32 %v1115, %v1118
  %vm1120 = vweird.f32 %v1114
  %vm1121 = vweird.f32 %v1115
  %vm1122 = vmor %vm1120, %vm1121
  %v1123 = vsel %vm1122, %v1115, %v1119
  %v1124 = vand.u32 2147483647, %v1114
  %vm1125 = vcmp.eq.f32.partialorder %v1124, 8.507059e+37
  %v1126 = vand.u32 %v1114, 2147483648
  %v1127 = vor.u32 1.1754944e-38, %v1126
  %v1128 = vsel %vm1125, %v1127, %v1123
  %v1129 = vmul.f32 1.0, %v1128
  %v1130 = vmul.f32 %v1109, %v1088
  %v1131 = vadd.f32 %v252, %v1130
  %v1132 = vtanh.pop %v1131
  %v1133 = vsub.f32 1.0, %v1129
  %v1134 = vmul.f32 %v1133, %v1132
  %v1135 = vmul.f32 %v1129, %v1026
  %v1136 = vadd.f32 %v1134, %v1135
  %s1137 = scalar_lea.vmem %s4, 96
  %v1138 = vld [vmem:[%s1137] sm:$0xff]
  %v1139 = vld [vmem:[%s1137 + $0x8] sm:$0xff]
  %v1140 = vld [vmem:[%s1137 + $0x10] sm:$0xff]
  %v1141 = vld [vmem:[%s1137 + $0x18] sm:$0xff]
  %s1142 = scalar_lea.vmem %s4, 128
  %v1143 = vld [vmem:[%s1142] sm:$0xff]
  %v1144 = vld [vmem:[%s1142 + $0x8] sm:$0xff]
  %v1145 = vld [vmem:[%s1142 + $0x10] sm:$0xff]
  %v1146 = vld [vmem:[%s1142 + $0x18] sm:$0xff]
  %s1147 = scalar_lea.vmem %s4, 160
  %v1148 = vld [vmem:[%s1147] sm:$0xff]
  %v1149 = vld [vmem:[%s1147 + $0x8] sm:$0xff]
  %v1150 = vld [vmem:[%s1147 + $0x10] sm:$0xff]
  %v1151 = vld [vmem:[%s1147 + $0x18] sm:$0xff]
  %s1152 = scalar_lea.vmem %s5, 96
  %v1153 = vld [vmem:[%s1152] sm:$0xff]
  %v1154 = vld [vmem:[%s1152 + $0x8] sm:$0xff]
  %v1155 = vld [vmem:[%s1152 + $0x10] sm:$0xff]
  %v1156 = vld [vmem:[%s1152 + $0x18] sm:$0xff]
  %s1157 = scalar_lea.vmem %s5, 128
  %v1158 = vld [vmem:[%s1157] sm:$0xff]
  %v1159 = vld [vmem:[%s1157 + $0x8] sm:$0xff]
  %v1160 = vld [vmem:[%s1157 + $0x10] sm:$0xff]
  %v1161 = vld [vmem:[%s1157 + $0x18] sm:$0xff]
  %s1162 = scalar_lea.vmem %s5, 160
  %v1163 = vld [vmem:[%s1162] sm:$0xff]
  %v1164 = vld [vmem:[%s1162 + $0x8] sm:$0xff]
  %v1165 = vld [vmem:[%s1162 + $0x10] sm:$0xff]
  %v1166 = vld [vmem:[%s1162 + $0x18] sm:$0xff]
  %s1167 = scalar_lea.vmem %s6, 3
  %v1168 = vld [vmem:[%s1167] sm:$0x1]
  %s1169 = scalar_lea.vmem %s7, 3
  %v1170 = vld [vmem:[%s1169] sm:$0x1]
  %v1171 = vadd.f32 %v1168, %v1170
  %s1172 = scalar_lea.vmem %s6, 4
  %v1173 = vld [vmem:[%s1172] sm:$0x1]
  %s1174 = scalar_lea.vmem %s7, 4
  %v1175 = vld [vmem:[%s1174] sm:$0x1]
  %v1176 = vadd.f32 %v1173, %v1175
  %s1177 = scalar_lea.vmem %s6, 5
  %v1178 = vld [vmem:[%s1177] sm:$0x1]
  %s1179 = scalar_lea.vmem %s7, 5
  %v1180 = vld [vmem:[%s1179] sm:$0x1]
  %v1182 = vperm.slane %v1171, 0
  %v1185 = vsel %vm100, %v1136, 0
  %1187 = vmatpush.msra.mxu0 0.0
  %1188 = vmatpush.msra.mxu0 0.0
  %1189 = vmatpush.msra.mxu0 0.0
  %1190 = vmatpush.msra.mxu0 0.0
  %1191 = vmatpush.msra.mxu0 0.0
  %1192 = vmatpush.msra.mxu0 0.0
  %1193 = vmatpush.msra.mxu0 0.0
  %1194 = vmatpush.msra.mxu0 0.0
  %1195 = vmatpush.msra.mxu0 0.0
  %1196 = vmatpush.msra.mxu0 0.0
  %1197 = vmatpush.msra.mxu0 0.0
  %1198 = vmatpush.msra.mxu0 0.0
  %1199 = vmatpush.msra.mxu0 %v1141
  %1200 = vmatpush.msra.mxu0 %v1140
  %1201 = vmatpush.msra.mxu0 %v1139
  %1202 = vmatpush.msra.mxu0 %v1138
  %1203 = vmatmul.f32.gmra.mxu0 %v368
  %v1204 = vpop.f32.mrf.mxu0
  %v1205 = vadd.f32 %v1182, %v1204
  %1206 = vmatmul.f32.gmra.mxu0 %v478
  %v1207 = vpop.f32.mrf.mxu0
  %v1208 = vadd.f32 %v1182, %v1207
  %1209 = vmatmul.f32.gmra.mxu0 %v588
  %v1210 = vpop.f32.mrf.mxu0
  %v1211 = vadd.f32 %v1182, %v1210
  %1212 = vmatmul.f32.gmra.mxu0 %v698
  %v1213 = vpop.f32.mrf.mxu0
  %v1214 = vadd.f32 %v1182, %v1213
  %1215 = vmatmul.f32.gmra.mxu0 %v808
  %v1216 = vpop.f32.mrf.mxu0
  %v1217 = vadd.f32 %v1182, %v1216
  %1218 = vmatmul.f32.gmra.mxu0 %v918
  %v1219 = vpop.f32.mrf.mxu0
  %v1220 = vadd.f32 %v1182, %v1219
  %1221 = vmatmul.f32.gmra.mxu0 %v1028
  %v1222 = vpop.f32.mrf.mxu0
  %v1223 = vadd.f32 %v1182, %v1222
  %1224 = vmatmul.f32.gmra.mxu0 %v1185
  %v1225 = vpop.f32.mrf.mxu0
  %v1226 = vadd.f32 %v1182, %v1225
  %1227 = vdwg.mxu0
  %v1229 = vperm.slane %v1176, 0
  %1231 = vmatpush.msra.mxu0 0.0
  %1232 = vmatpush.msra.mxu0 0.0
  %1233 = vmatpush.msra.mxu0 0.0
  %1234 = vmatpush.msra.mxu0 0.0
  %1235 = vmatpush.msra.mxu0 0.0
  %1236 = vmatpush.msra.mxu0 0.0
  %1237 = vmatpush.msra.mxu0 0.0
  %1238 = vmatpush.msra.mxu0 0.0
  %1239 = vmatpush.msra.mxu0 0.0
  %1240 = vmatpush.msra.mxu0 0.0
  %1241 = vmatpush.msra.mxu0 0.0
  %1242 = vmatpush.msra.mxu0 0.0
  %1243 = vmatpush.msra.mxu0 %v1146
  %1244 = vmatpush.msra.mxu0 %v1145
  %1245 = vmatpush.msra.mxu0 %v1144
  %1246 = vmatpush.msra.mxu0 %v1143
  %1247 = vmatmul.f32.gmra.mxu0 %v368
  %v1248 = vpop.f32.mrf.mxu0
  %v1249 = vadd.f32 %v1229, %v1248
  %1250 = vmatmul.f32.gmra.mxu0 %v478
  %v1251 = vpop.f32.mrf.mxu0
  %v1252 = vadd.f32 %v1229, %v1251
  %1253 = vmatmul.f32.gmra.mxu0 %v588
  %v1254 = vpop.f32.mrf.mxu0
  %v1255 = vadd.f32 %v1229, %v1254
  %1256 = vmatmul.f32.gmra.mxu0 %v698
  %v1257 = vpop.f32.mrf.mxu0
  %v1258 = vadd.f32 %v1229, %v1257
  %1259 = vmatmul.f32.gmra.mxu0 %v808
  %v1260 = vpop.f32.mrf.mxu0
  %v1261 = vadd.f32 %v1229, %v1260
  %1262 = vmatmul.f32.gmra.mxu0 %v918
  %v1263 = vpop.f32.mrf.mxu0
  %v1264 = vadd.f32 %v1229, %v1263
  %1265 = vmatmul.f32.gmra.mxu0 %v1028
  %v1266 = vpop.f32.mrf.mxu0
  %v1267 = vadd.f32 %v1229, %v1266
  %1268 = vmatmul.f32.gmra.mxu0 %v1185
  %v1269 = vpop.f32.mrf.mxu0
  %v1270 = vadd.f32 %v1229, %v1269
  %1271 = vdwg.mxu0
  %v1273 = vperm.slane %v1178, 0
  %1275 = vmatpush.msra.mxu0 0.0
  %1276 = vmatpush.msra.mxu0 0.0
  %1277 = vmatpush.msra.mxu0 0.0
  %1278 = vmatpush.msra.mxu0 0.0
  %1279 = vmatpush.msra.mxu0 0.0
  %1280 = vmatpush.msra.mxu0 0.0
  %1281 = vmatpush.msra.mxu0 0.0
  %1282 = vmatpush.msra.mxu0 0.0
  %1283 = vmatpush.msra.mxu0 0.0
  %1284 = vmatpush.msra.mxu0 0.0
  %1285 = vmatpush.msra.mxu0 0.0
  %1286 = vmatpush.msra.mxu0 0.0
  %1287 = vmatpush.msra.mxu0 %v1151
  %1288 = vmatpush.msra.mxu0 %v1150
  %1289 = vmatpush.msra.mxu0 %v1149
  %1290 = vmatpush.msra.mxu0 %v1148
  %1291 = vmatmul.f32.gmra.mxu0 %v368
  %v1292 = vpop.f32.mrf.mxu0
  %v1293 = vadd.f32 %v1273, %v1292
  %1294 = vmatmul.f32.gmra.mxu0 %v478
  %v1295 = vpop.f32.mrf.mxu0
  %v1296 = vadd.f32 %v1273, %v1295
  %1297 = vmatmul.f32.gmra.mxu0 %v588
  %v1298 = vpop.f32.mrf.mxu0
  %v1299 = vadd.f32 %v1273, %v1298
  %1300 = vmatmul.f32.gmra.mxu0 %v698
  %v1301 = vpop.f32.mrf.mxu0
  %v1302 = vadd.f32 %v1273, %v1301
  %1303 = vmatmul.f32.gmra.mxu0 %v808
  %v1304 = vpop.f32.mrf.mxu0
  %v1305 = vadd.f32 %v1273, %v1304
  %1306 = vmatmul.f32.gmra.mxu0 %v918
  %v1307 = vpop.f32.mrf.mxu0
  %v1308 = vadd.f32 %v1273, %v1307
  %1309 = vmatmul.f32.gmra.mxu0 %v1028
  %v1310 = vpop.f32.mrf.mxu0
  %v1311 = vadd.f32 %v1273, %v1310
  %1312 = vmatmul.f32.gmra.mxu0 %v1185
  %v1313 = vpop.f32.mrf.mxu0
  %v1314 = vadd.f32 %v1273, %v1313
  %1315 = vdwg.mxu0
  %1316 = vmatpush.msra.mxu0 0.0
  %1317 = vmatpush.msra.mxu0 0.0
  %1318 = vmatpush.msra.mxu0 0.0
  %1319 = vmatpush.msra.mxu0 0.0
  %1320 = vmatpush.msra.mxu0 0.0
  %1321 = vmatpush.msra.mxu0 0.0
  %1322 = vmatpush.msra.mxu0 0.0
  %1323 = vmatpush.msra.mxu0 0.0
  %1324 = vmatpush.msra.mxu0 0.0
  %1325 = vmatpush.msra.mxu0 0.0
  %1326 = vmatpush.msra.mxu0 0.0
  %1327 = vmatpush.msra.mxu0 0.0
  %1328 = vmatpush.msra.mxu0 %v1156
  %1329 = vmatpush.msra.mxu0 %v1155
  %1330 = vmatpush.msra.mxu0 %v1154
  %1331 = vmatpush.msra.mxu0 %v1153
  %1332 = vmatmul.f32.gmra.mxu0 %v255
  %v1333 = vpop.f32.mrf.mxu0
  %v1334 = vadd.f32 0.0, %v1333
  %1335 = vdwg.mxu0
  %1336 = vmatpush.msra.mxu0 0.0
  %1337 = vmatpush.msra.mxu0 0.0
  %1338 = vmatpush.msra.mxu0 0.0
  %1339 = vmatpush.msra.mxu0 0.0
  %1340 = vmatpush.msra.mxu0 0.0
  %1341 = vmatpush.msra.mxu0 0.0
  %1342 = vmatpush.msra.mxu0 0.0
  %1343 = vmatpush.msra.mxu0 0.0
  %1344 = vmatpush.msra.mxu0 0.0
  %1345 = vmatpush.msra.mxu0 0.0
  %1346 = vmatpush.msra.mxu0 0.0
  %1347 = vmatpush.msra.mxu0 0.0
  %1348 = vmatpush.msra.mxu0 %v1161
  %1349 = vmatpush.msra.mxu0 %v1160
  %1350 = vmatpush.msra.mxu0 %v1159
  %1351 = vmatpush.msra.mxu0 %v1158
  %1352 = vmatmul.f32.gmra.mxu0 %v255
  %v1353 = vpop.f32.mrf.mxu0
  %v1354 = vadd.f32 0.0, %v1353
  %1355 = vdwg.mxu0
  %v1357 = vperm.slane %v1180, 0
  %1359 = vmatpush.msra.mxu0 0.0
  %1360 = vmatpush.msra.mxu0 0.0
  %1361 = vmatpush.msra.mxu0 0.0
  %1362 = vmatpush.msra.mxu0 0.0
  %1363 = vmatpush.msra.mxu0 0.0
  %1364 = vmatpush.msra.mxu0 0.0
  %1365 = vmatpush.msra.mxu0 0.0
  %1366 = vmatpush.msra.mxu0 0.0
  %1367 = vmatpush.msra.mxu0 0.0
  %1368 = vmatpush.msra.mxu0 0.0
  %1369 = vmatpush.msra.mxu0 0.0
  %1370 = vmatpush.msra.mxu0 0.0
  %1371 = vmatpush.msra.mxu0 %v1166
  %1372 = vmatpush.msra.mxu0 %v1165
  %1373 = vmatpush.msra.mxu0 %v1164
  %1374 = vmatpush.msra.mxu0 %v1163
  %1375 = vmatmul.f32.gmra.mxu0 %v255
  %v1376 = vpop.f32.mrf.mxu0
  %v1377 = vadd.f32 %v1357, %v1376
  %1378 = vdwg.mxu0
  %v1379 = vadd.f32 %v1205, %v1334
  %v1380 = vxor.u32 %v1379, 2147483648
  %v1381 = vmul.f32 %v1380, 1.442695
  %v1382 = vpow.pop %v1381
  %v1383 = vadd.f32 %v1382, 1.0
  %v1384 = vrcp.pop %v1383
  %v1385 = vmul.f32 %v1383, %v1384
  %v1386 = vsub.f32 1.0, %v1385
  %v1387 = vmul.f32 %v1384, %v1386
  %v1388 = vadd.f32 %v1384, %v1387
  %vm1389 = vweird.f32 %v1383
  %vm1390 = vweird.f32 %v1384
  %vm1391 = vmor %vm1389, %vm1390
  %v1392 = vsel %vm1391, %v1384, %v1388
  %v1393 = vand.u32 2147483647, %v1383
  %vm1394 = vcmp.eq.f32.partialorder %v1393, 8.507059e+37
  %v1395 = vand.u32 %v1383, 2147483648
  %v1396 = vor.u32 1.1754944e-38, %v1395
  %v1397 = vsel %vm1394, %v1396, %v1392
  %v1398 = vmul.f32 1.0, %v1397
  %v1399 = vadd.f32 %v1249, %v1354
  %v1400 = vxor.u32 %v1399, 2147483648
  %v1401 = vmul.f32 %v1400, 1.442695
  %v1402 = vpow.pop %v1401
  %v1403 = vadd.f32 %v1402, 1.0
  %v1404 = vrcp.pop %v1403
  %v1405 = vmul.f32 %v1403, %v1404
  %v1406 = vsub.f32 1.0, %v1405
  %v1407 = vmul.f32 %v1404, %v1406
  %v1408 = vadd.f32 %v1404, %v1407
  %vm1409 = vweird.f32 %v1403
  %vm1410 = vweird.f32 %v1404
  %vm1411 = vmor %vm1409, %vm1410
  %v1412 = vsel %vm1411, %v1404, %v1408
  %v1413 = vand.u32 2147483647, %v1403
  %vm1414 = vcmp.eq.f32.partialorder %v1413, 8.507059e+37
  %v1415 = vand.u32 %v1403, 2147483648
  %v1416 = vor.u32 1.1754944e-38, %v1415
  %v1417 = vsel %vm1414, %v1416, %v1412
  %v1418 = vmul.f32 1.0, %v1417
  %v1419 = vmul.f32 %v1398, %v1377
  %v1420 = vadd.f32 %v1293, %v1419
  %v1421 = vtanh.pop %v1420
  %v1422 = vsub.f32 1.0, %v1418
  %v1423 = vmul.f32 %v1422, %v1421
  %v1424 = vmul.f32 %v1418, 0.0
  %v1425 = vadd.f32 %v1423, %v1424
  %v1427 = vsel %vm100, %v1425, 0
  %1429 = vmatpush.msra.mxu0 0.0
  %1430 = vmatpush.msra.mxu0 0.0
  %1431 = vmatpush.msra.mxu0 0.0
  %1432 = vmatpush.msra.mxu0 0.0
  %1433 = vmatpush.msra.mxu0 0.0
  %1434 = vmatpush.msra.mxu0 0.0
  %1435 = vmatpush.msra.mxu0 0.0
  %1436 = vmatpush.msra.mxu0 0.0
  %1437 = vmatpush.msra.mxu0 0.0
  %1438 = vmatpush.msra.mxu0 0.0
  %1439 = vmatpush.msra.mxu0 0.0
  %1440 = vmatpush.msra.mxu0 0.0
  %1441 = vmatpush.msra.mxu0 %v1156
  %1442 = vmatpush.msra.mxu0 %v1155
  %1443 = vmatpush.msra.mxu0 %v1154
  %1444 = vmatpush.msra.mxu0 %v1153
  %1445 = vmatmul.f32.gmra.mxu0 %v1427
  %v1446 = vpop.f32.mrf.mxu0
  %v1447 = vadd.f32 0.0, %v1446
  %1448 = vdwg.mxu0
  %1449 = vmatpush.msra.mxu0 0.0
  %1450 = vmatpush.msra.mxu0 0.0
  %1451 = vmatpush.msra.mxu0 0.0
  %1452 = vmatpush.msra.mxu0 0.0
  %1453 = vmatpush.msra.mxu0 0.0
  %1454 = vmatpush.msra.mxu0 0.0
  %1455 = vmatpush.msra.mxu0 0.0
  %1456 = vmatpush.msra.mxu0 0.0
  %1457 = vmatpush.msra.mxu0 0.0
  %1458 = vmatpush.msra.mxu0 0.0
  %1459 = vmatpush.msra.mxu0 0.0
  %1460 = vmatpush.msra.mxu0 0.0
  %1461 = vmatpush.msra.mxu0 %v1161
  %1462 = vmatpush.msra.mxu0 %v1160
  %1463 = vmatpush.msra.mxu0 %v1159
  %1464 = vmatpush.msra.mxu0 %v1158
  %1465 = vmatmul.f32.gmra.mxu0 %v1427
  %v1466 = vpop.f32.mrf.mxu0
  %v1467 = vadd.f32 0.0, %v1466
  %1468 = vdwg.mxu0
  %1469 = vmatpush.msra.mxu0 0.0
  %1470 = vmatpush.msra.mxu0 0.0
  %1471 = vmatpush.msra.mxu0 0.0
  %1472 = vmatpush.msra.mxu0 0.0
  %1473 = vmatpush.msra.mxu0 0.0
  %1474 = vmatpush.msra.mxu0 0.0
  %1475 = vmatpush.msra.mxu0 0.0
  %1476 = vmatpush.msra.mxu0 0.0
  %1477 = vmatpush.msra.mxu0 0.0
  %1478 = vmatpush.msra.mxu0 0.0
  %1479 = vmatpush.msra.mxu0 0.0
  %1480 = vmatpush.msra.mxu0 0.0
  %1481 = vmatpush.msra.mxu0 %v1166
  %1482 = vmatpush.msra.mxu0 %v1165
  %1483 = vmatpush.msra.mxu0 %v1164
  %1484 = vmatpush.msra.mxu0 %v1163
  %1485 = vmatmul.f32.gmra.mxu0 %v1427
  %v1486 = vpop.f32.mrf.mxu0
  %v1487 = vadd.f32 %v1357, %v1486
  %1488 = vdwg.mxu0
  %v1489 = vadd.f32 %v1208, %v1447
  %v1490 = vxor.u32 %v1489, 2147483648
  %v1491 = vmul.f32 %v1490, 1.442695
  %v1492 = vpow.pop %v1491
  %v1493 = vadd.f32 %v1492, 1.0
  %v1494 = vrcp.pop %v1493
  %v1495 = vmul.f32 %v1493, %v1494
  %v1496 = vsub.f32 1.0, %v1495
  %v1497 = vmul.f32 %v1494, %v1496
  %v1498 = vadd.f32 %v1494, %v1497
  %vm1499 = vweird.f32 %v1493
  %vm1500 = vweird.f32 %v1494
  %vm1501 = vmor %vm1499, %vm1500
  %v1502 = vsel %vm1501, %v1494, %v1498
  %v1503 = vand.u32 2147483647, %v1493
  %vm1504 = vcmp.eq.f32.partialorder %v1503, 8.507059e+37
  %v1505 = vand.u32 %v1493, 2147483648
  %v1506 = vor.u32 1.1754944e-38, %v1505
  %v1507 = vsel %vm1504, %v1506, %v1502
  %v1508 = vmul.f32 1.0, %v1507
  %v1509 = vadd.f32 %v1252, %v1467
  %v1510 = vxor.u32 %v1509, 2147483648
  %v1511 = vmul.f32 %v1510, 1.442695
  %v1512 = vpow.pop %v1511
  %v1513 = vadd.f32 %v1512, 1.0
  %v1514 = vrcp.pop %v1513
  %v1515 = vmul.f32 %v1513, %v1514
  %v1516 = vsub.f32 1.0, %v1515
  %v1517 = vmul.f32 %v1514, %v1516
  %v1518 = vadd.f32 %v1514, %v1517
  %vm1519 = vweird.f32 %v1513
  %vm1520 = vweird.f32 %v1514
  %vm1521 = vmor %vm1519, %vm1520
  %v1522 = vsel %vm1521, %v1514, %v1518
  %v1523 = vand.u32 2147483647, %v1513
  %vm1524 = vcmp.eq.f32.partialorder %v1523, 8.507059e+37
  %v1525 = vand.u32 %v1513, 2147483648
  %v1526 = vor.u32 1.1754944e-38, %v1525
  %v1527 = vsel %vm1524, %v1526, %v1522
  %v1528 = vmul.f32 1.0, %v1527
  %v1529 = vmul.f32 %v1508, %v1487
  %v1530 = vadd.f32 %v1296, %v1529
  %v1531 = vtanh.pop %v1530
  %v1532 = vsub.f32 1.0, %v1528
  %v1533 = vmul.f32 %v1532, %v1531
  %v1534 = vmul.f32 %v1528, %v1425
  %v1535 = vadd.f32 %v1533, %v1534
  %v1537 = vsel %vm100, %v1535, 0
  %1539 = vmatpush.msra.mxu0 0.0
  %1540 = vmatpush.msra.mxu0 0.0
  %1541 = vmatpush.msra.mxu0 0.0
  %1542 = vmatpush.msra.mxu0 0.0
  %1543 = vmatpush.msra.mxu0 0.0
  %1544 = vmatpush.msra.mxu0 0.0
  %1545 = vmatpush.msra.mxu0 0.0
  %1546 = vmatpush.msra.mxu0 0.0
  %1547 = vmatpush.msra.mxu0 0.0
  %1548 = vmatpush.msra.mxu0 0.0
  %1549 = vmatpush.msra.mxu0 0.0
  %1550 = vmatpush.msra.mxu0 0.0
  %1551 = vmatpush.msra.mxu0 %v1156
  %1552 = vmatpush.msra.mxu0 %v1155
  %1553 = vmatpush.msra.mxu0 %v1154
  %1554 = vmatpush.msra.mxu0 %v1153
  %1555 = vmatmul.f32.gmra.mxu0 %v1537
  %v1556 = vpop.f32.mrf.mxu0
  %v1557 = vadd.f32 0.0, %v1556
  %1558 = vdwg.mxu0
  %1559 = vmatpush.msra.mxu0 0.0
  %1560 = vmatpush.msra.mxu0 0.0
  %1561 = vmatpush.msra.mxu0 0.0
  %1562 = vmatpush.msra.mxu0 0.0
  %1563 = vmatpush.msra.mxu0 0.0
  %1564 = vmatpush.msra.mxu0 0.0
  %1565 = vmatpush.msra.mxu0 0.0
  %1566 = vmatpush.msra.mxu0 0.0
  %1567 = vmatpush.msra.mxu0 0.0
  %1568 = vmatpush.msra.mxu0 0.0
  %1569 = vmatpush.msra.mxu0 0.0
  %1570 = vmatpush.msra.mxu0 0.0
  %1571 = vmatpush.msra.mxu0 %v1161
  %1572 = vmatpush.msra.mxu0 %v1160
  %1573 = vmatpush.msra.mxu0 %v1159
  %1574 = vmatpush.msra.mxu0 %v1158
  %1575 = vmatmul.f32.gmra.mxu0 %v1537
  %v1576 = vpop.f32.mrf.mxu0
  %v1577 = vadd.f32 0.0, %v1576
  %1578 = vdwg.mxu0
  %1579 = vmatpush.msra.mxu0 0.0
  %1580 = vmatpush.msra.mxu0 0.0
  %1581 = vmatpush.msra.mxu0 0.0
  %1582 = vmatpush.msra.mxu0 0.0
  %1583 = vmatpush.msra.mxu0 0.0
  %1584 = vmatpush.msra.mxu0 0.0
  %1585 = vmatpush.msra.mxu0 0.0
  %1586 = vmatpush.msra.mxu0 0.0
  %1587 = vmatpush.msra.mxu0 0.0
  %1588 = vmatpush.msra.mxu0 0.0
  %1589 = vmatpush.msra.mxu0 0.0
  %1590 = vmatpush.msra.mxu0 0.0
  %1591 = vmatpush.msra.mxu0 %v1166
  %1592 = vmatpush.msra.mxu0 %v1165
  %1593 = vmatpush.msra.mxu0 %v1164
  %1594 = vmatpush.msra.mxu0 %v1163
  %1595 = vmatmul.f32.gmra.mxu0 %v1537
  %v1596 = vpop.f32.mrf.mxu0
  %v1597 = vadd.f32 %v1357, %v1596
  %1598 = vdwg.mxu0
  %v1599 = vadd.f32 %v1211, %v1557
  %v1600 = vxor.u32 %v1599, 2147483648
  %v1601 = vmul.f32 %v1600, 1.442695
  %v1602 = vpow.pop %v1601
  %v1603 = vadd.f32 %v1602, 1.0
  %v1604 = vrcp.pop %v1603
  %v1605 = vmul.f32 %v1603, %v1604
  %v1606 = vsub.f32 1.0, %v1605
  %v1607 = vmul.f32 %v1604, %v1606
  %v1608 = vadd.f32 %v1604, %v1607
  %vm1609 = vweird.f32 %v1603
  %vm1610 = vweird.f32 %v1604
  %vm1611 = vmor %vm1609, %vm1610
  %v1612 = vsel %vm1611, %v1604, %v1608
  %v1613 = vand.u32 2147483647, %v1603
  %vm1614 = vcmp.eq.f32.partialorder %v1613, 8.507059e+37
  %v1615 = vand.u32 %v1603, 2147483648
  %v1616 = vor.u32 1.1754944e-38, %v1615
  %v1617 = vsel %vm1614, %v1616, %v1612
  %v1618 = vmul.f32 1.0, %v1617
  %v1619 = vadd.f32 %v1255, %v1577
  %v1620 = vxor.u32 %v1619, 2147483648
  %v1621 = vmul.f32 %v1620, 1.442695
  %v1622 = vpow.pop %v1621
  %v1623 = vadd.f32 %v1622, 1.0
  %v1624 = vrcp.pop %v1623
  %v1625 = vmul.f32 %v1623, %v1624
  %v1626 = vsub.f32 1.0, %v1625
  %v1627 = vmul.f32 %v1624, %v1626
  %v1628 = vadd.f32 %v1624, %v1627
  %vm1629 = vweird.f32 %v1623
  %vm1630 = vweird.f32 %v1624
  %vm1631 = vmor %vm1629, %vm1630
  %v1632 = vsel %vm1631, %v1624, %v1628
  %v1633 = vand.u32 2147483647, %v1623
  %vm1634 = vcmp.eq.f32.partialorder %v1633, 8.507059e+37
  %v1635 = vand.u32 %v1623, 2147483648
  %v1636 = vor.u32 1.1754944e-38, %v1635
  %v1637 = vsel %vm1634, %v1636, %v1632
  %v1638 = vmul.f32 1.0, %v1637
  %v1639 = vmul.f32 %v1618, %v1597
  %v1640 = vadd.f32 %v1299, %v1639
  %v1641 = vtanh.pop %v1640
  %v1642 = vsub.f32 1.0, %v1638
  %v1643 = vmul.f32 %v1642, %v1641
  %v1644 = vmul.f32 %v1638, %v1535
  %v1645 = vadd.f32 %v1643, %v1644
  %v1647 = vsel %vm100, %v1645, 0
  %1649 = vmatpush.msra.mxu0 0.0
  %1650 = vmatpush.msra.mxu0 0.0
  %1651 = vmatpush.msra.mxu0 0.0
  %1652 = vmatpush.msra.mxu0 0.0
  %1653 = vmatpush.msra.mxu0 0.0
  %1654 = vmatpush.msra.mxu0 0.0
  %1655 = vmatpush.msra.mxu0 0.0
  %1656 = vmatpush.msra.mxu0 0.0
  %1657 = vmatpush.msra.mxu0 0.0
  %1658 = vmatpush.msra.mxu0 0.0
  %1659 = vmatpush.msra.mxu0 0.0
  %1660 = vmatpush.msra.mxu0 0.0
  %1661 = vmatpush.msra.mxu0 %v1156
  %1662 = vmatpush.msra.mxu0 %v1155
  %1663 = vmatpush.msra.mxu0 %v1154
  %1664 = vmatpush.msra.mxu0 %v1153
  %1665 = vmatmul.f32.gmra.mxu0 %v1647
  %v1666 = vpop.f32.mrf.mxu0
  %v1667 = vadd.f32 0.0, %v1666
  %1668 = vdwg.mxu0
  %1669 = vmatpush.msra.mxu0 0.0
  %1670 = vmatpush.msra.mxu0 0.0
  %1671 = vmatpush.msra.mxu0 0.0
  %1672 = vmatpush.msra.mxu0 0.0
  %1673 = vmatpush.msra.mxu0 0.0
  %1674 = vmatpush.msra.mxu0 0.0
  %1675 = vmatpush.msra.mxu0 0.0
  %1676 = vmatpush.msra.mxu0 0.0
  %1677 = vmatpush.msra.mxu0 0.0
  %1678 = vmatpush.msra.mxu0 0.0
  %1679 = vmatpush.msra.mxu0 0.0
  %1680 = vmatpush.msra.mxu0 0.0
  %1681 = vmatpush.msra.mxu0 %v1161
  %1682 = vmatpush.msra.mxu0 %v1160
  %1683 = vmatpush.msra.mxu0 %v1159
  %1684 = vmatpush.msra.mxu0 %v1158
  %1685 = vmatmul.f32.gmra.mxu0 %v1647
  %v1686 = vpop.f32.mrf.mxu0
  %v1687 = vadd.f32 0.0, %v1686
  %1688 = vdwg.mxu0
  %1689 = vmatpush.msra.mxu0 0.0
  %1690 = vmatpush.msra.mxu0 0.0
  %1691 = vmatpush.msra.mxu0 0.0
  %1692 = vmatpush.msra.mxu0 0.0
  %1693 = vmatpush.msra.mxu0 0.0
  %1694 = vmatpush.msra.mxu0 0.0
  %1695 = vmatpush.msra.mxu0 0.0
  %1696 = vmatpush.msra.mxu0 0.0
  %1697 = vmatpush.msra.mxu0 0.0
  %1698 = vmatpush.msra.mxu0 0.0
  %1699 = vmatpush.msra.mxu0 0.0
  %1700 = vmatpush.msra.mxu0 0.0
  %1701 = vmatpush.msra.mxu0 %v1166
  %1702 = vmatpush.msra.mxu0 %v1165
  %1703 = vmatpush.msra.mxu0 %v1164
  %1704 = vmatpush.msra.mxu0 %v1163
  %1705 = vmatmul.f32.gmra.mxu0 %v1647
  %v1706 = vpop.f32.mrf.mxu0
  %v1707 = vadd.f32 %v1357, %v1706
  %1708 = vdwg.mxu0
  %v1709 = vadd.f32 %v1214, %v1667
  %v1710 = vxor.u32 %v1709, 2147483648
  %v1711 = vmul.f32 %v1710, 1.442695
  %v1712 = vpow.pop %v1711
  %v1713 = vadd.f32 %v1712, 1.0
  %v1714 = vrcp.pop %v1713
  %v1715 = vmul.f32 %v1713, %v1714
  %v1716 = vsub.f32 1.0, %v1715
  %v1717 = vmul.f32 %v1714, %v1716
  %v1718 = vadd.f32 %v1714, %v1717
  %vm1719 = vweird.f32 %v1713
  %vm1720 = vweird.f32 %v1714
  %vm1721 = vmor %vm1719, %vm1720
  %v1722 = vsel %vm1721, %v1714, %v1718
  %v1723 = vand.u32 2147483647, %v1713
  %vm1724 = vcmp.eq.f32.partialorder %v1723, 8.507059e+37
  %v1725 = vand.u32 %v1713, 2147483648
  %v1726 = vor.u32 1.1754944e-38, %v1725
  %v1727 = vsel %vm1724, %v1726, %v1722
  %v1728 = vmul.f32 1.0, %v1727
  %v1729 = vadd.f32 %v1258, %v1687
  %v1730 = vxor.u32 %v1729, 2147483648
  %v1731 = vmul.f32 %v1730, 1.442695
  %v1732 = vpow.pop %v1731
  %v1733 = vadd.f32 %v1732, 1.0
  %v1734 = vrcp.pop %v1733
  %v1735 = vmul.f32 %v1733, %v1734
  %v1736 = vsub.f32 1.0, %v1735
  %v1737 = vmul.f32 %v1734, %v1736
  %v1738 = vadd.f32 %v1734, %v1737
  %vm1739 = vweird.f32 %v1733
  %vm1740 = vweird.f32 %v1734
  %vm1741 = vmor %vm1739, %vm1740
  %v1742 = vsel %vm1741, %v1734, %v1738
  %v1743 = vand.u32 2147483647, %v1733
  %vm1744 = vcmp.eq.f32.partialorder %v1743, 8.507059e+37
  %v1745 = vand.u32 %v1733, 2147483648
  %v1746 = vor.u32 1.1754944e-38, %v1745
  %v1747 = vsel %vm1744, %v1746, %v1742
  %v1748 = vmul.f32 1.0, %v1747
  %v1749 = vmul.f32 %v1728, %v1707
  %v1750 = vadd.f32 %v1302, %v1749
  %v1751 = vtanh.pop %v1750
  %v1752 = vsub.f32 1.0, %v1748
  %v1753 = vmul.f32 %v1752, %v1751
  %v1754 = vmul.f32 %v1748, %v1645
  %v1755 = vadd.f32 %v1753, %v1754
  %v1757 = vsel %vm100, %v1755, 0
  %1759 = vmatpush.msra.mxu0 0.0
  %1760 = vmatpush.msra.mxu0 0.0
  %1761 = vmatpush.msra.mxu0 0.0
  %1762 = vmatpush.msra.mxu0 0.0
  %1763 = vmatpush.msra.mxu0 0.0
  %1764 = vmatpush.msra.mxu0 0.0
  %1765 = vmatpush.msra.mxu0 0.0
  %1766 = vmatpush.msra.mxu0 0.0
  %1767 = vmatpush.msra.mxu0 0.0
  %1768 = vmatpush.msra.mxu0 0.0
  %1769 = vmatpush.msra.mxu0 0.0
  %1770 = vmatpush.msra.mxu0 0.0
  %1771 = vmatpush.msra.mxu0 %v1156
  %1772 = vmatpush.msra.mxu0 %v1155
  %1773 = vmatpush.msra.mxu0 %v1154
  %1774 = vmatpush.msra.mxu0 %v1153
  %1775 = vmatmul.f32.gmra.mxu0 %v1757
  %v1776 = vpop.f32.mrf.mxu0
  %v1777 = vadd.f32 0.0, %v1776
  %1778 = vdwg.mxu0
  %1779 = vmatpush.msra.mxu0 0.0
  %1780 = vmatpush.msra.mxu0 0.0
  %1781 = vmatpush.msra.mxu0 0.0
  %1782 = vmatpush.msra.mxu0 0.0
  %1783 = vmatpush.msra.mxu0 0.0
  %1784 = vmatpush.msra.mxu0 0.0
  %1785 = vmatpush.msra.mxu0 0.0
  %1786 = vmatpush.msra.mxu0 0.0
  %1787 = vmatpush.msra.mxu0 0.0
  %1788 = vmatpush.msra.mxu0 0.0
  %1789 = vmatpush.msra.mxu0 0.0
  %1790 = vmatpush.msra.mxu0 0.0
  %1791 = vmatpush.msra.mxu0 %v1161
  %1792 = vmatpush.msra.mxu0 %v1160
  %1793 = vmatpush.msra.mxu0 %v1159
  %1794 = vmatpush.msra.mxu0 %v1158
  %1795 = vmatmul.f32.gmra.mxu0 %v1757
  %v1796 = vpop.f32.mrf.mxu0
  %v1797 = vadd.f32 0.0, %v1796
  %1798 = vdwg.mxu0
  %1799 = vmatpush.msra.mxu0 0.0
  %1800 = vmatpush.msra.mxu0 0.0
  %1801 = vmatpush.msra.mxu0 0.0
  %1802 = vmatpush.msra.mxu0 0.0
  %1803 = vmatpush.msra.mxu0 0.0
  %1804 = vmatpush.msra.mxu0 0.0
  %1805 = vmatpush.msra.mxu0 0.0
  %1806 = vmatpush.msra.mxu0 0.0
  %1807 = vmatpush.msra.mxu0 0.0
  %1808 = vmatpush.msra.mxu0 0.0
  %1809 = vmatpush.msra.mxu0 0.0
  %1810 = vmatpush.msra.mxu0 0.0
  %1811 = vmatpush.msra.mxu0 %v1166
  %1812 = vmatpush.msra.mxu0 %v1165
  %1813 = vmatpush.msra.mxu0 %v1164
  %1814 = vmatpush.msra.mxu0 %v1163
  %1815 = vmatmul.f32.gmra.mxu0 %v1757
  %v1816 = vpop.f32.mrf.mxu0
  %v1817 = vadd.f32 %v1357, %v1816
  %1818 = vdwg.mxu0
  %v1819 = vadd.f32 %v1217, %v1777
  %v1820 = vxor.u32 %v1819, 2147483648
  %v1821 = vmul.f32 %v1820, 1.442695
  %v1822 = vpow.pop %v1821
  %v1823 = vadd.f32 %v1822, 1.0
  %v1824 = vrcp.pop %v1823
  %v1825 = vmul.f32 %v1823, %v1824
  %v1826 = vsub.f32 1.0, %v1825
  %v1827 = vmul.f32 %v1824, %v1826
  %v1828 = vadd.f32 %v1824, %v1827
  %vm1829 = vweird.f32 %v1823
  %vm1830 = vweird.f32 %v1824
  %vm1831 = vmor %vm1829, %vm1830
  %v1832 = vsel %vm1831, %v1824, %v1828
  %v1833 = vand.u32 2147483647, %v1823
  %vm1834 = vcmp.eq.f32.partialorder %v1833, 8.507059e+37
  %v1835 = vand.u32 %v1823, 2147483648
  %v1836 = vor.u32 1.1754944e-38, %v1835
  %v1837 = vsel %vm1834, %v1836, %v1832
  %v1838 = vmul.f32 1.0, %v1837
  %v1839 = vadd.f32 %v1261, %v1797
  %v1840 = vxor.u32 %v1839, 2147483648
  %v1841 = vmul.f32 %v1840, 1.442695
  %v1842 = vpow.pop %v1841
  %v1843 = vadd.f32 %v1842, 1.0
  %v1844 = vrcp.pop %v1843
  %v1845 = vmul.f32 %v1843, %v1844
  %v1846 = vsub.f32 1.0, %v1845
  %v1847 = vmul.f32 %v1844, %v1846
  %v1848 = vadd.f32 %v1844, %v1847
  %vm1849 = vweird.f32 %v1843
  %vm1850 = vweird.f32 %v1844
  %vm1851 = vmor %vm1849, %vm1850
  %v1852 = vsel %vm1851, %v1844, %v1848
  %v1853 = vand.u32 2147483647, %v1843
  %vm1854 = vcmp.eq.f32.partialorder %v1853, 8.507059e+37
  %v1855 = vand.u32 %v1843, 2147483648
  %v1856 = vor.u32 1.1754944e-38, %v1855
  %v1857 = vsel %vm1854, %v1856, %v1852
  %v1858 = vmul.f32 1.0, %v1857
  %v1859 = vmul.f32 %v1838, %v1817
  %v1860 = vadd.f32 %v1305, %v1859
  %v1861 = vtanh.pop %v1860
  %v1862 = vsub.f32 1.0, %v1858
  %v1863 = vmul.f32 %v1862, %v1861
  %v1864 = vmul.f32 %v1858, %v1755
  %v1865 = vadd.f32 %v1863, %v1864
  %v1867 = vsel %vm100, %v1865, 0
  %1869 = vmatpush.msra.mxu0 0.0
  %1870 = vmatpush.msra.mxu0 0.0
  %1871 = vmatpush.msra.mxu0 0.0
  %1872 = vmatpush.msra.mxu0 0.0
  %1873 = vmatpush.msra.mxu0 0.0
  %1874 = vmatpush.msra.mxu0 0.0
  %1875 = vmatpush.msra.mxu0 0.0
  %1876 = vmatpush.msra.mxu0 0.0
  %1877 = vmatpush.msra.mxu0 0.0
  %1878 = vmatpush.msra.mxu0 0.0
  %1879 = vmatpush.msra.mxu0 0.0
  %1880 = vmatpush.msra.mxu0 0.0
  %1881 = vmatpush.msra.mxu0 %v1156
  %1882 = vmatpush.msra.mxu0 %v1155
  %1883 = vmatpush.msra.mxu0 %v1154
  %1884 = vmatpush.msra.mxu0 %v1153
  %1885 = vmatmul.f32.gmra.mxu0 %v1867
  %v1886 = vpop.f32.mrf.mxu0
  %v1887 = vadd.f32 0.0, %v1886
  %1888 = vdwg.mxu0
  %1889 = vmatpush.msra.mxu0 0.0
  %1890 = vmatpush.msra.mxu0 0.0
  %1891 = vmatpush.msra.mxu0 0.0
  %1892 = vmatpush.msra.mxu0 0.0
  %1893 = vmatpush.msra.mxu0 0.0
  %1894 = vmatpush.msra.mxu0 0.0
  %1895 = vmatpush.msra.mxu0 0.0
  %1896 = vmatpush.msra.mxu0 0.0
  %1897 = vmatpush.msra.mxu0 0.0
  %1898 = vmatpush.msra.mxu0 0.0
  %1899 = vmatpush.msra.mxu0 0.0
  %1900 = vmatpush.msra.mxu0 0.0
  %1901 = vmatpush.msra.mxu0 %v1161
  %1902 = vmatpush.msra.mxu0 %v1160
  %1903 = vmatpush.msra.mxu0 %v1159
  %1904 = vmatpush.msra.mxu0 %v1158
  %1905 = vmatmul.f32.gmra.mxu0 %v1867
  %v1906 = vpop.f32.mrf.mxu0
  %v1907 = vadd.f32 0.0, %v1906
  %1908 = vdwg.mxu0
  %1909 = vmatpush.msra.mxu0 0.0
  %1910 = vmatpush.msra.mxu0 0.0
  %1911 = vmatpush.msra.mxu0 0.0
  %1912 = vmatpush.msra.mxu0 0.0
  %1913 = vmatpush.msra.mxu0 0.0
  %1914 = vmatpush.msra.mxu0 0.0
  %1915 = vmatpush.msra.mxu0 0.0
  %1916 = vmatpush.msra.mxu0 0.0
  %1917 = vmatpush.msra.mxu0 0.0
  %1918 = vmatpush.msra.mxu0 0.0
  %1919 = vmatpush.msra.mxu0 0.0
  %1920 = vmatpush.msra.mxu0 0.0
  %1921 = vmatpush.msra.mxu0 %v1166
  %1922 = vmatpush.msra.mxu0 %v1165
  %1923 = vmatpush.msra.mxu0 %v1164
  %1924 = vmatpush.msra.mxu0 %v1163
  %1925 = vmatmul.f32.gmra.mxu0 %v1867
  %v1926 = vpop.f32.mrf.mxu0
  %v1927 = vadd.f32 %v1357, %v1926
  %1928 = vdwg.mxu0
  %v1929 = vadd.f32 %v1220, %v1887
  %v1930 = vxor.u32 %v1929, 2147483648
  %v1931 = vmul.f32 %v1930, 1.442695
  %v1932 = vpow.pop %v1931
  %v1933 = vadd.f32 %v1932, 1.0
  %v1934 = vrcp.pop %v1933
  %v1935 = vmul.f32 %v1933, %v1934
  %v1936 = vsub.f32 1.0, %v1935
  %v1937 = vmul.f32 %v1934, %v1936
  %v1938 = vadd.f32 %v1934, %v1937
  %vm1939 = vweird.f32 %v1933
  %vm1940 = vweird.f32 %v1934
  %vm1941 = vmor %vm1939, %vm1940
  %v1942 = vsel %vm1941, %v1934, %v1938
  %v1943 = vand.u32 2147483647, %v1933
  %vm1944 = vcmp.eq.f32.partialorder %v1943, 8.507059e+37
  %v1945 = vand.u32 %v1933, 2147483648
  %v1946 = vor.u32 1.1754944e-38, %v1945
  %v1947 = vsel %vm1944, %v1946, %v1942
  %v1948 = vmul.f32 1.0, %v1947
  %v1949 = vadd.f32 %v1264, %v1907
  %v1950 = vxor.u32 %v1949, 2147483648
  %v1951 = vmul.f32 %v1950, 1.442695
  %v1952 = vpow.pop %v1951
  %v1953 = vadd.f32 %v1952, 1.0
  %v1954 = vrcp.pop %v1953
  %v1955 = vmul.f32 %v1953, %v1954
  %v1956 = vsub.f32 1.0, %v1955
  %v1957 = vmul.f32 %v1954, %v1956
  %v1958 = vadd.f32 %v1954, %v1957
  %vm1959 = vweird.f32 %v1953
  %vm1960 = vweird.f32 %v1954
  %vm1961 = vmor %vm1959, %vm1960
  %v1962 = vsel %vm1961, %v1954, %v1958
  %v1963 = vand.u32 2147483647, %v1953
  %vm1964 = vcmp.eq.f32.partialorder %v1963, 8.507059e+37
  %v1965 = vand.u32 %v1953, 2147483648
  %v1966 = vor.u32 1.1754944e-38, %v1965
  %v1967 = vsel %vm1964, %v1966, %v1962
  %v1968 = vmul.f32 1.0, %v1967
  %v1969 = vmul.f32 %v1948, %v1927
  %v1970 = vadd.f32 %v1308, %v1969
  %v1971 = vtanh.pop %v1970
  %v1972 = vsub.f32 1.0, %v1968
  %v1973 = vmul.f32 %v1972, %v1971
  %v1974 = vmul.f32 %v1968, %v1865
  %v1975 = vadd.f32 %v1973, %v1974
  %v1977 = vsel %vm100, %v1975, 0
  %1979 = vmatpush.msra.mxu0 0.0
  %1980 = vmatpush.msra.mxu0 0.0
  %1981 = vmatpush.msra.mxu0 0.0
  %1982 = vmatpush.msra.mxu0 0.0
  %1983 = vmatpush.msra.mxu0 0.0
  %1984 = vmatpush.msra.mxu0 0.0
  %1985 = vmatpush.msra.mxu0 0.0
  %1986 = vmatpush.msra.mxu0 0.0
  %1987 = vmatpush.msra.mxu0 0.0
  %1988 = vmatpush.msra.mxu0 0.0
  %1989 = vmatpush.msra.mxu0 0.0
  %1990 = vmatpush.msra.mxu0 0.0
  %1991 = vmatpush.msra.mxu0 %v1156
  %1992 = vmatpush.msra.mxu0 %v1155
  %1993 = vmatpush.msra.mxu0 %v1154
  %1994 = vmatpush.msra.mxu0 %v1153
  %1995 = vmatmul.f32.gmra.mxu0 %v1977
  %v1996 = vpop.f32.mrf.mxu0
  %v1997 = vadd.f32 0.0, %v1996
  %1998 = vdwg.mxu0
  %1999 = vmatpush.msra.mxu0 0.0
  %2000 = vmatpush.msra.mxu0 0.0
  %2001 = vmatpush.msra.mxu0 0.0
  %2002 = vmatpush.msra.mxu0 0.0
  %2003 = vmatpush.msra.mxu0 0.0
  %2004 = vmatpush.msra.mxu0 0.0
  %2005 = vmatpush.msra.mxu0 0.0
  %2006 = vmatpush.msra.mxu0 0.0
  %2007 = vmatpush.msra.mxu0 0.0
  %2008 = vmatpush.msra.mxu0 0.0
  %2009 = vmatpush.msra.mxu0 0.0
  %2010 = vmatpush.msra.mxu0 0.0
  %2011 = vmatpush.msra.mxu0 %v1161
  %2012 = vmatpush.msra.mxu0 %v1160
  %2013 = vmatpush.msra.mxu0 %v1159
  %2014 = vmatpush.msra.mxu0 %v1158
  %2015 = vmatmul.f32.gmra.mxu0 %v1977
  %v2016 = vpop.f32.mrf.mxu0
  %v2017 = vadd.f32 0.0, %v2016
  %2018 = vdwg.mxu0
  %2019 = vmatpush.msra.mxu0 0.0
  %2020 = vmatpush.msra.mxu0 0.0
  %2021 = vmatpush.msra.mxu0 0.0
  %2022 = vmatpush.msra.mxu0 0.0
  %2023 = vmatpush.msra.mxu0 0.0
  %2024 = vmatpush.msra.mxu0 0.0
  %2025 = vmatpush.msra.mxu0 0.0
  %2026 = vmatpush.msra.mxu0 0.0
  %2027 = vmatpush.msra.mxu0 0.0
  %2028 = vmatpush.msra.mxu0 0.0
  %2029 = vmatpush.msra.mxu0 0.0
  %2030 = vmatpush.msra.mxu0 0.0
  %2031 = vmatpush.msra.mxu0 %v1166
  %2032 = vmatpush.msra.mxu0 %v1165
  %2033 = vmatpush.msra.mxu0 %v1164
  %2034 = vmatpush.msra.mxu0 %v1163
  %2035 = vmatmul.f32.gmra.mxu0 %v1977
  %v2036 = vpop.f32.mrf.mxu0
  %v2037 = vadd.f32 %v1357, %v2036
  %2038 = vdwg.mxu0
  %v2039 = vadd.f32 %v1223, %v1997
  %v2040 = vxor.u32 %v2039, 2147483648
  %v2041 = vmul.f32 %v2040, 1.442695
  %v2042 = vpow.pop %v2041
  %v2043 = vadd.f32 %v2042, 1.0
  %v2044 = vrcp.pop %v2043
  %v2045 = vmul.f32 %v2043, %v2044
  %v2046 = vsub.f32 1.0, %v2045
  %v2047 = vmul.f32 %v2044, %v2046
  %v2048 = vadd.f32 %v2044, %v2047
  %vm2049 = vweird.f32 %v2043
  %vm2050 = vweird.f32 %v2044
  %vm2051 = vmor %vm2049, %vm2050
  %v2052 = vsel %vm2051, %v2044, %v2048
  %v2053 = vand.u32 2147483647, %v2043
  %vm2054 = vcmp.eq.f32.partialorder %v2053, 8.507059e+37
  %v2055 = vand.u32 %v2043, 2147483648
  %v2056 = vor.u32 1.1754944e-38, %v2055
  %v2057 = vsel %vm2054, %v2056, %v2052
  %v2058 = vmul.f32 1.0, %v2057
  %v2059 = vadd.f32 %v1267, %v2017
  %v2060 = vxor.u32 %v2059, 2147483648
  %v2061 = vmul.f32 %v2060, 1.442695
  %v2062 = vpow.pop %v2061
  %v2063 = vadd.f32 %v2062, 1.0
  %v2064 = vrcp.pop %v2063
  %v2065 = vmul.f32 %v2063, %v2064
  %v2066 = vsub.f32 1.0, %v2065
  %v2067 = vmul.f32 %v2064, %v2066
  %v2068 = vadd.f32 %v2064, %v2067
  %vm2069 = vweird.f32 %v2063
  %vm2070 = vweird.f32 %v2064
  %vm2071 = vmor %vm2069, %vm2070
  %v2072 = vsel %vm2071, %v2064, %v2068
  %v2073 = vand.u32 2147483647, %v2063
  %vm2074 = vcmp.eq.f32.partialorder %v2073, 8.507059e+37
  %v2075 = vand.u32 %v2063, 2147483648
  %v2076 = vor.u32 1.1754944e-38, %v2075
  %v2077 = vsel %vm2074, %v2076, %v2072
  %v2078 = vmul.f32 1.0, %v2077
  %v2079 = vmul.f32 %v2058, %v2037
  %v2080 = vadd.f32 %v1311, %v2079
  %v2081 = vtanh.pop %v2080
  %v2082 = vsub.f32 1.0, %v2078
  %v2083 = vmul.f32 %v2082, %v2081
  %v2084 = vmul.f32 %v2078, %v1975
  %v2085 = vadd.f32 %v2083, %v2084
  %v2087 = vsel %vm100, %v2085, 0
  %2089 = vmatpush.msra.mxu0 0.0
  %2090 = vmatpush.msra.mxu0 0.0
  %2091 = vmatpush.msra.mxu0 0.0
  %2092 = vmatpush.msra.mxu0 0.0
  %2093 = vmatpush.msra.mxu0 0.0
  %2094 = vmatpush.msra.mxu0 0.0
  %2095 = vmatpush.msra.mxu0 0.0
  %2096 = vmatpush.msra.mxu0 0.0
  %2097 = vmatpush.msra.mxu0 0.0
  %2098 = vmatpush.msra.mxu0 0.0
  %2099 = vmatpush.msra.mxu0 0.0
  %2100 = vmatpush.msra.mxu0 0.0
  %2101 = vmatpush.msra.mxu0 %v1156
  %2102 = vmatpush.msra.mxu0 %v1155
  %2103 = vmatpush.msra.mxu0 %v1154
  %2104 = vmatpush.msra.mxu0 %v1153
  %2105 = vmatmul.f32.gmra.mxu0 %v2087
  %v2106 = vpop.f32.mrf.mxu0
  %v2107 = vadd.f32 0.0, %v2106
  %2108 = vdwg.mxu0
  %2109 = vmatpush.msra.mxu0 0.0
  %2110 = vmatpush.msra.mxu0 0.0
  %2111 = vmatpush.msra.mxu0 0.0
  %2112 = vmatpush.msra.mxu0 0.0
  %2113 = vmatpush.msra.mxu0 0.0
  %2114 = vmatpush.msra.mxu0 0.0
  %2115 = vmatpush.msra.mxu0 0.0
  %2116 = vmatpush.msra.mxu0 0.0
  %2117 = vmatpush.msra.mxu0 0.0
  %2118 = vmatpush.msra.mxu0 0.0
  %2119 = vmatpush.msra.mxu0 0.0
  %2120 = vmatpush.msra.mxu0 0.0
  %2121 = vmatpush.msra.mxu0 %v1161
  %2122 = vmatpush.msra.mxu0 %v1160
  %2123 = vmatpush.msra.mxu0 %v1159
  %2124 = vmatpush.msra.mxu0 %v1158
  %2125 = vmatmul.f32.gmra.mxu0 %v2087
  %v2126 = vpop.f32.mrf.mxu0
  %v2127 = vadd.f32 0.0, %v2126
  %2128 = vdwg.mxu0
  %2129 = vmatpush.msra.mxu0 0.0
  %2130 = vmatpush.msra.mxu0 0.0
  %2131 = vmatpush.msra.mxu0 0.0
  %2132 = vmatpush.msra.mxu0 0.0
  %2133 = vmatpush.msra.mxu0 0.0
  %2134 = vmatpush.msra.mxu0 0.0
  %2135 = vmatpush.msra.mxu0 0.0
  %2136 = vmatpush.msra.mxu0 0.0
  %2137 = vmatpush.msra.mxu0 0.0
  %2138 = vmatpush.msra.mxu0 0.0
  %2139 = vmatpush.msra.mxu0 0.0
  %2140 = vmatpush.msra.mxu0 0.0
  %2141 = vmatpush.msra.mxu0 %v1166
  %2142 = vmatpush.msra.mxu0 %v1165
  %2143 = vmatpush.msra.mxu0 %v1164
  %2144 = vmatpush.msra.mxu0 %v1163
  %2145 = vmatmul.f32.gmra.mxu0 %v2087
  %v2146 = vpop.f32.mrf.mxu0
  %v2147 = vadd.f32 %v1357, %v2146
  %2148 = vdwg.mxu0
  %v2149 = vadd.f32 %v1226, %v2107
  %v2150 = vxor.u32 %v2149, 2147483648
  %v2151 = vmul.f32 %v2150, 1.442695
  %v2152 = vpow.pop %v2151
  %v2153 = vadd.f32 %v2152, 1.0
  %v2154 = vrcp.pop %v2153
  %v2155 = vmul.f32 %v2153, %v2154
  %v2156 = vsub.f32 1.0, %v2155
  %v2157 = vmul.f32 %v2154, %v2156
  %v2158 = vadd.f32 %v2154, %v2157
  %vm2159 = vweird.f32 %v2153
  %vm2160 = vweird.f32 %v2154
  %vm2161 = vmor %vm2159, %vm2160
  %v2162 = vsel %vm2161, %v2154, %v2158
  %v2163 = vand.u32 2147483647, %v2153
  %vm2164 = vcmp.eq.f32.partialorder %v2163, 8.507059e+37
  %v2165 = vand.u32 %v2153, 2147483648
  %v2166 = vor.u32 1.1754944e-38, %v2165
  %v2167 = vsel %vm2164, %v2166, %v2162
  %v2168 = vmul.f32 1.0, %v2167
  %v2169 = vadd.f32 %v1270, %v2127
  %v2170 = vxor.u32 %v2169, 2147483648
  %v2171 = vmul.f32 %v2170, 1.442695
  %v2172 = vpow.pop %v2171
  %v2173 = vadd.f32 %v2172, 1.0
  %v2174 = vrcp.pop %v2173
  %v2175 = vmul.f32 %v2173, %v2174
  %v2176 = vsub.f32 1.0, %v2175
  %v2177 = vmul.f32 %v2174, %v2176
  %v2178 = vadd.f32 %v2174, %v2177
  %vm2179 = vweird.f32 %v2173
  %vm2180 = vweird.f32 %v2174
  %vm2181 = vmor %vm2179, %vm2180
  %v2182 = vsel %vm2181, %v2174, %v2178
  %v2183 = vand.u32 2147483647, %v2173
  %vm2184 = vcmp.eq.f32.partialorder %v2183, 8.507059e+37
  %v2185 = vand.u32 %v2173, 2147483648
  %v2186 = vor.u32 1.1754944e-38, %v2185
  %v2187 = vsel %vm2184, %v2186, %v2182
  %v2188 = vmul.f32 1.0, %v2187
  %v2189 = vmul.f32 %v2168, %v2147
  %v2190 = vadd.f32 %v1314, %v2189
  %v2191 = vtanh.pop %v2190
  %v2192 = vsub.f32 1.0, %v2188
  %v2193 = vmul.f32 %v2192, %v2191
  %v2194 = vmul.f32 %v2188, %v2085
  %v2195 = vadd.f32 %v2193, %v2194
  %v2196 = vld [vmem:[%s3] sm:$0xff]
  %v2197 = vld [vmem:[%s3 + $0x8] sm:$0xff]
  %v2198 = vld [vmem:[%s3 + $0x10] sm:$0xff]
  %v2199 = vld [vmem:[%s3 + $0x18] sm:$0xff]
  %v2200 = vld [vmem:[%s2] sm:$0xff]
  %2201 = vmatpush.msra.mxu0 0.0
  %2202 = vmatpush.msra.mxu0 0.0
  %2203 = vmatpush.msra.mxu0 0.0
  %2204 = vmatpush.msra.mxu0 0.0
  %2205 = vmatpush.msra.mxu0 0.0
  %2206 = vmatpush.msra.mxu0 0.0
  %2207 = vmatpush.msra.mxu0 0.0
  %2208 = vmatpush.msra.mxu0 0.0
  %2209 = vmatpush.msra.mxu0 0.0
  %2210 = vmatpush.msra.mxu0 0.0
  %2211 = vmatpush.msra.mxu0 0.0
  %2212 = vmatpush.msra.mxu0 0.0
  %2213 = vmatpush.msra.mxu0 %v2199
  %2214 = vmatpush.msra.mxu0 %v2198
  %2215 = vmatpush.msra.mxu0 %v2197
  %2216 = vmatpush.msra.mxu0 %v2196
  %2217 = vmatmul.f32.gmra.mxu0 %v1185
  %v2218 = vpop.f32.mrf.mxu0
  %v2219 = vadd.f32 %v2200, %v2218
  %2220 = vdwg.mxu0
  %s2221 = scalar_lea.vmem %s2, 8
  %v2222 = vld [vmem:[%s2221] sm:$0xff]
  %v2224 = vsel %vm100, %v2195, 0
  %2226 = vmatpush.msra.mxu0 0.0
  %2227 = vmatpush.msra.mxu0 0.0
  %2228 = vmatpush.msra.mxu0 0.0
  %2229 = vmatpush.msra.mxu0 0.0
  %2230 = vmatpush.msra.mxu0 0.0
  %2231 = vmatpush.msra.mxu0 0.0
  %2232 = vmatpush.msra.mxu0 0.0
  %2233 = vmatpush.msra.mxu0 0.0
  %2234 = vmatpush.msra.mxu0 0.0
  %2235 = vmatpush.msra.mxu0 0.0
  %2236 = vmatpush.msra.mxu0 0.0
  %2237 = vmatpush.msra.mxu0 0.0
  %2238 = vmatpush.msra.mxu0 %v2199
  %2239 = vmatpush.msra.mxu0 %v2198
  %2240 = vmatpush.msra.mxu0 %v2197
  %2241 = vmatpush.msra.mxu0 %v2196
  %2242 = vmatmul.f32.gmra.mxu0 %v2224
  %v2243 = vpop.f32.mrf.mxu0
  %v2244 = vadd.f32 %v2222, %v2243
  %2245 = vdwg.mxu0
  %v2246 = vld [vmem:[%s1] sm:$0xff]
  %v2247 = vld [vmem:[%s1 + $0x8] sm:$0xff]
  %v2248 = vld [vmem:[%s1 + $0x10] sm:$0xff]
  %v2249 = vld [vmem:[%s1 + $0x18] sm:$0xff]
  %v2250 = vld [vmem:[%s1 + $0x20] sm:$0xff]
  %v2251 = vld [vmem:[%s1 + $0x28] sm:$0xff]
  %v2252 = vld [vmem:[%s1 + $0x30] sm:$0xff]
  %v2253 = vld [vmem:[%s1 + $0x38] sm:$0xff]
  %v2254 = vld [vmem:[%s8] sm:$0xff]
  %v2255 = vld [vmem:[%s8 + $0x8] sm:$0xff]
  %v2256 = vld [vmem:[%s8 + $0x10] sm:$0xff]
  %v2257 = vld [vmem:[%s8 + $0x18] sm:$0xff]
  %v2258 = vld [vmem:[%s8 + $0x20] sm:$0xff]
  %v2259 = vld [vmem:[%s8 + $0x28] sm:$0xff]
  %v2260 = vld [vmem:[%s8 + $0x30] sm:$0xff]
  %v2261 = vld [vmem:[%s8 + $0x38] sm:$0xff]
  %s2262 = scalar_lea.vmem %s8, 64
  %v2263 = vld [vmem:[%s2262] sm:$0xff]
  %v2264 = vld [vmem:[%s2262 + $0x8] sm:$0xff]
  %v2265 = vld [vmem:[%s2262 + $0x10] sm:$0xff]
  %v2266 = vld [vmem:[%s2262 + $0x18] sm:$0xff]
  %v2267 = vld [vmem:[%s2262 + $0x20] sm:$0xff]
  %v2268 = vld [vmem:[%s2262 + $0x28] sm:$0xff]
  %v2269 = vld [vmem:[%s2262 + $0x30] sm:$0xff]
  %v2270 = vld [vmem:[%s2262 + $0x38] sm:$0xff]
  %s2271 = scalar_lea.vmem %s8, 128
  %v2272 = vld [vmem:[%s2271] sm:$0xff]
  %v2273 = vld [vmem:[%s2271 + $0x8] sm:$0xff]
  %v2274 = vld [vmem:[%s2271 + $0x10] sm:$0xff]
  %v2275 = vld [vmem:[%s2271 + $0x18] sm:$0xff]
  %v2276 = vld [vmem:[%s2271 + $0x20] sm:$0xff]
  %v2277 = vld [vmem:[%s2271 + $0x28] sm:$0xff]
  %v2278 = vld [vmem:[%s2271 + $0x30] sm:$0xff]
  %v2279 = vld [vmem:[%s2271 + $0x38] sm:$0xff]
  %v2280 = vld [vmem:[%s9] sm:$0xff]
  %v2281 = vld [vmem:[%s9 + $0x8] sm:$0xff]
  %v2282 = vld [vmem:[%s9 + $0x10] sm:$0xff]
  %v2283 = vld [vmem:[%s9 + $0x18] sm:$0xff]
  %v2284 = vld [vmem:[%s9 + $0x20] sm:$0xff]
  %v2285 = vld [vmem:[%s9 + $0x28] sm:$0xff]
  %v2286 = vld [vmem:[%s9 + $0x30] sm:$0xff]
  %v2287 = vld [vmem:[%s9 + $0x38] sm:$0xff]
  %s2288 = scalar_lea.vmem %s9, 64
  %v2289 = vld [vmem:[%s2288] sm:$0xff]
  %v2290 = vld [vmem:[%s2288 + $0x8] sm:$0xff]
  %v2291 = vld [vmem:[%s2288 + $0x10] sm:$0xff]
  %v2292 = vld [vmem:[%s2288 + $0x18] sm:$0xff]
  %v2293 = vld [vmem:[%s2288 + $0x20] sm:$0xff]
  %v2294 = vld [vmem:[%s2288 + $0x28] sm:$0xff]
  %v2295 = vld [vmem:[%s2288 + $0x30] sm:$0xff]
  %v2296 = vld [vmem:[%s2288 + $0x38] sm:$0xff]
  %s2297 = scalar_lea.vmem %s9, 128
  %v2298 = vld [vmem:[%s2297] sm:$0xff]
  %v2299 = vld [vmem:[%s2297 + $0x8] sm:$0xff]
  %v2300 = vld [vmem:[%s2297 + $0x10] sm:$0xff]
  %v2301 = vld [vmem:[%s2297 + $0x18] sm:$0xff]
  %v2302 = vld [vmem:[%s2297 + $0x20] sm:$0xff]
  %v2303 = vld [vmem:[%s2297 + $0x28] sm:$0xff]
  %v2304 = vld [vmem:[%s2297 + $0x30] sm:$0xff]
  %v2305 = vld [vmem:[%s2297 + $0x38] sm:$0xff]
  %v2306 = vld [vmem:[%s10] sm:$0x1]
  %v2307 = vld [vmem:[%s11] sm:$0x1]
  %v2308 = vadd.f32 %v2306, %v2307
  %s2309 = scalar_lea.vmem %s10, 1
  %v2310 = vld [vmem:[%s2309] sm:$0x1]
  %s2311 = scalar_lea.vmem %s11, 1
  %v2312 = vld [vmem:[%s2311] sm:$0x1]
  %v2313 = vadd.f32 %v2310, %v2312
  %s2314 = scalar_lea.vmem %s10, 2
  %v2315 = vld [vmem:[%s2314] sm:$0x1]
  %s2316 = scalar_lea.vmem %s11, 2
  %v2317 = vld [vmem:[%s2316] sm:$0x1]
  %v2319 = vperm.slane %v2308, 0
  %vm2321 = vcmask 523264
  %v2323 = vsel %vm2321, %v2246, 0
  %v2326 = vsel %vm2321, %v2247, 0
  %v2329 = vsel %vm2321, %v2248, 0
  %v2332 = vsel %vm2321, %v2249, 0
  %v2335 = vsel %vm2321, %v2250, 0
  %v2338 = vsel %vm2321, %v2251, 0
  %v2341 = vsel %vm2321, %v2252, 0
  %v2344 = vsel %vm2321, %v2253, 0
  %2346 = vmatpush.msra.mxu0 0.0
  %2347 = vmatpush.msra.mxu0 0.0
  %2348 = vmatpush.msra.mxu0 0.0
  %2349 = vmatpush.msra.mxu0 0.0
  %2350 = vmatpush.msra.mxu0 0.0
  %2351 = vmatpush.msra.mxu0 0.0
  %2352 = vmatpush.msra.mxu0 0.0
  %2353 = vmatpush.msra.mxu0 0.0
  %2354 = vmatpush.msra.mxu0 %v2261
  %2355 = vmatpush.msra.mxu0 %v2260
  %2356 = vmatpush.msra.mxu0 %v2259
  %2357 = vmatpush.msra.mxu0 %v2258
  %2358 = vmatpush.msra.mxu0 %v2257
  %2359 = vmatpush.msra.mxu0 %v2256
  %2360 = vmatpush.msra.mxu0 %v2255
  %2361 = vmatpush.msra.mxu0 %v2254
  %2362 = vmatmul.f32.gmra.mxu0 %v2323
  %v2363 = vpop.f32.mrf.mxu0
  %v2364 = vadd.f32 %v2319, %v2363
  %2365 = vmatmul.f32.gmra.mxu0 %v2326
  %v2366 = vpop.f32.mrf.mxu0
  %v2367 = vadd.f32 %v2319, %v2366
  %2368 = vmatmul.f32.gmra.mxu0 %v2329
  %v2369 = vpop.f32.mrf.mxu0
  %v2370 = vadd.f32 %v2319, %v2369
  %2371 = vmatmul.f32.gmra.mxu0 %v2332
  %v2372 = vpop.f32.mrf.mxu0
  %v2373 = vadd.f32 %v2319, %v2372
  %2374 = vmatmul.f32.gmra.mxu0 %v2335
  %v2375 = vpop.f32.mrf.mxu0
  %v2376 = vadd.f32 %v2319, %v2375
  %2377 = vmatmul.f32.gmra.mxu0 %v2338
  %v2378 = vpop.f32.mrf.mxu0
  %v2379 = vadd.f32 %v2319, %v2378
  %2380 = vmatmul.f32.gmra.mxu0 %v2341
  %v2381 = vpop.f32.mrf.mxu0
  %v2382 = vadd.f32 %v2319, %v2381
  %2383 = vmatmul.f32.gmra.mxu0 %v2344
  %v2384 = vpop.f32.mrf.mxu0
  %v2385 = vadd.f32 %v2319, %v2384
  %2386 = vdwg.mxu0
  %v2388 = vperm.slane %v2313, 0
  %2390 = vmatpush.msra.mxu0 0.0
  %2391 = vmatpush.msra.mxu0 0.0
  %2392 = vmatpush.msra.mxu0 0.0
  %2393 = vmatpush.msra.mxu0 0.0
  %2394 = vmatpush.msra.mxu0 0.0
  %2395 = vmatpush.msra.mxu0 0.0
  %2396 = vmatpush.msra.mxu0 0.0
  %2397 = vmatpush.msra.mxu0 0.0
  %2398 = vmatpush.msra.mxu0 %v2270
  %2399 = vmatpush.msra.mxu0 %v2269
  %2400 = vmatpush.msra.mxu0 %v2268
  %2401 = vmatpush.msra.mxu0 %v2267
  %2402 = vmatpush.msra.mxu0 %v2266
  %2403 = vmatpush.msra.mxu0 %v2265
  %2404 = vmatpush.msra.mxu0 %v2264
  %2405 = vmatpush.msra.mxu0 %v2263
  %2406 = vmatmul.f32.gmra.mxu0 %v2323
  %v2407 = vpop.f32.mrf.mxu0
  %v2408 = vadd.f32 %v2388, %v2407
  %2409 = vmatmul.f32.gmra.mxu0 %v2326
  %v2410 = vpop.f32.mrf.mxu0
  %v2411 = vadd.f32 %v2388, %v2410
  %2412 = vmatmul.f32.gmra.mxu0 %v2329
  %v2413 = vpop.f32.mrf.mxu0
  %v2414 = vadd.f32 %v2388, %v2413
  %2415 = vmatmul.f32.gmra.mxu0 %v2332
  %v2416 = vpop.f32.mrf.mxu0
  %v2417 = vadd.f32 %v2388, %v2416
  %2418 = vmatmul.f32.gmra.mxu0 %v2335
  %v2419 = vpop.f32.mrf.mxu0
  %v2420 = vadd.f32 %v2388, %v2419
  %2421 = vmatmul.f32.gmra.mxu0 %v2338
  %v2422 = vpop.f32.mrf.mxu0
  %v2423 = vadd.f32 %v2388, %v2422
  %2424 = vmatmul.f32.gmra.mxu0 %v2341
  %v2425 = vpop.f32.mrf.mxu0
  %v2426 = vadd.f32 %v2388, %v2425
  %2427 = vmatmul.f32.gmra.mxu0 %v2344
  %v2428 = vpop.f32.mrf.mxu0
  %v2429 = vadd.f32 %v2388, %v2428
  %2430 = vdwg.mxu0
  %v2432 = vperm.slane %v2315, 0
  %2434 = vmatpush.msra.mxu0 0.0
  %2435 = vmatpush.msra.mxu0 0.0
  %2436 = vmatpush.msra.mxu0 0.0
  %2437 = vmatpush.msra.mxu0 0.0
  %2438 = vmatpush.msra.mxu0 0.0
  %2439 = vmatpush.msra.mxu0 0.0
  %2440 = vmatpush.msra.mxu0 0.0
  %2441 = vmatpush.msra.mxu0 0.0
  %2442 = vmatpush.msra.mxu0 %v2279
  %2443 = vmatpush.msra.mxu0 %v2278
  %2444 = vmatpush.msra.mxu0 %v2277
  %2445 = vmatpush.msra.mxu0 %v2276
  %2446 = vmatpush.msra.mxu0 %v2275
  %2447 = vmatpush.msra.mxu0 %v2274
  %2448 = vmatpush.msra.mxu0 %v2273
  %2449 = vmatpush.msra.mxu0 %v2272
  %2450 = vmatmul.f32.gmra.mxu0 %v2323
  %v2451 = vpop.f32.mrf.mxu0
  %v2452 = vadd.f32 %v2432, %v2451
  %2453 = vmatmul.f32.gmra.mxu0 %v2326
  %v2454 = vpop.f32.mrf.mxu0
  %v2455 = vadd.f32 %v2432, %v2454
  %2456 = vmatmul.f32.gmra.mxu0 %v2329
  %v2457 = vpop.f32.mrf.mxu0
  %v2458 = vadd.f32 %v2432, %v2457
  %2459 = vmatmul.f32.gmra.mxu0 %v2332
  %v2460 = vpop.f32.mrf.mxu0
  %v2461 = vadd.f32 %v2432, %v2460
  %2462 = vmatmul.f32.gmra.mxu0 %v2335
  %v2463 = vpop.f32.mrf.mxu0
  %v2464 = vadd.f32 %v2432, %v2463
  %2465 = vmatmul.f32.gmra.mxu0 %v2338
  %v2466 = vpop.f32.mrf.mxu0
  %v2467 = vadd.f32 %v2432, %v2466
  %2468 = vmatmul.f32.gmra.mxu0 %v2341
  %v2469 = vpop.f32.mrf.mxu0
  %v2470 = vadd.f32 %v2432, %v2469
  %2471 = vmatmul.f32.gmra.mxu0 %v2344
  %v2472 = vpop.f32.mrf.mxu0
  %v2473 = vadd.f32 %v2432, %v2472
  %2474 = vdwg.mxu0
  %v2476 = vsel %vm2321, %v2219, 0
  %2478 = vmatpush.msra.mxu0 0.0
  %2479 = vmatpush.msra.mxu0 0.0
  %2480 = vmatpush.msra.mxu0 0.0
  %2481 = vmatpush.msra.mxu0 0.0
  %2482 = vmatpush.msra.mxu0 0.0
  %2483 = vmatpush.msra.mxu0 0.0
  %2484 = vmatpush.msra.mxu0 0.0
  %2485 = vmatpush.msra.mxu0 0.0
  %2486 = vmatpush.msra.mxu0 %v2287
  %2487 = vmatpush.msra.mxu0 %v2286
  %2488 = vmatpush.msra.mxu0 %v2285
  %2489 = vmatpush.msra.mxu0 %v2284
  %2490 = vmatpush.msra.mxu0 %v2283
  %2491 = vmatpush.msra.mxu0 %v2282
  %2492 = vmatpush.msra.mxu0 %v2281
  %2493 = vmatpush.msra.mxu0 %v2280
  %2494 = vmatmul.f32.gmra.mxu0 %v2476
  %v2495 = vpop.f32.mrf.mxu0
  %v2496 = vadd.f32 0.0, %v2495
  %2497 = vdwg.mxu0
  %2498 = vmatpush.msra.mxu0 0.0
  %2499 = vmatpush.msra.mxu0 0.0
  %2500 = vmatpush.msra.mxu0 0.0
  %2501 = vmatpush.msra.mxu0 0.0
  %2502 = vmatpush.msra.mxu0 0.0
  %2503 = vmatpush.msra.mxu0 0.0
  %2504 = vmatpush.msra.mxu0 0.0
  %2505 = vmatpush.msra.mxu0 0.0
  %2506 = vmatpush.msra.mxu0 %v2296
  %2507 = vmatpush.msra.mxu0 %v2295
  %2508 = vmatpush.msra.mxu0 %v2294
  %2509 = vmatpush.msra.mxu0 %v2293
  %2510 = vmatpush.msra.mxu0 %v2292
  %2511 = vmatpush.msra.mxu0 %v2291
  %2512 = vmatpush.msra.mxu0 %v2290
  %2513 = vmatpush.msra.mxu0 %v2289
  %2514 = vmatmul.f32.gmra.mxu0 %v2476
  %v2515 = vpop.f32.mrf.mxu0
  %v2516 = vadd.f32 0.0, %v2515
  %2517 = vdwg.mxu0
  %v2519 = vperm.slane %v2317, 0
  %2521 = vmatpush.msra.mxu0 0.0
  %2522 = vmatpush.msra.mxu0 0.0
  %2523 = vmatpush.msra.mxu0 0.0
  %2524 = vmatpush.msra.mxu0 0.0
  %2525 = vmatpush.msra.mxu0 0.0
  %2526 = vmatpush.msra.mxu0 0.0
  %2527 = vmatpush.msra.mxu0 0.0
  %2528 = vmatpush.msra.mxu0 0.0
  %2529 = vmatpush.msra.mxu0 %v2305
  %2530 = vmatpush.msra.mxu0 %v2304
  %2531 = vmatpush.msra.mxu0 %v2303
  %2532 = vmatpush.msra.mxu0 %v2302
  %2533 = vmatpush.msra.mxu0 %v2301
  %2534 = vmatpush.msra.mxu0 %v2300
  %2535 = vmatpush.msra.mxu0 %v2299
  %2536 = vmatpush.msra.mxu0 %v2298
  %2537 = vmatmul.f32.gmra.mxu0 %v2476
  %v2538 = vpop.f32.mrf.mxu0
  %v2539 = vadd.f32 %v2519, %v2538
  %2540 = vdwg.mxu0
  %v2541 = vadd.f32 %v2364, %v2496
  %v2542 = vxor.u32 %v2541, 2147483648
  %v2543 = vmul.f32 %v2542, 1.442695
  %v2544 = vpow.pop %v2543
  %v2545 = vadd.f32 %v2544, 1.0
  %v2546 = vrcp.pop %v2545
  %v2547 = vmul.f32 %v2545, %v2546
  %v2548 = vsub.f32 1.0, %v2547
  %v2549 = vmul.f32 %v2546, %v2548
  %v2550 = vadd.f32 %v2546, %v2549
  %vm2551 = vweird.f32 %v2545
  %vm2552 = vweird.f32 %v2546
  %vm2553 = vmor %vm2551, %vm2552
  %v2554 = vsel %vm2553, %v2546, %v2550
  %v2555 = vand.u32 2147483647, %v2545
  %vm2556 = vcmp.eq.f32.partialorder %v2555, 8.507059e+37
  %v2557 = vand.u32 %v2545, 2147483648
  %v2558 = vor.u32 1.1754944e-38, %v2557
  %v2559 = vsel %vm2556, %v2558, %v2554
  %v2560 = vmul.f32 1.0, %v2559
  %v2561 = vadd.f32 %v2408, %v2516
  %v2562 = vxor.u32 %v2561, 2147483648
  %v2563 = vmul.f32 %v2562, 1.442695
  %v2564 = vpow.pop %v2563
  %v2565 = vadd.f32 %v2564, 1.0
  %v2566 = vrcp.pop %v2565
  %v2567 = vmul.f32 %v2565, %v2566
  %v2568 = vsub.f32 1.0, %v2567
  %v2569 = vmul.f32 %v2566, %v2568
  %v2570 = vadd.f32 %v2566, %v2569
  %vm2571 = vweird.f32 %v2565
  %vm2572 = vweird.f32 %v2566
  %vm2573 = vmor %vm2571, %vm2572
  %v2574 = vsel %vm2573, %v2566, %v2570
  %v2575 = vand.u32 2147483647, %v2565
  %vm2576 = vcmp.eq.f32.partialorder %v2575, 8.507059e+37
  %v2577 = vand.u32 %v2565, 2147483648
  %v2578 = vor.u32 1.1754944e-38, %v2577
  %v2579 = vsel %vm2576, %v2578, %v2574
  %v2580 = vmul.f32 1.0, %v2579
  %v2581 = vmul.f32 %v2560, %v2539
  %v2582 = vadd.f32 %v2452, %v2581
  %v2583 = vtanh.pop %v2582
  %v2584 = vsub.f32 1.0, %v2580
  %v2585 = vmul.f32 %v2584, %v2583
  %v2586 = vmul.f32 %v2580, %v2219
  %v2587 = vadd.f32 %v2585, %v2586
  %v2589 = vsel %vm2321, %v2587, 0
  %2591 = vmatpush.msra.mxu0 0.0
  %2592 = vmatpush.msra.mxu0 0.0
  %2593 = vmatpush.msra.mxu0 0.0
  %2594 = vmatpush.msra.mxu0 0.0
  %2595 = vmatpush.msra.mxu0 0.0
  %2596 = vmatpush.msra.mxu0 0.0
  %2597 = vmatpush.msra.mxu0 0.0
  %2598 = vmatpush.msra.mxu0 0.0
  %2599 = vmatpush.msra.mxu0 %v2287
  %2600 = vmatpush.msra.mxu0 %v2286
  %2601 = vmatpush.msra.mxu0 %v2285
  %2602 = vmatpush.msra.mxu0 %v2284
  %2603 = vmatpush.msra.mxu0 %v2283
  %2604 = vmatpush.msra.mxu0 %v2282
  %2605 = vmatpush.msra.mxu0 %v2281
  %2606 = vmatpush.msra.mxu0 %v2280
  %2607 = vmatmul.f32.gmra.mxu0 %v2589
  %v2608 = vpop.f32.mrf.mxu0
  %v2609 = vadd.f32 0.0, %v2608
  %2610 = vdwg.mxu0
  %2611 = vmatpush.msra.mxu0 0.0
  %2612 = vmatpush.msra.mxu0 0.0
  %2613 = vmatpush.msra.mxu0 0.0
  %2614 = vmatpush.msra.mxu0 0.0
  %2615 = vmatpush.msra.mxu0 0.0
  %2616 = vmatpush.msra.mxu0 0.0
  %2617 = vmatpush.msra.mxu0 0.0
  %2618 = vmatpush.msra.mxu0 0.0
  %2619 = vmatpush.msra.mxu0 %v2296
  %2620 = vmatpush.msra.mxu0 %v2295
  %2621 = vmatpush.msra.mxu0 %v2294
  %2622 = vmatpush.msra.mxu0 %v2293
  %2623 = vmatpush.msra.mxu0 %v2292
  %2624 = vmatpush.msra.mxu0 %v2291
  %2625 = vmatpush.msra.mxu0 %v2290
  %2626 = vmatpush.msra.mxu0 %v2289
  %2627 = vmatmul.f32.gmra.mxu0 %v2589
  %v2628 = vpop.f32.mrf.mxu0
  %v2629 = vadd.f32 0.0, %v2628
  %2630 = vdwg.mxu0
  %2631 = vmatpush.msra.mxu0 0.0
  %2632 = vmatpush.msra.mxu0 0.0
  %2633 = vmatpush.msra.mxu0 0.0
  %2634 = vmatpush.msra.mxu0 0.0
  %2635 = vmatpush.msra.mxu0 0.0
  %2636 = vmatpush.msra.mxu0 0.0
  %2637 = vmatpush.msra.mxu0 0.0
  %2638 = vmatpush.msra.mxu0 0.0
  %2639 = vmatpush.msra.mxu0 %v2305
  %2640 = vmatpush.msra.mxu0 %v2304
  %2641 = vmatpush.msra.mxu0 %v2303
  %2642 = vmatpush.msra.mxu0 %v2302
  %2643 = vmatpush.msra.mxu0 %v2301
  %2644 = vmatpush.msra.mxu0 %v2300
  %2645 = vmatpush.msra.mxu0 %v2299
  %2646 = vmatpush.msra.mxu0 %v2298
  %2647 = vmatmul.f32.gmra.mxu0 %v2589
  %v2648 = vpop.f32.mrf.mxu0
  %v2649 = vadd.f32 %v2519, %v2648
  %2650 = vdwg.mxu0
  %v2651 = vadd.f32 %v2367, %v2609
  %v2652 = vxor.u32 %v2651, 2147483648
  %v2653 = vmul.f32 %v2652, 1.442695
  %v2654 = vpow.pop %v2653
  %v2655 = vadd.f32 %v2654, 1.0
  %v2656 = vrcp.pop %v2655
  %v2657 = vmul.f32 %v2655, %v2656
  %v2658 = vsub.f32 1.0, %v2657
  %v2659 = vmul.f32 %v2656, %v2658
  %v2660 = vadd.f32 %v2656, %v2659
  %vm2661 = vweird.f32 %v2655
  %vm2662 = vweird.f32 %v2656
  %vm2663 = vmor %vm2661, %vm2662
  %v2664 = vsel %vm2663, %v2656, %v2660
  %v2665 = vand.u32 2147483647, %v2655
  %vm2666 = vcmp.eq.f32.partialorder %v2665, 8.507059e+37
  %v2667 = vand.u32 %v2655, 2147483648
  %v2668 = vor.u32 1.1754944e-38, %v2667
  %v2669 = vsel %vm2666, %v2668, %v2664
  %v2670 = vmul.f32 1.0, %v2669
  %v2671 = vadd.f32 %v2411, %v2629
  %v2672 = vxor.u32 %v2671, 2147483648
  %v2673 = vmul.f32 %v2672, 1.442695
  %v2674 = vpow.pop %v2673
  %v2675 = vadd.f32 %v2674, 1.0
  %v2676 = vrcp.pop %v2675
  %v2677 = vmul.f32 %v2675, %v2676
  %v2678 = vsub.f32 1.0, %v2677
  %v2679 = vmul.f32 %v2676, %v2678
  %v2680 = vadd.f32 %v2676, %v2679
  %vm2681 = vweird.f32 %v2675
  %vm2682 = vweird.f32 %v2676
  %vm2683 = vmor %vm2681, %vm2682
  %v2684 = vsel %vm2683, %v2676, %v2680
  %v2685 = vand.u32 2147483647, %v2675
  %vm2686 = vcmp.eq.f32.partialorder %v2685, 8.507059e+37
  %v2687 = vand.u32 %v2675, 2147483648
  %v2688 = vor.u32 1.1754944e-38, %v2687
  %v2689 = vsel %vm2686, %v2688, %v2684
  %v2690 = vmul.f32 1.0, %v2689
  %v2691 = vmul.f32 %v2670, %v2649
  %v2692 = vadd.f32 %v2455, %v2691
  %v2693 = vtanh.pop %v2692
  %v2694 = vsub.f32 1.0, %v2690
  %v2695 = vmul.f32 %v2694, %v2693
  %v2696 = vmul.f32 %v2690, %v2587
  %v2697 = vadd.f32 %v2695, %v2696
  %v2699 = vsel %vm2321, %v2697, 0
  %2701 = vmatpush.msra.mxu0 0.0
  %2702 = vmatpush.msra.mxu0 0.0
  %2703 = vmatpush.msra.mxu0 0.0
  %2704 = vmatpush.msra.mxu0 0.0
  %2705 = vmatpush.msra.mxu0 0.0
  %2706 = vmatpush.msra.mxu0 0.0
  %2707 = vmatpush.msra.mxu0 0.0
  %2708 = vmatpush.msra.mxu0 0.0
  %2709 = vmatpush.msra.mxu0 %v2287
  %2710 = vmatpush.msra.mxu0 %v2286
  %2711 = vmatpush.msra.mxu0 %v2285
  %2712 = vmatpush.msra.mxu0 %v2284
  %2713 = vmatpush.msra.mxu0 %v2283
  %2714 = vmatpush.msra.mxu0 %v2282
  %2715 = vmatpush.msra.mxu0 %v2281
  %2716 = vmatpush.msra.mxu0 %v2280
  %2717 = vmatmul.f32.gmra.mxu0 %v2699
  %v2718 = vpop.f32.mrf.mxu0
  %v2719 = vadd.f32 0.0, %v2718
  %2720 = vdwg.mxu0
  %2721 = vmatpush.msra.mxu0 0.0
  %2722 = vmatpush.msra.mxu0 0.0
  %2723 = vmatpush.msra.mxu0 0.0
  %2724 = vmatpush.msra.mxu0 0.0
  %2725 = vmatpush.msra.mxu0 0.0
  %2726 = vmatpush.msra.mxu0 0.0
  %2727 = vmatpush.msra.mxu0 0.0
  %2728 = vmatpush.msra.mxu0 0.0
  %2729 = vmatpush.msra.mxu0 %v2296
  %2730 = vmatpush.msra.mxu0 %v2295
  %2731 = vmatpush.msra.mxu0 %v2294
  %2732 = vmatpush.msra.mxu0 %v2293
  %2733 = vmatpush.msra.mxu0 %v2292
  %2734 = vmatpush.msra.mxu0 %v2291
  %2735 = vmatpush.msra.mxu0 %v2290
  %2736 = vmatpush.msra.mxu0 %v2289
  %2737 = vmatmul.f32.gmra.mxu0 %v2699
  %v2738 = vpop.f32.mrf.mxu0
  %v2739 = vadd.f32 0.0, %v2738
  %2740 = vdwg.mxu0
  %2741 = vmatpush.msra.mxu0 0.0
  %2742 = vmatpush.msra.mxu0 0.0
  %2743 = vmatpush.msra.mxu0 0.0
  %2744 = vmatpush.msra.mxu0 0.0
  %2745 = vmatpush.msra.mxu0 0.0
  %2746 = vmatpush.msra.mxu0 0.0
  %2747 = vmatpush.msra.mxu0 0.0
  %2748 = vmatpush.msra.mxu0 0.0
  %2749 = vmatpush.msra.mxu0 %v2305
  %2750 = vmatpush.msra.mxu0 %v2304
  %2751 = vmatpush.msra.mxu0 %v2303
  %2752 = vmatpush.msra.mxu0 %v2302
  %2753 = vmatpush.msra.mxu0 %v2301
  %2754 = vmatpush.msra.mxu0 %v2300
  %2755 = vmatpush.msra.mxu0 %v2299
  %2756 = vmatpush.msra.mxu0 %v2298
  %2757 = vmatmul.f32.gmra.mxu0 %v2699
  %v2758 = vpop.f32.mrf.mxu0
  %v2759 = vadd.f32 %v2519, %v2758
  %2760 = vdwg.mxu0
  %v2761 = vadd.f32 %v2370, %v2719
  %v2762 = vxor.u32 %v2761, 2147483648
  %v2763 = vmul.f32 %v2762, 1.442695
  %v2764 = vpow.pop %v2763
  %v2765 = vadd.f32 %v2764, 1.0
  %v2766 = vrcp.pop %v2765
  %v2767 = vmul.f32 %v2765, %v2766
  %v2768 = vsub.f32 1.0, %v2767
  %v2769 = vmul.f32 %v2766, %v2768
  %v2770 = vadd.f32 %v2766, %v2769
  %vm2771 = vweird.f32 %v2765
  %vm2772 = vweird.f32 %v2766
  %vm2773 = vmor %vm2771, %vm2772
  %v2774 = vsel %vm2773, %v2766, %v2770
  %v2775 = vand.u32 2147483647, %v2765
  %vm2776 = vcmp.eq.f32.partialorder %v2775, 8.507059e+37
  %v2777 = vand.u32 %v2765, 2147483648
  %v2778 = vor.u32 1.1754944e-38, %v2777
  %v2779 = vsel %vm2776, %v2778, %v2774
  %v2780 = vmul.f32 1.0, %v2779
  %v2781 = vadd.f32 %v2414, %v2739
  %v2782 = vxor.u32 %v2781, 2147483648
  %v2783 = vmul.f32 %v2782, 1.442695
  %v2784 = vpow.pop %v2783
  %v2785 = vadd.f32 %v2784, 1.0
  %v2786 = vrcp.pop %v2785
  %v2787 = vmul.f32 %v2785, %v2786
  %v2788 = vsub.f32 1.0, %v2787
  %v2789 = vmul.f32 %v2786, %v2788
  %v2790 = vadd.f32 %v2786, %v2789
  %vm2791 = vweird.f32 %v2785
  %vm2792 = vweird.f32 %v2786
  %vm2793 = vmor %vm2791, %vm2792
  %v2794 = vsel %vm2793, %v2786, %v2790
  %v2795 = vand.u32 2147483647, %v2785
  %vm2796 = vcmp.eq.f32.partialorder %v2795, 8.507059e+37
  %v2797 = vand.u32 %v2785, 2147483648
  %v2798 = vor.u32 1.1754944e-38, %v2797
  %v2799 = vsel %vm2796, %v2798, %v2794
  %v2800 = vmul.f32 1.0, %v2799
  %v2801 = vmul.f32 %v2780, %v2759
  %v2802 = vadd.f32 %v2458, %v2801
  %v2803 = vtanh.pop %v2802
  %v2804 = vsub.f32 1.0, %v2800
  %v2805 = vmul.f32 %v2804, %v2803
  %v2806 = vmul.f32 %v2800, %v2697
  %v2807 = vadd.f32 %v2805, %v2806
  %v2809 = vsel %vm2321, %v2807, 0
  %2811 = vmatpush.msra.mxu0 0.0
  %2812 = vmatpush.msra.mxu0 0.0
  %2813 = vmatpush.msra.mxu0 0.0
  %2814 = vmatpush.msra.mxu0 0.0
  %2815 = vmatpush.msra.mxu0 0.0
  %2816 = vmatpush.msra.mxu0 0.0
  %2817 = vmatpush.msra.mxu0 0.0
  %2818 = vmatpush.msra.mxu0 0.0
  %2819 = vmatpush.msra.mxu0 %v2287
  %2820 = vmatpush.msra.mxu0 %v2286
  %2821 = vmatpush.msra.mxu0 %v2285
  %2822 = vmatpush.msra.mxu0 %v2284
  %2823 = vmatpush.msra.mxu0 %v2283
  %2824 = vmatpush.msra.mxu0 %v2282
  %2825 = vmatpush.msra.mxu0 %v2281
  %2826 = vmatpush.msra.mxu0 %v2280
  %2827 = vmatmul.f32.gmra.mxu0 %v2809
  %v2828 = vpop.f32.mrf.mxu0
  %v2829 = vadd.f32 0.0, %v2828
  %2830 = vdwg.mxu0
  %2831 = vmatpush.msra.mxu0 0.0
  %2832 = vmatpush.msra.mxu0 0.0
  %2833 = vmatpush.msra.mxu0 0.0
  %2834 = vmatpush.msra.mxu0 0.0
  %2835 = vmatpush.msra.mxu0 0.0
  %2836 = vmatpush.msra.mxu0 0.0
  %2837 = vmatpush.msra.mxu0 0.0
  %2838 = vmatpush.msra.mxu0 0.0
  %2839 = vmatpush.msra.mxu0 %v2296
  %2840 = vmatpush.msra.mxu0 %v2295
  %2841 = vmatpush.msra.mxu0 %v2294
  %2842 = vmatpush.msra.mxu0 %v2293
  %2843 = vmatpush.msra.mxu0 %v2292
  %2844 = vmatpush.msra.mxu0 %v2291
  %2845 = vmatpush.msra.mxu0 %v2290
  %2846 = vmatpush.msra.mxu0 %v2289
  %2847 = vmatmul.f32.gmra.mxu0 %v2809
  %v2848 = vpop.f32.mrf.mxu0
  %v2849 = vadd.f32 0.0, %v2848
  %2850 = vdwg.mxu0
  %2851 = vmatpush.msra.mxu0 0.0
  %2852 = vmatpush.msra.mxu0 0.0
  %2853 = vmatpush.msra.mxu0 0.0
  %2854 = vmatpush.msra.mxu0 0.0
  %2855 = vmatpush.msra.mxu0 0.0
  %2856 = vmatpush.msra.mxu0 0.0
  %2857 = vmatpush.msra.mxu0 0.0
  %2858 = vmatpush.msra.mxu0 0.0
  %2859 = vmatpush.msra.mxu0 %v2305
  %2860 = vmatpush.msra.mxu0 %v2304
  %2861 = vmatpush.msra.mxu0 %v2303
  %2862 = vmatpush.msra.mxu0 %v2302
  %2863 = vmatpush.msra.mxu0 %v2301
  %2864 = vmatpush.msra.mxu0 %v2300
  %2865 = vmatpush.msra.mxu0 %v2299
  %2866 = vmatpush.msra.mxu0 %v2298
  %2867 = vmatmul.f32.gmra.mxu0 %v2809
  %v2868 = vpop.f32.mrf.mxu0
  %v2869 = vadd.f32 %v2519, %v2868
  %2870 = vdwg.mxu0
  %v2871 = vadd.f32 %v2373, %v2829
  %v2872 = vxor.u32 %v2871, 2147483648
  %v2873 = vmul.f32 %v2872, 1.442695
  %v2874 = vpow.pop %v2873
  %v2875 = vadd.f32 %v2874, 1.0
  %v2876 = vrcp.pop %v2875
  %v2877 = vmul.f32 %v2875, %v2876
  %v2878 = vsub.f32 1.0, %v2877
  %v2879 = vmul.f32 %v2876, %v2878
  %v2880 = vadd.f32 %v2876, %v2879
  %vm2881 = vweird.f32 %v2875
  %vm2882 = vweird.f32 %v2876
  %vm2883 = vmor %vm2881, %vm2882
  %v2884 = vsel %vm2883, %v2876, %v2880
  %v2885 = vand.u32 2147483647, %v2875
  %vm2886 = vcmp.eq.f32.partialorder %v2885, 8.507059e+37
  %v2887 = vand.u32 %v2875, 2147483648
  %v2888 = vor.u32 1.1754944e-38, %v2887
  %v2889 = vsel %vm2886, %v2888, %v2884
  %v2890 = vmul.f32 1.0, %v2889
  %v2891 = vadd.f32 %v2417, %v2849
  %v2892 = vxor.u32 %v2891, 2147483648
  %v2893 = vmul.f32 %v2892, 1.442695
  %v2894 = vpow.pop %v2893
  %v2895 = vadd.f32 %v2894, 1.0
  %v2896 = vrcp.pop %v2895
  %v2897 = vmul.f32 %v2895, %v2896
  %v2898 = vsub.f32 1.0, %v2897
  %v2899 = vmul.f32 %v2896, %v2898
  %v2900 = vadd.f32 %v2896, %v2899
  %vm2901 = vweird.f32 %v2895
  %vm2902 = vweird.f32 %v2896
  %vm2903 = vmor %vm2901, %vm2902
  %v2904 = vsel %vm2903, %v2896, %v2900
  %v2905 = vand.u32 2147483647, %v2895
  %vm2906 = vcmp.eq.f32.partialorder %v2905, 8.507059e+37
  %v2907 = vand.u32 %v2895, 2147483648
  %v2908 = vor.u32 1.1754944e-38, %v2907
  %v2909 = vsel %vm2906, %v2908, %v2904
  %v2910 = vmul.f32 1.0, %v2909
  %v2911 = vmul.f32 %v2890, %v2869
  %v2912 = vadd.f32 %v2461, %v2911
  %v2913 = vtanh.pop %v2912
  %v2914 = vsub.f32 1.0, %v2910
  %v2915 = vmul.f32 %v2914, %v2913
  %v2916 = vmul.f32 %v2910, %v2807
  %v2917 = vadd.f32 %v2915, %v2916
  %v2919 = vsel %vm2321, %v2917, 0
  %2921 = vmatpush.msra.mxu0 0.0
  %2922 = vmatpush.msra.mxu0 0.0
  %2923 = vmatpush.msra.mxu0 0.0
  %2924 = vmatpush.msra.mxu0 0.0
  %2925 = vmatpush.msra.mxu0 0.0
  %2926 = vmatpush.msra.mxu0 0.0
  %2927 = vmatpush.msra.mxu0 0.0
  %2928 = vmatpush.msra.mxu0 0.0
  %2929 = vmatpush.msra.mxu0 %v2287
  %2930 = vmatpush.msra.mxu0 %v2286
  %2931 = vmatpush.msra.mxu0 %v2285
  %2932 = vmatpush.msra.mxu0 %v2284
  %2933 = vmatpush.msra.mxu0 %v2283
  %2934 = vmatpush.msra.mxu0 %v2282
  %2935 = vmatpush.msra.mxu0 %v2281
  %2936 = vmatpush.msra.mxu0 %v2280
  %2937 = vmatmul.f32.gmra.mxu0 %v2919
  %v2938 = vpop.f32.mrf.mxu0
  %v2939 = vadd.f32 0.0, %v2938
  %2940 = vdwg.mxu0
  %2941 = vmatpush.msra.mxu0 0.0
  %2942 = vmatpush.msra.mxu0 0.0
  %2943 = vmatpush.msra.mxu0 0.0
  %2944 = vmatpush.msra.mxu0 0.0
  %2945 = vmatpush.msra.mxu0 0.0
  %2946 = vmatpush.msra.mxu0 0.0
  %2947 = vmatpush.msra.mxu0 0.0
  %2948 = vmatpush.msra.mxu0 0.0
  %2949 = vmatpush.msra.mxu0 %v2296
  %2950 = vmatpush.msra.mxu0 %v2295
  %2951 = vmatpush.msra.mxu0 %v2294
  %2952 = vmatpush.msra.mxu0 %v2293
  %2953 = vmatpush.msra.mxu0 %v2292
  %2954 = vmatpush.msra.mxu0 %v2291
  %2955 = vmatpush.msra.mxu0 %v2290
  %2956 = vmatpush.msra.mxu0 %v2289
  %2957 = vmatmul.f32.gmra.mxu0 %v2919
  %v2958 = vpop.f32.mrf.mxu0
  %v2959 = vadd.f32 0.0, %v2958
  %2960 = vdwg.mxu0
  %2961 = vmatpush.msra.mxu0 0.0
  %2962 = vmatpush.msra.mxu0 0.0
  %2963 = vmatpush.msra.mxu0 0.0
  %2964 = vmatpush.msra.mxu0 0.0
  %2965 = vmatpush.msra.mxu0 0.0
  %2966 = vmatpush.msra.mxu0 0.0
  %2967 = vmatpush.msra.mxu0 0.0
  %2968 = vmatpush.msra.mxu0 0.0
  %2969 = vmatpush.msra.mxu0 %v2305
  %2970 = vmatpush.msra.mxu0 %v2304
  %2971 = vmatpush.msra.mxu0 %v2303
  %2972 = vmatpush.msra.mxu0 %v2302
  %2973 = vmatpush.msra.mxu0 %v2301
  %2974 = vmatpush.msra.mxu0 %v2300
  %2975 = vmatpush.msra.mxu0 %v2299
  %2976 = vmatpush.msra.mxu0 %v2298
  %2977 = vmatmul.f32.gmra.mxu0 %v2919
  %v2978 = vpop.f32.mrf.mxu0
  %v2979 = vadd.f32 %v2519, %v2978
  %2980 = vdwg.mxu0
  %v2981 = vadd.f32 %v2376, %v2939
  %v2982 = vxor.u32 %v2981, 2147483648
  %v2983 = vmul.f32 %v2982, 1.442695
  %v2984 = vpow.pop %v2983
  %v2985 = vadd.f32 %v2984, 1.0
  %v2986 = vrcp.pop %v2985
  %v2987 = vmul.f32 %v2985, %v2986
  %v2988 = vsub.f32 1.0, %v2987
  %v2989 = vmul.f32 %v2986, %v2988
  %v2990 = vadd.f32 %v2986, %v2989
  %vm2991 = vweird.f32 %v2985
  %vm2992 = vweird.f32 %v2986
  %vm2993 = vmor %vm2991, %vm2992
  %v2994 = vsel %vm2993, %v2986, %v2990
  %v2995 = vand.u32 2147483647, %v2985
  %vm2996 = vcmp.eq.f32.partialorder %v2995, 8.507059e+37
  %v2997 = vand.u32 %v2985, 2147483648
  %v2998 = vor.u32 1.1754944e-38, %v2997
  %v2999 = vsel %vm2996, %v2998, %v2994
  %v3000 = vmul.f32 1.0, %v2999
  %v3001 = vadd.f32 %v2420, %v2959
  %v3002 = vxor.u32 %v3001, 2147483648
  %v3003 = vmul.f32 %v3002, 1.442695
  %v3004 = vpow.pop %v3003
  %v3005 = vadd.f32 %v3004, 1.0
  %v3006 = vrcp.pop %v3005
  %v3007 = vmul.f32 %v3005, %v3006
  %v3008 = vsub.f32 1.0, %v3007
  %v3009 = vmul.f32 %v3006, %v3008
  %v3010 = vadd.f32 %v3006, %v3009
  %vm3011 = vweird.f32 %v3005
  %vm3012 = vweird.f32 %v3006
  %vm3013 = vmor %vm3011, %vm3012
  %v3014 = vsel %vm3013, %v3006, %v3010
  %v3015 = vand.u32 2147483647, %v3005
  %vm3016 = vcmp.eq.f32.partialorder %v3015, 8.507059e+37
  %v3017 = vand.u32 %v3005, 2147483648
  %v3018 = vor.u32 1.1754944e-38, %v3017
  %v3019 = vsel %vm3016, %v3018, %v3014
  %v3020 = vmul.f32 1.0, %v3019
  %v3021 = vmul.f32 %v3000, %v2979
  %v3022 = vadd.f32 %v2464, %v3021
  %v3023 = vtanh.pop %v3022
  %v3024 = vsub.f32 1.0, %v3020
  %v3025 = vmul.f32 %v3024, %v3023
  %v3026 = vmul.f32 %v3020, %v2917
  %v3027 = vadd.f32 %v3025, %v3026
  %v3029 = vsel %vm2321, %v3027, 0
  %3031 = vmatpush.msra.mxu0 0.0
  %3032 = vmatpush.msra.mxu0 0.0
  %3033 = vmatpush.msra.mxu0 0.0
  %3034 = vmatpush.msra.mxu0 0.0
  %3035 = vmatpush.msra.mxu0 0.0
  %3036 = vmatpush.msra.mxu0 0.0
  %3037 = vmatpush.msra.mxu0 0.0
  %3038 = vmatpush.msra.mxu0 0.0
  %3039 = vmatpush.msra.mxu0 %v2287
  %3040 = vmatpush.msra.mxu0 %v2286
  %3041 = vmatpush.msra.mxu0 %v2285
  %3042 = vmatpush.msra.mxu0 %v2284
  %3043 = vmatpush.msra.mxu0 %v2283
  %3044 = vmatpush.msra.mxu0 %v2282
  %3045 = vmatpush.msra.mxu0 %v2281
  %3046 = vmatpush.msra.mxu0 %v2280
  %3047 = vmatmul.f32.gmra.mxu0 %v3029
  %v3048 = vpop.f32.mrf.mxu0
  %v3049 = vadd.f32 0.0, %v3048
  %3050 = vdwg.mxu0
  %3051 = vmatpush.msra.mxu0 0.0
  %3052 = vmatpush.msra.mxu0 0.0
  %3053 = vmatpush.msra.mxu0 0.0
  %3054 = vmatpush.msra.mxu0 0.0
  %3055 = vmatpush.msra.mxu0 0.0
  %3056 = vmatpush.msra.mxu0 0.0
  %3057 = vmatpush.msra.mxu0 0.0
  %3058 = vmatpush.msra.mxu0 0.0
  %3059 = vmatpush.msra.mxu0 %v2296
  %3060 = vmatpush.msra.mxu0 %v2295
  %3061 = vmatpush.msra.mxu0 %v2294
  %3062 = vmatpush.msra.mxu0 %v2293
  %3063 = vmatpush.msra.mxu0 %v2292
  %3064 = vmatpush.msra.mxu0 %v2291
  %3065 = vmatpush.msra.mxu0 %v2290
  %3066 = vmatpush.msra.mxu0 %v2289
  %3067 = vmatmul.f32.gmra.mxu0 %v3029
  %v3068 = vpop.f32.mrf.mxu0
  %v3069 = vadd.f32 0.0, %v3068
  %3070 = vdwg.mxu0
  %3071 = vmatpush.msra.mxu0 0.0
  %3072 = vmatpush.msra.mxu0 0.0
  %3073 = vmatpush.msra.mxu0 0.0
  %3074 = vmatpush.msra.mxu0 0.0
  %3075 = vmatpush.msra.mxu0 0.0
  %3076 = vmatpush.msra.mxu0 0.0
  %3077 = vmatpush.msra.mxu0 0.0
  %3078 = vmatpush.msra.mxu0 0.0
  %3079 = vmatpush.msra.mxu0 %v2305
  %3080 = vmatpush.msra.mxu0 %v2304
  %3081 = vmatpush.msra.mxu0 %v2303
  %3082 = vmatpush.msra.mxu0 %v2302
  %3083 = vmatpush.msra.mxu0 %v2301
  %3084 = vmatpush.msra.mxu0 %v2300
  %3085 = vmatpush.msra.mxu0 %v2299
  %3086 = vmatpush.msra.mxu0 %v2298
  %3087 = vmatmul.f32.gmra.mxu0 %v3029
  %v3088 = vpop.f32.mrf.mxu0
  %v3089 = vadd.f32 %v2519, %v3088
  %3090 = vdwg.mxu0
  %v3091 = vadd.f32 %v2379, %v3049
  %v3092 = vxor.u32 %v3091, 2147483648
  %v3093 = vmul.f32 %v3092, 1.442695
  %v3094 = vpow.pop %v3093
  %v3095 = vadd.f32 %v3094, 1.0
  %v3096 = vrcp.pop %v3095
  %v3097 = vmul.f32 %v3095, %v3096
  %v3098 = vsub.f32 1.0, %v3097
  %v3099 = vmul.f32 %v3096, %v3098
  %v3100 = vadd.f32 %v3096, %v3099
  %vm3101 = vweird.f32 %v3095
  %vm3102 = vweird.f32 %v3096
  %vm3103 = vmor %vm3101, %vm3102
  %v3104 = vsel %vm3103, %v3096, %v3100
  %v3105 = vand.u32 2147483647, %v3095
  %vm3106 = vcmp.eq.f32.partialorder %v3105, 8.507059e+37
  %v3107 = vand.u32 %v3095, 2147483648
  %v3108 = vor.u32 1.1754944e-38, %v3107
  %v3109 = vsel %vm3106, %v3108, %v3104
  %v3110 = vmul.f32 1.0, %v3109
  %v3111 = vadd.f32 %v2423, %v3069
  %v3112 = vxor.u32 %v3111, 2147483648
  %v3113 = vmul.f32 %v3112, 1.442695
  %v3114 = vpow.pop %v3113
  %v3115 = vadd.f32 %v3114, 1.0
  %v3116 = vrcp.pop %v3115
  %v3117 = vmul.f32 %v3115, %v3116
  %v3118 = vsub.f32 1.0, %v3117
  %v3119 = vmul.f32 %v3116, %v3118
  %v3120 = vadd.f32 %v3116, %v3119
  %vm3121 = vweird.f32 %v3115
  %vm3122 = vweird.f32 %v3116
  %vm3123 = vmor %vm3121, %vm3122
  %v3124 = vsel %vm3123, %v3116, %v3120
  %v3125 = vand.u32 2147483647, %v3115
  %vm3126 = vcmp.eq.f32.partialorder %v3125, 8.507059e+37
  %v3127 = vand.u32 %v3115, 2147483648
  %v3128 = vor.u32 1.1754944e-38, %v3127
  %v3129 = vsel %vm3126, %v3128, %v3124
  %v3130 = vmul.f32 1.0, %v3129
  %v3131 = vmul.f32 %v3110, %v3089
  %v3132 = vadd.f32 %v2467, %v3131
  %v3133 = vtanh.pop %v3132
  %v3134 = vsub.f32 1.0, %v3130
  %v3135 = vmul.f32 %v3134, %v3133
  %v3136 = vmul.f32 %v3130, %v3027
  %v3137 = vadd.f32 %v3135, %v3136
  %v3139 = vsel %vm2321, %v3137, 0
  %3141 = vmatpush.msra.mxu0 0.0
  %3142 = vmatpush.msra.mxu0 0.0
  %3143 = vmatpush.msra.mxu0 0.0
  %3144 = vmatpush.msra.mxu0 0.0
  %3145 = vmatpush.msra.mxu0 0.0
  %3146 = vmatpush.msra.mxu0 0.0
  %3147 = vmatpush.msra.mxu0 0.0
  %3148 = vmatpush.msra.mxu0 0.0
  %3149 = vmatpush.msra.mxu0 %v2287
  %3150 = vmatpush.msra.mxu0 %v2286
  %3151 = vmatpush.msra.mxu0 %v2285
  %3152 = vmatpush.msra.mxu0 %v2284
  %3153 = vmatpush.msra.mxu0 %v2283
  %3154 = vmatpush.msra.mxu0 %v2282
  %3155 = vmatpush.msra.mxu0 %v2281
  %3156 = vmatpush.msra.mxu0 %v2280
  %3157 = vmatmul.f32.gmra.mxu0 %v3139
  %v3158 = vpop.f32.mrf.mxu0
  %v3159 = vadd.f32 0.0, %v3158
  %3160 = vdwg.mxu0
  %3161 = vmatpush.msra.mxu0 0.0
  %3162 = vmatpush.msra.mxu0 0.0
  %3163 = vmatpush.msra.mxu0 0.0
  %3164 = vmatpush.msra.mxu0 0.0
  %3165 = vmatpush.msra.mxu0 0.0
  %3166 = vmatpush.msra.mxu0 0.0
  %3167 = vmatpush.msra.mxu0 0.0
  %3168 = vmatpush.msra.mxu0 0.0
  %3169 = vmatpush.msra.mxu0 %v2296
  %3170 = vmatpush.msra.mxu0 %v2295
  %3171 = vmatpush.msra.mxu0 %v2294
  %3172 = vmatpush.msra.mxu0 %v2293
  %3173 = vmatpush.msra.mxu0 %v2292
  %3174 = vmatpush.msra.mxu0 %v2291
  %3175 = vmatpush.msra.mxu0 %v2290
  %3176 = vmatpush.msra.mxu0 %v2289
  %3177 = vmatmul.f32.gmra.mxu0 %v3139
  %v3178 = vpop.f32.mrf.mxu0
  %v3179 = vadd.f32 0.0, %v3178
  %3180 = vdwg.mxu0
  %3181 = vmatpush.msra.mxu0 0.0
  %3182 = vmatpush.msra.mxu0 0.0
  %3183 = vmatpush.msra.mxu0 0.0
  %3184 = vmatpush.msra.mxu0 0.0
  %3185 = vmatpush.msra.mxu0 0.0
  %3186 = vmatpush.msra.mxu0 0.0
  %3187 = vmatpush.msra.mxu0 0.0
  %3188 = vmatpush.msra.mxu0 0.0
  %3189 = vmatpush.msra.mxu0 %v2305
  %3190 = vmatpush.msra.mxu0 %v2304
  %3191 = vmatpush.msra.mxu0 %v2303
  %3192 = vmatpush.msra.mxu0 %v2302
  %3193 = vmatpush.msra.mxu0 %v2301
  %3194 = vmatpush.msra.mxu0 %v2300
  %3195 = vmatpush.msra.mxu0 %v2299
  %3196 = vmatpush.msra.mxu0 %v2298
  %3197 = vmatmul.f32.gmra.mxu0 %v3139
  %v3198 = vpop.f32.mrf.mxu0
  %v3199 = vadd.f32 %v2519, %v3198
  %3200 = vdwg.mxu0
  %v3201 = vadd.f32 %v2382, %v3159
  %v3202 = vxor.u32 %v3201, 2147483648
  %v3203 = vmul.f32 %v3202, 1.442695
  %v3204 = vpow.pop %v3203
  %v3205 = vadd.f32 %v3204, 1.0
  %v3206 = vrcp.pop %v3205
  %v3207 = vmul.f32 %v3205, %v3206
  %v3208 = vsub.f32 1.0, %v3207
  %v3209 = vmul.f32 %v3206, %v3208
  %v3210 = vadd.f32 %v3206, %v3209
  %vm3211 = vweird.f32 %v3205
  %vm3212 = vweird.f32 %v3206
  %vm3213 = vmor %vm3211, %vm3212
  %v3214 = vsel %vm3213, %v3206, %v3210
  %v3215 = vand.u32 2147483647, %v3205
  %vm3216 = vcmp.eq.f32.partialorder %v3215, 8.507059e+37
  %v3217 = vand.u32 %v3205, 2147483648
  %v3218 = vor.u32 1.1754944e-38, %v3217
  %v3219 = vsel %vm3216, %v3218, %v3214
  %v3220 = vmul.f32 1.0, %v3219
  %v3221 = vadd.f32 %v2426, %v3179
  %v3222 = vxor.u32 %v3221, 2147483648
  %v3223 = vmul.f32 %v3222, 1.442695
  %v3224 = vpow.pop %v3223
  %v3225 = vadd.f32 %v3224, 1.0
  %v3226 = vrcp.pop %v3225
  %v3227 = vmul.f32 %v3225, %v3226
  %v3228 = vsub.f32 1.0, %v3227
  %v3229 = vmul.f32 %v3226, %v3228
  %v3230 = vadd.f32 %v3226, %v3229
  %vm3231 = vweird.f32 %v3225
  %vm3232 = vweird.f32 %v3226
  %vm3233 = vmor %vm3231, %vm3232
  %v3234 = vsel %vm3233, %v3226, %v3230
  %v3235 = vand.u32 2147483647, %v3225
  %vm3236 = vcmp.eq.f32.partialorder %v3235, 8.507059e+37
  %v3237 = vand.u32 %v3225, 2147483648
  %v3238 = vor.u32 1.1754944e-38, %v3237
  %v3239 = vsel %vm3236, %v3238, %v3234
  %v3240 = vmul.f32 1.0, %v3239
  %v3241 = vmul.f32 %v3220, %v3199
  %v3242 = vadd.f32 %v2470, %v3241
  %v3243 = vtanh.pop %v3242
  %v3244 = vsub.f32 1.0, %v3240
  %v3245 = vmul.f32 %v3244, %v3243
  %v3246 = vmul.f32 %v3240, %v3137
  %v3247 = vadd.f32 %v3245, %v3246
  %v3249 = vsel %vm2321, %v3247, 0
  %3251 = vmatpush.msra.mxu0 0.0
  %3252 = vmatpush.msra.mxu0 0.0
  %3253 = vmatpush.msra.mxu0 0.0
  %3254 = vmatpush.msra.mxu0 0.0
  %3255 = vmatpush.msra.mxu0 0.0
  %3256 = vmatpush.msra.mxu0 0.0
  %3257 = vmatpush.msra.mxu0 0.0
  %3258 = vmatpush.msra.mxu0 0.0
  %3259 = vmatpush.msra.mxu0 %v2287
  %3260 = vmatpush.msra.mxu0 %v2286
  %3261 = vmatpush.msra.mxu0 %v2285
  %3262 = vmatpush.msra.mxu0 %v2284
  %3263 = vmatpush.msra.mxu0 %v2283
  %3264 = vmatpush.msra.mxu0 %v2282
  %3265 = vmatpush.msra.mxu0 %v2281
  %3266 = vmatpush.msra.mxu0 %v2280
  %3267 = vmatmul.f32.gmra.mxu0 %v3249
  %v3268 = vpop.f32.mrf.mxu0
  %v3269 = vadd.f32 0.0, %v3268
  %3270 = vdwg.mxu0
  %3271 = vmatpush.msra.mxu0 0.0
  %3272 = vmatpush.msra.mxu0 0.0
  %3273 = vmatpush.msra.mxu0 0.0
  %3274 = vmatpush.msra.mxu0 0.0
  %3275 = vmatpush.msra.mxu0 0.0
  %3276 = vmatpush.msra.mxu0 0.0
  %3277 = vmatpush.msra.mxu0 0.0
  %3278 = vmatpush.msra.mxu0 0.0
  %3279 = vmatpush.msra.mxu0 %v2296
  %3280 = vmatpush.msra.mxu0 %v2295
  %3281 = vmatpush.msra.mxu0 %v2294
  %3282 = vmatpush.msra.mxu0 %v2293
  %3283 = vmatpush.msra.mxu0 %v2292
  %3284 = vmatpush.msra.mxu0 %v2291
  %3285 = vmatpush.msra.mxu0 %v2290
  %3286 = vmatpush.msra.mxu0 %v2289
  %3287 = vmatmul.f32.gmra.mxu0 %v3249
  %v3288 = vpop.f32.mrf.mxu0
  %v3289 = vadd.f32 0.0, %v3288
  %3290 = vdwg.mxu0
  %3291 = vmatpush.msra.mxu0 0.0
  %3292 = vmatpush.msra.mxu0 0.0
  %3293 = vmatpush.msra.mxu0 0.0
  %3294 = vmatpush.msra.mxu0 0.0
  %3295 = vmatpush.msra.mxu0 0.0
  %3296 = vmatpush.msra.mxu0 0.0
  %3297 = vmatpush.msra.mxu0 0.0
  %3298 = vmatpush.msra.mxu0 0.0
  %3299 = vmatpush.msra.mxu0 %v2305
  %3300 = vmatpush.msra.mxu0 %v2304
  %3301 = vmatpush.msra.mxu0 %v2303
  %3302 = vmatpush.msra.mxu0 %v2302
  %3303 = vmatpush.msra.mxu0 %v2301
  %3304 = vmatpush.msra.mxu0 %v2300
  %3305 = vmatpush.msra.mxu0 %v2299
  %3306 = vmatpush.msra.mxu0 %v2298
  %3307 = vmatmul.f32.gmra.mxu0 %v3249
  %v3308 = vpop.f32.mrf.mxu0
  %v3309 = vadd.f32 %v2519, %v3308
  %3310 = vdwg.mxu0
  %v3311 = vadd.f32 %v2385, %v3269
  %v3312 = vxor.u32 %v3311, 2147483648
  %v3313 = vmul.f32 %v3312, 1.442695
  %v3314 = vpow.pop %v3313
  %v3315 = vadd.f32 %v3314, 1.0
  %v3316 = vrcp.pop %v3315
  %v3317 = vmul.f32 %v3315, %v3316
  %v3318 = vsub.f32 1.0, %v3317
  %v3319 = vmul.f32 %v3316, %v3318
  %v3320 = vadd.f32 %v3316, %v3319
  %vm3321 = vweird.f32 %v3315
  %vm3322 = vweird.f32 %v3316
  %vm3323 = vmor %vm3321, %vm3322
  %v3324 = vsel %vm3323, %v3316, %v3320
  %v3325 = vand.u32 2147483647, %v3315
  %vm3326 = vcmp.eq.f32.partialorder %v3325, 8.507059e+37
  %v3327 = vand.u32 %v3315, 2147483648
  %v3328 = vor.u32 1.1754944e-38, %v3327
  %v3329 = vsel %vm3326, %v3328, %v3324
  %v3330 = vmul.f32 1.0, %v3329
  %v3331 = vadd.f32 %v2429, %v3289
  %v3332 = vxor.u32 %v3331, 2147483648
  %v3333 = vmul.f32 %v3332, 1.442695
  %v3334 = vpow.pop %v3333
  %v3335 = vadd.f32 %v3334, 1.0
  %v3336 = vrcp.pop %v3335
  %v3337 = vmul.f32 %v3335, %v3336
  %v3338 = vsub.f32 1.0, %v3337
  %v3339 = vmul.f32 %v3336, %v3338
  %v3340 = vadd.f32 %v3336, %v3339
  %vm3341 = vweird.f32 %v3335
  %vm3342 = vweird.f32 %v3336
  %vm3343 = vmor %vm3341, %vm3342
  %v3344 = vsel %vm3343, %v3336, %v3340
  %v3345 = vand.u32 2147483647, %v3335
  %vm3346 = vcmp.eq.f32.partialorder %v3345, 8.507059e+37
  %v3347 = vand.u32 %v3335, 2147483648
  %v3348 = vor.u32 1.1754944e-38, %v3347
  %v3349 = vsel %vm3346, %v3348, %v3344
  %v3350 = vmul.f32 1.0, %v3349
  %v3351 = vmul.f32 %v3330, %v3309
  %v3352 = vadd.f32 %v2473, %v3351
  %v3353 = vtanh.pop %v3352
  %v3354 = vsub.f32 1.0, %v3350
  %v3355 = vmul.f32 %v3354, %v3353
  %v3356 = vmul.f32 %v3350, %v3247
  %v3357 = vadd.f32 %v3355, %v3356
  %s3358 = scalar_lea.vmem %s8, 192
  %v3359 = vld [vmem:[%s3358] sm:$0xff]
  %v3360 = vld [vmem:[%s3358 + $0x8] sm:$0xff]
  %v3361 = vld [vmem:[%s3358 + $0x10] sm:$0xff]
  %v3362 = vld [vmem:[%s3358 + $0x18] sm:$0xff]
  %v3363 = vld [vmem:[%s3358 + $0x20] sm:$0xff]
  %v3364 = vld [vmem:[%s3358 + $0x28] sm:$0xff]
  %v3365 = vld [vmem:[%s3358 + $0x30] sm:$0xff]
  %v3366 = vld [vmem:[%s3358 + $0x38] sm:$0xff]
  %s3367 = scalar_lea.vmem %s8, 256
  %v3368 = vld [vmem:[%s3367] sm:$0xff]
  %v3369 = vld [vmem:[%s3367 + $0x8] sm:$0xff]
  %v3370 = vld [vmem:[%s3367 + $0x10] sm:$0xff]
  %v3371 = vld [vmem:[%s3367 + $0x18] sm:$0xff]
  %v3372 = vld [vmem:[%s3367 + $0x20] sm:$0xff]
  %v3373 = vld [vmem:[%s3367 + $0x28] sm:$0xff]
  %v3374 = vld [vmem:[%s3367 + $0x30] sm:$0xff]
  %v3375 = vld [vmem:[%s3367 + $0x38] sm:$0xff]
  %s3376 = scalar_lea.vmem %s8, 320
  %v3377 = vld [vmem:[%s3376] sm:$0xff]
  %v3378 = vld [vmem:[%s3376 + $0x8] sm:$0xff]
  %v3379 = vld [vmem:[%s3376 + $0x10] sm:$0xff]
  %v3380 = vld [vmem:[%s3376 + $0x18] sm:$0xff]
  %v3381 = vld [vmem:[%s3376 + $0x20] sm:$0xff]
  %v3382 = vld [vmem:[%s3376 + $0x28] sm:$0xff]
  %v3383 = vld [vmem:[%s3376 + $0x30] sm:$0xff]
  %v3384 = vld [vmem:[%s3376 + $0x38] sm:$0xff]
  %s3385 = scalar_lea.vmem %s9, 192
  %v3386 = vld [vmem:[%s3385] sm:$0xff]
  %v3387 = vld [vmem:[%s3385 + $0x8] sm:$0xff]
  %v3388 = vld [vmem:[%s3385 + $0x10] sm:$0xff]
  %v3389 = vld [vmem:[%s3385 + $0x18] sm:$0xff]
  %v3390 = vld [vmem:[%s3385 + $0x20] sm:$0xff]
  %v3391 = vld [vmem:[%s3385 + $0x28] sm:$0xff]
  %v3392 = vld [vmem:[%s3385 + $0x30] sm:$0xff]
  %v3393 = vld [vmem:[%s3385 + $0x38] sm:$0xff]
  %s3394 = scalar_lea.vmem %s9, 256
  %v3395 = vld [vmem:[%s3394] sm:$0xff]
  %v3396 = vld [vmem:[%s3394 + $0x8] sm:$0xff]
  %v3397 = vld [vmem:[%s3394 + $0x10] sm:$0xff]
  %v3398 = vld [vmem:[%s3394 + $0x18] sm:$0xff]
  %v3399 = vld [vmem:[%s3394 + $0x20] sm:$0xff]
  %v3400 = vld [vmem:[%s3394 + $0x28] sm:$0xff]
  %v3401 = vld [vmem:[%s3394 + $0x30] sm:$0xff]
  %v3402 = vld [vmem:[%s3394 + $0x38] sm:$0xff]
  %s3403 = scalar_lea.vmem %s9, 320
  %v3404 = vld [vmem:[%s3403] sm:$0xff]
  %v3405 = vld [vmem:[%s3403 + $0x8] sm:$0xff]
  %v3406 = vld [vmem:[%s3403 + $0x10] sm:$0xff]
  %v3407 = vld [vmem:[%s3403 + $0x18] sm:$0xff]
  %v3408 = vld [vmem:[%s3403 + $0x20] sm:$0xff]
  %v3409 = vld [vmem:[%s3403 + $0x28] sm:$0xff]
  %v3410 = vld [vmem:[%s3403 + $0x30] sm:$0xff]
  %v3411 = vld [vmem:[%s3403 + $0x38] sm:$0xff]
  %s3412 = scalar_lea.vmem %s10, 3
  %v3413 = vld [vmem:[%s3412] sm:$0x1]
  %s3414 = scalar_lea.vmem %s11, 3
  %v3415 = vld [vmem:[%s3414] sm:$0x1]
  %v3416 = vadd.f32 %v3413, %v3415
  %s3417 = scalar_lea.vmem %s10, 4
  %v3418 = vld [vmem:[%s3417] sm:$0x1]
  %s3419 = scalar_lea.vmem %s11, 4
  %v3420 = vld [vmem:[%s3419] sm:$0x1]
  %v3421 = vadd.f32 %v3418, %v3420
  %s3422 = scalar_lea.vmem %s10, 5
  %v3423 = vld [vmem:[%s3422] sm:$0x1]
  %s3424 = scalar_lea.vmem %s11, 5
  %v3425 = vld [vmem:[%s3424] sm:$0x1]
  %v3427 = vperm.slane %v3416, 0
  %v3430 = vsel %vm2321, %v3357, 0
  %3432 = vmatpush.msra.mxu0 0.0
  %3433 = vmatpush.msra.mxu0 0.0
  %3434 = vmatpush.msra.mxu0 0.0
  %3435 = vmatpush.msra.mxu0 0.0
  %3436 = vmatpush.msra.mxu0 0.0
  %3437 = vmatpush.msra.mxu0 0.0
  %3438 = vmatpush.msra.mxu0 0.0
  %3439 = vmatpush.msra.mxu0 0.0
  %3440 = vmatpush.msra.mxu0 %v3366
  %3441 = vmatpush.msra.mxu0 %v3365
  %3442 = vmatpush.msra.mxu0 %v3364
  %3443 = vmatpush.msra.mxu0 %v3363
  %3444 = vmatpush.msra.mxu0 %v3362
  %3445 = vmatpush.msra.mxu0 %v3361
  %3446 = vmatpush.msra.mxu0 %v3360
  %3447 = vmatpush.msra.mxu0 %v3359
  %3448 = vmatmul.f32.gmra.mxu0 %v2589
  %v3449 = vpop.f32.mrf.mxu0
  %v3450 = vadd.f32 %v3427, %v3449
  %3451 = vmatmul.f32.gmra.mxu0 %v2699
  %v3452 = vpop.f32.mrf.mxu0
  %v3453 = vadd.f32 %v3427, %v3452
  %3454 = vmatmul.f32.gmra.mxu0 %v2809
  %v3455 = vpop.f32.mrf.mxu0
  %v3456 = vadd.f32 %v3427, %v3455
  %3457 = vmatmul.f32.gmra.mxu0 %v2919
  %v3458 = vpop.f32.mrf.mxu0
  %v3459 = vadd.f32 %v3427, %v3458
  %3460 = vmatmul.f32.gmra.mxu0 %v3029
  %v3461 = vpop.f32.mrf.mxu0
  %v3462 = vadd.f32 %v3427, %v3461
  %3463 = vmatmul.f32.gmra.mxu0 %v3139
  %v3464 = vpop.f32.mrf.mxu0
  %v3465 = vadd.f32 %v3427, %v3464
  %3466 = vmatmul.f32.gmra.mxu0 %v3249
  %v3467 = vpop.f32.mrf.mxu0
  %v3468 = vadd.f32 %v3427, %v3467
  %3469 = vmatmul.f32.gmra.mxu0 %v3430
  %v3470 = vpop.f32.mrf.mxu0
  %v3471 = vadd.f32 %v3427, %v3470
  %3472 = vdwg.mxu0
  %v3474 = vperm.slane %v3421, 0
  %3476 = vmatpush.msra.mxu0 0.0
  %3477 = vmatpush.msra.mxu0 0.0
  %3478 = vmatpush.msra.mxu0 0.0
  %3479 = vmatpush.msra.mxu0 0.0
  %3480 = vmatpush.msra.mxu0 0.0
  %3481 = vmatpush.msra.mxu0 0.0
  %3482 = vmatpush.msra.mxu0 0.0
  %3483 = vmatpush.msra.mxu0 0.0
  %3484 = vmatpush.msra.mxu0 %v3375
  %3485 = vmatpush.msra.mxu0 %v3374
  %3486 = vmatpush.msra.mxu0 %v3373
  %3487 = vmatpush.msra.mxu0 %v3372
  %3488 = vmatpush.msra.mxu0 %v3371
  %3489 = vmatpush.msra.mxu0 %v3370
  %3490 = vmatpush.msra.mxu0 %v3369
  %3491 = vmatpush.msra.mxu0 %v3368
  %3492 = vmatmul.f32.gmra.mxu0 %v2589
  %v3493 = vpop.f32.mrf.mxu0
  %v3494 = vadd.f32 %v3474, %v3493
  %3495 = vmatmul.f32.gmra.mxu0 %v2699
  %v3496 = vpop.f32.mrf.mxu0
  %v3497 = vadd.f32 %v3474, %v3496
  %3498 = vmatmul.f32.gmra.mxu0 %v2809
  %v3499 = vpop.f32.mrf.mxu0
  %v3500 = vadd.f32 %v3474, %v3499
  %3501 = vmatmul.f32.gmra.mxu0 %v2919
  %v3502 = vpop.f32.mrf.mxu0
  %v3503 = vadd.f32 %v3474, %v3502
  %3504 = vmatmul.f32.gmra.mxu0 %v3029
  %v3505 = vpop.f32.mrf.mxu0
  %v3506 = vadd.f32 %v3474, %v3505
  %3507 = vmatmul.f32.gmra.mxu0 %v3139
  %v3508 = vpop.f32.mrf.mxu0
  %v3509 = vadd.f32 %v3474, %v3508
  %3510 = vmatmul.f32.gmra.mxu0 %v3249
  %v3511 = vpop.f32.mrf.mxu0
  %v3512 = vadd.f32 %v3474, %v3511
  %3513 = vmatmul.f32.gmra.mxu0 %v3430
  %v3514 = vpop.f32.mrf.mxu0
  %v3515 = vadd.f32 %v3474, %v3514
  %3516 = vdwg.mxu0
  %v3518 = vperm.slane %v3423, 0
  %3520 = vmatpush.msra.mxu0 0.0
  %3521 = vmatpush.msra.mxu0 0.0
  %3522 = vmatpush.msra.mxu0 0.0
  %3523 = vmatpush.msra.mxu0 0.0
  %3524 = vmatpush.msra.mxu0 0.0
  %3525 = vmatpush.msra.mxu0 0.0
  %3526 = vmatpush.msra.mxu0 0.0
  %3527 = vmatpush.msra.mxu0 0.0
  %3528 = vmatpush.msra.mxu0 %v3384
  %3529 = vmatpush.msra.mxu0 %v3383
  %3530 = vmatpush.msra.mxu0 %v3382
  %3531 = vmatpush.msra.mxu0 %v3381
  %3532 = vmatpush.msra.mxu0 %v3380
  %3533 = vmatpush.msra.mxu0 %v3379
  %3534 = vmatpush.msra.mxu0 %v3378
  %3535 = vmatpush.msra.mxu0 %v3377
  %3536 = vmatmul.f32.gmra.mxu0 %v2589
  %v3537 = vpop.f32.mrf.mxu0
  %v3538 = vadd.f32 %v3518, %v3537
  %3539 = vmatmul.f32.gmra.mxu0 %v2699
  %v3540 = vpop.f32.mrf.mxu0
  %v3541 = vadd.f32 %v3518, %v3540
  %3542 = vmatmul.f32.gmra.mxu0 %v2809
  %v3543 = vpop.f32.mrf.mxu0
  %v3544 = vadd.f32 %v3518, %v3543
  %3545 = vmatmul.f32.gmra.mxu0 %v2919
  %v3546 = vpop.f32.mrf.mxu0
  %v3547 = vadd.f32 %v3518, %v3546
  %3548 = vmatmul.f32.gmra.mxu0 %v3029
  %v3549 = vpop.f32.mrf.mxu0
  %v3550 = vadd.f32 %v3518, %v3549
  %3551 = vmatmul.f32.gmra.mxu0 %v3139
  %v3552 = vpop.f32.mrf.mxu0
  %v3553 = vadd.f32 %v3518, %v3552
  %3554 = vmatmul.f32.gmra.mxu0 %v3249
  %v3555 = vpop.f32.mrf.mxu0
  %v3556 = vadd.f32 %v3518, %v3555
  %3557 = vmatmul.f32.gmra.mxu0 %v3430
  %v3558 = vpop.f32.mrf.mxu0
  %v3559 = vadd.f32 %v3518, %v3558
  %3560 = vdwg.mxu0
  %v3562 = vsel %vm2321, %v2244, 0
  %3564 = vmatpush.msra.mxu0 0.0
  %3565 = vmatpush.msra.mxu0 0.0
  %3566 = vmatpush.msra.mxu0 0.0
  %3567 = vmatpush.msra.mxu0 0.0
  %3568 = vmatpush.msra.mxu0 0.0
  %3569 = vmatpush.msra.mxu0 0.0
  %3570 = vmatpush.msra.mxu0 0.0
  %3571 = vmatpush.msra.mxu0 0.0
  %3572 = vmatpush.msra.mxu0 %v3393
  %3573 = vmatpush.msra.mxu0 %v3392
  %3574 = vmatpush.msra.mxu0 %v3391
  %3575 = vmatpush.msra.mxu0 %v3390
  %3576 = vmatpush.msra.mxu0 %v3389
  %3577 = vmatpush.msra.mxu0 %v3388
  %3578 = vmatpush.msra.mxu0 %v3387
  %3579 = vmatpush.msra.mxu0 %v3386
  %3580 = vmatmul.f32.gmra.mxu0 %v3562
  %v3581 = vpop.f32.mrf.mxu0
  %v3582 = vadd.f32 0.0, %v3581
  %3583 = vdwg.mxu0
  %3584 = vmatpush.msra.mxu0 0.0
  %3585 = vmatpush.msra.mxu0 0.0
  %3586 = vmatpush.msra.mxu0 0.0
  %3587 = vmatpush.msra.mxu0 0.0
  %3588 = vmatpush.msra.mxu0 0.0
  %3589 = vmatpush.msra.mxu0 0.0
  %3590 = vmatpush.msra.mxu0 0.0
  %3591 = vmatpush.msra.mxu0 0.0
  %3592 = vmatpush.msra.mxu0 %v3402
  %3593 = vmatpush.msra.mxu0 %v3401
  %3594 = vmatpush.msra.mxu0 %v3400
  %3595 = vmatpush.msra.mxu0 %v3399
  %3596 = vmatpush.msra.mxu0 %v3398
  %3597 = vmatpush.msra.mxu0 %v3397
  %3598 = vmatpush.msra.mxu0 %v3396
  %3599 = vmatpush.msra.mxu0 %v3395
  %3600 = vmatmul.f32.gmra.mxu0 %v3562
  %v3601 = vpop.f32.mrf.mxu0
  %v3602 = vadd.f32 0.0, %v3601
  %3603 = vdwg.mxu0
  %v3605 = vperm.slane %v3425, 0
  %3607 = vmatpush.msra.mxu0 0.0
  %3608 = vmatpush.msra.mxu0 0.0
  %3609 = vmatpush.msra.mxu0 0.0
  %3610 = vmatpush.msra.mxu0 0.0
  %3611 = vmatpush.msra.mxu0 0.0
  %3612 = vmatpush.msra.mxu0 0.0
  %3613 = vmatpush.msra.mxu0 0.0
  %3614 = vmatpush.msra.mxu0 0.0
  %3615 = vmatpush.msra.mxu0 %v3411
  %3616 = vmatpush.msra.mxu0 %v3410
  %3617 = vmatpush.msra.mxu0 %v3409
  %3618 = vmatpush.msra.mxu0 %v3408
  %3619 = vmatpush.msra.mxu0 %v3407
  %3620 = vmatpush.msra.mxu0 %v3406
  %3621 = vmatpush.msra.mxu0 %v3405
  %3622 = vmatpush.msra.mxu0 %v3404
  %3623 = vmatmul.f32.gmra.mxu0 %v3562
  %v3624 = vpop.f32.mrf.mxu0
  %v3625 = vadd.f32 %v3605, %v3624
  %3626 = vdwg.mxu0
  %v3627 = vadd.f32 %v3450, %v3582
  %v3628 = vxor.u32 %v3627, 2147483648
  %v3629 = vmul.f32 %v3628, 1.442695
  %v3630 = vpow.pop %v3629
  %v3631 = vadd.f32 %v3630, 1.0
  %v3632 = vrcp.pop %v3631
  %v3633 = vmul.f32 %v3631, %v3632
  %v3634 = vsub.f32 1.0, %v3633
  %v3635 = vmul.f32 %v3632, %v3634
  %v3636 = vadd.f32 %v3632, %v3635
  %vm3637 = vweird.f32 %v3631
  %vm3638 = vweird.f32 %v3632
  %vm3639 = vmor %vm3637, %vm3638
  %v3640 = vsel %vm3639, %v3632, %v3636
  %v3641 = vand.u32 2147483647, %v3631
  %vm3642 = vcmp.eq.f32.partialorder %v3641, 8.507059e+37
  %v3643 = vand.u32 %v3631, 2147483648
  %v3644 = vor.u32 1.1754944e-38, %v3643
  %v3645 = vsel %vm3642, %v3644, %v3640
  %v3646 = vmul.f32 1.0, %v3645
  %v3647 = vadd.f32 %v3494, %v3602
  %v3648 = vxor.u32 %v3647, 2147483648
  %v3649 = vmul.f32 %v3648, 1.442695
  %v3650 = vpow.pop %v3649
  %v3651 = vadd.f32 %v3650, 1.0
  %v3652 = vrcp.pop %v3651
  %v3653 = vmul.f32 %v3651, %v3652
  %v3654 = vsub.f32 1.0, %v3653
  %v3655 = vmul.f32 %v3652, %v3654
  %v3656 = vadd.f32 %v3652, %v3655
  %vm3657 = vweird.f32 %v3651
  %vm3658 = vweird.f32 %v3652
  %vm3659 = vmor %vm3657, %vm3658
  %v3660 = vsel %vm3659, %v3652, %v3656
  %v3661 = vand.u32 2147483647, %v3651
  %vm3662 = vcmp.eq.f32.partialorder %v3661, 8.507059e+37
  %v3663 = vand.u32 %v3651, 2147483648
  %v3664 = vor.u32 1.1754944e-38, %v3663
  %v3665 = vsel %vm3662, %v3664, %v3660
  %v3666 = vmul.f32 1.0, %v3665
  %v3667 = vmul.f32 %v3646, %v3625
  %v3668 = vadd.f32 %v3538, %v3667
  %v3669 = vtanh.pop %v3668
  %v3670 = vsub.f32 1.0, %v3666
  %v3671 = vmul.f32 %v3670, %v3669
  %v3672 = vmul.f32 %v3666, %v2244
  %v3673 = vadd.f32 %v3671, %v3672
  %v3675 = vsel %vm2321, %v3673, 0
  %3677 = vmatpush.msra.mxu0 0.0
  %3678 = vmatpush.msra.mxu0 0.0
  %3679 = vmatpush.msra.mxu0 0.0
  %3680 = vmatpush.msra.mxu0 0.0
  %3681 = vmatpush.msra.mxu0 0.0
  %3682 = vmatpush.msra.mxu0 0.0
  %3683 = vmatpush.msra.mxu0 0.0
  %3684 = vmatpush.msra.mxu0 0.0
  %3685 = vmatpush.msra.mxu0 %v3393
  %3686 = vmatpush.msra.mxu0 %v3392
  %3687 = vmatpush.msra.mxu0 %v3391
  %3688 = vmatpush.msra.mxu0 %v3390
  %3689 = vmatpush.msra.mxu0 %v3389
  %3690 = vmatpush.msra.mxu0 %v3388
  %3691 = vmatpush.msra.mxu0 %v3387
  %3692 = vmatpush.msra.mxu0 %v3386
  %3693 = vmatmul.f32.gmra.mxu0 %v3675
  %v3694 = vpop.f32.mrf.mxu0
  %v3695 = vadd.f32 0.0, %v3694
  %3696 = vdwg.mxu0
  %3697 = vmatpush.msra.mxu0 0.0
  %3698 = vmatpush.msra.mxu0 0.0
  %3699 = vmatpush.msra.mxu0 0.0
  %3700 = vmatpush.msra.mxu0 0.0
  %3701 = vmatpush.msra.mxu0 0.0
  %3702 = vmatpush.msra.mxu0 0.0
  %3703 = vmatpush.msra.mxu0 0.0
  %3704 = vmatpush.msra.mxu0 0.0
  %3705 = vmatpush.msra.mxu0 %v3402
  %3706 = vmatpush.msra.mxu0 %v3401
  %3707 = vmatpush.msra.mxu0 %v3400
  %3708 = vmatpush.msra.mxu0 %v3399
  %3709 = vmatpush.msra.mxu0 %v3398
  %3710 = vmatpush.msra.mxu0 %v3397
  %3711 = vmatpush.msra.mxu0 %v3396
  %3712 = vmatpush.msra.mxu0 %v3395
  %3713 = vmatmul.f32.gmra.mxu0 %v3675
  %v3714 = vpop.f32.mrf.mxu0
  %v3715 = vadd.f32 0.0, %v3714
  %3716 = vdwg.mxu0
  %3717 = vmatpush.msra.mxu0 0.0
  %3718 = vmatpush.msra.mxu0 0.0
  %3719 = vmatpush.msra.mxu0 0.0
  %3720 = vmatpush.msra.mxu0 0.0
  %3721 = vmatpush.msra.mxu0 0.0
  %3722 = vmatpush.msra.mxu0 0.0
  %3723 = vmatpush.msra.mxu0 0.0
  %3724 = vmatpush.msra.mxu0 0.0
  %3725 = vmatpush.msra.mxu0 %v3411
  %3726 = vmatpush.msra.mxu0 %v3410
  %3727 = vmatpush.msra.mxu0 %v3409
  %3728 = vmatpush.msra.mxu0 %v3408
  %3729 = vmatpush.msra.mxu0 %v3407
  %3730 = vmatpush.msra.mxu0 %v3406
  %3731 = vmatpush.msra.mxu0 %v3405
  %3732 = vmatpush.msra.mxu0 %v3404
  %3733 = vmatmul.f32.gmra.mxu0 %v3675
  %v3734 = vpop.f32.mrf.mxu0
  %v3735 = vadd.f32 %v3605, %v3734
  %3736 = vdwg.mxu0
  %v3737 = vadd.f32 %v3453, %v3695
  %v3738 = vxor.u32 %v3737, 2147483648
  %v3739 = vmul.f32 %v3738, 1.442695
  %v3740 = vpow.pop %v3739
  %v3741 = vadd.f32 %v3740, 1.0
  %v3742 = vrcp.pop %v3741
  %v3743 = vmul.f32 %v3741, %v3742
  %v3744 = vsub.f32 1.0, %v3743
  %v3745 = vmul.f32 %v3742, %v3744
  %v3746 = vadd.f32 %v3742, %v3745
  %vm3747 = vweird.f32 %v3741
  %vm3748 = vweird.f32 %v3742
  %vm3749 = vmor %vm3747, %vm3748
  %v3750 = vsel %vm3749, %v3742, %v3746
  %v3751 = vand.u32 2147483647, %v3741
  %vm3752 = vcmp.eq.f32.partialorder %v3751, 8.507059e+37
  %v3753 = vand.u32 %v3741, 2147483648
  %v3754 = vor.u32 1.1754944e-38, %v3753
  %v3755 = vsel %vm3752, %v3754, %v3750
  %v3756 = vmul.f32 1.0, %v3755
  %v3757 = vadd.f32 %v3497, %v3715
  %v3758 = vxor.u32 %v3757, 2147483648
  %v3759 = vmul.f32 %v3758, 1.442695
  %v3760 = vpow.pop %v3759
  %v3761 = vadd.f32 %v3760, 1.0
  %v3762 = vrcp.pop %v3761
  %v3763 = vmul.f32 %v3761, %v3762
  %v3764 = vsub.f32 1.0, %v3763
  %v3765 = vmul.f32 %v3762, %v3764
  %v3766 = vadd.f32 %v3762, %v3765
  %vm3767 = vweird.f32 %v3761
  %vm3768 = vweird.f32 %v3762
  %vm3769 = vmor %vm3767, %vm3768
  %v3770 = vsel %vm3769, %v3762, %v3766
  %v3771 = vand.u32 2147483647, %v3761
  %vm3772 = vcmp.eq.f32.partialorder %v3771, 8.507059e+37
  %v3773 = vand.u32 %v3761, 2147483648
  %v3774 = vor.u32 1.1754944e-38, %v3773
  %v3775 = vsel %vm3772, %v3774, %v3770
  %v3776 = vmul.f32 1.0, %v3775
  %v3777 = vmul.f32 %v3756, %v3735
  %v3778 = vadd.f32 %v3541, %v3777
  %v3779 = vtanh.pop %v3778
  %v3780 = vsub.f32 1.0, %v3776
  %v3781 = vmul.f32 %v3780, %v3779
  %v3782 = vmul.f32 %v3776, %v3673
  %v3783 = vadd.f32 %v3781, %v3782
  %v3785 = vsel %vm2321, %v3783, 0
  %3787 = vmatpush.msra.mxu0 0.0
  %3788 = vmatpush.msra.mxu0 0.0
  %3789 = vmatpush.msra.mxu0 0.0
  %3790 = vmatpush.msra.mxu0 0.0
  %3791 = vmatpush.msra.mxu0 0.0
  %3792 = vmatpush.msra.mxu0 0.0
  %3793 = vmatpush.msra.mxu0 0.0
  %3794 = vmatpush.msra.mxu0 0.0
  %3795 = vmatpush.msra.mxu0 %v3393
  %3796 = vmatpush.msra.mxu0 %v3392
  %3797 = vmatpush.msra.mxu0 %v3391
  %3798 = vmatpush.msra.mxu0 %v3390
  %3799 = vmatpush.msra.mxu0 %v3389
  %3800 = vmatpush.msra.mxu0 %v3388
  %3801 = vmatpush.msra.mxu0 %v3387
  %3802 = vmatpush.msra.mxu0 %v3386
  %3803 = vmatmul.f32.gmra.mxu0 %v3785
  %v3804 = vpop.f32.mrf.mxu0
  %v3805 = vadd.f32 0.0, %v3804
  %3806 = vdwg.mxu0
  %3807 = vmatpush.msra.mxu0 0.0
  %3808 = vmatpush.msra.mxu0 0.0
  %3809 = vmatpush.msra.mxu0 0.0
  %3810 = vmatpush.msra.mxu0 0.0
  %3811 = vmatpush.msra.mxu0 0.0
  %3812 = vmatpush.msra.mxu0 0.0
  %3813 = vmatpush.msra.mxu0 0.0
  %3814 = vmatpush.msra.mxu0 0.0
  %3815 = vmatpush.msra.mxu0 %v3402
  %3816 = vmatpush.msra.mxu0 %v3401
  %3817 = vmatpush.msra.mxu0 %v3400
  %3818 = vmatpush.msra.mxu0 %v3399
  %3819 = vmatpush.msra.mxu0 %v3398
  %3820 = vmatpush.msra.mxu0 %v3397
  %3821 = vmatpush.msra.mxu0 %v3396
  %3822 = vmatpush.msra.mxu0 %v3395
  %3823 = vmatmul.f32.gmra.mxu0 %v3785
  %v3824 = vpop.f32.mrf.mxu0
  %v3825 = vadd.f32 0.0, %v3824
  %3826 = vdwg.mxu0
  %3827 = vmatpush.msra.mxu0 0.0
  %3828 = vmatpush.msra.mxu0 0.0
  %3829 = vmatpush.msra.mxu0 0.0
  %3830 = vmatpush.msra.mxu0 0.0
  %3831 = vmatpush.msra.mxu0 0.0
  %3832 = vmatpush.msra.mxu0 0.0
  %3833 = vmatpush.msra.mxu0 0.0
  %3834 = vmatpush.msra.mxu0 0.0
  %3835 = vmatpush.msra.mxu0 %v3411
  %3836 = vmatpush.msra.mxu0 %v3410
  %3837 = vmatpush.msra.mxu0 %v3409
  %3838 = vmatpush.msra.mxu0 %v3408
  %3839 = vmatpush.msra.mxu0 %v3407
  %3840 = vmatpush.msra.mxu0 %v3406
  %3841 = vmatpush.msra.mxu0 %v3405
  %3842 = vmatpush.msra.mxu0 %v3404
  %3843 = vmatmul.f32.gmra.mxu0 %v3785
  %v3844 = vpop.f32.mrf.mxu0
  %v3845 = vadd.f32 %v3605, %v3844
  %3846 = vdwg.mxu0
  %v3847 = vadd.f32 %v3456, %v3805
  %v3848 = vxor.u32 %v3847, 2147483648
  %v3849 = vmul.f32 %v3848, 1.442695
  %v3850 = vpow.pop %v3849
  %v3851 = vadd.f32 %v3850, 1.0
  %v3852 = vrcp.pop %v3851
  %v3853 = vmul.f32 %v3851, %v3852
  %v3854 = vsub.f32 1.0, %v3853
  %v3855 = vmul.f32 %v3852, %v3854
  %v3856 = vadd.f32 %v3852, %v3855
  %vm3857 = vweird.f32 %v3851
  %vm3858 = vweird.f32 %v3852
  %vm3859 = vmor %vm3857, %vm3858
  %v3860 = vsel %vm3859, %v3852, %v3856
  %v3861 = vand.u32 2147483647, %v3851
  %vm3862 = vcmp.eq.f32.partialorder %v3861, 8.507059e+37
  %v3863 = vand.u32 %v3851, 2147483648
  %v3864 = vor.u32 1.1754944e-38, %v3863
  %v3865 = vsel %vm3862, %v3864, %v3860
  %v3866 = vmul.f32 1.0, %v3865
  %v3867 = vadd.f32 %v3500, %v3825
  %v3868 = vxor.u32 %v3867, 2147483648
  %v3869 = vmul.f32 %v3868, 1.442695
  %v3870 = vpow.pop %v3869
  %v3871 = vadd.f32 %v3870, 1.0
  %v3872 = vrcp.pop %v3871
  %v3873 = vmul.f32 %v3871, %v3872
  %v3874 = vsub.f32 1.0, %v3873
  %v3875 = vmul.f32 %v3872, %v3874
  %v3876 = vadd.f32 %v3872, %v3875
  %vm3877 = vweird.f32 %v3871
  %vm3878 = vweird.f32 %v3872
  %vm3879 = vmor %vm3877, %vm3878
  %v3880 = vsel %vm3879, %v3872, %v3876
  %v3881 = vand.u32 2147483647, %v3871
  %vm3882 = vcmp.eq.f32.partialorder %v3881, 8.507059e+37
  %v3883 = vand.u32 %v3871, 2147483648
  %v3884 = vor.u32 1.1754944e-38, %v3883
  %v3885 = vsel %vm3882, %v3884, %v3880
  %v3886 = vmul.f32 1.0, %v3885
  %v3887 = vmul.f32 %v3866, %v3845
  %v3888 = vadd.f32 %v3544, %v3887
  %v3889 = vtanh.pop %v3888
  %v3890 = vsub.f32 1.0, %v3886
  %v3891 = vmul.f32 %v3890, %v3889
  %v3892 = vmul.f32 %v3886, %v3783
  %v3893 = vadd.f32 %v3891, %v3892
  %v3895 = vsel %vm2321, %v3893, 0
  %3897 = vmatpush.msra.mxu0 0.0
  %3898 = vmatpush.msra.mxu0 0.0
  %3899 = vmatpush.msra.mxu0 0.0
  %3900 = vmatpush.msra.mxu0 0.0
  %3901 = vmatpush.msra.mxu0 0.0
  %3902 = vmatpush.msra.mxu0 0.0
  %3903 = vmatpush.msra.mxu0 0.0
  %3904 = vmatpush.msra.mxu0 0.0
  %3905 = vmatpush.msra.mxu0 %v3393
  %3906 = vmatpush.msra.mxu0 %v3392
  %3907 = vmatpush.msra.mxu0 %v3391
  %3908 = vmatpush.msra.mxu0 %v3390
  %3909 = vmatpush.msra.mxu0 %v3389
  %3910 = vmatpush.msra.mxu0 %v3388
  %3911 = vmatpush.msra.mxu0 %v3387
  %3912 = vmatpush.msra.mxu0 %v3386
  %3913 = vmatmul.f32.gmra.mxu0 %v3895
  %v3914 = vpop.f32.mrf.mxu0
  %v3915 = vadd.f32 0.0, %v3914
  %3916 = vdwg.mxu0
  %3917 = vmatpush.msra.mxu0 0.0
  %3918 = vmatpush.msra.mxu0 0.0
  %3919 = vmatpush.msra.mxu0 0.0
  %3920 = vmatpush.msra.mxu0 0.0
  %3921 = vmatpush.msra.mxu0 0.0
  %3922 = vmatpush.msra.mxu0 0.0
  %3923 = vmatpush.msra.mxu0 0.0
  %3924 = vmatpush.msra.mxu0 0.0
  %3925 = vmatpush.msra.mxu0 %v3402
  %3926 = vmatpush.msra.mxu0 %v3401
  %3927 = vmatpush.msra.mxu0 %v3400
  %3928 = vmatpush.msra.mxu0 %v3399
  %3929 = vmatpush.msra.mxu0 %v3398
  %3930 = vmatpush.msra.mxu0 %v3397
  %3931 = vmatpush.msra.mxu0 %v3396
  %3932 = vmatpush.msra.mxu0 %v3395
  %3933 = vmatmul.f32.gmra.mxu0 %v3895
  %v3934 = vpop.f32.mrf.mxu0
  %v3935 = vadd.f32 0.0, %v3934
  %3936 = vdwg.mxu0
  %3937 = vmatpush.msra.mxu0 0.0
  %3938 = vmatpush.msra.mxu0 0.0
  %3939 = vmatpush.msra.mxu0 0.0
  %3940 = vmatpush.msra.mxu0 0.0
  %3941 = vmatpush.msra.mxu0 0.0
  %3942 = vmatpush.msra.mxu0 0.0
  %3943 = vmatpush.msra.mxu0 0.0
  %3944 = vmatpush.msra.mxu0 0.0
  %3945 = vmatpush.msra.mxu0 %v3411
  %3946 = vmatpush.msra.mxu0 %v3410
  %3947 = vmatpush.msra.mxu0 %v3409
  %3948 = vmatpush.msra.mxu0 %v3408
  %3949 = vmatpush.msra.mxu0 %v3407
  %3950 = vmatpush.msra.mxu0 %v3406
  %3951 = vmatpush.msra.mxu0 %v3405
  %3952 = vmatpush.msra.mxu0 %v3404
  %3953 = vmatmul.f32.gmra.mxu0 %v3895
  %v3954 = vpop.f32.mrf.mxu0
  %v3955 = vadd.f32 %v3605, %v3954
  %3956 = vdwg.mxu0
  %v3957 = vadd.f32 %v3459, %v3915
  %v3958 = vxor.u32 %v3957, 2147483648
  %v3959 = vmul.f32 %v3958, 1.442695
  %v3960 = vpow.pop %v3959
  %v3961 = vadd.f32 %v3960, 1.0
  %v3962 = vrcp.pop %v3961
  %v3963 = vmul.f32 %v3961, %v3962
  %v3964 = vsub.f32 1.0, %v3963
  %v3965 = vmul.f32 %v3962, %v3964
  %v3966 = vadd.f32 %v3962, %v3965
  %vm3967 = vweird.f32 %v3961
  %vm3968 = vweird.f32 %v3962
  %vm3969 = vmor %vm3967, %vm3968
  %v3970 = vsel %vm3969, %v3962, %v3966
  %v3971 = vand.u32 2147483647, %v3961
  %vm3972 = vcmp.eq.f32.partialorder %v3971, 8.507059e+37
  %v3973 = vand.u32 %v3961, 2147483648
  %v3974 = vor.u32 1.1754944e-38, %v3973
  %v3975 = vsel %vm3972, %v3974, %v3970
  %v3976 = vmul.f32 1.0, %v3975
  %v3977 = vadd.f32 %v3503, %v3935
  %v3978 = vxor.u32 %v3977, 2147483648
  %v3979 = vmul.f32 %v3978, 1.442695
  %v3980 = vpow.pop %v3979
  %v3981 = vadd.f32 %v3980, 1.0
  %v3982 = vrcp.pop %v3981
  %v3983 = vmul.f32 %v3981, %v3982
  %v3984 = vsub.f32 1.0, %v3983
  %v3985 = vmul.f32 %v3982, %v3984
  %v3986 = vadd.f32 %v3982, %v3985
  %vm3987 = vweird.f32 %v3981
  %vm3988 = vweird.f32 %v3982
  %vm3989 = vmor %vm3987, %vm3988
  %v3990 = vsel %vm3989, %v3982, %v3986
  %v3991 = vand.u32 2147483647, %v3981
  %vm3992 = vcmp.eq.f32.partialorder %v3991, 8.507059e+37
  %v3993 = vand.u32 %v3981, 2147483648
  %v3994 = vor.u32 1.1754944e-38, %v3993
  %v3995 = vsel %vm3992, %v3994, %v3990
  %v3996 = vmul.f32 1.0, %v3995
  %v3997 = vmul.f32 %v3976, %v3955
  %v3998 = vadd.f32 %v3547, %v3997
  %v3999 = vtanh.pop %v3998
  %v4000 = vsub.f32 1.0, %v3996
  %v4001 = vmul.f32 %v4000, %v3999
  %v4002 = vmul.f32 %v3996, %v3893
  %v4003 = vadd.f32 %v4001, %v4002
  %v4005 = vsel %vm2321, %v4003, 0
  %4007 = vmatpush.msra.mxu0 0.0
  %4008 = vmatpush.msra.mxu0 0.0
  %4009 = vmatpush.msra.mxu0 0.0
  %4010 = vmatpush.msra.mxu0 0.0
  %4011 = vmatpush.msra.mxu0 0.0
  %4012 = vmatpush.msra.mxu0 0.0
  %4013 = vmatpush.msra.mxu0 0.0
  %4014 = vmatpush.msra.mxu0 0.0
  %4015 = vmatpush.msra.mxu0 %v3393
  %4016 = vmatpush.msra.mxu0 %v3392
  %4017 = vmatpush.msra.mxu0 %v3391
  %4018 = vmatpush.msra.mxu0 %v3390
  %4019 = vmatpush.msra.mxu0 %v3389
  %4020 = vmatpush.msra.mxu0 %v3388
  %4021 = vmatpush.msra.mxu0 %v3387
  %4022 = vmatpush.msra.mxu0 %v3386
  %4023 = vmatmul.f32.gmra.mxu0 %v4005
  %v4024 = vpop.f32.mrf.mxu0
  %v4025 = vadd.f32 0.0, %v4024
  %4026 = vdwg.mxu0
  %4027 = vmatpush.msra.mxu0 0.0
  %4028 = vmatpush.msra.mxu0 0.0
  %4029 = vmatpush.msra.mxu0 0.0
  %4030 = vmatpush.msra.mxu0 0.0
  %4031 = vmatpush.msra.mxu0 0.0
  %4032 = vmatpush.msra.mxu0 0.0
  %4033 = vmatpush.msra.mxu0 0.0
  %4034 = vmatpush.msra.mxu0 0.0
  %4035 = vmatpush.msra.mxu0 %v3402
  %4036 = vmatpush.msra.mxu0 %v3401
  %4037 = vmatpush.msra.mxu0 %v3400
  %4038 = vmatpush.msra.mxu0 %v3399
  %4039 = vmatpush.msra.mxu0 %v3398
  %4040 = vmatpush.msra.mxu0 %v3397
  %4041 = vmatpush.msra.mxu0 %v3396
  %4042 = vmatpush.msra.mxu0 %v3395
  %4043 = vmatmul.f32.gmra.mxu0 %v4005
  %v4044 = vpop.f32.mrf.mxu0
  %v4045 = vadd.f32 0.0, %v4044
  %4046 = vdwg.mxu0
  %4047 = vmatpush.msra.mxu0 0.0
  %4048 = vmatpush.msra.mxu0 0.0
  %4049 = vmatpush.msra.mxu0 0.0
  %4050 = vmatpush.msra.mxu0 0.0
  %4051 = vmatpush.msra.mxu0 0.0
  %4052 = vmatpush.msra.mxu0 0.0
  %4053 = vmatpush.msra.mxu0 0.0
  %4054 = vmatpush.msra.mxu0 0.0
  %4055 = vmatpush.msra.mxu0 %v3411
  %4056 = vmatpush.msra.mxu0 %v3410
  %4057 = vmatpush.msra.mxu0 %v3409
  %4058 = vmatpush.msra.mxu0 %v3408
  %4059 = vmatpush.msra.mxu0 %v3407
  %4060 = vmatpush.msra.mxu0 %v3406
  %4061 = vmatpush.msra.mxu0 %v3405
  %4062 = vmatpush.msra.mxu0 %v3404
  %4063 = vmatmul.f32.gmra.mxu0 %v4005
  %v4064 = vpop.f32.mrf.mxu0
  %v4065 = vadd.f32 %v3605, %v4064
  %4066 = vdwg.mxu0
  %v4067 = vadd.f32 %v3462, %v4025
  %v4068 = vxor.u32 %v4067, 2147483648
  %v4069 = vmul.f32 %v4068, 1.442695
  %v4070 = vpow.pop %v4069
  %v4071 = vadd.f32 %v4070, 1.0
  %v4072 = vrcp.pop %v4071
  %v4073 = vmul.f32 %v4071, %v4072
  %v4074 = vsub.f32 1.0, %v4073
  %v4075 = vmul.f32 %v4072, %v4074
  %v4076 = vadd.f32 %v4072, %v4075
  %vm4077 = vweird.f32 %v4071
  %vm4078 = vweird.f32 %v4072
  %vm4079 = vmor %vm4077, %vm4078
  %v4080 = vsel %vm4079, %v4072, %v4076
  %v4081 = vand.u32 2147483647, %v4071
  %vm4082 = vcmp.eq.f32.partialorder %v4081, 8.507059e+37
  %v4083 = vand.u32 %v4071, 2147483648
  %v4084 = vor.u32 1.1754944e-38, %v4083
  %v4085 = vsel %vm4082, %v4084, %v4080
  %v4086 = vmul.f32 1.0, %v4085
  %v4087 = vadd.f32 %v3506, %v4045
  %v4088 = vxor.u32 %v4087, 2147483648
  %v4089 = vmul.f32 %v4088, 1.442695
  %v4090 = vpow.pop %v4089
  %v4091 = vadd.f32 %v4090, 1.0
  %v4092 = vrcp.pop %v4091
  %v4093 = vmul.f32 %v4091, %v4092
  %v4094 = vsub.f32 1.0, %v4093
  %v4095 = vmul.f32 %v4092, %v4094
  %v4096 = vadd.f32 %v4092, %v4095
  %vm4097 = vweird.f32 %v4091
  %vm4098 = vweird.f32 %v4092
  %vm4099 = vmor %vm4097, %vm4098
  %v4100 = vsel %vm4099, %v4092, %v4096
  %v4101 = vand.u32 2147483647, %v4091
  %vm4102 = vcmp.eq.f32.partialorder %v4101, 8.507059e+37
  %v4103 = vand.u32 %v4091, 2147483648
  %v4104 = vor.u32 1.1754944e-38, %v4103
  %v4105 = vsel %vm4102, %v4104, %v4100
  %v4106 = vmul.f32 1.0, %v4105
  %v4107 = vmul.f32 %v4086, %v4065
  %v4108 = vadd.f32 %v3550, %v4107
  %v4109 = vtanh.pop %v4108
  %v4110 = vsub.f32 1.0, %v4106
  %v4111 = vmul.f32 %v4110, %v4109
  %v4112 = vmul.f32 %v4106, %v4003
  %v4113 = vadd.f32 %v4111, %v4112
  %v4115 = vsel %vm2321, %v4113, 0
  %4117 = vmatpush.msra.mxu0 0.0
  %4118 = vmatpush.msra.mxu0 0.0
  %4119 = vmatpush.msra.mxu0 0.0
  %4120 = vmatpush.msra.mxu0 0.0
  %4121 = vmatpush.msra.mxu0 0.0
  %4122 = vmatpush.msra.mxu0 0.0
  %4123 = vmatpush.msra.mxu0 0.0
  %4124 = vmatpush.msra.mxu0 0.0
  %4125 = vmatpush.msra.mxu0 %v3393
  %4126 = vmatpush.msra.mxu0 %v3392
  %4127 = vmatpush.msra.mxu0 %v3391
  %4128 = vmatpush.msra.mxu0 %v3390
  %4129 = vmatpush.msra.mxu0 %v3389
  %4130 = vmatpush.msra.mxu0 %v3388
  %4131 = vmatpush.msra.mxu0 %v3387
  %4132 = vmatpush.msra.mxu0 %v3386
  %4133 = vmatmul.f32.gmra.mxu0 %v4115
  %v4134 = vpop.f32.mrf.mxu0
  %v4135 = vadd.f32 0.0, %v4134
  %4136 = vdwg.mxu0
  %4137 = vmatpush.msra.mxu0 0.0
  %4138 = vmatpush.msra.mxu0 0.0
  %4139 = vmatpush.msra.mxu0 0.0
  %4140 = vmatpush.msra.mxu0 0.0
  %4141 = vmatpush.msra.mxu0 0.0
  %4142 = vmatpush.msra.mxu0 0.0
  %4143 = vmatpush.msra.mxu0 0.0
  %4144 = vmatpush.msra.mxu0 0.0
  %4145 = vmatpush.msra.mxu0 %v3402
  %4146 = vmatpush.msra.mxu0 %v3401
  %4147 = vmatpush.msra.mxu0 %v3400
  %4148 = vmatpush.msra.mxu0 %v3399
  %4149 = vmatpush.msra.mxu0 %v3398
  %4150 = vmatpush.msra.mxu0 %v3397
  %4151 = vmatpush.msra.mxu0 %v3396
  %4152 = vmatpush.msra.mxu0 %v3395
  %4153 = vmatmul.f32.gmra.mxu0 %v4115
  %v4154 = vpop.f32.mrf.mxu0
  %v4155 = vadd.f32 0.0, %v4154
  %4156 = vdwg.mxu0
  %4157 = vmatpush.msra.mxu0 0.0
  %4158 = vmatpush.msra.mxu0 0.0
  %4159 = vmatpush.msra.mxu0 0.0
  %4160 = vmatpush.msra.mxu0 0.0
  %4161 = vmatpush.msra.mxu0 0.0
  %4162 = vmatpush.msra.mxu0 0.0
  %4163 = vmatpush.msra.mxu0 0.0
  %4164 = vmatpush.msra.mxu0 0.0
  %4165 = vmatpush.msra.mxu0 %v3411
  %4166 = vmatpush.msra.mxu0 %v3410
  %4167 = vmatpush.msra.mxu0 %v3409
  %4168 = vmatpush.msra.mxu0 %v3408
  %4169 = vmatpush.msra.mxu0 %v3407
  %4170 = vmatpush.msra.mxu0 %v3406
  %4171 = vmatpush.msra.mxu0 %v3405
  %4172 = vmatpush.msra.mxu0 %v3404
  %4173 = vmatmul.f32.gmra.mxu0 %v4115
  %v4174 = vpop.f32.mrf.mxu0
  %v4175 = vadd.f32 %v3605, %v4174
  %4176 = vdwg.mxu0
  %v4177 = vadd.f32 %v3465, %v4135
  %v4178 = vxor.u32 %v4177, 2147483648
  %v4179 = vmul.f32 %v4178, 1.442695
  %v4180 = vpow.pop %v4179
  %v4181 = vadd.f32 %v4180, 1.0
  %v4182 = vrcp.pop %v4181
  %v4183 = vmul.f32 %v4181, %v4182
  %v4184 = vsub.f32 1.0, %v4183
  %v4185 = vmul.f32 %v4182, %v4184
  %v4186 = vadd.f32 %v4182, %v4185
  %vm4187 = vweird.f32 %v4181
  %vm4188 = vweird.f32 %v4182
  %vm4189 = vmor %vm4187, %vm4188
  %v4190 = vsel %vm4189, %v4182, %v4186
  %v4191 = vand.u32 2147483647, %v4181
  %vm4192 = vcmp.eq.f32.partialorder %v4191, 8.507059e+37
  %v4193 = vand.u32 %v4181, 2147483648
  %v4194 = vor.u32 1.1754944e-38, %v4193
  %v4195 = vsel %vm4192, %v4194, %v4190
  %v4196 = vmul.f32 1.0, %v4195
  %v4197 = vadd.f32 %v3509, %v4155
  %v4198 = vxor.u32 %v4197, 2147483648
  %v4199 = vmul.f32 %v4198, 1.442695
  %v4200 = vpow.pop %v4199
  %v4201 = vadd.f32 %v4200, 1.0
  %v4202 = vrcp.pop %v4201
  %v4203 = vmul.f32 %v4201, %v4202
  %v4204 = vsub.f32 1.0, %v4203
  %v4205 = vmul.f32 %v4202, %v4204
  %v4206 = vadd.f32 %v4202, %v4205
  %vm4207 = vweird.f32 %v4201
  %vm4208 = vweird.f32 %v4202
  %vm4209 = vmor %vm4207, %vm4208
  %v4210 = vsel %vm4209, %v4202, %v4206
  %v4211 = vand.u32 2147483647, %v4201
  %vm4212 = vcmp.eq.f32.partialorder %v4211, 8.507059e+37
  %v4213 = vand.u32 %v4201, 2147483648
  %v4214 = vor.u32 1.1754944e-38, %v4213
  %v4215 = vsel %vm4212, %v4214, %v4210
  %v4216 = vmul.f32 1.0, %v4215
  %v4217 = vmul.f32 %v4196, %v4175
  %v4218 = vadd.f32 %v3553, %v4217
  %v4219 = vtanh.pop %v4218
  %v4220 = vsub.f32 1.0, %v4216
  %v4221 = vmul.f32 %v4220, %v4219
  %v4222 = vmul.f32 %v4216, %v4113
  %v4223 = vadd.f32 %v4221, %v4222
  %v4225 = vsel %vm2321, %v4223, 0
  %4227 = vmatpush.msra.mxu0 0.0
  %4228 = vmatpush.msra.mxu0 0.0
  %4229 = vmatpush.msra.mxu0 0.0
  %4230 = vmatpush.msra.mxu0 0.0
  %4231 = vmatpush.msra.mxu0 0.0
  %4232 = vmatpush.msra.mxu0 0.0
  %4233 = vmatpush.msra.mxu0 0.0
  %4234 = vmatpush.msra.mxu0 0.0
  %4235 = vmatpush.msra.mxu0 %v3393
  %4236 = vmatpush.msra.mxu0 %v3392
  %4237 = vmatpush.msra.mxu0 %v3391
  %4238 = vmatpush.msra.mxu0 %v3390
  %4239 = vmatpush.msra.mxu0 %v3389
  %4240 = vmatpush.msra.mxu0 %v3388
  %4241 = vmatpush.msra.mxu0 %v3387
  %4242 = vmatpush.msra.mxu0 %v3386
  %4243 = vmatmul.f32.gmra.mxu0 %v4225
  %v4244 = vpop.f32.mrf.mxu0
  %v4245 = vadd.f32 0.0, %v4244
  %4246 = vdwg.mxu0
  %4247 = vmatpush.msra.mxu0 0.0
  %4248 = vmatpush.msra.mxu0 0.0
  %4249 = vmatpush.msra.mxu0 0.0
  %4250 = vmatpush.msra.mxu0 0.0
  %4251 = vmatpush.msra.mxu0 0.0
  %4252 = vmatpush.msra.mxu0 0.0
  %4253 = vmatpush.msra.mxu0 0.0
  %4254 = vmatpush.msra.mxu0 0.0
  %4255 = vmatpush.msra.mxu0 %v3402
  %4256 = vmatpush.msra.mxu0 %v3401
  %4257 = vmatpush.msra.mxu0 %v3400
  %4258 = vmatpush.msra.mxu0 %v3399
  %4259 = vmatpush.msra.mxu0 %v3398
  %4260 = vmatpush.msra.mxu0 %v3397
  %4261 = vmatpush.msra.mxu0 %v3396
  %4262 = vmatpush.msra.mxu0 %v3395
  %4263 = vmatmul.f32.gmra.mxu0 %v4225
  %v4264 = vpop.f32.mrf.mxu0
  %v4265 = vadd.f32 0.0, %v4264
  %4266 = vdwg.mxu0
  %4267 = vmatpush.msra.mxu0 0.0
  %4268 = vmatpush.msra.mxu0 0.0
  %4269 = vmatpush.msra.mxu0 0.0
  %4270 = vmatpush.msra.mxu0 0.0
  %4271 = vmatpush.msra.mxu0 0.0
  %4272 = vmatpush.msra.mxu0 0.0
  %4273 = vmatpush.msra.mxu0 0.0
  %4274 = vmatpush.msra.mxu0 0.0
  %4275 = vmatpush.msra.mxu0 %v3411
  %4276 = vmatpush.msra.mxu0 %v3410
  %4277 = vmatpush.msra.mxu0 %v3409
  %4278 = vmatpush.msra.mxu0 %v3408
  %4279 = vmatpush.msra.mxu0 %v3407
  %4280 = vmatpush.msra.mxu0 %v3406
  %4281 = vmatpush.msra.mxu0 %v3405
  %4282 = vmatpush.msra.mxu0 %v3404
  %4283 = vmatmul.f32.gmra.mxu0 %v4225
  %v4284 = vpop.f32.mrf.mxu0
  %v4285 = vadd.f32 %v3605, %v4284
  %4286 = vdwg.mxu0
  %v4287 = vadd.f32 %v3468, %v4245
  %v4288 = vxor.u32 %v4287, 2147483648
  %v4289 = vmul.f32 %v4288, 1.442695
  %v4290 = vpow.pop %v4289
  %v4291 = vadd.f32 %v4290, 1.0
  %v4292 = vrcp.pop %v4291
  %v4293 = vmul.f32 %v4291, %v4292
  %v4294 = vsub.f32 1.0, %v4293
  %v4295 = vmul.f32 %v4292, %v4294
  %v4296 = vadd.f32 %v4292, %v4295
  %vm4297 = vweird.f32 %v4291
  %vm4298 = vweird.f32 %v4292
  %vm4299 = vmor %vm4297, %vm4298
  %v4300 = vsel %vm4299, %v4292, %v4296
  %v4301 = vand.u32 2147483647, %v4291
  %vm4302 = vcmp.eq.f32.partialorder %v4301, 8.507059e+37
  %v4303 = vand.u32 %v4291, 2147483648
  %v4304 = vor.u32 1.1754944e-38, %v4303
  %v4305 = vsel %vm4302, %v4304, %v4300
  %v4306 = vmul.f32 1.0, %v4305
  %v4307 = vadd.f32 %v3512, %v4265
  %v4308 = vxor.u32 %v4307, 2147483648
  %v4309 = vmul.f32 %v4308, 1.442695
  %v4310 = vpow.pop %v4309
  %v4311 = vadd.f32 %v4310, 1.0
  %v4312 = vrcp.pop %v4311
  %v4313 = vmul.f32 %v4311, %v4312
  %v4314 = vsub.f32 1.0, %v4313
  %v4315 = vmul.f32 %v4312, %v4314
  %v4316 = vadd.f32 %v4312, %v4315
  %vm4317 = vweird.f32 %v4311
  %vm4318 = vweird.f32 %v4312
  %vm4319 = vmor %vm4317, %vm4318
  %v4320 = vsel %vm4319, %v4312, %v4316
  %v4321 = vand.u32 2147483647, %v4311
  %vm4322 = vcmp.eq.f32.partialorder %v4321, 8.507059e+37
  %v4323 = vand.u32 %v4311, 2147483648
  %v4324 = vor.u32 1.1754944e-38, %v4323
  %v4325 = vsel %vm4322, %v4324, %v4320
  %v4326 = vmul.f32 1.0, %v4325
  %v4327 = vmul.f32 %v4306, %v4285
  %v4328 = vadd.f32 %v3556, %v4327
  %v4329 = vtanh.pop %v4328
  %v4330 = vsub.f32 1.0, %v4326
  %v4331 = vmul.f32 %v4330, %v4329
  %v4332 = vmul.f32 %v4326, %v4223
  %v4333 = vadd.f32 %v4331, %v4332
  %v4335 = vsel %vm2321, %v4333, 0
  %4337 = vmatpush.msra.mxu0 0.0
  %4338 = vmatpush.msra.mxu0 0.0
  %4339 = vmatpush.msra.mxu0 0.0
  %4340 = vmatpush.msra.mxu0 0.0
  %4341 = vmatpush.msra.mxu0 0.0
  %4342 = vmatpush.msra.mxu0 0.0
  %4343 = vmatpush.msra.mxu0 0.0
  %4344 = vmatpush.msra.mxu0 0.0
  %4345 = vmatpush.msra.mxu0 %v3393
  %4346 = vmatpush.msra.mxu0 %v3392
  %4347 = vmatpush.msra.mxu0 %v3391
  %4348 = vmatpush.msra.mxu0 %v3390
  %4349 = vmatpush.msra.mxu0 %v3389
  %4350 = vmatpush.msra.mxu0 %v3388
  %4351 = vmatpush.msra.mxu0 %v3387
  %4352 = vmatpush.msra.mxu0 %v3386
  %4353 = vmatmul.f32.gmra.mxu0 %v4335
  %v4354 = vpop.f32.mrf.mxu0
  %v4355 = vadd.f32 0.0, %v4354
  %4356 = vdwg.mxu0
  %4357 = vmatpush.msra.mxu0 0.0
  %4358 = vmatpush.msra.mxu0 0.0
  %4359 = vmatpush.msra.mxu0 0.0
  %4360 = vmatpush.msra.mxu0 0.0
  %4361 = vmatpush.msra.mxu0 0.0
  %4362 = vmatpush.msra.mxu0 0.0
  %4363 = vmatpush.msra.mxu0 0.0
  %4364 = vmatpush.msra.mxu0 0.0
  %4365 = vmatpush.msra.mxu0 %v3402
  %4366 = vmatpush.msra.mxu0 %v3401
  %4367 = vmatpush.msra.mxu0 %v3400
  %4368 = vmatpush.msra.mxu0 %v3399
  %4369 = vmatpush.msra.mxu0 %v3398
  %4370 = vmatpush.msra.mxu0 %v3397
  %4371 = vmatpush.msra.mxu0 %v3396
  %4372 = vmatpush.msra.mxu0 %v3395
  %4373 = vmatmul.f32.gmra.mxu0 %v4335
  %v4374 = vpop.f32.mrf.mxu0
  %v4375 = vadd.f32 0.0, %v4374
  %4376 = vdwg.mxu0
  %4377 = vmatpush.msra.mxu0 0.0
  %4378 = vmatpush.msra.mxu0 0.0
  %4379 = vmatpush.msra.mxu0 0.0
  %4380 = vmatpush.msra.mxu0 0.0
  %4381 = vmatpush.msra.mxu0 0.0
  %4382 = vmatpush.msra.mxu0 0.0
  %4383 = vmatpush.msra.mxu0 0.0
  %4384 = vmatpush.msra.mxu0 0.0
  %4385 = vmatpush.msra.mxu0 %v3411
  %4386 = vmatpush.msra.mxu0 %v3410
  %4387 = vmatpush.msra.mxu0 %v3409
  %4388 = vmatpush.msra.mxu0 %v3408
  %4389 = vmatpush.msra.mxu0 %v3407
  %4390 = vmatpush.msra.mxu0 %v3406
  %4391 = vmatpush.msra.mxu0 %v3405
  %4392 = vmatpush.msra.mxu0 %v3404
  %4393 = vmatmul.f32.gmra.mxu0 %v4335
  %v4394 = vpop.f32.mrf.mxu0
  %v4395 = vadd.f32 %v3605, %v4394
  %4396 = vdwg.mxu0
  %v4397 = vadd.f32 %v3471, %v4355
  %v4398 = vxor.u32 %v4397, 2147483648
  %v4399 = vmul.f32 %v4398, 1.442695
  %v4400 = vpow.pop %v4399
  %v4401 = vadd.f32 %v4400, 1.0
  %v4402 = vrcp.pop %v4401
  %v4403 = vmul.f32 %v4401, %v4402
  %v4404 = vsub.f32 1.0, %v4403
  %v4405 = vmul.f32 %v4402, %v4404
  %v4406 = vadd.f32 %v4402, %v4405
  %vm4407 = vweird.f32 %v4401
  %vm4408 = vweird.f32 %v4402
  %vm4409 = vmor %vm4407, %vm4408
  %v4410 = vsel %vm4409, %v4402, %v4406
  %v4411 = vand.u32 2147483647, %v4401
  %vm4412 = vcmp.eq.f32.partialorder %v4411, 8.507059e+37
  %v4413 = vand.u32 %v4401, 2147483648
  %v4414 = vor.u32 1.1754944e-38, %v4413
  %v4415 = vsel %vm4412, %v4414, %v4410
  %v4416 = vmul.f32 1.0, %v4415
  %v4417 = vadd.f32 %v3515, %v4375
  %v4418 = vxor.u32 %v4417, 2147483648
  %v4419 = vmul.f32 %v4418, 1.442695
  %v4420 = vpow.pop %v4419
  %v4421 = vadd.f32 %v4420, 1.0
  %v4422 = vrcp.pop %v4421
  %v4423 = vmul.f32 %v4421, %v4422
  %v4424 = vsub.f32 1.0, %v4423
  %v4425 = vmul.f32 %v4422, %v4424
  %v4426 = vadd.f32 %v4422, %v4425
  %vm4427 = vweird.f32 %v4421
  %vm4428 = vweird.f32 %v4422
  %vm4429 = vmor %vm4427, %vm4428
  %v4430 = vsel %vm4429, %v4422, %v4426
  %v4431 = vand.u32 2147483647, %v4421
  %vm4432 = vcmp.eq.f32.partialorder %v4431, 8.507059e+37
  %v4433 = vand.u32 %v4421, 2147483648
  %v4434 = vor.u32 1.1754944e-38, %v4433
  %v4435 = vsel %vm4432, %v4434, %v4430
  %v4436 = vmul.f32 1.0, %v4435
  %v4437 = vmul.f32 %v4416, %v4395
  %v4438 = vadd.f32 %v3559, %v4437
  %v4439 = vtanh.pop %v4438
  %v4440 = vsub.f32 1.0, %v4436
  %v4441 = vmul.f32 %v4440, %v4439
  %v4442 = vmul.f32 %v4436, %v4333
  %v4443 = vadd.f32 %v4441, %v4442
  %v4444 = vld [vmem:[%s12] sm:$0xff]
  %v4445 = vld [vmem:[%s12 + $0x8] sm:$0xff]
  %v4446 = vld [vmem:[%s12 + $0x10] sm:$0xff]
  %v4447 = vld [vmem:[%s12 + $0x18] sm:$0xff]
  %v4448 = vld [vmem:[%s12 + $0x20] sm:$0xff]
  %v4449 = vld [vmem:[%s12 + $0x28] sm:$0xff]
  %v4450 = vld [vmem:[%s12 + $0x30] sm:$0xff]
  %v4451 = vld [vmem:[%s12 + $0x38] sm:$0xff]
  %v4452 = vld [vmem:[#allocation2] sm:$0x1]
  %v4454 = vperm.slane %v4452, 0
  %v4457 = vsel %vm2321, %v4443, 0
  %4459 = vmatpush.msra.mxu0 0.0
  %4460 = vmatpush.msra.mxu0 0.0
  %4461 = vmatpush.msra.mxu0 0.0
  %4462 = vmatpush.msra.mxu0 0.0
  %4463 = vmatpush.msra.mxu0 0.0
  %4464 = vmatpush.msra.mxu0 0.0
  %4465 = vmatpush.msra.mxu0 0.0
  %4466 = vmatpush.msra.mxu0 0.0
  %4467 = vmatpush.msra.mxu0 %v4451
  %4468 = vmatpush.msra.mxu0 %v4450
  %4469 = vmatpush.msra.mxu0 %v4449
  %4470 = vmatpush.msra.mxu0 %v4448
  %4471 = vmatpush.msra.mxu0 %v4447
  %4472 = vmatpush.msra.mxu0 %v4446
  %4473 = vmatpush.msra.mxu0 %v4445
  %4474 = vmatpush.msra.mxu0 %v4444
  %4475 = vmatmul.f32.gmra.mxu0 %v3675
  %v4476 = vpop.f32.mrf.mxu0
  %v4477 = vadd.f32 %v4454, %v4476
  %4478 = vmatmul.f32.gmra.mxu0 %v3785
  %v4479 = vpop.f32.mrf.mxu0
  %v4480 = vadd.f32 %v4454, %v4479
  %4481 = vmatmul.f32.gmra.mxu0 %v3895
  %v4482 = vpop.f32.mrf.mxu0
  %v4483 = vadd.f32 %v4454, %v4482
  %4484 = vmatmul.f32.gmra.mxu0 %v4005
  %v4485 = vpop.f32.mrf.mxu0
  %v4486 = vadd.f32 %v4454, %v4485
  %4487 = vmatmul.f32.gmra.mxu0 %v4115
  %v4488 = vpop.f32.mrf.mxu0
  %v4489 = vadd.f32 %v4454, %v4488
  %4490 = vmatmul.f32.gmra.mxu0 %v4225
  %v4491 = vpop.f32.mrf.mxu0
  %v4492 = vadd.f32 %v4454, %v4491
  %4493 = vmatmul.f32.gmra.mxu0 %v4335
  %v4494 = vpop.f32.mrf.mxu0
  %v4495 = vadd.f32 %v4454, %v4494
  %4496 = vmatmul.f32.gmra.mxu0 %v4457
  %v4497 = vpop.f32.mrf.mxu0
  %v4498 = vadd.f32 %v4454, %v4497
  %4499 = vdwg.mxu0
  %vm4500 = vcmask 7168
  %4501 = vst.msk [vmem:[%s14] sm:$0xff] %vm4500, %v4477
  %4502 = vst.msk [vmem:[%s14 + $0x8] sm:$0xff] %vm4500, %v4480
  %4503 = vst.msk [vmem:[%s14 + $0x10] sm:$0xff] %vm4500, %v4483
  %4504 = vst.msk [vmem:[%s14 + $0x18] sm:$0xff] %vm4500, %v4486
  %4505 = vst.msk [vmem:[%s14 + $0x20] sm:$0xff] %vm4500, %v4489
  %4506 = vst.msk [vmem:[%s14 + $0x28] sm:$0xff] %vm4500, %v4492
  %4507 = vst.msk [vmem:[%s14 + $0x30] sm:$0xff] %vm4500, %v4495
  %4508 = vst.msk [vmem:[%s14 + $0x38] sm:$0xff] %vm4500, %v4498
  // Predicated region
  $region58: #{client_forward.1} parent=0 // pred_check
    _
  $region59: #{client_forward.1} parent=0 // pred_check_branch
    %4510 = sbr.rel (0) target = $region61
  $region60: #{client_forward.1} parent=0 // pred_region
    _
  $region61: #{client_forward.1} parent=0 // pred_fallthru
    _
  // Predicated region
  $region62: #{client_forward.1} parent=0 // pred_check
    _
  $region63: #{client_forward.1} parent=0 // pred_check_branch
    %4512 = sbr.rel (0) target = $region65
  $region64: #{client_forward.1} parent=0 // pred_region
    _
  $region65: #{client_forward.1} parent=0 // pred_fallthru
    _

</llo_original>
